<compile_context>
chip_gen: v6e
topology: v6e:2x2x1
jax: 0.10.0
libtpu: 0.0.40
codegen_flags: <defaults>
</compile_context>

<pallas_src>
import jax
import jax.numpy as jnp
from jax.experimental import pallas as pl
from jax.experimental.pallas import tpu as pltpu

EPS = 1e-5
LANES = 128


def _round_up(x, m):
    return (x + m - 1) // m * m


def double_conv_kernel(x_ref, w1_ref, g1_ref, bt1_ref, w2_ref, g2_ref, bt2_ref,
                       out_ref, xpad_ref, hpad_ref):
    N, Hp, Wp, C = xpad_ref.shape
    H, W = Hp - 2, Wp - 2
    M = N * H * W

    def pad_into(dst_ref, interior_nhwc):
        # Write the interior, then zero ONLY the 1-wide halo (not the whole buffer).
        dst_ref[:, 1:H + 1, 1:W + 1, :] = interior_nhwc.astype(dst_ref.dtype)
        zrow = jnp.zeros((N, 1, Wp, C), dst_ref.dtype)
        zcol = jnp.zeros((N, Hp, 1, C), dst_ref.dtype)
        dst_ref[:, 0:1, :, :] = zrow
        dst_ref[:, H + 1:H + 2, :, :] = zrow
        dst_ref[:, :, 0:1, :] = zcol
        dst_ref[:, :, W + 1:W + 2, :] = zcol

    def conv3x3(src_ref, w_ref):
        # 3 W-shifted (sublane-axis) slices, reused across kh; kh slices are cheap
        # (they do not cross the (8,128) tile of the last two dims).
        xw = [src_ref[:, :, kw:kw + W, :].astype(jnp.bfloat16) for kw in range(3)]
        # im2col: 9 taps, each C (= k*128) lanes wide, concatenated at lane-aligned
        # offsets -> one (M, 9C) slab -> a single fat MXU matmul in bf16, f32 acc.
        taps = [xw[kw][:, kh:kh + H, :, :] for kh in range(3) for kw in range(3)]
        patches = jnp.concatenate(taps, axis=-1).reshape(M, 9 * C)
        return jnp.dot(patches, w_ref[...], preferred_element_type=jnp.float32)

    def bn_relu(y, gamma, beta):
        # Training-mode BN: biased batch variance, centered (numerically stable) form.
        mean = jnp.mean(y, axis=0, keepdims=True)
        d = y - mean
        var = jnp.mean(d * d, axis=0, keepdims=True)
        scale = gamma * jax.lax.rsqrt(var + EPS)
        return jnp.maximum(d * scale + beta, 0.0)

    # conv1 -> BN1 -> ReLU   (conv bias omitted: it cancels in BN's mean subtraction)
    pad_into(xpad_ref, x_ref[...])
    h1 = bn_relu(conv3x3(xpad_ref, w1_ref), g1_ref[...], bt1_ref[...])

    # conv2 -> BN2 -> ReLU
    pad_into(hpad_ref, h1.reshape(N, H, W, C))
    h2 = bn_relu(conv3x3(hpad_ref, w2_ref), g2_ref[...], bt2_ref[...])

    # Lane-dense store: last dim is the padded channel width (multiple of 128).
    out_ref[...] = h2.reshape(N, H, W, C).astype(out_ref.dtype)


def init_params(key, cin, cout):
    """Same parameter set as the PyTorch module (Kaiming-uniform-like conv init,
    BN gamma=1 / beta=0). Conv weights are HWIO."""
    k1, k2, k3, k4 = jax.random.split(key, 4)
    bound1 = (cin * 9) ** -0.5
    w1 = jax.random.uniform(k1, (3, 3, cin, cout), jnp.float32, -bound1, bound1)
    b1 = jax.random.uniform(k2, (cout,), jnp.float32, -bound1, bound1)
    bound2 = (cout * 9) ** -0.5
    w2 = jax.random.uniform(k3, (3, 3, cout, cout), jnp.float32, -bound2, bound2)
    b2 = jax.random.uniform(k4, (cout,), jnp.float32, -bound2, bound2)
    g1 = jnp.ones((cout,), jnp.float32)
    bt1 = jnp.zeros((cout,), jnp.float32)
    g2 = jnp.ones((cout,), jnp.float32)
    bt2 = jnp.zeros((cout,), jnp.float32)
    return (w1, b1, g1, bt1, w2, b2, g2, bt2)


def prepare_params(params, cin, cout):
    """One-time packing (keep out of the per-call hot path): pad channels to the
    128-lane width, reshape conv weights to (9*Cp, Cp) im2col form, cast to bf16.
    Conv biases are dropped on purpose: a per-channel constant added before
    training-mode BatchNorm cancels exactly in (x - mean), so they are dead."""
    w1, _b1, g1, bt1, w2, _b2, g2, bt2 = params
    cp = _round_up(max(cin, cout, 1), LANES)

    def pack_w(w, ci, co):
        wp = jnp.zeros((3, 3, cp, cp), jnp.float32).at[:, :, :ci, :co].set(w)
        return wp.reshape(9 * cp, cp).astype(jnp.bfloat16)

    def pack_bn(v, fill):
        return jnp.full((1, cp), fill, jnp.float32).at[0, :cout].set(v)

    packed = (pack_w(w1, cin, cout), pack_bn(g1, 1.0), pack_bn(bt1, 0.0),
              pack_w(w2, cout, cout), pack_bn(g2, 1.0), pack_bn(bt2, 0.0))
    return packed, cin, cout, cp


def double_conv(x_nchw, packed_params):
    (w1p, g1p, bt1p, w2p, g2p, bt2p), cin, cout, cp = packed_params
    N, C, H, W = x_nchw.shape
    assert C == cin

    # NCHW (PyTorch) -> NHWC, channel-pad to the lane width, bf16 for HBM + MXU.
    x = jnp.transpose(x_nchw, (0, 2, 3, 1))
    x = jnp.pad(x, ((0, 0), (0, 0), (0, 0), (0, cp - cin))).astype(jnp.bfloat16)

    args = (x, w1p, g1p, bt1p, w2p, g2p, bt2p)

    def full_spec(a):
        return pl.BlockSpec(a.shape, lambda i, nd=a.ndim: (0,) * nd)

    # TODO(synk): for production UNet sizes, tile with a real grid (N / H row-stripes,
    # halo-aware BlockSpecs) and a two-pass BN (per-tile sum/sumsq accumulators on an
    # "arbitrary" axis, normalization applied in a second pass); mark independent axes
    # "parallel" so v7x uses both TensorCores and re-size tiles for its 64 MiB VMEM.
    # The single-block version below is sized for small demo shapes that fit in VMEM.
    out = pl.pallas_call(
        double_conv_kernel,
        out_shape=jax.ShapeDtypeStruct((N, H, W, cp), jnp.float32),
        grid_spec=pltpu.PrefetchScalarGridSpec(
            num_scalar_prefetch=0,
            grid=(1,),
            in_specs=[full_spec(a) for a in args],
            out_specs=pl.BlockSpec((N, H, W, cp), lambda i: (0, 0, 0, 0)),
            scratch_shapes=[
                pltpu.VMEM((N, H + 2, W + 2, cp), jnp.float32),   # spatially padded input
                pltpu.VMEM((N, H + 2, W + 2, cp), jnp.float32),   # spatially padded conv1 act
            ],
        ),
        compiler_params=pltpu.CompilerParams(
            dimension_semantics=("arbitrary",),
            vmem_limit_bytes=64 * 1024 * 1024,
        ),
    )(*args)

    # Drop padded channels, back to NCHW.
    return jnp.transpose(out[..., :cout], (0, 3, 1, 2))


if __name__ == "__main__":
    key = jax.random.PRNGKey(0)
    kx, kp = jax.random.split(key)

    N, Cin, Cout, H, W = 2, 4, 8, 16, 16
    x = jax.random.normal(kx, (N, Cin, H, W), jnp.float32)
    params = init_params(kp, Cin, Cout)
    packed = prepare_params(params, Cin, Cout)   # one-time packing, outside hot path

    y = double_conv(x, packed)
    y = jax.block_until_ready(y)

    assert y.shape == (N, Cout, H, W), y.shape
    assert bool(jnp.all(jnp.isfinite(y))) and bool(jnp.all(y >= 0.0))  # finite ReLU out
    print("KERNEL_OK")
</pallas_src>

<mosaic_0001>
module attributes {stable_mosaic.version = 11 : i64} {
  func.func @double_conv_kernel(%arg0: i32, %arg1: memref<2x16x16x128xbf16, #tpu.memory_space<vmem>>, %arg2: memref<1152x128xbf16, #tpu.memory_space<vmem>>, %arg3: memref<1x128xf32, #tpu.memory_space<vmem>>, %arg4: memref<1x128xf32, #tpu.memory_space<vmem>>, %arg5: memref<1152x128xbf16, #tpu.memory_space<vmem>>, %arg6: memref<1x128xf32, #tpu.memory_space<vmem>>, %arg7: memref<1x128xf32, #tpu.memory_space<vmem>>, %arg8: memref<2x16x16x128xf32, #tpu.memory_space<vmem>>, %arg9: memref<2x18x18x128xf32, #tpu.memory_space<vmem>>, %arg10: memref<2x18x18x128xf32, #tpu.memory_space<vmem>>) attributes {dimension_semantics = [#tpu.dimension_semantics<arbitrary>], iteration_bounds = array<i64: 1>, scalar_prefetch = 0 : i64, scratch_operands = 2 : i64, tpu.core_type = #tpu.core_type<tc>, window_params = [{pipeline_mode = #tpu.pipeline_mode<synchronous>, transform_indices = @transform_0, window_bounds = array<i64: 2, 16, 16, 128>}, {pipeline_mode = #tpu.pipeline_mode<synchronous>, transform_indices = @transform_1, window_bounds = array<i64: 1152, 128>}, {pipeline_mode = #tpu.pipeline_mode<synchronous>, transform_indices = @transform_2, window_bounds = array<i64: 1, 128>}, {pipeline_mode = #tpu.pipeline_mode<synchronous>, transform_indices = @transform_3, window_bounds = array<i64: 1, 128>}, {pipeline_mode = #tpu.pipeline_mode<synchronous>, transform_indices = @transform_4, window_bounds = array<i64: 1152, 128>}, {pipeline_mode = #tpu.pipeline_mode<synchronous>, transform_indices = @transform_5, window_bounds = array<i64: 1, 128>}, {pipeline_mode = #tpu.pipeline_mode<synchronous>, transform_indices = @transform_6, window_bounds = array<i64: 1, 128>}, {pipeline_mode = #tpu.pipeline_mode<synchronous>, transform_indices = @transform_7, window_bounds = array<i64: 2, 16, 16, 128>}]} {
    %c0 = arith.constant 0 : index
    %c0_0 = arith.constant 0 : index
    %c0_1 = arith.constant 0 : index
    %c0_2 = arith.constant 0 : index
    %0 = vector.load %arg1[%c0, %c0_0, %c0_1, %c0_2] : memref<2x16x16x128xbf16, #tpu.memory_space<vmem>>, vector<2x16x16x128xbf16>
    %1 = arith.extf %0 : vector<2x16x16x128xbf16> to vector<2x16x16x128xf32>
    %c0_3 = arith.constant 0 : index
    %c1 = arith.constant 1 : index
    %c1_4 = arith.constant 1 : index
    %c0_5 = arith.constant 0 : index
    %2 = vector.load %arg9[%c0_3, %c1, %c1_4, %c0_5] : memref<2x18x18x128xf32, #tpu.memory_space<vmem>>, vector<2x16x16x128xf32>
    tpu.vector_store %arg9[%c0_3, %c1, %c1_4, %c0_5], %1 {strides = array<i32>} : memref<2x18x18x128xf32, #tpu.memory_space<vmem>>, vector<2x16x16x128xf32>,
    %cst = arith.constant 0.000000e+00 : f32
    %3 = vector.broadcast %cst : f32 to vector<2x1x18x128xf32>
    %cst_6 = arith.constant 0.000000e+00 : f32
    %4 = vector.broadcast %cst_6 : f32 to vector<2x18x1x128xf32>
    %c0_7 = arith.constant 0 : index
    %c0_8 = arith.constant 0 : index
    %c0_9 = arith.constant 0 : index
    %c0_10 = arith.constant 0 : index
    %5 = vector.load %arg9[%c0_7, %c0_8, %c0_9, %c0_10] : memref<2x18x18x128xf32, #tpu.memory_space<vmem>>, vector<2x1x18x128xf32>
    tpu.vector_store %arg9[%c0_7, %c0_8, %c0_9, %c0_10], %3 {strides = array<i32>} : memref<2x18x18x128xf32, #tpu.memory_space<vmem>>, vector<2x1x18x128xf32>,
    %c0_11 = arith.constant 0 : index
    %c17 = arith.constant 17 : index
    %c0_12 = arith.constant 0 : index
    %c0_13 = arith.constant 0 : index
    %6 = vector.load %arg9[%c0_11, %c17, %c0_12, %c0_13] : memref<2x18x18x128xf32, #tpu.memory_space<vmem>>, vector<2x1x18x128xf32>
    tpu.vector_store %arg9[%c0_11, %c17, %c0_12, %c0_13], %3 {strides = array<i32>} : memref<2x18x18x128xf32, #tpu.memory_space<vmem>>, vector<2x1x18x128xf32>,
    %c0_14 = arith.constant 0 : index
    %c0_15 = arith.constant 0 : index
    %c0_16 = arith.constant 0 : index
    %c0_17 = arith.constant 0 : index
    %7 = vector.load %arg9[%c0_14, %c0_15, %c0_16, %c0_17] : memref<2x18x18x128xf32, #tpu.memory_space<vmem>>, vector<2x18x1x128xf32>
    tpu.vector_store %arg9[%c0_14, %c0_15, %c0_16, %c0_17], %4 {strides = array<i32>} : memref<2x18x18x128xf32, #tpu.memory_space<vmem>>, vector<2x18x1x128xf32>,
    %c0_18 = arith.constant 0 : index
    %c0_19 = arith.constant 0 : index
    %c17_20 = arith.constant 17 : index
    %c0_21 = arith.constant 0 : index
    %8 = vector.load %arg9[%c0_18, %c0_19, %c17_20, %c0_21] : memref<2x18x18x128xf32, #tpu.memory_space<vmem>>, vector<2x18x1x128xf32>
    tpu.vector_store %arg9[%c0_18, %c0_19, %c17_20, %c0_21], %4 {strides = array<i32>} : memref<2x18x18x128xf32, #tpu.memory_space<vmem>>, vector<2x18x1x128xf32>,
    %c0_22 = arith.constant 0 : index
    %c0_23 = arith.constant 0 : index
    %c0_24 = arith.constant 0 : index
    %c0_25 = arith.constant 0 : index
    %9 = vector.load %arg9[%c0_22, %c0_23, %c0_24, %c0_25] : memref<2x18x18x128xf32, #tpu.memory_space<vmem>>, vector<2x18x16x128xf32>
    %10 = arith.truncf %9 : vector<2x18x16x128xf32> to vector<2x18x16x128xbf16>
    %c0_26 = arith.constant 0 : index
    %c0_27 = arith.constant 0 : index
    %c1_28 = arith.constant 1 : index
    %c0_29 = arith.constant 0 : index
    %11 = vector.load %arg9[%c0_26, %c0_27, %c1_28, %c0_29] : memref<2x18x18x128xf32, #tpu.memory_space<vmem>>, vector<2x18x16x128xf32>
    %12 = arith.truncf %11 : vector<2x18x16x128xf32> to vector<2x18x16x128xbf16>
    %c0_30 = arith.constant 0 : index
    %c0_31 = arith.constant 0 : index
    %c2 = arith.constant 2 : index
    %c0_32 = arith.constant 0 : index
    %13 = vector.load %arg9[%c0_30, %c0_31, %c2, %c0_32] : memref<2x18x18x128xf32, #tpu.memory_space<vmem>>, vector<2x18x16x128xf32>
    %14 = arith.truncf %13 : vector<2x18x16x128xf32> to vector<2x18x16x128xbf16>
    %15 = vector.extract_strided_slice %10 {offsets = [0, 0, 0, 0], sizes = [2, 16, 16, 128], strides = [1, 1, 1, 1]} : vector<2x18x16x128xbf16> to vector<2x16x16x128xbf16>
    %16 = vector.extract_strided_slice %12 {offsets = [0, 0, 0, 0], sizes = [2, 16, 16, 128], strides = [1, 1, 1, 1]} : vector<2x18x16x128xbf16> to vector<2x16x16x128xbf16>
    %17 = vector.extract_strided_slice %14 {offsets = [0, 0, 0, 0], sizes = [2, 16, 16, 128], strides = [1, 1, 1, 1]} : vector<2x18x16x128xbf16> to vector<2x16x16x128xbf16>
    %18 = vector.extract_strided_slice %10 {offsets = [0, 1, 0, 0], sizes = [2, 16, 16, 128], strides = [1, 1, 1, 1]} : vector<2x18x16x128xbf16> to vector<2x16x16x128xbf16>
    %19 = vector.extract_strided_slice %12 {offsets = [0, 1, 0, 0], sizes = [2, 16, 16, 128], strides = [1, 1, 1, 1]} : vector<2x18x16x128xbf16> to vector<2x16x16x128xbf16>
    %20 = vector.extract_strided_slice %14 {offsets = [0, 1, 0, 0], sizes = [2, 16, 16, 128], strides = [1, 1, 1, 1]} : vector<2x18x16x128xbf16> to vector<2x16x16x128xbf16>
    %21 = vector.extract_strided_slice %10 {offsets = [0, 2, 0, 0], sizes = [2, 16, 16, 128], strides = [1, 1, 1, 1]} : vector<2x18x16x128xbf16> to vector<2x16x16x128xbf16>
    %22 = vector.extract_strided_slice %12 {offsets = [0, 2, 0, 0], sizes = [2, 16, 16, 128], strides = [1, 1, 1, 1]} : vector<2x18x16x128xbf16> to vector<2x16x16x128xbf16>
    %23 = vector.extract_strided_slice %14 {offsets = [0, 2, 0, 0], sizes = [2, 16, 16, 128], strides = [1, 1, 1, 1]} : vector<2x18x16x128xbf16> to vector<2x16x16x128xbf16>
    %24 = tpu.concatenate %15, %16, %17, %18, %19, %20, %21, %22, %23 in 3 : vector<2x16x16x128xbf16>, vector<2x16x16x128xbf16>, vector<2x16x16x128xbf16>, vector<2x16x16x128xbf16>, vector<2x16x16x128xbf16>, vector<2x16x16x128xbf16>, vector<2x16x16x128xbf16>, vector<2x16x16x128xbf16>, vector<2x16x16x128xbf16> -> vector<2x16x16x1152xbf16>
    %25 = vector.shape_cast %24 : vector<2x16x16x1152xbf16> to vector<512x1152xbf16>
    %c0_33 = arith.constant 0 : index
    %c0_34 = arith.constant 0 : index
    %26 = vector.load %arg2[%c0_33, %c0_34] : memref<1152x128xbf16, #tpu.memory_space<vmem>>, vector<1152x128xbf16>
    %cst_35 = arith.constant dense<0.000000e+00> : vector<512x128xf32>
    %27 = tpu.matmul %25, %26, %cst_35 {dimension_numbers = #tpu.dot_dimension_numbers<[1], [0], [0], [1], [0, 0, 1, 1], [], []>} : vector<512x1152xbf16>, vector<1152x128xbf16>, vector<512x128xf32> -> vector<512x128xf32>
    %c0_36 = arith.constant 0 : index
    %c0_37 = arith.constant 0 : index
    %28 = vector.load %arg3[%c0_36, %c0_37] : memref<1x128xf32, #tpu.memory_space<vmem>>, vector<1x128xf32>
    %c0_38 = arith.constant 0 : index
    %c0_39 = arith.constant 0 : index
    %29 = vector.load %arg4[%c0_38, %c0_39] : memref<1x128xf32, #tpu.memory_space<vmem>>, vector<1x128xf32>
    %cst_40 = arith.constant dense<0.000000e+00> : vector<128xf32>
    %30 = vector.multi_reduction <add>, %27, %cst_40 [0] : vector<512x128xf32> to vector<128xf32>
    %31 = vector.shape_cast %30 : vector<128xf32> to vector<1x128xf32>
    %cst_41 = arith.constant 5.120000e+02 : f32
    %32 = vector.broadcast %cst_41 : f32 to vector<1x128xf32>
    %33 = arith.divf %31, %32 : vector<1x128xf32>
    %34 = vector.broadcast %33 : vector<1x128xf32> to vector<512x128xf32>
    %35 = arith.subf %27, %34 : vector<512x128xf32>
    %36 = arith.mulf %35, %35 : vector<512x128xf32>
    %cst_42 = arith.constant dense<0.000000e+00> : vector<128xf32>
    %37 = vector.multi_reduction <add>, %36, %cst_42 [0] : vector<512x128xf32> to vector<128xf32>
    %38 = vector.shape_cast %37 : vector<128xf32> to vector<1x128xf32>
    %cst_43 = arith.constant 5.120000e+02 : f32
    %39 = vector.broadcast %cst_43 : f32 to vector<1x128xf32>
    %40 = arith.divf %38, %39 : vector<1x128xf32>
    %cst_44 = arith.constant 9.99999974E-6 : f32
    %41 = vector.broadcast %cst_44 : f32 to vector<1x128xf32>
    %42 = arith.addf %40, %41 : vector<1x128xf32>
    %43 = math.rsqrt %42 : vector<1x128xf32>
    %44 = arith.mulf %28, %43 : vector<1x128xf32>
    %45 = vector.broadcast %44 : vector<1x128xf32> to vector<512x128xf32>
    %46 = arith.mulf %35, %45 : vector<512x128xf32>
    %47 = vector.broadcast %29 : vector<1x128xf32> to vector<512x128xf32>
    %48 = arith.addf %46, %47 : vector<512x128xf32>
    %cst_45 = arith.constant 0.000000e+00 : f32
    %49 = vector.broadcast %cst_45 : f32 to vector<512x128xf32>
    %50 = arith.maximumf %48, %49 : vector<512x128xf32>
    %51 = vector.shape_cast %50 : vector<512x128xf32> to vector<2x16x16x128xf32>
    %c0_46 = arith.constant 0 : index
    %c1_47 = arith.constant 1 : index
    %c1_48 = arith.constant 1 : index
    %c0_49 = arith.constant 0 : index
    %52 = vector.load %arg10[%c0_46, %c1_47, %c1_48, %c0_49] : memref<2x18x18x128xf32, #tpu.memory_space<vmem>>, vector<2x16x16x128xf32>
    tpu.vector_store %arg10[%c0_46, %c1_47, %c1_48, %c0_49], %51 {strides = array<i32>} : memref<2x18x18x128xf32, #tpu.memory_space<vmem>>, vector<2x16x16x128xf32>,
    %cst_50 = arith.constant 0.000000e+00 : f32
    %53 = vector.broadcast %cst_50 : f32 to vector<2x1x18x128xf32>
    %cst_51 = arith.constant 0.000000e+00 : f32
    %54 = vector.broadcast %cst_51 : f32 to vector<2x18x1x128xf32>
    %c0_52 = arith.constant 0 : index
    %c0_53 = arith.constant 0 : index
    %c0_54 = arith.constant 0 : index
    %c0_55 = arith.constant 0 : index
    %55 = vector.load %arg10[%c0_52, %c0_53, %c0_54, %c0_55] : memref<2x18x18x128xf32, #tpu.memory_space<vmem>>, vector<2x1x18x128xf32>
    tpu.vector_store %arg10[%c0_52, %c0_53, %c0_54, %c0_55], %53 {strides = array<i32>} : memref<2x18x18x128xf32, #tpu.memory_space<vmem>>, vector<2x1x18x128xf32>,
    %c0_56 = arith.constant 0 : index
    %c17_57 = arith.constant 17 : index
    %c0_58 = arith.constant 0 : index
    %c0_59 = arith.constant 0 : index
    %56 = vector.load %arg10[%c0_56, %c17_57, %c0_58, %c0_59] : memref<2x18x18x128xf32, #tpu.memory_space<vmem>>, vector<2x1x18x128xf32>
    tpu.vector_store %arg10[%c0_56, %c17_57, %c0_58, %c0_59], %53 {strides = array<i32>} : memref<2x18x18x128xf32, #tpu.memory_space<vmem>>, vector<2x1x18x128xf32>,
    %c0_60 = arith.constant 0 : index
    %c0_61 = arith.constant 0 : index
    %c0_62 = arith.constant 0 : index
    %c0_63 = arith.constant 0 : index
    %57 = vector.load %arg10[%c0_60, %c0_61, %c0_62, %c0_63] : memref<2x18x18x128xf32, #tpu.memory_space<vmem>>, vector<2x18x1x128xf32>
    tpu.vector_store %arg10[%c0_60, %c0_61, %c0_62, %c0_63], %54 {strides = array<i32>} : memref<2x18x18x128xf32, #tpu.memory_space<vmem>>, vector<2x18x1x128xf32>,
    %c0_64 = arith.constant 0 : index
    %c0_65 = arith.constant 0 : index
    %c17_66 = arith.constant 17 : index
    %c0_67 = arith.constant 0 : index
    %58 = vector.load %arg10[%c0_64, %c0_65, %c17_66, %c0_67] : memref<2x18x18x128xf32, #tpu.memory_space<vmem>>, vector<2x18x1x128xf32>
    tpu.vector_store %arg10[%c0_64, %c0_65, %c17_66, %c0_67], %54 {strides = array<i32>} : memref<2x18x18x128xf32, #tpu.memory_space<vmem>>, vector<2x18x1x128xf32>,
    %c0_68 = arith.constant 0 : index
    %c0_69 = arith.constant 0 : index
    %c0_70 = arith.constant 0 : index
    %c0_71 = arith.constant 0 : index
    %59 = vector.load %arg10[%c0_68, %c0_69, %c0_70, %c0_71] : memref<2x18x18x128xf32, #tpu.memory_space<vmem>>, vector<2x18x16x128xf32>
    %60 = arith.truncf %59 : vector<2x18x16x128xf32> to vector<2x18x16x128xbf16>
    %c0_72 = arith.constant 0 : index
    %c0_73 = arith.constant 0 : index
    %c1_74 = arith.constant 1 : index
    %c0_75 = arith.constant 0 : index
    %61 = vector.load %arg10[%c0_72, %c0_73, %c1_74, %c0_75] : memref<2x18x18x128xf32, #tpu.memory_space<vmem>>, vector<2x18x16x128xf32>
    %62 = arith.truncf %61 : vector<2x18x16x128xf32> to vector<2x18x16x128xbf16>
    %c0_76 = arith.constant 0 : index
    %c0_77 = arith.constant 0 : index
    %c2_78 = arith.constant 2 : index
    %c0_79 = arith.constant 0 : index
    %63 = vector.load %arg10[%c0_76, %c0_77, %c2_78, %c0_79] : memref<2x18x18x128xf32, #tpu.memory_space<vmem>>, vector<2x18x16x128xf32>
    %64 = arith.truncf %63 : vector<2x18x16x128xf32> to vector<2x18x16x128xbf16>
    %65 = vector.extract_strided_slice %60 {offsets = [0, 0, 0, 0], sizes = [2, 16, 16, 128], strides = [1, 1, 1, 1]} : vector<2x18x16x128xbf16> to vector<2x16x16x128xbf16>
    %66 = vector.extract_strided_slice %62 {offsets = [0, 0, 0, 0], sizes = [2, 16, 16, 128], strides = [1, 1, 1, 1]} : vector<2x18x16x128xbf16> to vector<2x16x16x128xbf16>
    %67 = vector.extract_strided_slice %64 {offsets = [0, 0, 0, 0], sizes = [2, 16, 16, 128], strides = [1, 1, 1, 1]} : vector<2x18x16x128xbf16> to vector<2x16x16x128xbf16>
    %68 = vector.extract_strided_slice %60 {offsets = [0, 1, 0, 0], sizes = [2, 16, 16, 128], strides = [1, 1, 1, 1]} : vector<2x18x16x128xbf16> to vector<2x16x16x128xbf16>
    %69 = vector.extract_strided_slice %62 {offsets = [0, 1, 0, 0], sizes = [2, 16, 16, 128], strides = [1, 1, 1, 1]} : vector<2x18x16x128xbf16> to vector<2x16x16x128xbf16>
    %70 = vector.extract_strided_slice %64 {offsets = [0, 1, 0, 0], sizes = [2, 16, 16, 128], strides = [1, 1, 1, 1]} : vector<2x18x16x128xbf16> to vector<2x16x16x128xbf16>
    %71 = vector.extract_strided_slice %60 {offsets = [0, 2, 0, 0], sizes = [2, 16, 16, 128], strides = [1, 1, 1, 1]} : vector<2x18x16x128xbf16> to vector<2x16x16x128xbf16>
    %72 = vector.extract_strided_slice %62 {offsets = [0, 2, 0, 0], sizes = [2, 16, 16, 128], strides = [1, 1, 1, 1]} : vector<2x18x16x128xbf16> to vector<2x16x16x128xbf16>
    %73 = vector.extract_strided_slice %64 {offsets = [0, 2, 0, 0], sizes = [2, 16, 16, 128], strides = [1, 1, 1, 1]} : vector<2x18x16x128xbf16> to vector<2x16x16x128xbf16>
    %74 = tpu.concatenate %65, %66, %67, %68, %69, %70, %71, %72, %73 in 3 : vector<2x16x16x128xbf16>, vector<2x16x16x128xbf16>, vector<2x16x16x128xbf16>, vector<2x16x16x128xbf16>, vector<2x16x16x128xbf16>, vector<2x16x16x128xbf16>, vector<2x16x16x128xbf16>, vector<2x16x16x128xbf16>, vector<2x16x16x128xbf16> -> vector<2x16x16x1152xbf16>
    %75 = vector.shape_cast %74 : vector<2x16x16x1152xbf16> to vector<512x1152xbf16>
    %c0_80 = arith.constant 0 : index
    %c0_81 = arith.constant 0 : index
    %76 = vector.load %arg5[%c0_80, %c0_81] : memref<1152x128xbf16, #tpu.memory_space<vmem>>, vector<1152x128xbf16>
    %cst_82 = arith.constant dense<0.000000e+00> : vector<512x128xf32>
    %77 = tpu.matmul %75, %76, %cst_82 {dimension_numbers = #tpu.dot_dimension_numbers<[1], [0], [0], [1], [0, 0, 1, 1], [], []>} : vector<512x1152xbf16>, vector<1152x128xbf16>, vector<512x128xf32> -> vector<512x128xf32>
    %c0_83 = arith.constant 0 : index
    %c0_84 = arith.constant 0 : index
    %78 = vector.load %arg6[%c0_83, %c0_84] : memref<1x128xf32, #tpu.memory_space<vmem>>, vector<1x128xf32>
    %c0_85 = arith.constant 0 : index
    %c0_86 = arith.constant 0 : index
    %79 = vector.load %arg7[%c0_85, %c0_86] : memref<1x128xf32, #tpu.memory_space<vmem>>, vector<1x128xf32>
    %cst_87 = arith.constant dense<0.000000e+00> : vector<128xf32>
    %80 = vector.multi_reduction <add>, %77, %cst_87 [0] : vector<512x128xf32> to vector<128xf32>
    %81 = vector.shape_cast %80 : vector<128xf32> to vector<1x128xf32>
    %cst_88 = arith.constant 5.120000e+02 : f32
    %82 = vector.broadcast %cst_88 : f32 to vector<1x128xf32>
    %83 = arith.divf %81, %82 : vector<1x128xf32>
    %84 = vector.broadcast %83 : vector<1x128xf32> to vector<512x128xf32>
    %85 = arith.subf %77, %84 : vector<512x128xf32>
    %86 = arith.mulf %85, %85 : vector<512x128xf32>
    %cst_89 = arith.constant dense<0.000000e+00> : vector<128xf32>
    %87 = vector.multi_reduction <add>, %86, %cst_89 [0] : vector<512x128xf32> to vector<128xf32>
    %88 = vector.shape_cast %87 : vector<128xf32> to vector<1x128xf32>
    %cst_90 = arith.constant 5.120000e+02 : f32
    %89 = vector.broadcast %cst_90 : f32 to vector<1x128xf32>
    %90 = arith.divf %88, %89 : vector<1x128xf32>
    %cst_91 = arith.constant 9.99999974E-6 : f32
    %91 = vector.broadcast %cst_91 : f32 to vector<1x128xf32>
    %92 = arith.addf %90, %91 : vector<1x128xf32>
    %93 = math.rsqrt %92 : vector<1x128xf32>
    %94 = arith.mulf %78, %93 : vector<1x128xf32>
    %95 = vector.broadcast %94 : vector<1x128xf32> to vector<512x128xf32>
    %96 = arith.mulf %85, %95 : vector<512x128xf32>
    %97 = vector.broadcast %79 : vector<1x128xf32> to vector<512x128xf32>
    %98 = arith.addf %96, %97 : vector<512x128xf32>
    %cst_92 = arith.constant 0.000000e+00 : f32
    %99 = vector.broadcast %cst_92 : f32 to vector<512x128xf32>
    %100 = arith.maximumf %98, %99 : vector<512x128xf32>
    %101 = vector.shape_cast %100 : vector<512x128xf32> to vector<2x16x16x128xf32>
    %c0_93 = arith.constant 0 : index
    %c0_94 = arith.constant 0 : index
    %c0_95 = arith.constant 0 : index
    %c0_96 = arith.constant 0 : index
    %102 = vector.load %arg8[%c0_93, %c0_94, %c0_95, %c0_96] : memref<2x16x16x128xf32, #tpu.memory_space<vmem>>, vector<2x16x16x128xf32>
    tpu.vector_store %arg8[%c0_93, %c0_94, %c0_95, %c0_96], %101 {strides = array<i32>} : memref<2x16x16x128xf32, #tpu.memory_space<vmem>>, vector<2x16x16x128xf32>,
    return
  }
  func.func @transform_0(%arg0: i32) -> (i32, i32, i32, i32) {
    %c0_i32 = arith.constant 0 : i32
    %c0_i32_0 = arith.constant 0 : i32
    %c0_i32_1 = arith.constant 0 : i32
    %c0_i32_2 = arith.constant 0 : i32
    %c0_i32_3 = arith.constant 0 : i32
    return %c0_i32, %c0_i32_0, %c0_i32_1, %c0_i32_2 : i32, i32, i32, i32
  }
  func.func @transform_1(%arg0: i32) -> (i32, i32) {
    %c0_i32 = arith.constant 0 : i32
    %c0_i32_0 = arith.constant 0 : i32
    %c0_i32_1 = arith.constant 0 : i32
    return %c0_i32, %c0_i32_0 : i32, i32
  }
  func.func @transform_2(%arg0: i32) -> (i32, i32) {
    %c0_i32 = arith.constant 0 : i32
    %c0_i32_0 = arith.constant 0 : i32
    %c0_i32_1 = arith.constant 0 : i32
    return %c0_i32, %c0_i32_0 : i32, i32
  }
  func.func @transform_3(%arg0: i32) -> (i32, i32) {
    %c0_i32 = arith.constant 0 : i32
    %c0_i32_0 = arith.constant 0 : i32
    %c0_i32_1 = arith.constant 0 : i32
    return %c0_i32, %c0_i32_0 : i32, i32
  }
  func.func @transform_4(%arg0: i32) -> (i32, i32) {
    %c0_i32 = arith.constant 0 : i32
    %c0_i32_0 = arith.constant 0 : i32
    %c0_i32_1 = arith.constant 0 : i32
    return %c0_i32, %c0_i32_0 : i32, i32
  }
  func.func @transform_5(%arg0: i32) -> (i32, i32) {
    %c0_i32 = arith.constant 0 : i32
    %c0_i32_0 = arith.constant 0 : i32
    %c0_i32_1 = arith.constant 0 : i32
    return %c0_i32, %c0_i32_0 : i32, i32
  }
  func.func @transform_6(%arg0: i32) -> (i32, i32) {
    %c0_i32 = arith.constant 0 : i32
    %c0_i32_0 = arith.constant 0 : i32
    %c0_i32_1 = arith.constant 0 : i32
    return %c0_i32, %c0_i32_0 : i32, i32
  }
  func.func @transform_7(%arg0: i32) -> (i32, i32, i32, i32) {
    %c0_i32 = arith.constant 0 : i32
    %c0_i32_0 = arith.constant 0 : i32
    %c0_i32_1 = arith.constant 0 : i32
    %c0_i32_2 = arith.constant 0 : i32
    %c0_i32_3 = arith.constant 0 : i32
    return %c0_i32, %c0_i32_0, %c0_i32_1, %c0_i32_2 : i32, i32, i32, i32
  }
}

</mosaic_0001>

<llo_original>
// kernel: tpu_custom_call.1
$region0: #{tpu_custom_call.1}
  #allocation0 [shape = 'u32[]', space=smem, size = 0x4, offset = 0x4, fixed_abs, tag = 'smem constant byte address 0x4 - core index']
  #allocation1 [shape = 'u32[144,128]{1,0:T(1,128)}', space=vmem, size = 0x12000, scoped, tag = 'internal scratch']
  #allocation2 [shape = 'f32[2,18,18,128]{3,2,1,0:T(8,128)}', space=vmem, size = 0x6c000, scoped, tag = 'scratch operand']
  #allocation3 [shape = 'f32[2,18,18,128]{3,2,1,0:T(8,128)}', space=vmem, size = 0x6c000, scoped, tag = 'scratch operand']
  %s0 = inlined_call_operand.hbm [shape: bf16[2,16,16,128], index: 0, kind: input, shape index: {}]
  %s1 = inlined_call_operand.hbm [shape: bf16[1152,128], index: 1, kind: input, shape index: {}]
  %s2 = inlined_call_operand.vmem [shape: f32[1,128], index: 2, kind: input, shape index: {}]
  %s3 = inlined_call_operand.vmem [shape: f32[1,128], index: 3, kind: input, shape index: {}]
  %s4 = inlined_call_operand.hbm [shape: bf16[1152,128], index: 4, kind: input, shape index: {}]
  %s5 = inlined_call_operand.vmem [shape: f32[1,128], index: 5, kind: input, shape index: {}]
  %s6 = inlined_call_operand.vmem [shape: f32[1,128], index: 6, kind: input, shape index: {}]
  %s7 = inlined_call_operand.hbm [shape: f32[2,16,16,128], index: 7, kind: output, shape index: {}]
  %s8 = sld [smem:[#allocation0]]
  $region50: #{tpu_custom_call.1} parent=0
    _
  %s10 = ssub.s32 1, %s8
  %s11 = scalar_select 0, %s10, %s8
  $region1: #{tpu_custom_call.1} parent=0
    #allocation4 [shape = 'u8[131072]{0}', space=vmem, size = 0x20000, scoped, tag = 'input window, operand 0, single buffered']
    #allocation5 [shape = 's32[1]{0}', space=sflag, size = 0x4, scoped, tag = 'scoped memory for tpu_custom_call.1']
    #allocation6 [shape = 's32[1]{0}', space=sflag, size = 0x4, scoped, tag = 'scoped memory for tpu_custom_call.1']
    #allocation7 [shape = 'u8[294912]{0}', space=vmem, size = 0x48000, scoped, tag = 'input window, operand 1, single buffered']
    #allocation8 [shape = 's32[1]{0}', space=sflag, size = 0x4, scoped, tag = 'scoped memory for tpu_custom_call.1']
    #allocation9 [shape = 'u8[294912]{0}', space=vmem, size = 0x48000, scoped, tag = 'input window, operand 4, single buffered']
    #allocation10 [shape = 'u8[262144]{0}', space=vmem, size = 0x40000, scoped, tag = 'output window, operand 0, single buffered']
    %12 = vsyncpa [#allocation5], 0
    %13 = vsyncpa [#allocation8], 0
    %14 = vsyncpa [#allocation6], 0
    // Predicated region
    $region2: #{tpu_custom_call.1} parent=1 // pred_check
      _
    $region3: #{tpu_custom_call.1} parent=1 // pred_check_branch
      %16 = sbr.rel (0) target = $region5
    $region4: #{tpu_custom_call.1} parent=1 // pred_region
      %s18 = ssub.s32 4096, 4096
      %19 = vsyncadd [#allocation5], %s18
      %s20 = sshll.u32 [#allocation4], 4
      %s21 = int_to_ptr.vmem [resolvable:$true] %s20
      %26 = dma.hbm_to_vmem [thread:$0]  %s0, 4096, %s21, [#allocation5], 64, 64, 4
    $region5: #{tpu_custom_call.1} parent=1 // pred_fallthru
      _
    // Predicated region
    $region6: #{tpu_custom_call.1} parent=1 // pred_check
      _
    $region7: #{tpu_custom_call.1} parent=1 // pred_check_branch
      %28 = sbr.rel (0) target = $region9
    $region8: #{tpu_custom_call.1} parent=1 // pred_region
      %s30 = ssub.s32 9216, 9216
      %31 = vsyncadd [#allocation8], %s30
      %s32 = sshll.u32 [#allocation7], 4
      %s33 = int_to_ptr.vmem [resolvable:$true] %s32
      %38 = dma.hbm_to_vmem [thread:$0]  %s1, 9216, %s33, [#allocation8], 64, 64, 4
    $region9: #{tpu_custom_call.1} parent=1 // pred_fallthru
      _
    // Predicated region
    $region10: #{tpu_custom_call.1} parent=1 // pred_check
      _
    $region11: #{tpu_custom_call.1} parent=1 // pred_check_branch
      %40 = sbr.rel (0) target = $region13
    $region12: #{tpu_custom_call.1} parent=1 // pred_region
      _
    $region13: #{tpu_custom_call.1} parent=1 // pred_fallthru
      _
    // Predicated region
    $region14: #{tpu_custom_call.1} parent=1 // pred_check
      _
    $region15: #{tpu_custom_call.1} parent=1 // pred_check_branch
      %42 = sbr.rel (0) target = $region17
    $region16: #{tpu_custom_call.1} parent=1 // pred_region
      _
    $region17: #{tpu_custom_call.1} parent=1 // pred_fallthru
      _
    // Predicated region
    $region18: #{tpu_custom_call.1} parent=1 // pred_check
      _
    $region19: #{tpu_custom_call.1} parent=1 // pred_check_branch
      %44 = sbr.rel (0) target = $region21
    $region20: #{tpu_custom_call.1} parent=1 // pred_region
      %s46 = ssub.s32 9216, 9216
      %47 = vsyncadd [#allocation8], %s46
      %s48 = sshll.u32 [#allocation9], 4
      %s49 = int_to_ptr.vmem [resolvable:$true] %s48
      %54 = dma.hbm_to_vmem [thread:$0]  %s4, 9216, %s49, [#allocation8], 64, 64, 4
    $region21: #{tpu_custom_call.1} parent=1 // pred_fallthru
      _
    // Predicated region
    $region22: #{tpu_custom_call.1} parent=1 // pred_check
      _
    $region23: #{tpu_custom_call.1} parent=1 // pred_check_branch
      %56 = sbr.rel (0) target = $region25
    $region24: #{tpu_custom_call.1} parent=1 // pred_region
      _
    $region25: #{tpu_custom_call.1} parent=1 // pred_fallthru
      _
    // Predicated region
    $region26: #{tpu_custom_call.1} parent=1 // pred_check
      _
    $region27: #{tpu_custom_call.1} parent=1 // pred_check_branch
      %58 = sbr.rel (0) target = $region29
    $region28: #{tpu_custom_call.1} parent=1 // pred_region
      _
    $region29: #{tpu_custom_call.1} parent=1 // pred_fallthru
      _
    // Predicated region
    $region30: #{tpu_custom_call.1} parent=1 // pred_check
      _
    $region31: #{tpu_custom_call.1} parent=1 // pred_check_branch
      %60 = sbr.rel (0) target = $region33
    $region32: #{tpu_custom_call.1} parent=1 // pred_region
      %61 = dma.done [#allocation5], 4096
    $region33: #{tpu_custom_call.1} parent=1 // pred_fallthru
      _
    // Predicated region
    $region34: #{tpu_custom_call.1} parent=1 // pred_check
      _
    $region35: #{tpu_custom_call.1} parent=1 // pred_check_branch
      %63 = sbr.rel (0) target = $region37
    $region36: #{tpu_custom_call.1} parent=1 // pred_region
      %64 = dma.done [#allocation8], 9216
    $region37: #{tpu_custom_call.1} parent=1 // pred_fallthru
      _
    // Predicated region
    $region38: #{tpu_custom_call.1} parent=1 // pred_check
      _
    $region39: #{tpu_custom_call.1} parent=1 // pred_check_branch
      %66 = sbr.rel (0) target = $region41
    $region40: #{tpu_custom_call.1} parent=1 // pred_region
      %67 = dma.done [#allocation8], 9216
    $region41: #{tpu_custom_call.1} parent=1 // pred_fallthru
      _
    %v69 = vld [vmem:[#allocation4] sm:$0xf]
    %v70 = vld [vmem:[#allocation4 + $0x4] sm:$0xf]
    %v71 = vld [vmem:[#allocation4 + $0x8] sm:$0xf]
    %v72 = vld [vmem:[#allocation4 + $0xc] sm:$0xf]
    %v73 = vld [vmem:[#allocation4 + $0x10] sm:$0xf]
    %v74 = vld [vmem:[#allocation4 + $0x14] sm:$0xf]
    %v75 = vld [vmem:[#allocation4 + $0x18] sm:$0xf]
    %v76 = vld [vmem:[#allocation4 + $0x1c] sm:$0xf]
    %v77 = vld [vmem:[#allocation4 + $0x20] sm:$0xf]
    %v78 = vld [vmem:[#allocation4 + $0x24] sm:$0xf]
    %v79 = vld [vmem:[#allocation4 + $0x28] sm:$0xf]
    %v80 = vld [vmem:[#allocation4 + $0x2c] sm:$0xf]
    %v81 = vld [vmem:[#allocation4 + $0x30] sm:$0xf]
    %v82 = vld [vmem:[#allocation4 + $0x34] sm:$0xf]
    %v83 = vld [vmem:[#allocation4 + $0x38] sm:$0xf]
    %v84 = vld [vmem:[#allocation4 + $0x3c] sm:$0xf]
    %v85 = vld [vmem:[#allocation4 + $0x40] sm:$0xf]
    %v86 = vld [vmem:[#allocation4 + $0x44] sm:$0xf]
    %v87 = vld [vmem:[#allocation4 + $0x48] sm:$0xf]
    %v88 = vld [vmem:[#allocation4 + $0x4c] sm:$0xf]
    %v89 = vld [vmem:[#allocation4 + $0x50] sm:$0xf]
    %v90 = vld [vmem:[#allocation4 + $0x54] sm:$0xf]
    %v91 = vld [vmem:[#allocation4 + $0x58] sm:$0xf]
    %v92 = vld [vmem:[#allocation4 + $0x5c] sm:$0xf]
    %v93 = vld [vmem:[#allocation4 + $0x60] sm:$0xf]
    %v94 = vld [vmem:[#allocation4 + $0x64] sm:$0xf]
    %v95 = vld [vmem:[#allocation4 + $0x68] sm:$0xf]
    %v96 = vld [vmem:[#allocation4 + $0x6c] sm:$0xf]
    %v97 = vld [vmem:[#allocation4 + $0x70] sm:$0xf]
    %v98 = vld [vmem:[#allocation4 + $0x74] sm:$0xf]
    %v99 = vld [vmem:[#allocation4 + $0x78] sm:$0xf]
    %v100 = vld [vmem:[#allocation4 + $0x7c] sm:$0xf]
    %v101 = vld [vmem:[#allocation4 + $0x80] sm:$0xf]
    %v102 = vld [vmem:[#allocation4 + $0x84] sm:$0xf]
    %v103 = vld [vmem:[#allocation4 + $0x88] sm:$0xf]
    %v104 = vld [vmem:[#allocation4 + $0x8c] sm:$0xf]
    %v105 = vld [vmem:[#allocation4 + $0x90] sm:$0xf]
    %v106 = vld [vmem:[#allocation4 + $0x94] sm:$0xf]
    %v107 = vld [vmem:[#allocation4 + $0x98] sm:$0xf]
    %v108 = vld [vmem:[#allocation4 + $0x9c] sm:$0xf]
    %v109 = vld [vmem:[#allocation4 + $0xa0] sm:$0xf]
    %v110 = vld [vmem:[#allocation4 + $0xa4] sm:$0xf]
    %v111 = vld [vmem:[#allocation4 + $0xa8] sm:$0xf]
    %v112 = vld [vmem:[#allocation4 + $0xac] sm:$0xf]
    %v113 = vld [vmem:[#allocation4 + $0xb0] sm:$0xf]
    %v114 = vld [vmem:[#allocation4 + $0xb4] sm:$0xf]
    %v115 = vld [vmem:[#allocation4 + $0xb8] sm:$0xf]
    %v116 = vld [vmem:[#allocation4 + $0xbc] sm:$0xf]
    %v117 = vld [vmem:[#allocation4 + $0xc0] sm:$0xf]
    %v118 = vld [vmem:[#allocation4 + $0xc4] sm:$0xf]
    %v119 = vld [vmem:[#allocation4 + $0xc8] sm:$0xf]
    %v120 = vld [vmem:[#allocation4 + $0xcc] sm:$0xf]
    %v121 = vld [vmem:[#allocation4 + $0xd0] sm:$0xf]
    %v122 = vld [vmem:[#allocation4 + $0xd4] sm:$0xf]
    %v123 = vld [vmem:[#allocation4 + $0xd8] sm:$0xf]
    %v124 = vld [vmem:[#allocation4 + $0xdc] sm:$0xf]
    %v125 = vld [vmem:[#allocation4 + $0xe0] sm:$0xf]
    %v126 = vld [vmem:[#allocation4 + $0xe4] sm:$0xf]
    %v127 = vld [vmem:[#allocation4 + $0xe8] sm:$0xf]
    %v128 = vld [vmem:[#allocation4 + $0xec] sm:$0xf]
    %v129 = vld [vmem:[#allocation4 + $0xf0] sm:$0xf]
    %v130 = vld [vmem:[#allocation4 + $0xf4] sm:$0xf]
    %v131 = vld [vmem:[#allocation4 + $0xf8] sm:$0xf]
    %v132 = vld [vmem:[#allocation4 + $0xfc] sm:$0xf]
    %v133 = vunpack.c.l.bf16 %v69
    %v134 = vunpack.c.l.bf16 %v70
    %v135 = vunpack.c.l.bf16 %v71
    %v136 = vunpack.c.l.bf16 %v72
    %v137 = vunpack.c.l.bf16 %v73
    %v138 = vunpack.c.l.bf16 %v74
    %v139 = vunpack.c.l.bf16 %v75
    %v140 = vunpack.c.l.bf16 %v76
    %v141 = vunpack.c.l.bf16 %v77
    %v142 = vunpack.c.l.bf16 %v78
    %v143 = vunpack.c.l.bf16 %v79
    %v144 = vunpack.c.l.bf16 %v80
    %v145 = vunpack.c.l.bf16 %v81
    %v146 = vunpack.c.l.bf16 %v82
    %v147 = vunpack.c.l.bf16 %v83
    %v148 = vunpack.c.l.bf16 %v84
    %v149 = vunpack.c.l.bf16 %v85
    %v150 = vunpack.c.l.bf16 %v86
    %v151 = vunpack.c.l.bf16 %v87
    %v152 = vunpack.c.l.bf16 %v88
    %v153 = vunpack.c.l.bf16 %v89
    %v154 = vunpack.c.l.bf16 %v90
    %v155 = vunpack.c.l.bf16 %v91
    %v156 = vunpack.c.l.bf16 %v92
    %v157 = vunpack.c.l.bf16 %v93
    %v158 = vunpack.c.l.bf16 %v94
    %v159 = vunpack.c.l.bf16 %v95
    %v160 = vunpack.c.l.bf16 %v96
    %v161 = vunpack.c.l.bf16 %v97
    %v162 = vunpack.c.l.bf16 %v98
    %v163 = vunpack.c.l.bf16 %v99
    %v164 = vunpack.c.l.bf16 %v100
    %v165 = vunpack.c.l.bf16 %v101
    %v166 = vunpack.c.l.bf16 %v102
    %v167 = vunpack.c.l.bf16 %v103
    %v168 = vunpack.c.l.bf16 %v104
    %v169 = vunpack.c.l.bf16 %v105
    %v170 = vunpack.c.l.bf16 %v106
    %v171 = vunpack.c.l.bf16 %v107
    %v172 = vunpack.c.l.bf16 %v108
    %v173 = vunpack.c.l.bf16 %v109
    %v174 = vunpack.c.l.bf16 %v110
    %v175 = vunpack.c.l.bf16 %v111
    %v176 = vunpack.c.l.bf16 %v112
    %v177 = vunpack.c.l.bf16 %v113
    %v178 = vunpack.c.l.bf16 %v114
    %v179 = vunpack.c.l.bf16 %v115
    %v180 = vunpack.c.l.bf16 %v116
    %v181 = vunpack.c.l.bf16 %v117
    %v182 = vunpack.c.l.bf16 %v118
    %v183 = vunpack.c.l.bf16 %v119
    %v184 = vunpack.c.l.bf16 %v120
    %v185 = vunpack.c.l.bf16 %v121
    %v186 = vunpack.c.l.bf16 %v122
    %v187 = vunpack.c.l.bf16 %v123
    %v188 = vunpack.c.l.bf16 %v124
    %v189 = vunpack.c.l.bf16 %v125
    %v190 = vunpack.c.l.bf16 %v126
    %v191 = vunpack.c.l.bf16 %v127
    %v192 = vunpack.c.l.bf16 %v128
    %v193 = vunpack.c.l.bf16 %v129
    %v194 = vunpack.c.l.bf16 %v130
    %v195 = vunpack.c.l.bf16 %v131
    %v196 = vunpack.c.l.bf16 %v132
    %s197 = scalar_lea.vmem [#allocation2], 24
    %198 = vst [vmem:[%s197 + $0x1] sm:$0xff] %v133
    %199 = vst [vmem:[%s197 + $0x9] sm:$0xff] %v134
    %200 = vst [vmem:[%s197 + $0x19] sm:$0xff] %v135
    %201 = vst [vmem:[%s197 + $0x21] sm:$0xff] %v136
    %202 = vst [vmem:[%s197 + $0x31] sm:$0xff] %v137
    %203 = vst [vmem:[%s197 + $0x39] sm:$0xff] %v138
    %204 = vst [vmem:[%s197 + $0x49] sm:$0xff] %v139
    %205 = vst [vmem:[%s197 + $0x51] sm:$0xff] %v140
    %206 = vst [vmem:[%s197 + $0x61] sm:$0xff] %v141
    %207 = vst [vmem:[%s197 + $0x69] sm:$0xff] %v142
    %208 = vst [vmem:[%s197 + $0x79] sm:$0xff] %v143
    %209 = vst [vmem:[%s197 + $0x81] sm:$0xff] %v144
    %210 = vst [vmem:[%s197 + $0x91] sm:$0xff] %v145
    %211 = vst [vmem:[%s197 + $0x99] sm:$0xff] %v146
    %212 = vst [vmem:[%s197 + $0xa9] sm:$0xff] %v147
    %213 = vst [vmem:[%s197 + $0xb1] sm:$0xff] %v148
    %214 = vst [vmem:[%s197 + $0xc1] sm:$0xff] %v149
    %215 = vst [vmem:[%s197 + $0xc9] sm:$0xff] %v150
    %216 = vst [vmem:[%s197 + $0xd9] sm:$0xff] %v151
    %217 = vst [vmem:[%s197 + $0xe1] sm:$0xff] %v152
    %218 = vst [vmem:[%s197 + $0xf1] sm:$0xff] %v153
    %219 = vst [vmem:[%s197 + $0xf9] sm:$0xff] %v154
    %220 = vst [vmem:[%s197 + $0x109] sm:$0xff] %v155
    %221 = vst [vmem:[%s197 + $0x111] sm:$0xff] %v156
    %222 = vst [vmem:[%s197 + $0x121] sm:$0xff] %v157
    %223 = vst [vmem:[%s197 + $0x129] sm:$0xff] %v158
    %224 = vst [vmem:[%s197 + $0x139] sm:$0xff] %v159
    %225 = vst [vmem:[%s197 + $0x141] sm:$0xff] %v160
    %226 = vst [vmem:[%s197 + $0x151] sm:$0xff] %v161
    %227 = vst [vmem:[%s197 + $0x159] sm:$0xff] %v162
    %228 = vst [vmem:[%s197 + $0x169] sm:$0xff] %v163
    %229 = vst [vmem:[%s197 + $0x171] sm:$0xff] %v164
    %230 = vst [vmem:[%s197 + $0x1b1] sm:$0xff] %v165
    %231 = vst [vmem:[%s197 + $0x1b9] sm:$0xff] %v166
    %232 = vst [vmem:[%s197 + $0x1c9] sm:$0xff] %v167
    %233 = vst [vmem:[%s197 + $0x1d1] sm:$0xff] %v168
    %234 = vst [vmem:[%s197 + $0x1e1] sm:$0xff] %v169
    %235 = vst [vmem:[%s197 + $0x1e9] sm:$0xff] %v170
    %236 = vst [vmem:[%s197 + $0x1f9] sm:$0xff] %v171
    %237 = vst [vmem:[%s197 + $0x201] sm:$0xff] %v172
    %238 = vst [vmem:[%s197 + $0x211] sm:$0xff] %v173
    %239 = vst [vmem:[%s197 + $0x219] sm:$0xff] %v174
    %240 = vst [vmem:[%s197 + $0x229] sm:$0xff] %v175
    %241 = vst [vmem:[%s197 + $0x231] sm:$0xff] %v176
    %242 = vst [vmem:[%s197 + $0x241] sm:$0xff] %v177
    %243 = vst [vmem:[%s197 + $0x249] sm:$0xff] %v178
    %244 = vst [vmem:[%s197 + $0x259] sm:$0xff] %v179
    %245 = vst [vmem:[%s197 + $0x261] sm:$0xff] %v180
    %246 = vst [vmem:[%s197 + $0x271] sm:$0xff] %v181
    %247 = vst [vmem:[%s197 + $0x279] sm:$0xff] %v182
    %248 = vst [vmem:[%s197 + $0x289] sm:$0xff] %v183
    %249 = vst [vmem:[%s197 + $0x291] sm:$0xff] %v184
    %250 = vst [vmem:[%s197 + $0x2a1] sm:$0xff] %v185
    %251 = vst [vmem:[%s197 + $0x2a9] sm:$0xff] %v186
    %252 = vst [vmem:[%s197 + $0x2b9] sm:$0xff] %v187
    %253 = vst [vmem:[%s197 + $0x2c1] sm:$0xff] %v188
    %254 = vst [vmem:[%s197 + $0x2d1] sm:$0xff] %v189
    %255 = vst [vmem:[%s197 + $0x2d9] sm:$0xff] %v190
    %256 = vst [vmem:[%s197 + $0x2e9] sm:$0xff] %v191
    %257 = vst [vmem:[%s197 + $0x2f1] sm:$0xff] %v192
    %258 = vst [vmem:[%s197 + $0x301] sm:$0xff] %v193
    %259 = vst [vmem:[%s197 + $0x309] sm:$0xff] %v194
    %260 = vst [vmem:[%s197 + $0x319] sm:$0xff] %v195
    %261 = vst [vmem:[%s197 + $0x321] sm:$0xff] %v196
    %262 = vst [vmem:[#allocation2] sm:$0xff] 0.0
    %263 = vst [vmem:[#allocation2 + $0x8] sm:$0xff] 0.0
    %264 = vst [vmem:[#allocation2 + $0x10] sm:$0x3] 0.0
    %265 = vst [vmem:[#allocation2 + $0x1b0] sm:$0xff] 0.0
    %266 = vst [vmem:[#allocation2 + $0x1b8] sm:$0xff] 0.0
    %267 = vst [vmem:[#allocation2 + $0x1c0] sm:$0x3] 0.0
    %s268 = scalar_lea.vmem [#allocation2], 408
    %269 = vst [vmem:[%s268] sm:$0xff] 0.0
    %270 = vst [vmem:[%s268 + $0x8] sm:$0xff] 0.0
    %271 = vst [vmem:[%s268 + $0x10] sm:$0x3] 0.0
    %272 = vst [vmem:[%s268 + $0x1b0] sm:$0xff] 0.0
    %273 = vst [vmem:[%s268 + $0x1b8] sm:$0xff] 0.0
    %274 = vst [vmem:[%s268 + $0x1c0] sm:$0x3] 0.0
    %275 = vst [vmem:[#allocation2] sm:$0x1] 0.0
    %276 = vst [vmem:[#allocation2 + $0x18] sm:$0x1] 0.0
    %277 = vst [vmem:[#allocation2 + $0x30] sm:$0x1] 0.0
    %278 = vst [vmem:[#allocation2 + $0x48] sm:$0x1] 0.0
    %279 = vst [vmem:[#allocation2 + $0x60] sm:$0x1] 0.0
    %280 = vst [vmem:[#allocation2 + $0x78] sm:$0x1] 0.0
    %281 = vst [vmem:[#allocation2 + $0x90] sm:$0x1] 0.0
    %282 = vst [vmem:[#allocation2 + $0xa8] sm:$0x1] 0.0
    %283 = vst [vmem:[#allocation2 + $0xc0] sm:$0x1] 0.0
    %284 = vst [vmem:[#allocation2 + $0xd8] sm:$0x1] 0.0
    %285 = vst [vmem:[#allocation2 + $0xf0] sm:$0x1] 0.0
    %286 = vst [vmem:[#allocation2 + $0x108] sm:$0x1] 0.0
    %287 = vst [vmem:[#allocation2 + $0x120] sm:$0x1] 0.0
    %288 = vst [vmem:[#allocation2 + $0x138] sm:$0x1] 0.0
    %289 = vst [vmem:[#allocation2 + $0x150] sm:$0x1] 0.0
    %290 = vst [vmem:[#allocation2 + $0x168] sm:$0x1] 0.0
    %291 = vst [vmem:[#allocation2 + $0x180] sm:$0x1] 0.0
    %292 = vst [vmem:[#allocation2 + $0x198] sm:$0x1] 0.0
    %293 = vst [vmem:[#allocation2 + $0x1b0] sm:$0x1] 0.0
    %294 = vst [vmem:[#allocation2 + $0x1c8] sm:$0x1] 0.0
    %295 = vst [vmem:[#allocation2 + $0x1e0] sm:$0x1] 0.0
    %296 = vst [vmem:[#allocation2 + $0x1f8] sm:$0x1] 0.0
    %297 = vst [vmem:[#allocation2 + $0x210] sm:$0x1] 0.0
    %298 = vst [vmem:[#allocation2 + $0x228] sm:$0x1] 0.0
    %299 = vst [vmem:[#allocation2 + $0x240] sm:$0x1] 0.0
    %300 = vst [vmem:[#allocation2 + $0x258] sm:$0x1] 0.0
    %301 = vst [vmem:[#allocation2 + $0x270] sm:$0x1] 0.0
    %302 = vst [vmem:[#allocation2 + $0x288] sm:$0x1] 0.0
    %303 = vst [vmem:[#allocation2 + $0x2a0] sm:$0x1] 0.0
    %304 = vst [vmem:[#allocation2 + $0x2b8] sm:$0x1] 0.0
    %305 = vst [vmem:[#allocation2 + $0x2d0] sm:$0x1] 0.0
    %306 = vst [vmem:[#allocation2 + $0x2e8] sm:$0x1] 0.0
    %307 = vst [vmem:[#allocation2 + $0x300] sm:$0x1] 0.0
    %308 = vst [vmem:[#allocation2 + $0x318] sm:$0x1] 0.0
    %309 = vst [vmem:[#allocation2 + $0x330] sm:$0x1] 0.0
    %310 = vst [vmem:[#allocation2 + $0x348] sm:$0x1] 0.0
    %311 = vst [vmem:[#allocation2 + $0x11] sm:$0x1] 0.0
    %312 = vst [vmem:[#allocation2 + $0x29] sm:$0x1] 0.0
    %313 = vst [vmem:[#allocation2 + $0x41] sm:$0x1] 0.0
    %314 = vst [vmem:[#allocation2 + $0x59] sm:$0x1] 0.0
    %315 = vst [vmem:[#allocation2 + $0x71] sm:$0x1] 0.0
    %316 = vst [vmem:[#allocation2 + $0x89] sm:$0x1] 0.0
    %317 = vst [vmem:[#allocation2 + $0xa1] sm:$0x1] 0.0
    %318 = vst [vmem:[#allocation2 + $0xb9] sm:$0x1] 0.0
    %319 = vst [vmem:[#allocation2 + $0xd1] sm:$0x1] 0.0
    %320 = vst [vmem:[#allocation2 + $0xe9] sm:$0x1] 0.0
    %321 = vst [vmem:[#allocation2 + $0x101] sm:$0x1] 0.0
    %322 = vst [vmem:[#allocation2 + $0x119] sm:$0x1] 0.0
    %323 = vst [vmem:[#allocation2 + $0x131] sm:$0x1] 0.0
    %324 = vst [vmem:[#allocation2 + $0x149] sm:$0x1] 0.0
    %325 = vst [vmem:[#allocation2 + $0x161] sm:$0x1] 0.0
    %326 = vst [vmem:[#allocation2 + $0x179] sm:$0x1] 0.0
    %327 = vst [vmem:[#allocation2 + $0x191] sm:$0x1] 0.0
    %328 = vst [vmem:[#allocation2 + $0x1a9] sm:$0x1] 0.0
    %329 = vst [vmem:[#allocation2 + $0x1c1] sm:$0x1] 0.0
    %330 = vst [vmem:[#allocation2 + $0x1d9] sm:$0x1] 0.0
    %331 = vst [vmem:[#allocation2 + $0x1f1] sm:$0x1] 0.0
    %332 = vst [vmem:[#allocation2 + $0x209] sm:$0x1] 0.0
    %333 = vst [vmem:[#allocation2 + $0x221] sm:$0x1] 0.0
    %334 = vst [vmem:[#allocation2 + $0x239] sm:$0x1] 0.0
    %335 = vst [vmem:[#allocation2 + $0x251] sm:$0x1] 0.0
    %336 = vst [vmem:[#allocation2 + $0x269] sm:$0x1] 0.0
    %337 = vst [vmem:[#allocation2 + $0x281] sm:$0x1] 0.0
    %338 = vst [vmem:[#allocation2 + $0x299] sm:$0x1] 0.0
    %339 = vst [vmem:[#allocation2 + $0x2b1] sm:$0x1] 0.0
    %340 = vst [vmem:[#allocation2 + $0x2c9] sm:$0x1] 0.0
    %341 = vst [vmem:[#allocation2 + $0x2e1] sm:$0x1] 0.0
    %342 = vst [vmem:[#allocation2 + $0x2f9] sm:$0x1] 0.0
    %343 = vst [vmem:[#allocation2 + $0x311] sm:$0x1] 0.0
    %344 = vst [vmem:[#allocation2 + $0x329] sm:$0x1] 0.0
    %345 = vst [vmem:[#allocation2 + $0x341] sm:$0x1] 0.0
    %346 = vst [vmem:[#allocation2 + $0x359] sm:$0x1] 0.0
    %v347 = vld [vmem:[#allocation2] sm:$0xff]
    %v348 = vld [vmem:[#allocation2 + $0x8] sm:$0xff]
    %v349 = vld [vmem:[#allocation2 + $0x18] sm:$0xff]
    %v350 = vld [vmem:[#allocation2 + $0x20] sm:$0xff]
    %v351 = vld [vmem:[#allocation2 + $0x30] sm:$0xff]
    %v352 = vld [vmem:[#allocation2 + $0x38] sm:$0xff]
    %v353 = vld [vmem:[#allocation2 + $0x48] sm:$0xff]
    %v354 = vld [vmem:[#allocation2 + $0x50] sm:$0xff]
    %v355 = vld [vmem:[#allocation2 + $0x60] sm:$0xff]
    %v356 = vld [vmem:[#allocation2 + $0x68] sm:$0xff]
    %v357 = vld [vmem:[#allocation2 + $0x78] sm:$0xff]
    %v358 = vld [vmem:[#allocation2 + $0x80] sm:$0xff]
    %v359 = vld [vmem:[#allocation2 + $0x90] sm:$0xff]
    %v360 = vld [vmem:[#allocation2 + $0x98] sm:$0xff]
    %v361 = vld [vmem:[#allocation2 + $0xa8] sm:$0xff]
    %v362 = vld [vmem:[#allocation2 + $0xb0] sm:$0xff]
    %v363 = vld [vmem:[#allocation2 + $0xc0] sm:$0xff]
    %v364 = vld [vmem:[#allocation2 + $0xc8] sm:$0xff]
    %v365 = vld [vmem:[#allocation2 + $0xd8] sm:$0xff]
    %v366 = vld [vmem:[#allocation2 + $0xe0] sm:$0xff]
    %v367 = vld [vmem:[#allocation2 + $0xf0] sm:$0xff]
    %v368 = vld [vmem:[#allocation2 + $0xf8] sm:$0xff]
    %v369 = vld [vmem:[#allocation2 + $0x108] sm:$0xff]
    %v370 = vld [vmem:[#allocation2 + $0x110] sm:$0xff]
    %v371 = vld [vmem:[#allocation2 + $0x120] sm:$0xff]
    %v372 = vld [vmem:[#allocation2 + $0x128] sm:$0xff]
    %v373 = vld [vmem:[#allocation2 + $0x138] sm:$0xff]
    %v374 = vld [vmem:[#allocation2 + $0x140] sm:$0xff]
    %v375 = vld [vmem:[#allocation2 + $0x150] sm:$0xff]
    %v376 = vld [vmem:[#allocation2 + $0x158] sm:$0xff]
    %v377 = vld [vmem:[#allocation2 + $0x168] sm:$0xff]
    %v378 = vld [vmem:[#allocation2 + $0x170] sm:$0xff]
    %v379 = vld [vmem:[#allocation2 + $0x180] sm:$0xff]
    %v380 = vld [vmem:[#allocation2 + $0x188] sm:$0xff]
    %v381 = vld [vmem:[#allocation2 + $0x198] sm:$0xff]
    %v382 = vld [vmem:[#allocation2 + $0x1a0] sm:$0xff]
    %v383 = vld [vmem:[#allocation2 + $0x1b0] sm:$0xff]
    %v384 = vld [vmem:[#allocation2 + $0x1b8] sm:$0xff]
    %v385 = vld [vmem:[#allocation2 + $0x1c8] sm:$0xff]
    %v386 = vld [vmem:[#allocation2 + $0x1d0] sm:$0xff]
    %v387 = vld [vmem:[#allocation2 + $0x1e0] sm:$0xff]
    %v388 = vld [vmem:[#allocation2 + $0x1e8] sm:$0xff]
    %v389 = vld [vmem:[#allocation2 + $0x1f8] sm:$0xff]
    %v390 = vld [vmem:[#allocation2 + $0x200] sm:$0xff]
    %v391 = vld [vmem:[#allocation2 + $0x210] sm:$0xff]
    %v392 = vld [vmem:[#allocation2 + $0x218] sm:$0xff]
    %v393 = vld [vmem:[#allocation2 + $0x228] sm:$0xff]
    %v394 = vld [vmem:[#allocation2 + $0x230] sm:$0xff]
    %v395 = vld [vmem:[#allocation2 + $0x240] sm:$0xff]
    %v396 = vld [vmem:[#allocation2 + $0x248] sm:$0xff]
    %v397 = vld [vmem:[#allocation2 + $0x258] sm:$0xff]
    %v398 = vld [vmem:[#allocation2 + $0x260] sm:$0xff]
    %v399 = vld [vmem:[#allocation2 + $0x270] sm:$0xff]
    %v400 = vld [vmem:[#allocation2 + $0x278] sm:$0xff]
    %v401 = vld [vmem:[#allocation2 + $0x288] sm:$0xff]
    %v402 = vld [vmem:[#allocation2 + $0x290] sm:$0xff]
    %v403 = vld [vmem:[#allocation2 + $0x2a0] sm:$0xff]
    %v404 = vld [vmem:[#allocation2 + $0x2a8] sm:$0xff]
    %v405 = vld [vmem:[#allocation2 + $0x2b8] sm:$0xff]
    %v406 = vld [vmem:[#allocation2 + $0x2c0] sm:$0xff]
    %v407 = vld [vmem:[#allocation2 + $0x2d0] sm:$0xff]
    %v408 = vld [vmem:[#allocation2 + $0x2d8] sm:$0xff]
    %v409 = vld [vmem:[#allocation2 + $0x2e8] sm:$0xff]
    %v410 = vld [vmem:[#allocation2 + $0x2f0] sm:$0xff]
    %v411 = vld [vmem:[#allocation2 + $0x300] sm:$0xff]
    %v412 = vld [vmem:[#allocation2 + $0x308] sm:$0xff]
    %v413 = vld [vmem:[#allocation2 + $0x318] sm:$0xff]
    %v414 = vld [vmem:[#allocation2 + $0x320] sm:$0xff]
    %v415 = vld [vmem:[#allocation2 + $0x330] sm:$0xff]
    %v416 = vld [vmem:[#allocation2 + $0x338] sm:$0xff]
    %v417 = vld [vmem:[#allocation2 + $0x348] sm:$0xff]
    %v418 = vld [vmem:[#allocation2 + $0x350] sm:$0xff]
    %v419 = vpack.c.bf16 %v348, %v347
    %v420 = vpack.c.bf16 %v350, %v349
    %v421 = vpack.c.bf16 %v352, %v351
    %v422 = vpack.c.bf16 %v354, %v353
    %v423 = vpack.c.bf16 %v356, %v355
    %v424 = vpack.c.bf16 %v358, %v357
    %v425 = vpack.c.bf16 %v360, %v359
    %v426 = vpack.c.bf16 %v362, %v361
    %v427 = vpack.c.bf16 %v364, %v363
    %v428 = vpack.c.bf16 %v366, %v365
    %v429 = vpack.c.bf16 %v368, %v367
    %v430 = vpack.c.bf16 %v370, %v369
    %v431 = vpack.c.bf16 %v372, %v371
    %v432 = vpack.c.bf16 %v374, %v373
    %v433 = vpack.c.bf16 %v376, %v375
    %v434 = vpack.c.bf16 %v378, %v377
    %v435 = vpack.c.bf16 %v380, %v379
    %v436 = vpack.c.bf16 %v382, %v381
    %v437 = vpack.c.bf16 %v384, %v383
    %v438 = vpack.c.bf16 %v386, %v385
    %v439 = vpack.c.bf16 %v388, %v387
    %v440 = vpack.c.bf16 %v390, %v389
    %v441 = vpack.c.bf16 %v392, %v391
    %v442 = vpack.c.bf16 %v394, %v393
    %v443 = vpack.c.bf16 %v396, %v395
    %v444 = vpack.c.bf16 %v398, %v397
    %v445 = vpack.c.bf16 %v400, %v399
    %v446 = vpack.c.bf16 %v402, %v401
    %v447 = vpack.c.bf16 %v404, %v403
    %v448 = vpack.c.bf16 %v406, %v405
    %v449 = vpack.c.bf16 %v408, %v407
    %v450 = vpack.c.bf16 %v410, %v409
    %v451 = vpack.c.bf16 %v412, %v411
    %v452 = vpack.c.bf16 %v414, %v413
    %v453 = vpack.c.bf16 %v416, %v415
    %v454 = vpack.c.bf16 %v418, %v417
    %v455 = vld [vmem:[#allocation2 + $0x1] sm:$0xff]
    %v456 = vld [vmem:[#allocation2 + $0x9] sm:$0xff]
    %v457 = vld [vmem:[#allocation2 + $0x19] sm:$0xff]
    %v458 = vld [vmem:[#allocation2 + $0x21] sm:$0xff]
    %v459 = vld [vmem:[#allocation2 + $0x31] sm:$0xff]
    %v460 = vld [vmem:[#allocation2 + $0x39] sm:$0xff]
    %v461 = vld [vmem:[#allocation2 + $0x49] sm:$0xff]
    %v462 = vld [vmem:[#allocation2 + $0x51] sm:$0xff]
    %v463 = vld [vmem:[#allocation2 + $0x61] sm:$0xff]
    %v464 = vld [vmem:[#allocation2 + $0x69] sm:$0xff]
    %v465 = vld [vmem:[#allocation2 + $0x79] sm:$0xff]
    %v466 = vld [vmem:[#allocation2 + $0x81] sm:$0xff]
    %v467 = vld [vmem:[#allocation2 + $0x91] sm:$0xff]
    %v468 = vld [vmem:[#allocation2 + $0x99] sm:$0xff]
    %v469 = vld [vmem:[#allocation2 + $0xa9] sm:$0xff]
    %v470 = vld [vmem:[#allocation2 + $0xb1] sm:$0xff]
    %v471 = vld [vmem:[#allocation2 + $0xc1] sm:$0xff]
    %v472 = vld [vmem:[#allocation2 + $0xc9] sm:$0xff]
    %v473 = vld [vmem:[#allocation2 + $0xd9] sm:$0xff]
    %v474 = vld [vmem:[#allocation2 + $0xe1] sm:$0xff]
    %v475 = vld [vmem:[#allocation2 + $0xf1] sm:$0xff]
    %v476 = vld [vmem:[#allocation2 + $0xf9] sm:$0xff]
    %v477 = vld [vmem:[#allocation2 + $0x109] sm:$0xff]
    %v478 = vld [vmem:[#allocation2 + $0x111] sm:$0xff]
    %v479 = vld [vmem:[#allocation2 + $0x121] sm:$0xff]
    %v480 = vld [vmem:[#allocation2 + $0x129] sm:$0xff]
    %v481 = vld [vmem:[#allocation2 + $0x139] sm:$0xff]
    %v482 = vld [vmem:[#allocation2 + $0x141] sm:$0xff]
    %v483 = vld [vmem:[#allocation2 + $0x151] sm:$0xff]
    %v484 = vld [vmem:[#allocation2 + $0x159] sm:$0xff]
    %v485 = vld [vmem:[#allocation2 + $0x169] sm:$0xff]
    %v486 = vld [vmem:[#allocation2 + $0x171] sm:$0xff]
    %v487 = vld [vmem:[#allocation2 + $0x181] sm:$0xff]
    %v488 = vld [vmem:[#allocation2 + $0x189] sm:$0xff]
    %v489 = vld [vmem:[#allocation2 + $0x199] sm:$0xff]
    %v490 = vld [vmem:[#allocation2 + $0x1a1] sm:$0xff]
    %v491 = vld [vmem:[#allocation2 + $0x1b1] sm:$0xff]
    %v492 = vld [vmem:[#allocation2 + $0x1b9] sm:$0xff]
    %v493 = vld [vmem:[#allocation2 + $0x1c9] sm:$0xff]
    %v494 = vld [vmem:[#allocation2 + $0x1d1] sm:$0xff]
    %v495 = vld [vmem:[#allocation2 + $0x1e1] sm:$0xff]
    %v496 = vld [vmem:[#allocation2 + $0x1e9] sm:$0xff]
    %v497 = vld [vmem:[#allocation2 + $0x1f9] sm:$0xff]
    %v498 = vld [vmem:[#allocation2 + $0x201] sm:$0xff]
    %v499 = vld [vmem:[#allocation2 + $0x211] sm:$0xff]
    %v500 = vld [vmem:[#allocation2 + $0x219] sm:$0xff]
    %v501 = vld [vmem:[#allocation2 + $0x229] sm:$0xff]
    %v502 = vld [vmem:[#allocation2 + $0x231] sm:$0xff]
    %v503 = vld [vmem:[#allocation2 + $0x241] sm:$0xff]
    %v504 = vld [vmem:[#allocation2 + $0x249] sm:$0xff]
    %v505 = vld [vmem:[#allocation2 + $0x259] sm:$0xff]
    %v506 = vld [vmem:[#allocation2 + $0x261] sm:$0xff]
    %v507 = vld [vmem:[#allocation2 + $0x271] sm:$0xff]
    %v508 = vld [vmem:[#allocation2 + $0x279] sm:$0xff]
    %v509 = vld [vmem:[#allocation2 + $0x289] sm:$0xff]
    %v510 = vld [vmem:[#allocation2 + $0x291] sm:$0xff]
    %v511 = vld [vmem:[#allocation2 + $0x2a1] sm:$0xff]
    %v512 = vld [vmem:[#allocation2 + $0x2a9] sm:$0xff]
    %v513 = vld [vmem:[#allocation2 + $0x2b9] sm:$0xff]
    %v514 = vld [vmem:[#allocation2 + $0x2c1] sm:$0xff]
    %v515 = vld [vmem:[#allocation2 + $0x2d1] sm:$0xff]
    %v516 = vld [vmem:[#allocation2 + $0x2d9] sm:$0xff]
    %v517 = vld [vmem:[#allocation2 + $0x2e9] sm:$0xff]
    %v518 = vld [vmem:[#allocation2 + $0x2f1] sm:$0xff]
    %v519 = vld [vmem:[#allocation2 + $0x301] sm:$0xff]
    %v520 = vld [vmem:[#allocation2 + $0x309] sm:$0xff]
    %v521 = vld [vmem:[#allocation2 + $0x319] sm:$0xff]
    %v522 = vld [vmem:[#allocation2 + $0x321] sm:$0xff]
    %v523 = vld [vmem:[#allocation2 + $0x331] sm:$0xff]
    %v524 = vld [vmem:[#allocation2 + $0x339] sm:$0xff]
    %v525 = vld [vmem:[#allocation2 + $0x349] sm:$0xff]
    %v526 = vld [vmem:[#allocation2 + $0x351] sm:$0xff]
    %v527 = vpack.c.bf16 %v456, %v455
    %v528 = vpack.c.bf16 %v458, %v457
    %v529 = vpack.c.bf16 %v460, %v459
    %v530 = vpack.c.bf16 %v462, %v461
    %v531 = vpack.c.bf16 %v464, %v463
    %v532 = vpack.c.bf16 %v466, %v465
    %v533 = vpack.c.bf16 %v468, %v467
    %v534 = vpack.c.bf16 %v470, %v469
    %v535 = vpack.c.bf16 %v472, %v471
    %v536 = vpack.c.bf16 %v474, %v473
    %v537 = vpack.c.bf16 %v476, %v475
    %v538 = vpack.c.bf16 %v478, %v477
    %v539 = vpack.c.bf16 %v480, %v479
    %v540 = vpack.c.bf16 %v482, %v481
    %v541 = vpack.c.bf16 %v484, %v483
    %v542 = vpack.c.bf16 %v486, %v485
    %v543 = vpack.c.bf16 %v488, %v487
    %v544 = vpack.c.bf16 %v490, %v489
    %v545 = vpack.c.bf16 %v492, %v491
    %v546 = vpack.c.bf16 %v494, %v493
    %v547 = vpack.c.bf16 %v496, %v495
    %v548 = vpack.c.bf16 %v498, %v497
    %v549 = vpack.c.bf16 %v500, %v499
    %v550 = vpack.c.bf16 %v502, %v501
    %v551 = vpack.c.bf16 %v504, %v503
    %v552 = vpack.c.bf16 %v506, %v505
    %v553 = vpack.c.bf16 %v508, %v507
    %v554 = vpack.c.bf16 %v510, %v509
    %v555 = vpack.c.bf16 %v512, %v511
    %v556 = vpack.c.bf16 %v514, %v513
    %v557 = vpack.c.bf16 %v516, %v515
    %v558 = vpack.c.bf16 %v518, %v517
    %v559 = vpack.c.bf16 %v520, %v519
    %v560 = vpack.c.bf16 %v522, %v521
    %v561 = vpack.c.bf16 %v524, %v523
    %v562 = vpack.c.bf16 %v526, %v525
    %v563 = vld [vmem:[#allocation2 + $0x2] sm:$0xff]
    %v564 = vld [vmem:[#allocation2 + $0xa] sm:$0xff]
    %v565 = vld [vmem:[#allocation2 + $0x1a] sm:$0xff]
    %v566 = vld [vmem:[#allocation2 + $0x22] sm:$0xff]
    %v567 = vld [vmem:[#allocation2 + $0x32] sm:$0xff]
    %v568 = vld [vmem:[#allocation2 + $0x3a] sm:$0xff]
    %v569 = vld [vmem:[#allocation2 + $0x4a] sm:$0xff]
    %v570 = vld [vmem:[#allocation2 + $0x52] sm:$0xff]
    %v571 = vld [vmem:[#allocation2 + $0x62] sm:$0xff]
    %v572 = vld [vmem:[#allocation2 + $0x6a] sm:$0xff]
    %v573 = vld [vmem:[#allocation2 + $0x7a] sm:$0xff]
    %v574 = vld [vmem:[#allocation2 + $0x82] sm:$0xff]
    %v575 = vld [vmem:[#allocation2 + $0x92] sm:$0xff]
    %v576 = vld [vmem:[#allocation2 + $0x9a] sm:$0xff]
    %v577 = vld [vmem:[#allocation2 + $0xaa] sm:$0xff]
    %v578 = vld [vmem:[#allocation2 + $0xb2] sm:$0xff]
    %v579 = vld [vmem:[#allocation2 + $0xc2] sm:$0xff]
    %v580 = vld [vmem:[#allocation2 + $0xca] sm:$0xff]
    %v581 = vld [vmem:[#allocation2 + $0xda] sm:$0xff]
    %v582 = vld [vmem:[#allocation2 + $0xe2] sm:$0xff]
    %v583 = vld [vmem:[#allocation2 + $0xf2] sm:$0xff]
    %v584 = vld [vmem:[#allocation2 + $0xfa] sm:$0xff]
    %v585 = vld [vmem:[#allocation2 + $0x10a] sm:$0xff]
    %v586 = vld [vmem:[#allocation2 + $0x112] sm:$0xff]
    %v587 = vld [vmem:[#allocation2 + $0x122] sm:$0xff]
    %v588 = vld [vmem:[#allocation2 + $0x12a] sm:$0xff]
    %v589 = vld [vmem:[#allocation2 + $0x13a] sm:$0xff]
    %v590 = vld [vmem:[#allocation2 + $0x142] sm:$0xff]
    %v591 = vld [vmem:[#allocation2 + $0x152] sm:$0xff]
    %v592 = vld [vmem:[#allocation2 + $0x15a] sm:$0xff]
    %v593 = vld [vmem:[#allocation2 + $0x16a] sm:$0xff]
    %v594 = vld [vmem:[#allocation2 + $0x172] sm:$0xff]
    %v595 = vld [vmem:[#allocation2 + $0x182] sm:$0xff]
    %v596 = vld [vmem:[#allocation2 + $0x18a] sm:$0xff]
    %v597 = vld [vmem:[#allocation2 + $0x19a] sm:$0xff]
    %v598 = vld [vmem:[#allocation2 + $0x1a2] sm:$0xff]
    %v599 = vld [vmem:[#allocation2 + $0x1b2] sm:$0xff]
    %v600 = vld [vmem:[#allocation2 + $0x1ba] sm:$0xff]
    %v601 = vld [vmem:[#allocation2 + $0x1ca] sm:$0xff]
    %v602 = vld [vmem:[#allocation2 + $0x1d2] sm:$0xff]
    %v603 = vld [vmem:[#allocation2 + $0x1e2] sm:$0xff]
    %v604 = vld [vmem:[#allocation2 + $0x1ea] sm:$0xff]
    %v605 = vld [vmem:[#allocation2 + $0x1fa] sm:$0xff]
    %v606 = vld [vmem:[#allocation2 + $0x202] sm:$0xff]
    %v607 = vld [vmem:[#allocation2 + $0x212] sm:$0xff]
    %v608 = vld [vmem:[#allocation2 + $0x21a] sm:$0xff]
    %v609 = vld [vmem:[#allocation2 + $0x22a] sm:$0xff]
    %v610 = vld [vmem:[#allocation2 + $0x232] sm:$0xff]
    %v611 = vld [vmem:[#allocation2 + $0x242] sm:$0xff]
    %v612 = vld [vmem:[#allocation2 + $0x24a] sm:$0xff]
    %v613 = vld [vmem:[#allocation2 + $0x25a] sm:$0xff]
    %v614 = vld [vmem:[#allocation2 + $0x262] sm:$0xff]
    %v615 = vld [vmem:[#allocation2 + $0x272] sm:$0xff]
    %v616 = vld [vmem:[#allocation2 + $0x27a] sm:$0xff]
    %v617 = vld [vmem:[#allocation2 + $0x28a] sm:$0xff]
    %v618 = vld [vmem:[#allocation2 + $0x292] sm:$0xff]
    %v619 = vld [vmem:[#allocation2 + $0x2a2] sm:$0xff]
    %v620 = vld [vmem:[#allocation2 + $0x2aa] sm:$0xff]
    %v621 = vld [vmem:[#allocation2 + $0x2ba] sm:$0xff]
    %v622 = vld [vmem:[#allocation2 + $0x2c2] sm:$0xff]
    %v623 = vld [vmem:[#allocation2 + $0x2d2] sm:$0xff]
    %v624 = vld [vmem:[#allocation2 + $0x2da] sm:$0xff]
    %v625 = vld [vmem:[#allocation2 + $0x2ea] sm:$0xff]
    %v626 = vld [vmem:[#allocation2 + $0x2f2] sm:$0xff]
    %v627 = vld [vmem:[#allocation2 + $0x302] sm:$0xff]
    %v628 = vld [vmem:[#allocation2 + $0x30a] sm:$0xff]
    %v629 = vld [vmem:[#allocation2 + $0x31a] sm:$0xff]
    %v630 = vld [vmem:[#allocation2 + $0x322] sm:$0xff]
    %v631 = vld [vmem:[#allocation2 + $0x332] sm:$0xff]
    %v632 = vld [vmem:[#allocation2 + $0x33a] sm:$0xff]
    %v633 = vld [vmem:[#allocation2 + $0x34a] sm:$0xff]
    %v634 = vld [vmem:[#allocation2 + $0x352] sm:$0xff]
    %v635 = vpack.c.bf16 %v564, %v563
    %v636 = vpack.c.bf16 %v566, %v565
    %v637 = vpack.c.bf16 %v568, %v567
    %v638 = vpack.c.bf16 %v570, %v569
    %v639 = vpack.c.bf16 %v572, %v571
    %v640 = vpack.c.bf16 %v574, %v573
    %v641 = vpack.c.bf16 %v576, %v575
    %v642 = vpack.c.bf16 %v578, %v577
    %v643 = vpack.c.bf16 %v580, %v579
    %v644 = vpack.c.bf16 %v582, %v581
    %v645 = vpack.c.bf16 %v584, %v583
    %v646 = vpack.c.bf16 %v586, %v585
    %v647 = vpack.c.bf16 %v588, %v587
    %v648 = vpack.c.bf16 %v590, %v589
    %v649 = vpack.c.bf16 %v592, %v591
    %v650 = vpack.c.bf16 %v594, %v593
    %v651 = vpack.c.bf16 %v596, %v595
    %v652 = vpack.c.bf16 %v598, %v597
    %v653 = vpack.c.bf16 %v600, %v599
    %v654 = vpack.c.bf16 %v602, %v601
    %v655 = vpack.c.bf16 %v604, %v603
    %v656 = vpack.c.bf16 %v606, %v605
    %v657 = vpack.c.bf16 %v608, %v607
    %v658 = vpack.c.bf16 %v610, %v609
    %v659 = vpack.c.bf16 %v612, %v611
    %v660 = vpack.c.bf16 %v614, %v613
    %v661 = vpack.c.bf16 %v616, %v615
    %v662 = vpack.c.bf16 %v618, %v617
    %v663 = vpack.c.bf16 %v620, %v619
    %v664 = vpack.c.bf16 %v622, %v621
    %v665 = vpack.c.bf16 %v624, %v623
    %v666 = vpack.c.bf16 %v626, %v625
    %v667 = vpack.c.bf16 %v628, %v627
    %v668 = vpack.c.bf16 %v630, %v629
    %v669 = vpack.c.bf16 %v632, %v631
    %v670 = vpack.c.bf16 %v634, %v633
    %v671 = vld [vmem:[#allocation7] sm:$0xf]
    %v672 = vld [vmem:[#allocation7 + $0x4] sm:$0xf]
    %v673 = vld [vmem:[#allocation7 + $0x8] sm:$0xf]
    %v674 = vld [vmem:[#allocation7 + $0xc] sm:$0xf]
    %v675 = vld [vmem:[#allocation7 + $0x10] sm:$0xf]
    %v676 = vld [vmem:[#allocation7 + $0x14] sm:$0xf]
    %v677 = vld [vmem:[#allocation7 + $0x18] sm:$0xf]
    %v678 = vld [vmem:[#allocation7 + $0x1c] sm:$0xf]
    %v679 = vld [vmem:[#allocation7 + $0x20] sm:$0xf]
    %v680 = vld [vmem:[#allocation7 + $0x24] sm:$0xf]
    %v681 = vld [vmem:[#allocation7 + $0x28] sm:$0xf]
    %v682 = vld [vmem:[#allocation7 + $0x2c] sm:$0xf]
    %v683 = vld [vmem:[#allocation7 + $0x30] sm:$0xf]
    %v684 = vld [vmem:[#allocation7 + $0x34] sm:$0xf]
    %v685 = vld [vmem:[#allocation7 + $0x38] sm:$0xf]
    %v686 = vld [vmem:[#allocation7 + $0x3c] sm:$0xf]
    %v687 = vld [vmem:[#allocation7 + $0x40] sm:$0xf]
    %v688 = vld [vmem:[#allocation7 + $0x44] sm:$0xf]
    %v689 = vld [vmem:[#allocation7 + $0x48] sm:$0xf]
    %v690 = vld [vmem:[#allocation7 + $0x4c] sm:$0xf]
    %v691 = vld [vmem:[#allocation7 + $0x50] sm:$0xf]
    %v692 = vld [vmem:[#allocation7 + $0x54] sm:$0xf]
    %v693 = vld [vmem:[#allocation7 + $0x58] sm:$0xf]
    %v694 = vld [vmem:[#allocation7 + $0x5c] sm:$0xf]
    %v695 = vld [vmem:[#allocation7 + $0x60] sm:$0xf]
    %v696 = vld [vmem:[#allocation7 + $0x64] sm:$0xf]
    %v697 = vld [vmem:[#allocation7 + $0x68] sm:$0xf]
    %v698 = vld [vmem:[#allocation7 + $0x6c] sm:$0xf]
    %v699 = vld [vmem:[#allocation7 + $0x70] sm:$0xf]
    %v700 = vld [vmem:[#allocation7 + $0x74] sm:$0xf]
    %v701 = vld [vmem:[#allocation7 + $0x78] sm:$0xf]
    %v702 = vld [vmem:[#allocation7 + $0x7c] sm:$0xf]
    %v703 = vld [vmem:[#allocation7 + $0x80] sm:$0xf]
    %v704 = vld [vmem:[#allocation7 + $0x84] sm:$0xf]
    %v705 = vld [vmem:[#allocation7 + $0x88] sm:$0xf]
    %v706 = vld [vmem:[#allocation7 + $0x8c] sm:$0xf]
    %v707 = vld [vmem:[#allocation7 + $0x90] sm:$0xf]
    %v708 = vld [vmem:[#allocation7 + $0x94] sm:$0xf]
    %v709 = vld [vmem:[#allocation7 + $0x98] sm:$0xf]
    %v710 = vld [vmem:[#allocation7 + $0x9c] sm:$0xf]
    %v711 = vld [vmem:[#allocation7 + $0xa0] sm:$0xf]
    %v712 = vld [vmem:[#allocation7 + $0xa4] sm:$0xf]
    %v713 = vld [vmem:[#allocation7 + $0xa8] sm:$0xf]
    %v714 = vld [vmem:[#allocation7 + $0xac] sm:$0xf]
    %v715 = vld [vmem:[#allocation7 + $0xb0] sm:$0xf]
    %v716 = vld [vmem:[#allocation7 + $0xb4] sm:$0xf]
    %v717 = vld [vmem:[#allocation7 + $0xb8] sm:$0xf]
    %v718 = vld [vmem:[#allocation7 + $0xbc] sm:$0xf]
    %v719 = vld [vmem:[#allocation7 + $0xc0] sm:$0xf]
    %v720 = vld [vmem:[#allocation7 + $0xc4] sm:$0xf]
    %v721 = vld [vmem:[#allocation7 + $0xc8] sm:$0xf]
    %v722 = vld [vmem:[#allocation7 + $0xcc] sm:$0xf]
    %v723 = vld [vmem:[#allocation7 + $0xd0] sm:$0xf]
    %v724 = vld [vmem:[#allocation7 + $0xd4] sm:$0xf]
    %v725 = vld [vmem:[#allocation7 + $0xd8] sm:$0xf]
    %v726 = vld [vmem:[#allocation7 + $0xdc] sm:$0xf]
    %v727 = vld [vmem:[#allocation7 + $0xe0] sm:$0xf]
    %v728 = vld [vmem:[#allocation7 + $0xe4] sm:$0xf]
    %v729 = vld [vmem:[#allocation7 + $0xe8] sm:$0xf]
    %v730 = vld [vmem:[#allocation7 + $0xec] sm:$0xf]
    %v731 = vld [vmem:[#allocation7 + $0xf0] sm:$0xf]
    %v732 = vld [vmem:[#allocation7 + $0xf4] sm:$0xf]
    %v733 = vld [vmem:[#allocation7 + $0xf8] sm:$0xf]
    %v734 = vld [vmem:[#allocation7 + $0xfc] sm:$0xf]
    %v735 = vld [vmem:[#allocation7 + $0x100] sm:$0xf]
    %v736 = vld [vmem:[#allocation7 + $0x104] sm:$0xf]
    %v737 = vld [vmem:[#allocation7 + $0x108] sm:$0xf]
    %v738 = vld [vmem:[#allocation7 + $0x10c] sm:$0xf]
    %v739 = vld [vmem:[#allocation7 + $0x110] sm:$0xf]
    %v740 = vld [vmem:[#allocation7 + $0x114] sm:$0xf]
    %v741 = vld [vmem:[#allocation7 + $0x118] sm:$0xf]
    %v742 = vld [vmem:[#allocation7 + $0x11c] sm:$0xf]
    %v743 = vld [vmem:[#allocation7 + $0x120] sm:$0xf]
    %v744 = vld [vmem:[#allocation7 + $0x124] sm:$0xf]
    %v745 = vld [vmem:[#allocation7 + $0x128] sm:$0xf]
    %v746 = vld [vmem:[#allocation7 + $0x12c] sm:$0xf]
    %v747 = vld [vmem:[#allocation7 + $0x130] sm:$0xf]
    %v748 = vld [vmem:[#allocation7 + $0x134] sm:$0xf]
    %v749 = vld [vmem:[#allocation7 + $0x138] sm:$0xf]
    %v750 = vld [vmem:[#allocation7 + $0x13c] sm:$0xf]
    %v751 = vld [vmem:[#allocation7 + $0x140] sm:$0xf]
    %v752 = vld [vmem:[#allocation7 + $0x144] sm:$0xf]
    %v753 = vld [vmem:[#allocation7 + $0x148] sm:$0xf]
    %v754 = vld [vmem:[#allocation7 + $0x14c] sm:$0xf]
    %v755 = vld [vmem:[#allocation7 + $0x150] sm:$0xf]
    %v756 = vld [vmem:[#allocation7 + $0x154] sm:$0xf]
    %v757 = vld [vmem:[#allocation7 + $0x158] sm:$0xf]
    %v758 = vld [vmem:[#allocation7 + $0x15c] sm:$0xf]
    %v759 = vld [vmem:[#allocation7 + $0x160] sm:$0xf]
    %v760 = vld [vmem:[#allocation7 + $0x164] sm:$0xf]
    %v761 = vld [vmem:[#allocation7 + $0x168] sm:$0xf]
    %v762 = vld [vmem:[#allocation7 + $0x16c] sm:$0xf]
    %v763 = vld [vmem:[#allocation7 + $0x170] sm:$0xf]
    %v764 = vld [vmem:[#allocation7 + $0x174] sm:$0xf]
    %v765 = vld [vmem:[#allocation7 + $0x178] sm:$0xf]
    %v766 = vld [vmem:[#allocation7 + $0x17c] sm:$0xf]
    %v767 = vld [vmem:[#allocation7 + $0x180] sm:$0xf]
    %v768 = vld [vmem:[#allocation7 + $0x184] sm:$0xf]
    %v769 = vld [vmem:[#allocation7 + $0x188] sm:$0xf]
    %v770 = vld [vmem:[#allocation7 + $0x18c] sm:$0xf]
    %v771 = vld [vmem:[#allocation7 + $0x190] sm:$0xf]
    %v772 = vld [vmem:[#allocation7 + $0x194] sm:$0xf]
    %v773 = vld [vmem:[#allocation7 + $0x198] sm:$0xf]
    %v774 = vld [vmem:[#allocation7 + $0x19c] sm:$0xf]
    %v775 = vld [vmem:[#allocation7 + $0x1a0] sm:$0xf]
    %v776 = vld [vmem:[#allocation7 + $0x1a4] sm:$0xf]
    %v777 = vld [vmem:[#allocation7 + $0x1a8] sm:$0xf]
    %v778 = vld [vmem:[#allocation7 + $0x1ac] sm:$0xf]
    %v779 = vld [vmem:[#allocation7 + $0x1b0] sm:$0xf]
    %v780 = vld [vmem:[#allocation7 + $0x1b4] sm:$0xf]
    %v781 = vld [vmem:[#allocation7 + $0x1b8] sm:$0xf]
    %v782 = vld [vmem:[#allocation7 + $0x1bc] sm:$0xf]
    %v783 = vld [vmem:[#allocation7 + $0x1c0] sm:$0xf]
    %v784 = vld [vmem:[#allocation7 + $0x1c4] sm:$0xf]
    %v785 = vld [vmem:[#allocation7 + $0x1c8] sm:$0xf]
    %v786 = vld [vmem:[#allocation7 + $0x1cc] sm:$0xf]
    %v787 = vld [vmem:[#allocation7 + $0x1d0] sm:$0xf]
    %v788 = vld [vmem:[#allocation7 + $0x1d4] sm:$0xf]
    %v789 = vld [vmem:[#allocation7 + $0x1d8] sm:$0xf]
    %v790 = vld [vmem:[#allocation7 + $0x1dc] sm:$0xf]
    %v791 = vld [vmem:[#allocation7 + $0x1e0] sm:$0xf]
    %v792 = vld [vmem:[#allocation7 + $0x1e4] sm:$0xf]
    %v793 = vld [vmem:[#allocation7 + $0x1e8] sm:$0xf]
    %v794 = vld [vmem:[#allocation7 + $0x1ec] sm:$0xf]
    %v795 = vld [vmem:[#allocation7 + $0x1f0] sm:$0xf]
    %v796 = vld [vmem:[#allocation7 + $0x1f4] sm:$0xf]
    %v797 = vld [vmem:[#allocation7 + $0x1f8] sm:$0xf]
    %v798 = vld [vmem:[#allocation7 + $0x1fc] sm:$0xf]
    %v799 = vld [vmem:[#allocation7 + $0x200] sm:$0xf]
    %v800 = vld [vmem:[#allocation7 + $0x204] sm:$0xf]
    %v801 = vld [vmem:[#allocation7 + $0x208] sm:$0xf]
    %v802 = vld [vmem:[#allocation7 + $0x20c] sm:$0xf]
    %v803 = vld [vmem:[#allocation7 + $0x210] sm:$0xf]
    %v804 = vld [vmem:[#allocation7 + $0x214] sm:$0xf]
    %v805 = vld [vmem:[#allocation7 + $0x218] sm:$0xf]
    %v806 = vld [vmem:[#allocation7 + $0x21c] sm:$0xf]
    %v807 = vld [vmem:[#allocation7 + $0x220] sm:$0xf]
    %v808 = vld [vmem:[#allocation7 + $0x224] sm:$0xf]
    %v809 = vld [vmem:[#allocation7 + $0x228] sm:$0xf]
    %v810 = vld [vmem:[#allocation7 + $0x22c] sm:$0xf]
    %v811 = vld [vmem:[#allocation7 + $0x230] sm:$0xf]
    %v812 = vld [vmem:[#allocation7 + $0x234] sm:$0xf]
    %v813 = vld [vmem:[#allocation7 + $0x238] sm:$0xf]
    %v814 = vld [vmem:[#allocation7 + $0x23c] sm:$0xf]
    %v959 = vunpack.c.l.b16 %v671
    %v960 = vunpack.c.l.b16 %v672
    %v961 = vunpack.c.l.b16 %v673
    %v962 = vunpack.c.l.b16 %v674
    %v963 = vunpack.c.l.b16 %v675
    %v964 = vunpack.c.l.b16 %v676
    %v965 = vunpack.c.l.b16 %v677
    %v966 = vunpack.c.l.b16 %v678
    %v967 = vunpack.c.l.b16 %v679
    %v968 = vunpack.c.l.b16 %v680
    %v969 = vunpack.c.l.b16 %v681
    %v970 = vunpack.c.l.b16 %v682
    %v971 = vunpack.c.l.b16 %v683
    %v972 = vunpack.c.l.b16 %v684
    %v973 = vunpack.c.l.b16 %v685
    %v974 = vunpack.c.l.b16 %v686
    %v975 = vunpack.c.l.b16 %v687
    %v976 = vunpack.c.l.b16 %v688
    %v977 = vunpack.c.l.b16 %v689
    %v978 = vunpack.c.l.b16 %v690
    %v979 = vunpack.c.l.b16 %v691
    %v980 = vunpack.c.l.b16 %v692
    %v981 = vunpack.c.l.b16 %v693
    %v982 = vunpack.c.l.b16 %v694
    %v983 = vunpack.c.l.b16 %v695
    %v984 = vunpack.c.l.b16 %v696
    %v985 = vunpack.c.l.b16 %v697
    %v986 = vunpack.c.l.b16 %v698
    %v987 = vunpack.c.l.b16 %v699
    %v988 = vunpack.c.l.b16 %v700
    %v989 = vunpack.c.l.b16 %v701
    %v990 = vunpack.c.l.b16 %v702
    %v991 = vunpack.c.l.b16 %v703
    %v992 = vunpack.c.l.b16 %v704
    %v993 = vunpack.c.l.b16 %v705
    %v994 = vunpack.c.l.b16 %v706
    %v995 = vunpack.c.l.b16 %v707
    %v996 = vunpack.c.l.b16 %v708
    %v997 = vunpack.c.l.b16 %v709
    %v998 = vunpack.c.l.b16 %v710
    %v999 = vunpack.c.l.b16 %v711
    %v1000 = vunpack.c.l.b16 %v712
    %v1001 = vunpack.c.l.b16 %v713
    %v1002 = vunpack.c.l.b16 %v714
    %v1003 = vunpack.c.l.b16 %v715
    %v1004 = vunpack.c.l.b16 %v716
    %v1005 = vunpack.c.l.b16 %v717
    %v1006 = vunpack.c.l.b16 %v718
    %v1007 = vunpack.c.l.b16 %v719
    %v1008 = vunpack.c.l.b16 %v720
    %v1009 = vunpack.c.l.b16 %v721
    %v1010 = vunpack.c.l.b16 %v722
    %v1011 = vunpack.c.l.b16 %v723
    %v1012 = vunpack.c.l.b16 %v724
    %v1013 = vunpack.c.l.b16 %v725
    %v1014 = vunpack.c.l.b16 %v726
    %v1015 = vunpack.c.l.b16 %v727
    %v1016 = vunpack.c.l.b16 %v728
    %v1017 = vunpack.c.l.b16 %v729
    %v1018 = vunpack.c.l.b16 %v730
    %v1019 = vunpack.c.l.b16 %v731
    %v1020 = vunpack.c.l.b16 %v732
    %v1021 = vunpack.c.l.b16 %v733
    %v1022 = vunpack.c.l.b16 %v734
    %v1023 = vunpack.c.l.b16 %v735
    %v1024 = vunpack.c.l.b16 %v736
    %v1025 = vunpack.c.l.b16 %v737
    %v1026 = vunpack.c.l.b16 %v738
    %v1027 = vunpack.c.l.b16 %v739
    %v1028 = vunpack.c.l.b16 %v740
    %v1029 = vunpack.c.l.b16 %v741
    %v1030 = vunpack.c.l.b16 %v742
    %v1031 = vunpack.c.l.b16 %v743
    %v1032 = vunpack.c.l.b16 %v744
    %v1033 = vunpack.c.l.b16 %v745
    %v1034 = vunpack.c.l.b16 %v746
    %v1035 = vunpack.c.l.b16 %v747
    %v1036 = vunpack.c.l.b16 %v748
    %v1037 = vunpack.c.l.b16 %v749
    %v1038 = vunpack.c.l.b16 %v750
    %v1039 = vunpack.c.l.b16 %v751
    %v1040 = vunpack.c.l.b16 %v752
    %v1041 = vunpack.c.l.b16 %v753
    %v1042 = vunpack.c.l.b16 %v754
    %v1043 = vunpack.c.l.b16 %v755
    %v1044 = vunpack.c.l.b16 %v756
    %v1045 = vunpack.c.l.b16 %v757
    %v1046 = vunpack.c.l.b16 %v758
    %v1047 = vunpack.c.l.b16 %v759
    %v1048 = vunpack.c.l.b16 %v760
    %v1049 = vunpack.c.l.b16 %v761
    %v1050 = vunpack.c.l.b16 %v762
    %v1051 = vunpack.c.l.b16 %v763
    %v1052 = vunpack.c.l.b16 %v764
    %v1053 = vunpack.c.l.b16 %v765
    %v1054 = vunpack.c.l.b16 %v766
    %v1055 = vunpack.c.l.b16 %v767
    %v1056 = vunpack.c.l.b16 %v768
    %v1057 = vunpack.c.l.b16 %v769
    %v1058 = vunpack.c.l.b16 %v770
    %v1059 = vunpack.c.l.b16 %v771
    %v1060 = vunpack.c.l.b16 %v772
    %v1061 = vunpack.c.l.b16 %v773
    %v1062 = vunpack.c.l.b16 %v774
    %v1063 = vunpack.c.l.b16 %v775
    %v1064 = vunpack.c.l.b16 %v776
    %v1065 = vunpack.c.l.b16 %v777
    %v1066 = vunpack.c.l.b16 %v778
    %v1067 = vunpack.c.l.b16 %v779
    %v1068 = vunpack.c.l.b16 %v780
    %v1069 = vunpack.c.l.b16 %v781
    %v1070 = vunpack.c.l.b16 %v782
    %v1071 = vunpack.c.l.b16 %v783
    %v1072 = vunpack.c.l.b16 %v784
    %v1073 = vunpack.c.l.b16 %v785
    %v1074 = vunpack.c.l.b16 %v786
    %v1075 = vunpack.c.l.b16 %v787
    %v1076 = vunpack.c.l.b16 %v788
    %v1077 = vunpack.c.l.b16 %v789
    %v1078 = vunpack.c.l.b16 %v790
    %v1079 = vunpack.c.l.b16 %v791
    %v1080 = vunpack.c.l.b16 %v792
    %v1081 = vunpack.c.l.b16 %v793
    %v1082 = vunpack.c.l.b16 %v794
    %v1083 = vunpack.c.l.b16 %v795
    %v1084 = vunpack.c.l.b16 %v796
    %v1085 = vunpack.c.l.b16 %v797
    %v1086 = vunpack.c.l.b16 %v798
    %v1087 = vunpack.c.l.b16 %v799
    %v1088 = vunpack.c.l.b16 %v800
    %v1089 = vunpack.c.l.b16 %v801
    %v1090 = vunpack.c.l.b16 %v802
    %v1091 = vunpack.c.l.b16 %v803
    %v1092 = vunpack.c.l.b16 %v804
    %v1093 = vunpack.c.l.b16 %v805
    %v1094 = vunpack.c.l.b16 %v806
    %v1095 = vunpack.c.l.b16 %v807
    %v1096 = vunpack.c.l.b16 %v808
    %v1097 = vunpack.c.l.b16 %v809
    %v1098 = vunpack.c.l.b16 %v810
    %v1099 = vunpack.c.l.b16 %v811
    %v1100 = vunpack.c.l.b16 %v812
    %v1101 = vunpack.c.l.b16 %v813
    %v1102 = vunpack.c.l.b16 %v814
    %v1103 = vpack.c.b16 %v960, %v959
    %v1104 = vpack.c.b16 %v962, %v961
    %v1105 = vpack.c.b16 %v964, %v963
    %v1106 = vpack.c.b16 %v966, %v965
    %v1107 = vpack.c.b16 %v968, %v967
    %v1108 = vpack.c.b16 %v970, %v969
    %v1109 = vpack.c.b16 %v972, %v971
    %v1110 = vpack.c.b16 %v974, %v973
    %v1111 = vpack.c.b16 %v976, %v975
    %v1112 = vpack.c.b16 %v978, %v977
    %v1113 = vpack.c.b16 %v980, %v979
    %v1114 = vpack.c.b16 %v982, %v981
    %v1115 = vpack.c.b16 %v984, %v983
    %v1116 = vpack.c.b16 %v986, %v985
    %v1117 = vpack.c.b16 %v988, %v987
    %v1118 = vpack.c.b16 %v990, %v989
    %v1119 = vpack.c.b16 %v992, %v991
    %v1120 = vpack.c.b16 %v994, %v993
    %v1121 = vpack.c.b16 %v996, %v995
    %v1122 = vpack.c.b16 %v998, %v997
    %v1123 = vpack.c.b16 %v1000, %v999
    %v1124 = vpack.c.b16 %v1002, %v1001
    %v1125 = vpack.c.b16 %v1004, %v1003
    %v1126 = vpack.c.b16 %v1006, %v1005
    %v1127 = vpack.c.b16 %v1008, %v1007
    %v1128 = vpack.c.b16 %v1010, %v1009
    %v1129 = vpack.c.b16 %v1012, %v1011
    %v1130 = vpack.c.b16 %v1014, %v1013
    %v1131 = vpack.c.b16 %v1016, %v1015
    %v1132 = vpack.c.b16 %v1018, %v1017
    %v1133 = vpack.c.b16 %v1020, %v1019
    %v1134 = vpack.c.b16 %v1022, %v1021
    %v1135 = vpack.c.b16 %v1024, %v1023
    %v1136 = vpack.c.b16 %v1026, %v1025
    %v1137 = vpack.c.b16 %v1028, %v1027
    %v1138 = vpack.c.b16 %v1030, %v1029
    %v1139 = vpack.c.b16 %v1032, %v1031
    %v1140 = vpack.c.b16 %v1034, %v1033
    %v1141 = vpack.c.b16 %v1036, %v1035
    %v1142 = vpack.c.b16 %v1038, %v1037
    %v1143 = vpack.c.b16 %v1040, %v1039
    %v1144 = vpack.c.b16 %v1042, %v1041
    %v1145 = vpack.c.b16 %v1044, %v1043
    %v1146 = vpack.c.b16 %v1046, %v1045
    %v1147 = vpack.c.b16 %v1048, %v1047
    %v1148 = vpack.c.b16 %v1050, %v1049
    %v1149 = vpack.c.b16 %v1052, %v1051
    %v1150 = vpack.c.b16 %v1054, %v1053
    %v1151 = vpack.c.b16 %v1056, %v1055
    %v1152 = vpack.c.b16 %v1058, %v1057
    %v1153 = vpack.c.b16 %v1060, %v1059
    %v1154 = vpack.c.b16 %v1062, %v1061
    %v1155 = vpack.c.b16 %v1064, %v1063
    %v1156 = vpack.c.b16 %v1066, %v1065
    %v1157 = vpack.c.b16 %v1068, %v1067
    %v1158 = vpack.c.b16 %v1070, %v1069
    %v1159 = vpack.c.b16 %v1072, %v1071
    %v1160 = vpack.c.b16 %v1074, %v1073
    %v1161 = vpack.c.b16 %v1076, %v1075
    %v1162 = vpack.c.b16 %v1078, %v1077
    %v1163 = vpack.c.b16 %v1080, %v1079
    %v1164 = vpack.c.b16 %v1082, %v1081
    %v1165 = vpack.c.b16 %v1084, %v1083
    %v1166 = vpack.c.b16 %v1086, %v1085
    %v1167 = vpack.c.b16 %v1088, %v1087
    %v1168 = vpack.c.b16 %v1090, %v1089
    %v1169 = vpack.c.b16 %v1092, %v1091
    %v1170 = vpack.c.b16 %v1094, %v1093
    %v1171 = vpack.c.b16 %v1096, %v1095
    %v1172 = vpack.c.b16 %v1098, %v1097
    %v1173 = vpack.c.b16 %v1100, %v1099
    %v1174 = vpack.c.b16 %v1102, %v1101
    %1247 = vmatprep.subr.bf16.mxu0 0
    %1248 = vmatpush1.bf16.msra.mxu0 %v1110
    %1249 = vmatprep.subr.bf16.mxu0 0
    %1250 = vmatpush1.bf16.msra.mxu0 %v1109
    %1251 = vmatprep.subr.bf16.mxu0 0
    %1252 = vmatpush1.bf16.msra.mxu0 %v1108
    %1253 = vmatprep.subr.bf16.mxu0 0
    %1254 = vmatpush1.bf16.msra.mxu0 %v1107
    %1255 = vmatprep.subr.bf16.mxu0 0
    %1256 = vmatpush1.bf16.msra.mxu0 %v1106
    %1257 = vmatprep.subr.bf16.mxu0 0
    %1258 = vmatpush1.bf16.msra.mxu0 %v1105
    %1259 = vmatprep.subr.bf16.mxu0 0
    %1260 = vmatpush1.bf16.msra.mxu0 %v1104
    %1261 = vmatprep.subr.bf16.mxu0 0
    %1262 = vmatpush1.bf16.msra.mxu0 %v1103
    %1263 = vmatprep.subr.bf16.mxu0 0
    %1264 = vmatpush2.bf16.msra.mxu0 %v1118
    %1265 = vmatprep.subr.bf16.mxu0 0
    %1266 = vmatpush2.bf16.msra.mxu0 %v1117
    %1267 = vmatprep.subr.bf16.mxu0 0
    %1268 = vmatpush2.bf16.msra.mxu0 %v1116
    %1269 = vmatprep.subr.bf16.mxu0 0
    %1270 = vmatpush2.bf16.msra.mxu0 %v1115
    %1271 = vmatprep.subr.bf16.mxu0 0
    %1272 = vmatpush2.bf16.msra.mxu0 %v1114
    %1273 = vmatprep.subr.bf16.mxu0 0
    %1274 = vmatpush2.bf16.msra.mxu0 %v1113
    %1275 = vmatprep.subr.bf16.mxu0 0
    %1276 = vmatpush2.bf16.msra.mxu0 %v1112
    %1277 = vmatprep.subr.bf16.mxu0 0
    %1278 = vmatpush2.bf16.msra.mxu0 %v1111
    %1279 = vmatprep.mubr.bf16.mxu0 %v527
    %1280 = vmatmul.mubr.bf16.gmra.mxu0 %v419
    %v1281 = vpop.f32.mrf.mxu0
    %v1282 = vadd.f32 0.0, %v1281
    %v1283 = vpop.f32.mrf.mxu0
    %v1284 = vpop.f32.mrf.mxu0
    %v1285 = vadd.f32 0.0, %v1284
    %v1286 = vpop.f32.mrf.mxu0
    %1287 = vmatprep.mubr.bf16.mxu0 %v528
    %1288 = vmatmul.mubr.bf16.gmra.mxu0 %v420
    %v1289 = vpop.f32.mrf.mxu0
    %v1290 = vadd.f32 0.0, %v1289
    %v1291 = vpop.f32.mrf.mxu0
    %v1292 = vpop.f32.mrf.mxu0
    %v1293 = vadd.f32 0.0, %v1292
    %v1294 = vpop.f32.mrf.mxu0
    %1295 = vmatprep.mubr.bf16.mxu0 %v529
    %1296 = vmatmul.mubr.bf16.gmra.mxu0 %v421
    %v1297 = vpop.f32.mrf.mxu0
    %v1298 = vadd.f32 0.0, %v1297
    %v1299 = vpop.f32.mrf.mxu0
    %v1300 = vpop.f32.mrf.mxu0
    %v1301 = vadd.f32 0.0, %v1300
    %v1302 = vpop.f32.mrf.mxu0
    %1303 = vmatprep.mubr.bf16.mxu0 %v530
    %1304 = vmatmul.mubr.bf16.gmra.mxu0 %v422
    %v1305 = vpop.f32.mrf.mxu0
    %v1306 = vadd.f32 0.0, %v1305
    %v1307 = vpop.f32.mrf.mxu0
    %v1308 = vpop.f32.mrf.mxu0
    %v1309 = vadd.f32 0.0, %v1308
    %v1310 = vpop.f32.mrf.mxu0
    %1311 = vmatprep.mubr.bf16.mxu0 %v531
    %1312 = vmatmul.mubr.bf16.gmra.mxu0 %v423
    %v1313 = vpop.f32.mrf.mxu0
    %v1314 = vadd.f32 0.0, %v1313
    %v1315 = vpop.f32.mrf.mxu0
    %v1316 = vpop.f32.mrf.mxu0
    %v1317 = vadd.f32 0.0, %v1316
    %v1318 = vpop.f32.mrf.mxu0
    %1319 = vmatprep.mubr.bf16.mxu0 %v532
    %1320 = vmatmul.mubr.bf16.gmra.mxu0 %v424
    %v1321 = vpop.f32.mrf.mxu0
    %v1322 = vadd.f32 0.0, %v1321
    %v1323 = vpop.f32.mrf.mxu0
    %v1324 = vpop.f32.mrf.mxu0
    %v1325 = vadd.f32 0.0, %v1324
    %v1326 = vpop.f32.mrf.mxu0
    %1327 = vmatprep.mubr.bf16.mxu0 %v533
    %1328 = vmatmul.mubr.bf16.gmra.mxu0 %v425
    %v1329 = vpop.f32.mrf.mxu0
    %v1330 = vadd.f32 0.0, %v1329
    %v1331 = vpop.f32.mrf.mxu0
    %v1332 = vpop.f32.mrf.mxu0
    %v1333 = vadd.f32 0.0, %v1332
    %v1334 = vpop.f32.mrf.mxu0
    %1335 = vmatprep.mubr.bf16.mxu0 %v534
    %1336 = vmatmul.mubr.bf16.gmra.mxu0 %v426
    %v1337 = vpop.f32.mrf.mxu0
    %v1338 = vadd.f32 0.0, %v1337
    %v1339 = vpop.f32.mrf.mxu0
    %v1340 = vpop.f32.mrf.mxu0
    %v1341 = vadd.f32 0.0, %v1340
    %v1342 = vpop.f32.mrf.mxu0
    %1343 = vmatprep.mubr.bf16.mxu0 %v535
    %1344 = vmatmul.mubr.bf16.gmra.mxu0 %v427
    %v1345 = vpop.f32.mrf.mxu0
    %v1346 = vadd.f32 0.0, %v1345
    %v1347 = vpop.f32.mrf.mxu0
    %v1348 = vpop.f32.mrf.mxu0
    %v1349 = vadd.f32 0.0, %v1348
    %v1350 = vpop.f32.mrf.mxu0
    %1351 = vmatprep.mubr.bf16.mxu0 %v536
    %1352 = vmatmul.mubr.bf16.gmra.mxu0 %v428
    %v1353 = vpop.f32.mrf.mxu0
    %v1354 = vadd.f32 0.0, %v1353
    %v1355 = vpop.f32.mrf.mxu0
    %v1356 = vpop.f32.mrf.mxu0
    %v1357 = vadd.f32 0.0, %v1356
    %v1358 = vpop.f32.mrf.mxu0
    %1359 = vmatprep.mubr.bf16.mxu0 %v537
    %1360 = vmatmul.mubr.bf16.gmra.mxu0 %v429
    %v1361 = vpop.f32.mrf.mxu0
    %v1362 = vadd.f32 0.0, %v1361
    %v1363 = vpop.f32.mrf.mxu0
    %v1364 = vpop.f32.mrf.mxu0
    %v1365 = vadd.f32 0.0, %v1364
    %v1366 = vpop.f32.mrf.mxu0
    %1367 = vmatprep.mubr.bf16.mxu0 %v538
    %1368 = vmatmul.mubr.bf16.gmra.mxu0 %v430
    %v1369 = vpop.f32.mrf.mxu0
    %v1370 = vadd.f32 0.0, %v1369
    %v1371 = vpop.f32.mrf.mxu0
    %v1372 = vpop.f32.mrf.mxu0
    %v1373 = vadd.f32 0.0, %v1372
    %v1374 = vpop.f32.mrf.mxu0
    %1375 = vmatprep.mubr.bf16.mxu0 %v539
    %1376 = vmatmul.mubr.bf16.gmra.mxu0 %v431
    %v1377 = vpop.f32.mrf.mxu0
    %v1378 = vadd.f32 0.0, %v1377
    %v1379 = vpop.f32.mrf.mxu0
    %v1380 = vpop.f32.mrf.mxu0
    %v1381 = vadd.f32 0.0, %v1380
    %v1382 = vpop.f32.mrf.mxu0
    %1383 = vmatprep.mubr.bf16.mxu0 %v540
    %1384 = vmatmul.mubr.bf16.gmra.mxu0 %v432
    %v1385 = vpop.f32.mrf.mxu0
    %v1386 = vadd.f32 0.0, %v1385
    %v1387 = vpop.f32.mrf.mxu0
    %v1388 = vpop.f32.mrf.mxu0
    %v1389 = vadd.f32 0.0, %v1388
    %v1390 = vpop.f32.mrf.mxu0
    %1391 = vmatprep.mubr.bf16.mxu0 %v541
    %1392 = vmatmul.mubr.bf16.gmra.mxu0 %v433
    %v1393 = vpop.f32.mrf.mxu0
    %v1394 = vadd.f32 0.0, %v1393
    %v1395 = vpop.f32.mrf.mxu0
    %v1396 = vpop.f32.mrf.mxu0
    %v1397 = vadd.f32 0.0, %v1396
    %v1398 = vpop.f32.mrf.mxu0
    %1399 = vmatprep.mubr.bf16.mxu0 %v542
    %1400 = vmatmul.mubr.bf16.gmra.mxu0 %v434
    %v1401 = vpop.f32.mrf.mxu0
    %v1402 = vadd.f32 0.0, %v1401
    %v1403 = vpop.f32.mrf.mxu0
    %v1404 = vpop.f32.mrf.mxu0
    %v1405 = vadd.f32 0.0, %v1404
    %v1406 = vpop.f32.mrf.mxu0
    %1407 = vmatprep.mubr.bf16.mxu0 %v545
    %1408 = vmatmul.mubr.bf16.gmra.mxu0 %v437
    %v1409 = vpop.f32.mrf.mxu0
    %v1410 = vadd.f32 0.0, %v1409
    %v1411 = vpop.f32.mrf.mxu0
    %v1412 = vpop.f32.mrf.mxu0
    %v1413 = vadd.f32 0.0, %v1412
    %v1414 = vpop.f32.mrf.mxu0
    %1415 = vmatprep.mubr.bf16.mxu0 %v546
    %1416 = vmatmul.mubr.bf16.gmra.mxu0 %v438
    %v1417 = vpop.f32.mrf.mxu0
    %v1418 = vadd.f32 0.0, %v1417
    %v1419 = vpop.f32.mrf.mxu0
    %v1420 = vpop.f32.mrf.mxu0
    %v1421 = vadd.f32 0.0, %v1420
    %v1422 = vpop.f32.mrf.mxu0
    %1423 = vmatprep.mubr.bf16.mxu0 %v547
    %1424 = vmatmul.mubr.bf16.gmra.mxu0 %v439
    %v1425 = vpop.f32.mrf.mxu0
    %v1426 = vadd.f32 0.0, %v1425
    %v1427 = vpop.f32.mrf.mxu0
    %v1428 = vpop.f32.mrf.mxu0
    %v1429 = vadd.f32 0.0, %v1428
    %v1430 = vpop.f32.mrf.mxu0
    %1431 = vmatprep.mubr.bf16.mxu0 %v548
    %1432 = vmatmul.mubr.bf16.gmra.mxu0 %v440
    %v1433 = vpop.f32.mrf.mxu0
    %v1434 = vadd.f32 0.0, %v1433
    %v1435 = vpop.f32.mrf.mxu0
    %v1436 = vpop.f32.mrf.mxu0
    %v1437 = vadd.f32 0.0, %v1436
    %v1438 = vpop.f32.mrf.mxu0
    %1439 = vmatprep.mubr.bf16.mxu0 %v549
    %1440 = vmatmul.mubr.bf16.gmra.mxu0 %v441
    %v1441 = vpop.f32.mrf.mxu0
    %v1442 = vadd.f32 0.0, %v1441
    %v1443 = vpop.f32.mrf.mxu0
    %v1444 = vpop.f32.mrf.mxu0
    %v1445 = vadd.f32 0.0, %v1444
    %v1446 = vpop.f32.mrf.mxu0
    %1447 = vmatprep.mubr.bf16.mxu0 %v550
    %1448 = vmatmul.mubr.bf16.gmra.mxu0 %v442
    %v1449 = vpop.f32.mrf.mxu0
    %v1450 = vadd.f32 0.0, %v1449
    %v1451 = vpop.f32.mrf.mxu0
    %v1452 = vpop.f32.mrf.mxu0
    %v1453 = vadd.f32 0.0, %v1452
    %v1454 = vpop.f32.mrf.mxu0
    %1455 = vmatprep.mubr.bf16.mxu0 %v551
    %1456 = vmatmul.mubr.bf16.gmra.mxu0 %v443
    %v1457 = vpop.f32.mrf.mxu0
    %v1458 = vadd.f32 0.0, %v1457
    %v1459 = vpop.f32.mrf.mxu0
    %v1460 = vpop.f32.mrf.mxu0
    %v1461 = vadd.f32 0.0, %v1460
    %v1462 = vpop.f32.mrf.mxu0
    %1463 = vmatprep.mubr.bf16.mxu0 %v552
    %1464 = vmatmul.mubr.bf16.gmra.mxu0 %v444
    %v1465 = vpop.f32.mrf.mxu0
    %v1466 = vadd.f32 0.0, %v1465
    %v1467 = vpop.f32.mrf.mxu0
    %v1468 = vpop.f32.mrf.mxu0
    %v1469 = vadd.f32 0.0, %v1468
    %v1470 = vpop.f32.mrf.mxu0
    %1471 = vmatprep.mubr.bf16.mxu0 %v553
    %1472 = vmatmul.mubr.bf16.gmra.mxu0 %v445
    %v1473 = vpop.f32.mrf.mxu0
    %v1474 = vadd.f32 0.0, %v1473
    %v1475 = vpop.f32.mrf.mxu0
    %v1476 = vpop.f32.mrf.mxu0
    %v1477 = vadd.f32 0.0, %v1476
    %v1478 = vpop.f32.mrf.mxu0
    %1479 = vmatprep.mubr.bf16.mxu0 %v554
    %1480 = vmatmul.mubr.bf16.gmra.mxu0 %v446
    %v1481 = vpop.f32.mrf.mxu0
    %v1482 = vadd.f32 0.0, %v1481
    %v1483 = vpop.f32.mrf.mxu0
    %v1484 = vpop.f32.mrf.mxu0
    %v1485 = vadd.f32 0.0, %v1484
    %v1486 = vpop.f32.mrf.mxu0
    %1487 = vmatprep.mubr.bf16.mxu0 %v555
    %1488 = vmatmul.mubr.bf16.gmra.mxu0 %v447
    %v1489 = vpop.f32.mrf.mxu0
    %v1490 = vadd.f32 0.0, %v1489
    %v1491 = vpop.f32.mrf.mxu0
    %v1492 = vpop.f32.mrf.mxu0
    %v1493 = vadd.f32 0.0, %v1492
    %v1494 = vpop.f32.mrf.mxu0
    %1495 = vmatprep.mubr.bf16.mxu0 %v556
    %1496 = vmatmul.mubr.bf16.gmra.mxu0 %v448
    %v1497 = vpop.f32.mrf.mxu0
    %v1498 = vadd.f32 0.0, %v1497
    %v1499 = vpop.f32.mrf.mxu0
    %v1500 = vpop.f32.mrf.mxu0
    %v1501 = vadd.f32 0.0, %v1500
    %v1502 = vpop.f32.mrf.mxu0
    %1503 = vmatprep.mubr.bf16.mxu0 %v557
    %1504 = vmatmul.mubr.bf16.gmra.mxu0 %v449
    %v1505 = vpop.f32.mrf.mxu0
    %v1506 = vadd.f32 0.0, %v1505
    %v1507 = vpop.f32.mrf.mxu0
    %v1508 = vpop.f32.mrf.mxu0
    %v1509 = vadd.f32 0.0, %v1508
    %v1510 = vpop.f32.mrf.mxu0
    %1511 = vmatprep.mubr.bf16.mxu0 %v558
    %1512 = vmatmul.mubr.bf16.gmra.mxu0 %v450
    %v1513 = vpop.f32.mrf.mxu0
    %v1514 = vadd.f32 0.0, %v1513
    %v1515 = vpop.f32.mrf.mxu0
    %v1516 = vpop.f32.mrf.mxu0
    %v1517 = vadd.f32 0.0, %v1516
    %v1518 = vpop.f32.mrf.mxu0
    %1519 = vmatprep.mubr.bf16.mxu0 %v559
    %1520 = vmatmul.mubr.bf16.gmra.mxu0 %v451
    %v1521 = vpop.f32.mrf.mxu0
    %v1522 = vadd.f32 0.0, %v1521
    %v1523 = vpop.f32.mrf.mxu0
    %v1524 = vpop.f32.mrf.mxu0
    %v1525 = vadd.f32 0.0, %v1524
    %v1526 = vpop.f32.mrf.mxu0
    %1527 = vmatprep.mubr.bf16.mxu0 %v560
    %1528 = vmatmul.mubr.bf16.gmra.mxu0 %v452
    %v1529 = vpop.f32.mrf.mxu0
    %v1530 = vadd.f32 0.0, %v1529
    %v1531 = vpop.f32.mrf.mxu0
    %v1532 = vpop.f32.mrf.mxu0
    %v1533 = vadd.f32 0.0, %v1532
    %v1534 = vpop.f32.mrf.mxu0
    %1535 = vdwg.mxu0
    %1536 = vmatprep.subr.bf16.mxu0 0
    %1537 = vmatpush1.bf16.msra.mxu0 %v1126
    %1538 = vmatprep.subr.bf16.mxu0 0
    %1539 = vmatpush1.bf16.msra.mxu0 %v1125
    %1540 = vmatprep.subr.bf16.mxu0 0
    %1541 = vmatpush1.bf16.msra.mxu0 %v1124
    %1542 = vmatprep.subr.bf16.mxu0 0
    %1543 = vmatpush1.bf16.msra.mxu0 %v1123
    %1544 = vmatprep.subr.bf16.mxu0 0
    %1545 = vmatpush1.bf16.msra.mxu0 %v1122
    %1546 = vmatprep.subr.bf16.mxu0 0
    %1547 = vmatpush1.bf16.msra.mxu0 %v1121
    %1548 = vmatprep.subr.bf16.mxu0 0
    %1549 = vmatpush1.bf16.msra.mxu0 %v1120
    %1550 = vmatprep.subr.bf16.mxu0 0
    %1551 = vmatpush1.bf16.msra.mxu0 %v1119
    %1552 = vmatprep.subr.bf16.mxu0 0
    %1553 = vmatpush2.bf16.msra.mxu0 %v1134
    %1554 = vmatprep.subr.bf16.mxu0 0
    %1555 = vmatpush2.bf16.msra.mxu0 %v1133
    %1556 = vmatprep.subr.bf16.mxu0 0
    %1557 = vmatpush2.bf16.msra.mxu0 %v1132
    %1558 = vmatprep.subr.bf16.mxu0 0
    %1559 = vmatpush2.bf16.msra.mxu0 %v1131
    %1560 = vmatprep.subr.bf16.mxu0 0
    %1561 = vmatpush2.bf16.msra.mxu0 %v1130
    %1562 = vmatprep.subr.bf16.mxu0 0
    %1563 = vmatpush2.bf16.msra.mxu0 %v1129
    %1564 = vmatprep.subr.bf16.mxu0 0
    %1565 = vmatpush2.bf16.msra.mxu0 %v1128
    %1566 = vmatprep.subr.bf16.mxu0 0
    %1567 = vmatpush2.bf16.msra.mxu0 %v1127
    %1568 = vmatprep.mubr.bf16.mxu0 %v420
    %1569 = vmatmul.mubr.bf16.gmra.mxu0 %v635
    %v1570 = vpop.f32.mrf.mxu0
    %v1571 = vadd.f32 %v1282, %v1570
    %v1572 = vpop.f32.mrf.mxu0
    %v1573 = vpop.f32.mrf.mxu0
    %v1574 = vadd.f32 %v1285, %v1573
    %v1575 = vpop.f32.mrf.mxu0
    %1576 = vmatprep.mubr.bf16.mxu0 %v421
    %1577 = vmatmul.mubr.bf16.gmra.mxu0 %v636
    %v1578 = vpop.f32.mrf.mxu0
    %v1579 = vadd.f32 %v1290, %v1578
    %v1580 = vpop.f32.mrf.mxu0
    %v1581 = vpop.f32.mrf.mxu0
    %v1582 = vadd.f32 %v1293, %v1581
    %v1583 = vpop.f32.mrf.mxu0
    %1584 = vmatprep.mubr.bf16.mxu0 %v422
    %1585 = vmatmul.mubr.bf16.gmra.mxu0 %v637
    %v1586 = vpop.f32.mrf.mxu0
    %v1587 = vadd.f32 %v1298, %v1586
    %v1588 = vpop.f32.mrf.mxu0
    %v1589 = vpop.f32.mrf.mxu0
    %v1590 = vadd.f32 %v1301, %v1589
    %v1591 = vpop.f32.mrf.mxu0
    %1592 = vmatprep.mubr.bf16.mxu0 %v423
    %1593 = vmatmul.mubr.bf16.gmra.mxu0 %v638
    %v1594 = vpop.f32.mrf.mxu0
    %v1595 = vadd.f32 %v1306, %v1594
    %v1596 = vpop.f32.mrf.mxu0
    %v1597 = vpop.f32.mrf.mxu0
    %v1598 = vadd.f32 %v1309, %v1597
    %v1599 = vpop.f32.mrf.mxu0
    %1600 = vmatprep.mubr.bf16.mxu0 %v424
    %1601 = vmatmul.mubr.bf16.gmra.mxu0 %v639
    %v1602 = vpop.f32.mrf.mxu0
    %v1603 = vadd.f32 %v1314, %v1602
    %v1604 = vpop.f32.mrf.mxu0
    %v1605 = vpop.f32.mrf.mxu0
    %v1606 = vadd.f32 %v1317, %v1605
    %v1607 = vpop.f32.mrf.mxu0
    %1608 = vmatprep.mubr.bf16.mxu0 %v425
    %1609 = vmatmul.mubr.bf16.gmra.mxu0 %v640
    %v1610 = vpop.f32.mrf.mxu0
    %v1611 = vadd.f32 %v1322, %v1610
    %v1612 = vpop.f32.mrf.mxu0
    %v1613 = vpop.f32.mrf.mxu0
    %v1614 = vadd.f32 %v1325, %v1613
    %v1615 = vpop.f32.mrf.mxu0
    %1616 = vmatprep.mubr.bf16.mxu0 %v426
    %1617 = vmatmul.mubr.bf16.gmra.mxu0 %v641
    %v1618 = vpop.f32.mrf.mxu0
    %v1619 = vadd.f32 %v1330, %v1618
    %v1620 = vpop.f32.mrf.mxu0
    %v1621 = vpop.f32.mrf.mxu0
    %v1622 = vadd.f32 %v1333, %v1621
    %v1623 = vpop.f32.mrf.mxu0
    %1624 = vmatprep.mubr.bf16.mxu0 %v427
    %1625 = vmatmul.mubr.bf16.gmra.mxu0 %v642
    %v1626 = vpop.f32.mrf.mxu0
    %v1627 = vadd.f32 %v1338, %v1626
    %v1628 = vpop.f32.mrf.mxu0
    %v1629 = vpop.f32.mrf.mxu0
    %v1630 = vadd.f32 %v1341, %v1629
    %v1631 = vpop.f32.mrf.mxu0
    %1632 = vmatprep.mubr.bf16.mxu0 %v428
    %1633 = vmatmul.mubr.bf16.gmra.mxu0 %v643
    %v1634 = vpop.f32.mrf.mxu0
    %v1635 = vadd.f32 %v1346, %v1634
    %v1636 = vpop.f32.mrf.mxu0
    %v1637 = vpop.f32.mrf.mxu0
    %v1638 = vadd.f32 %v1349, %v1637
    %v1639 = vpop.f32.mrf.mxu0
    %1640 = vmatprep.mubr.bf16.mxu0 %v429
    %1641 = vmatmul.mubr.bf16.gmra.mxu0 %v644
    %v1642 = vpop.f32.mrf.mxu0
    %v1643 = vadd.f32 %v1354, %v1642
    %v1644 = vpop.f32.mrf.mxu0
    %v1645 = vpop.f32.mrf.mxu0
    %v1646 = vadd.f32 %v1357, %v1645
    %v1647 = vpop.f32.mrf.mxu0
    %1648 = vmatprep.mubr.bf16.mxu0 %v430
    %1649 = vmatmul.mubr.bf16.gmra.mxu0 %v645
    %v1650 = vpop.f32.mrf.mxu0
    %v1651 = vadd.f32 %v1362, %v1650
    %v1652 = vpop.f32.mrf.mxu0
    %v1653 = vpop.f32.mrf.mxu0
    %v1654 = vadd.f32 %v1365, %v1653
    %v1655 = vpop.f32.mrf.mxu0
    %1656 = vmatprep.mubr.bf16.mxu0 %v431
    %1657 = vmatmul.mubr.bf16.gmra.mxu0 %v646
    %v1658 = vpop.f32.mrf.mxu0
    %v1659 = vadd.f32 %v1370, %v1658
    %v1660 = vpop.f32.mrf.mxu0
    %v1661 = vpop.f32.mrf.mxu0
    %v1662 = vadd.f32 %v1373, %v1661
    %v1663 = vpop.f32.mrf.mxu0
    %1664 = vmatprep.mubr.bf16.mxu0 %v432
    %1665 = vmatmul.mubr.bf16.gmra.mxu0 %v647
    %v1666 = vpop.f32.mrf.mxu0
    %v1667 = vadd.f32 %v1378, %v1666
    %v1668 = vpop.f32.mrf.mxu0
    %v1669 = vpop.f32.mrf.mxu0
    %v1670 = vadd.f32 %v1381, %v1669
    %v1671 = vpop.f32.mrf.mxu0
    %1672 = vmatprep.mubr.bf16.mxu0 %v433
    %1673 = vmatmul.mubr.bf16.gmra.mxu0 %v648
    %v1674 = vpop.f32.mrf.mxu0
    %v1675 = vadd.f32 %v1386, %v1674
    %v1676 = vpop.f32.mrf.mxu0
    %v1677 = vpop.f32.mrf.mxu0
    %v1678 = vadd.f32 %v1389, %v1677
    %v1679 = vpop.f32.mrf.mxu0
    %1680 = vmatprep.mubr.bf16.mxu0 %v434
    %1681 = vmatmul.mubr.bf16.gmra.mxu0 %v649
    %v1682 = vpop.f32.mrf.mxu0
    %v1683 = vadd.f32 %v1394, %v1682
    %v1684 = vpop.f32.mrf.mxu0
    %v1685 = vpop.f32.mrf.mxu0
    %v1686 = vadd.f32 %v1397, %v1685
    %v1687 = vpop.f32.mrf.mxu0
    %1688 = vmatprep.mubr.bf16.mxu0 %v435
    %1689 = vmatmul.mubr.bf16.gmra.mxu0 %v650
    %v1690 = vpop.f32.mrf.mxu0
    %v1691 = vadd.f32 %v1402, %v1690
    %v1692 = vpop.f32.mrf.mxu0
    %v1693 = vpop.f32.mrf.mxu0
    %v1694 = vadd.f32 %v1405, %v1693
    %v1695 = vpop.f32.mrf.mxu0
    %1696 = vmatprep.mubr.bf16.mxu0 %v438
    %1697 = vmatmul.mubr.bf16.gmra.mxu0 %v653
    %v1698 = vpop.f32.mrf.mxu0
    %v1699 = vadd.f32 %v1410, %v1698
    %v1700 = vpop.f32.mrf.mxu0
    %v1701 = vpop.f32.mrf.mxu0
    %v1702 = vadd.f32 %v1413, %v1701
    %v1703 = vpop.f32.mrf.mxu0
    %1704 = vmatprep.mubr.bf16.mxu0 %v439
    %1705 = vmatmul.mubr.bf16.gmra.mxu0 %v654
    %v1706 = vpop.f32.mrf.mxu0
    %v1707 = vadd.f32 %v1418, %v1706
    %v1708 = vpop.f32.mrf.mxu0
    %v1709 = vpop.f32.mrf.mxu0
    %v1710 = vadd.f32 %v1421, %v1709
    %v1711 = vpop.f32.mrf.mxu0
    %1712 = vmatprep.mubr.bf16.mxu0 %v440
    %1713 = vmatmul.mubr.bf16.gmra.mxu0 %v655
    %v1714 = vpop.f32.mrf.mxu0
    %v1715 = vadd.f32 %v1426, %v1714
    %v1716 = vpop.f32.mrf.mxu0
    %v1717 = vpop.f32.mrf.mxu0
    %v1718 = vadd.f32 %v1429, %v1717
    %v1719 = vpop.f32.mrf.mxu0
    %1720 = vmatprep.mubr.bf16.mxu0 %v441
    %1721 = vmatmul.mubr.bf16.gmra.mxu0 %v656
    %v1722 = vpop.f32.mrf.mxu0
    %v1723 = vadd.f32 %v1434, %v1722
    %v1724 = vpop.f32.mrf.mxu0
    %v1725 = vpop.f32.mrf.mxu0
    %v1726 = vadd.f32 %v1437, %v1725
    %v1727 = vpop.f32.mrf.mxu0
    %1728 = vmatprep.mubr.bf16.mxu0 %v442
    %1729 = vmatmul.mubr.bf16.gmra.mxu0 %v657
    %v1730 = vpop.f32.mrf.mxu0
    %v1731 = vadd.f32 %v1442, %v1730
    %v1732 = vpop.f32.mrf.mxu0
    %v1733 = vpop.f32.mrf.mxu0
    %v1734 = vadd.f32 %v1445, %v1733
    %v1735 = vpop.f32.mrf.mxu0
    %1736 = vmatprep.mubr.bf16.mxu0 %v443
    %1737 = vmatmul.mubr.bf16.gmra.mxu0 %v658
    %v1738 = vpop.f32.mrf.mxu0
    %v1739 = vadd.f32 %v1450, %v1738
    %v1740 = vpop.f32.mrf.mxu0
    %v1741 = vpop.f32.mrf.mxu0
    %v1742 = vadd.f32 %v1453, %v1741
    %v1743 = vpop.f32.mrf.mxu0
    %1744 = vmatprep.mubr.bf16.mxu0 %v444
    %1745 = vmatmul.mubr.bf16.gmra.mxu0 %v659
    %v1746 = vpop.f32.mrf.mxu0
    %v1747 = vadd.f32 %v1458, %v1746
    %v1748 = vpop.f32.mrf.mxu0
    %v1749 = vpop.f32.mrf.mxu0
    %v1750 = vadd.f32 %v1461, %v1749
    %v1751 = vpop.f32.mrf.mxu0
    %1752 = vmatprep.mubr.bf16.mxu0 %v445
    %1753 = vmatmul.mubr.bf16.gmra.mxu0 %v660
    %v1754 = vpop.f32.mrf.mxu0
    %v1755 = vadd.f32 %v1466, %v1754
    %v1756 = vpop.f32.mrf.mxu0
    %v1757 = vpop.f32.mrf.mxu0
    %v1758 = vadd.f32 %v1469, %v1757
    %v1759 = vpop.f32.mrf.mxu0
    %1760 = vmatprep.mubr.bf16.mxu0 %v446
    %1761 = vmatmul.mubr.bf16.gmra.mxu0 %v661
    %v1762 = vpop.f32.mrf.mxu0
    %v1763 = vadd.f32 %v1474, %v1762
    %v1764 = vpop.f32.mrf.mxu0
    %v1765 = vpop.f32.mrf.mxu0
    %v1766 = vadd.f32 %v1477, %v1765
    %v1767 = vpop.f32.mrf.mxu0
    %1768 = vmatprep.mubr.bf16.mxu0 %v447
    %1769 = vmatmul.mubr.bf16.gmra.mxu0 %v662
    %v1770 = vpop.f32.mrf.mxu0
    %v1771 = vadd.f32 %v1482, %v1770
    %v1772 = vpop.f32.mrf.mxu0
    %v1773 = vpop.f32.mrf.mxu0
    %v1774 = vadd.f32 %v1485, %v1773
    %v1775 = vpop.f32.mrf.mxu0
    %1776 = vmatprep.mubr.bf16.mxu0 %v448
    %1777 = vmatmul.mubr.bf16.gmra.mxu0 %v663
    %v1778 = vpop.f32.mrf.mxu0
    %v1779 = vadd.f32 %v1490, %v1778
    %v1780 = vpop.f32.mrf.mxu0
    %v1781 = vpop.f32.mrf.mxu0
    %v1782 = vadd.f32 %v1493, %v1781
    %v1783 = vpop.f32.mrf.mxu0
    %1784 = vmatprep.mubr.bf16.mxu0 %v449
    %1785 = vmatmul.mubr.bf16.gmra.mxu0 %v664
    %v1786 = vpop.f32.mrf.mxu0
    %v1787 = vadd.f32 %v1498, %v1786
    %v1788 = vpop.f32.mrf.mxu0
    %v1789 = vpop.f32.mrf.mxu0
    %v1790 = vadd.f32 %v1501, %v1789
    %v1791 = vpop.f32.mrf.mxu0
    %1792 = vmatprep.mubr.bf16.mxu0 %v450
    %1793 = vmatmul.mubr.bf16.gmra.mxu0 %v665
    %v1794 = vpop.f32.mrf.mxu0
    %v1795 = vadd.f32 %v1506, %v1794
    %v1796 = vpop.f32.mrf.mxu0
    %v1797 = vpop.f32.mrf.mxu0
    %v1798 = vadd.f32 %v1509, %v1797
    %v1799 = vpop.f32.mrf.mxu0
    %1800 = vmatprep.mubr.bf16.mxu0 %v451
    %1801 = vmatmul.mubr.bf16.gmra.mxu0 %v666
    %v1802 = vpop.f32.mrf.mxu0
    %v1803 = vadd.f32 %v1514, %v1802
    %v1804 = vpop.f32.mrf.mxu0
    %v1805 = vpop.f32.mrf.mxu0
    %v1806 = vadd.f32 %v1517, %v1805
    %v1807 = vpop.f32.mrf.mxu0
    %1808 = vmatprep.mubr.bf16.mxu0 %v452
    %1809 = vmatmul.mubr.bf16.gmra.mxu0 %v667
    %v1810 = vpop.f32.mrf.mxu0
    %v1811 = vadd.f32 %v1522, %v1810
    %v1812 = vpop.f32.mrf.mxu0
    %v1813 = vpop.f32.mrf.mxu0
    %v1814 = vadd.f32 %v1525, %v1813
    %v1815 = vpop.f32.mrf.mxu0
    %1816 = vmatprep.mubr.bf16.mxu0 %v453
    %1817 = vmatmul.mubr.bf16.gmra.mxu0 %v668
    %v1818 = vpop.f32.mrf.mxu0
    %v1819 = vadd.f32 %v1530, %v1818
    %v1820 = vpop.f32.mrf.mxu0
    %v1821 = vpop.f32.mrf.mxu0
    %v1822 = vadd.f32 %v1533, %v1821
    %v1823 = vpop.f32.mrf.mxu0
    %1824 = vdwg.mxu0
    %1825 = vmatprep.subr.bf16.mxu0 0
    %1826 = vmatpush1.bf16.msra.mxu0 %v1142
    %1827 = vmatprep.subr.bf16.mxu0 0
    %1828 = vmatpush1.bf16.msra.mxu0 %v1141
    %1829 = vmatprep.subr.bf16.mxu0 0
    %1830 = vmatpush1.bf16.msra.mxu0 %v1140
    %1831 = vmatprep.subr.bf16.mxu0 0
    %1832 = vmatpush1.bf16.msra.mxu0 %v1139
    %1833 = vmatprep.subr.bf16.mxu0 0
    %1834 = vmatpush1.bf16.msra.mxu0 %v1138
    %1835 = vmatprep.subr.bf16.mxu0 0
    %1836 = vmatpush1.bf16.msra.mxu0 %v1137
    %1837 = vmatprep.subr.bf16.mxu0 0
    %1838 = vmatpush1.bf16.msra.mxu0 %v1136
    %1839 = vmatprep.subr.bf16.mxu0 0
    %1840 = vmatpush1.bf16.msra.mxu0 %v1135
    %1841 = vmatprep.subr.bf16.mxu0 0
    %1842 = vmatpush2.bf16.msra.mxu0 %v1150
    %1843 = vmatprep.subr.bf16.mxu0 0
    %1844 = vmatpush2.bf16.msra.mxu0 %v1149
    %1845 = vmatprep.subr.bf16.mxu0 0
    %1846 = vmatpush2.bf16.msra.mxu0 %v1148
    %1847 = vmatprep.subr.bf16.mxu0 0
    %1848 = vmatpush2.bf16.msra.mxu0 %v1147
    %1849 = vmatprep.subr.bf16.mxu0 0
    %1850 = vmatpush2.bf16.msra.mxu0 %v1146
    %1851 = vmatprep.subr.bf16.mxu0 0
    %1852 = vmatpush2.bf16.msra.mxu0 %v1145
    %1853 = vmatprep.subr.bf16.mxu0 0
    %1854 = vmatpush2.bf16.msra.mxu0 %v1144
    %1855 = vmatprep.subr.bf16.mxu0 0
    %1856 = vmatpush2.bf16.msra.mxu0 %v1143
    %1857 = vmatprep.mubr.bf16.mxu0 %v636
    %1858 = vmatmul.mubr.bf16.gmra.mxu0 %v528
    %v1859 = vpop.f32.mrf.mxu0
    %v1860 = vadd.f32 %v1571, %v1859
    %v1861 = vpop.f32.mrf.mxu0
    %v1862 = vpop.f32.mrf.mxu0
    %v1863 = vadd.f32 %v1574, %v1862
    %v1864 = vpop.f32.mrf.mxu0
    %1865 = vmatprep.mubr.bf16.mxu0 %v637
    %1866 = vmatmul.mubr.bf16.gmra.mxu0 %v529
    %v1867 = vpop.f32.mrf.mxu0
    %v1868 = vadd.f32 %v1579, %v1867
    %v1869 = vpop.f32.mrf.mxu0
    %v1870 = vpop.f32.mrf.mxu0
    %v1871 = vadd.f32 %v1582, %v1870
    %v1872 = vpop.f32.mrf.mxu0
    %1873 = vmatprep.mubr.bf16.mxu0 %v638
    %1874 = vmatmul.mubr.bf16.gmra.mxu0 %v530
    %v1875 = vpop.f32.mrf.mxu0
    %v1876 = vadd.f32 %v1587, %v1875
    %v1877 = vpop.f32.mrf.mxu0
    %v1878 = vpop.f32.mrf.mxu0
    %v1879 = vadd.f32 %v1590, %v1878
    %v1880 = vpop.f32.mrf.mxu0
    %1881 = vmatprep.mubr.bf16.mxu0 %v639
    %1882 = vmatmul.mubr.bf16.gmra.mxu0 %v531
    %v1883 = vpop.f32.mrf.mxu0
    %v1884 = vadd.f32 %v1595, %v1883
    %v1885 = vpop.f32.mrf.mxu0
    %v1886 = vpop.f32.mrf.mxu0
    %v1887 = vadd.f32 %v1598, %v1886
    %v1888 = vpop.f32.mrf.mxu0
    %1889 = vmatprep.mubr.bf16.mxu0 %v640
    %1890 = vmatmul.mubr.bf16.gmra.mxu0 %v532
    %v1891 = vpop.f32.mrf.mxu0
    %v1892 = vadd.f32 %v1603, %v1891
    %v1893 = vpop.f32.mrf.mxu0
    %v1894 = vpop.f32.mrf.mxu0
    %v1895 = vadd.f32 %v1606, %v1894
    %v1896 = vpop.f32.mrf.mxu0
    %1897 = vmatprep.mubr.bf16.mxu0 %v641
    %1898 = vmatmul.mubr.bf16.gmra.mxu0 %v533
    %v1899 = vpop.f32.mrf.mxu0
    %v1900 = vadd.f32 %v1611, %v1899
    %v1901 = vpop.f32.mrf.mxu0
    %v1902 = vpop.f32.mrf.mxu0
    %v1903 = vadd.f32 %v1614, %v1902
    %v1904 = vpop.f32.mrf.mxu0
    %1905 = vmatprep.mubr.bf16.mxu0 %v642
    %1906 = vmatmul.mubr.bf16.gmra.mxu0 %v534
    %v1907 = vpop.f32.mrf.mxu0
    %v1908 = vadd.f32 %v1619, %v1907
    %v1909 = vpop.f32.mrf.mxu0
    %v1910 = vpop.f32.mrf.mxu0
    %v1911 = vadd.f32 %v1622, %v1910
    %v1912 = vpop.f32.mrf.mxu0
    %1913 = vmatprep.mubr.bf16.mxu0 %v643
    %1914 = vmatmul.mubr.bf16.gmra.mxu0 %v535
    %v1915 = vpop.f32.mrf.mxu0
    %v1916 = vadd.f32 %v1627, %v1915
    %v1917 = vpop.f32.mrf.mxu0
    %v1918 = vpop.f32.mrf.mxu0
    %v1919 = vadd.f32 %v1630, %v1918
    %v1920 = vpop.f32.mrf.mxu0
    %1921 = vmatprep.mubr.bf16.mxu0 %v644
    %1922 = vmatmul.mubr.bf16.gmra.mxu0 %v536
    %v1923 = vpop.f32.mrf.mxu0
    %v1924 = vadd.f32 %v1635, %v1923
    %v1925 = vpop.f32.mrf.mxu0
    %v1926 = vpop.f32.mrf.mxu0
    %v1927 = vadd.f32 %v1638, %v1926
    %v1928 = vpop.f32.mrf.mxu0
    %1929 = vmatprep.mubr.bf16.mxu0 %v645
    %1930 = vmatmul.mubr.bf16.gmra.mxu0 %v537
    %v1931 = vpop.f32.mrf.mxu0
    %v1932 = vadd.f32 %v1643, %v1931
    %v1933 = vpop.f32.mrf.mxu0
    %v1934 = vpop.f32.mrf.mxu0
    %v1935 = vadd.f32 %v1646, %v1934
    %v1936 = vpop.f32.mrf.mxu0
    %1937 = vmatprep.mubr.bf16.mxu0 %v646
    %1938 = vmatmul.mubr.bf16.gmra.mxu0 %v538
    %v1939 = vpop.f32.mrf.mxu0
    %v1940 = vadd.f32 %v1651, %v1939
    %v1941 = vpop.f32.mrf.mxu0
    %v1942 = vpop.f32.mrf.mxu0
    %v1943 = vadd.f32 %v1654, %v1942
    %v1944 = vpop.f32.mrf.mxu0
    %1945 = vmatprep.mubr.bf16.mxu0 %v647
    %1946 = vmatmul.mubr.bf16.gmra.mxu0 %v539
    %v1947 = vpop.f32.mrf.mxu0
    %v1948 = vadd.f32 %v1659, %v1947
    %v1949 = vpop.f32.mrf.mxu0
    %v1950 = vpop.f32.mrf.mxu0
    %v1951 = vadd.f32 %v1662, %v1950
    %v1952 = vpop.f32.mrf.mxu0
    %1953 = vmatprep.mubr.bf16.mxu0 %v648
    %1954 = vmatmul.mubr.bf16.gmra.mxu0 %v540
    %v1955 = vpop.f32.mrf.mxu0
    %v1956 = vadd.f32 %v1667, %v1955
    %v1957 = vpop.f32.mrf.mxu0
    %v1958 = vpop.f32.mrf.mxu0
    %v1959 = vadd.f32 %v1670, %v1958
    %v1960 = vpop.f32.mrf.mxu0
    %1961 = vmatprep.mubr.bf16.mxu0 %v649
    %1962 = vmatmul.mubr.bf16.gmra.mxu0 %v541
    %v1963 = vpop.f32.mrf.mxu0
    %v1964 = vadd.f32 %v1675, %v1963
    %v1965 = vpop.f32.mrf.mxu0
    %v1966 = vpop.f32.mrf.mxu0
    %v1967 = vadd.f32 %v1678, %v1966
    %v1968 = vpop.f32.mrf.mxu0
    %1969 = vmatprep.mubr.bf16.mxu0 %v650
    %1970 = vmatmul.mubr.bf16.gmra.mxu0 %v542
    %v1971 = vpop.f32.mrf.mxu0
    %v1972 = vadd.f32 %v1683, %v1971
    %v1973 = vpop.f32.mrf.mxu0
    %v1974 = vpop.f32.mrf.mxu0
    %v1975 = vadd.f32 %v1686, %v1974
    %v1976 = vpop.f32.mrf.mxu0
    %1977 = vmatprep.mubr.bf16.mxu0 %v651
    %1978 = vmatmul.mubr.bf16.gmra.mxu0 %v543
    %v1979 = vpop.f32.mrf.mxu0
    %v1980 = vadd.f32 %v1691, %v1979
    %v1981 = vpop.f32.mrf.mxu0
    %v1982 = vpop.f32.mrf.mxu0
    %v1983 = vadd.f32 %v1694, %v1982
    %v1984 = vpop.f32.mrf.mxu0
    %1985 = vmatprep.mubr.bf16.mxu0 %v654
    %1986 = vmatmul.mubr.bf16.gmra.mxu0 %v546
    %v1987 = vpop.f32.mrf.mxu0
    %v1988 = vadd.f32 %v1699, %v1987
    %v1989 = vpop.f32.mrf.mxu0
    %v1990 = vpop.f32.mrf.mxu0
    %v1991 = vadd.f32 %v1702, %v1990
    %v1992 = vpop.f32.mrf.mxu0
    %1993 = vmatprep.mubr.bf16.mxu0 %v655
    %1994 = vmatmul.mubr.bf16.gmra.mxu0 %v547
    %v1995 = vpop.f32.mrf.mxu0
    %v1996 = vadd.f32 %v1707, %v1995
    %v1997 = vpop.f32.mrf.mxu0
    %v1998 = vpop.f32.mrf.mxu0
    %v1999 = vadd.f32 %v1710, %v1998
    %v2000 = vpop.f32.mrf.mxu0
    %2001 = vmatprep.mubr.bf16.mxu0 %v656
    %2002 = vmatmul.mubr.bf16.gmra.mxu0 %v548
    %v2003 = vpop.f32.mrf.mxu0
    %v2004 = vadd.f32 %v1715, %v2003
    %v2005 = vpop.f32.mrf.mxu0
    %v2006 = vpop.f32.mrf.mxu0
    %v2007 = vadd.f32 %v1718, %v2006
    %v2008 = vpop.f32.mrf.mxu0
    %2009 = vmatprep.mubr.bf16.mxu0 %v657
    %2010 = vmatmul.mubr.bf16.gmra.mxu0 %v549
    %v2011 = vpop.f32.mrf.mxu0
    %v2012 = vadd.f32 %v1723, %v2011
    %v2013 = vpop.f32.mrf.mxu0
    %v2014 = vpop.f32.mrf.mxu0
    %v2015 = vadd.f32 %v1726, %v2014
    %v2016 = vpop.f32.mrf.mxu0
    %2017 = vmatprep.mubr.bf16.mxu0 %v658
    %2018 = vmatmul.mubr.bf16.gmra.mxu0 %v550
    %v2019 = vpop.f32.mrf.mxu0
    %v2020 = vadd.f32 %v1731, %v2019
    %v2021 = vpop.f32.mrf.mxu0
    %v2022 = vpop.f32.mrf.mxu0
    %v2023 = vadd.f32 %v1734, %v2022
    %v2024 = vpop.f32.mrf.mxu0
    %2025 = vmatprep.mubr.bf16.mxu0 %v659
    %2026 = vmatmul.mubr.bf16.gmra.mxu0 %v551
    %v2027 = vpop.f32.mrf.mxu0
    %v2028 = vadd.f32 %v1739, %v2027
    %v2029 = vpop.f32.mrf.mxu0
    %v2030 = vpop.f32.mrf.mxu0
    %v2031 = vadd.f32 %v1742, %v2030
    %v2032 = vpop.f32.mrf.mxu0
    %2033 = vmatprep.mubr.bf16.mxu0 %v660
    %2034 = vmatmul.mubr.bf16.gmra.mxu0 %v552
    %v2035 = vpop.f32.mrf.mxu0
    %v2036 = vadd.f32 %v1747, %v2035
    %v2037 = vpop.f32.mrf.mxu0
    %v2038 = vpop.f32.mrf.mxu0
    %v2039 = vadd.f32 %v1750, %v2038
    %v2040 = vpop.f32.mrf.mxu0
    %2041 = vmatprep.mubr.bf16.mxu0 %v661
    %2042 = vmatmul.mubr.bf16.gmra.mxu0 %v553
    %v2043 = vpop.f32.mrf.mxu0
    %v2044 = vadd.f32 %v1755, %v2043
    %v2045 = vpop.f32.mrf.mxu0
    %v2046 = vpop.f32.mrf.mxu0
    %v2047 = vadd.f32 %v1758, %v2046
    %v2048 = vpop.f32.mrf.mxu0
    %2049 = vmatprep.mubr.bf16.mxu0 %v662
    %2050 = vmatmul.mubr.bf16.gmra.mxu0 %v554
    %v2051 = vpop.f32.mrf.mxu0
    %v2052 = vadd.f32 %v1763, %v2051
    %v2053 = vpop.f32.mrf.mxu0
    %v2054 = vpop.f32.mrf.mxu0
    %v2055 = vadd.f32 %v1766, %v2054
    %v2056 = vpop.f32.mrf.mxu0
    %2057 = vmatprep.mubr.bf16.mxu0 %v663
    %2058 = vmatmul.mubr.bf16.gmra.mxu0 %v555
    %v2059 = vpop.f32.mrf.mxu0
    %v2060 = vadd.f32 %v1771, %v2059
    %v2061 = vpop.f32.mrf.mxu0
    %v2062 = vpop.f32.mrf.mxu0
    %v2063 = vadd.f32 %v1774, %v2062
    %v2064 = vpop.f32.mrf.mxu0
    %2065 = vmatprep.mubr.bf16.mxu0 %v664
    %2066 = vmatmul.mubr.bf16.gmra.mxu0 %v556
    %v2067 = vpop.f32.mrf.mxu0
    %v2068 = vadd.f32 %v1779, %v2067
    %v2069 = vpop.f32.mrf.mxu0
    %v2070 = vpop.f32.mrf.mxu0
    %v2071 = vadd.f32 %v1782, %v2070
    %v2072 = vpop.f32.mrf.mxu0
    %2073 = vmatprep.mubr.bf16.mxu0 %v665
    %2074 = vmatmul.mubr.bf16.gmra.mxu0 %v557
    %v2075 = vpop.f32.mrf.mxu0
    %v2076 = vadd.f32 %v1787, %v2075
    %v2077 = vpop.f32.mrf.mxu0
    %v2078 = vpop.f32.mrf.mxu0
    %v2079 = vadd.f32 %v1790, %v2078
    %v2080 = vpop.f32.mrf.mxu0
    %2081 = vmatprep.mubr.bf16.mxu0 %v666
    %2082 = vmatmul.mubr.bf16.gmra.mxu0 %v558
    %v2083 = vpop.f32.mrf.mxu0
    %v2084 = vadd.f32 %v1795, %v2083
    %v2085 = vpop.f32.mrf.mxu0
    %v2086 = vpop.f32.mrf.mxu0
    %v2087 = vadd.f32 %v1798, %v2086
    %v2088 = vpop.f32.mrf.mxu0
    %2089 = vmatprep.mubr.bf16.mxu0 %v667
    %2090 = vmatmul.mubr.bf16.gmra.mxu0 %v559
    %v2091 = vpop.f32.mrf.mxu0
    %v2092 = vadd.f32 %v1803, %v2091
    %v2093 = vpop.f32.mrf.mxu0
    %v2094 = vpop.f32.mrf.mxu0
    %v2095 = vadd.f32 %v1806, %v2094
    %v2096 = vpop.f32.mrf.mxu0
    %2097 = vmatprep.mubr.bf16.mxu0 %v668
    %2098 = vmatmul.mubr.bf16.gmra.mxu0 %v560
    %v2099 = vpop.f32.mrf.mxu0
    %v2100 = vadd.f32 %v1811, %v2099
    %v2101 = vpop.f32.mrf.mxu0
    %v2102 = vpop.f32.mrf.mxu0
    %v2103 = vadd.f32 %v1814, %v2102
    %v2104 = vpop.f32.mrf.mxu0
    %2105 = vmatprep.mubr.bf16.mxu0 %v669
    %2106 = vmatmul.mubr.bf16.gmra.mxu0 %v561
    %v2107 = vpop.f32.mrf.mxu0
    %v2108 = vadd.f32 %v1819, %v2107
    %v2109 = vpop.f32.mrf.mxu0
    %v2110 = vpop.f32.mrf.mxu0
    %v2111 = vadd.f32 %v1822, %v2110
    %v2112 = vpop.f32.mrf.mxu0
    %2113 = vdwg.mxu0
    %2114 = vmatprep.subr.bf16.mxu0 0
    %2115 = vmatpush1.bf16.msra.mxu0 %v1158
    %2116 = vmatprep.subr.bf16.mxu0 0
    %2117 = vmatpush1.bf16.msra.mxu0 %v1157
    %2118 = vmatprep.subr.bf16.mxu0 0
    %2119 = vmatpush1.bf16.msra.mxu0 %v1156
    %2120 = vmatprep.subr.bf16.mxu0 0
    %2121 = vmatpush1.bf16.msra.mxu0 %v1155
    %2122 = vmatprep.subr.bf16.mxu0 0
    %2123 = vmatpush1.bf16.msra.mxu0 %v1154
    %2124 = vmatprep.subr.bf16.mxu0 0
    %2125 = vmatpush1.bf16.msra.mxu0 %v1153
    %2126 = vmatprep.subr.bf16.mxu0 0
    %2127 = vmatpush1.bf16.msra.mxu0 %v1152
    %2128 = vmatprep.subr.bf16.mxu0 0
    %2129 = vmatpush1.bf16.msra.mxu0 %v1151
    %2130 = vmatprep.subr.bf16.mxu0 0
    %2131 = vmatpush2.bf16.msra.mxu0 %v1166
    %2132 = vmatprep.subr.bf16.mxu0 0
    %2133 = vmatpush2.bf16.msra.mxu0 %v1165
    %2134 = vmatprep.subr.bf16.mxu0 0
    %2135 = vmatpush2.bf16.msra.mxu0 %v1164
    %2136 = vmatprep.subr.bf16.mxu0 0
    %2137 = vmatpush2.bf16.msra.mxu0 %v1163
    %2138 = vmatprep.subr.bf16.mxu0 0
    %2139 = vmatpush2.bf16.msra.mxu0 %v1162
    %2140 = vmatprep.subr.bf16.mxu0 0
    %2141 = vmatpush2.bf16.msra.mxu0 %v1161
    %2142 = vmatprep.subr.bf16.mxu0 0
    %2143 = vmatpush2.bf16.msra.mxu0 %v1160
    %2144 = vmatprep.subr.bf16.mxu0 0
    %2145 = vmatpush2.bf16.msra.mxu0 %v1159
    %2146 = vmatprep.mubr.bf16.mxu0 %v529
    %2147 = vmatmul.mubr.bf16.gmra.mxu0 %v421
    %v2148 = vpop.f32.mrf.mxu0
    %v2149 = vadd.f32 %v1860, %v2148
    %v2150 = vpop.f32.mrf.mxu0
    %v2151 = vpop.f32.mrf.mxu0
    %v2152 = vadd.f32 %v1863, %v2151
    %v2153 = vpop.f32.mrf.mxu0
    %2154 = vmatprep.mubr.bf16.mxu0 %v530
    %2155 = vmatmul.mubr.bf16.gmra.mxu0 %v422
    %v2156 = vpop.f32.mrf.mxu0
    %v2157 = vadd.f32 %v1868, %v2156
    %v2158 = vpop.f32.mrf.mxu0
    %v2159 = vpop.f32.mrf.mxu0
    %v2160 = vadd.f32 %v1871, %v2159
    %v2161 = vpop.f32.mrf.mxu0
    %2162 = vmatprep.mubr.bf16.mxu0 %v531
    %2163 = vmatmul.mubr.bf16.gmra.mxu0 %v423
    %v2164 = vpop.f32.mrf.mxu0
    %v2165 = vadd.f32 %v1876, %v2164
    %v2166 = vpop.f32.mrf.mxu0
    %v2167 = vpop.f32.mrf.mxu0
    %v2168 = vadd.f32 %v1879, %v2167
    %v2169 = vpop.f32.mrf.mxu0
    %2170 = vmatprep.mubr.bf16.mxu0 %v532
    %2171 = vmatmul.mubr.bf16.gmra.mxu0 %v424
    %v2172 = vpop.f32.mrf.mxu0
    %v2173 = vadd.f32 %v1884, %v2172
    %v2174 = vpop.f32.mrf.mxu0
    %v2175 = vpop.f32.mrf.mxu0
    %v2176 = vadd.f32 %v1887, %v2175
    %v2177 = vpop.f32.mrf.mxu0
    %2178 = vmatprep.mubr.bf16.mxu0 %v533
    %2179 = vmatmul.mubr.bf16.gmra.mxu0 %v425
    %v2180 = vpop.f32.mrf.mxu0
    %v2181 = vadd.f32 %v1892, %v2180
    %v2182 = vpop.f32.mrf.mxu0
    %v2183 = vpop.f32.mrf.mxu0
    %v2184 = vadd.f32 %v1895, %v2183
    %v2185 = vpop.f32.mrf.mxu0
    %2186 = vmatprep.mubr.bf16.mxu0 %v534
    %2187 = vmatmul.mubr.bf16.gmra.mxu0 %v426
    %v2188 = vpop.f32.mrf.mxu0
    %v2189 = vadd.f32 %v1900, %v2188
    %v2190 = vpop.f32.mrf.mxu0
    %v2191 = vpop.f32.mrf.mxu0
    %v2192 = vadd.f32 %v1903, %v2191
    %v2193 = vpop.f32.mrf.mxu0
    %2194 = vmatprep.mubr.bf16.mxu0 %v535
    %2195 = vmatmul.mubr.bf16.gmra.mxu0 %v427
    %v2196 = vpop.f32.mrf.mxu0
    %v2197 = vadd.f32 %v1908, %v2196
    %v2198 = vpop.f32.mrf.mxu0
    %v2199 = vpop.f32.mrf.mxu0
    %v2200 = vadd.f32 %v1911, %v2199
    %v2201 = vpop.f32.mrf.mxu0
    %2202 = vmatprep.mubr.bf16.mxu0 %v536
    %2203 = vmatmul.mubr.bf16.gmra.mxu0 %v428
    %v2204 = vpop.f32.mrf.mxu0
    %v2205 = vadd.f32 %v1916, %v2204
    %v2206 = vpop.f32.mrf.mxu0
    %v2207 = vpop.f32.mrf.mxu0
    %v2208 = vadd.f32 %v1919, %v2207
    %v2209 = vpop.f32.mrf.mxu0
    %2210 = vmatprep.mubr.bf16.mxu0 %v537
    %2211 = vmatmul.mubr.bf16.gmra.mxu0 %v429
    %v2212 = vpop.f32.mrf.mxu0
    %v2213 = vadd.f32 %v1924, %v2212
    %v2214 = vpop.f32.mrf.mxu0
    %v2215 = vpop.f32.mrf.mxu0
    %v2216 = vadd.f32 %v1927, %v2215
    %v2217 = vpop.f32.mrf.mxu0
    %2218 = vmatprep.mubr.bf16.mxu0 %v538
    %2219 = vmatmul.mubr.bf16.gmra.mxu0 %v430
    %v2220 = vpop.f32.mrf.mxu0
    %v2221 = vadd.f32 %v1932, %v2220
    %v2222 = vpop.f32.mrf.mxu0
    %v2223 = vpop.f32.mrf.mxu0
    %v2224 = vadd.f32 %v1935, %v2223
    %v2225 = vpop.f32.mrf.mxu0
    %2226 = vmatprep.mubr.bf16.mxu0 %v539
    %2227 = vmatmul.mubr.bf16.gmra.mxu0 %v431
    %v2228 = vpop.f32.mrf.mxu0
    %v2229 = vadd.f32 %v1940, %v2228
    %v2230 = vpop.f32.mrf.mxu0
    %v2231 = vpop.f32.mrf.mxu0
    %v2232 = vadd.f32 %v1943, %v2231
    %v2233 = vpop.f32.mrf.mxu0
    %2234 = vmatprep.mubr.bf16.mxu0 %v540
    %2235 = vmatmul.mubr.bf16.gmra.mxu0 %v432
    %v2236 = vpop.f32.mrf.mxu0
    %v2237 = vadd.f32 %v1948, %v2236
    %v2238 = vpop.f32.mrf.mxu0
    %v2239 = vpop.f32.mrf.mxu0
    %v2240 = vadd.f32 %v1951, %v2239
    %v2241 = vpop.f32.mrf.mxu0
    %2242 = vmatprep.mubr.bf16.mxu0 %v541
    %2243 = vmatmul.mubr.bf16.gmra.mxu0 %v433
    %v2244 = vpop.f32.mrf.mxu0
    %v2245 = vadd.f32 %v1956, %v2244
    %v2246 = vpop.f32.mrf.mxu0
    %v2247 = vpop.f32.mrf.mxu0
    %v2248 = vadd.f32 %v1959, %v2247
    %v2249 = vpop.f32.mrf.mxu0
    %2250 = vmatprep.mubr.bf16.mxu0 %v542
    %2251 = vmatmul.mubr.bf16.gmra.mxu0 %v434
    %v2252 = vpop.f32.mrf.mxu0
    %v2253 = vadd.f32 %v1964, %v2252
    %v2254 = vpop.f32.mrf.mxu0
    %v2255 = vpop.f32.mrf.mxu0
    %v2256 = vadd.f32 %v1967, %v2255
    %v2257 = vpop.f32.mrf.mxu0
    %2258 = vmatprep.mubr.bf16.mxu0 %v543
    %2259 = vmatmul.mubr.bf16.gmra.mxu0 %v435
    %v2260 = vpop.f32.mrf.mxu0
    %v2261 = vadd.f32 %v1972, %v2260
    %v2262 = vpop.f32.mrf.mxu0
    %v2263 = vpop.f32.mrf.mxu0
    %v2264 = vadd.f32 %v1975, %v2263
    %v2265 = vpop.f32.mrf.mxu0
    %2266 = vmatprep.mubr.bf16.mxu0 %v544
    %2267 = vmatmul.mubr.bf16.gmra.mxu0 %v436
    %v2268 = vpop.f32.mrf.mxu0
    %v2269 = vadd.f32 %v1980, %v2268
    %v2270 = vpop.f32.mrf.mxu0
    %v2271 = vpop.f32.mrf.mxu0
    %v2272 = vadd.f32 %v1983, %v2271
    %v2273 = vpop.f32.mrf.mxu0
    %2274 = vmatprep.mubr.bf16.mxu0 %v547
    %2275 = vmatmul.mubr.bf16.gmra.mxu0 %v439
    %v2276 = vpop.f32.mrf.mxu0
    %v2277 = vadd.f32 %v1988, %v2276
    %v2278 = vpop.f32.mrf.mxu0
    %v2279 = vpop.f32.mrf.mxu0
    %v2280 = vadd.f32 %v1991, %v2279
    %v2281 = vpop.f32.mrf.mxu0
    %2282 = vmatprep.mubr.bf16.mxu0 %v548
    %2283 = vmatmul.mubr.bf16.gmra.mxu0 %v440
    %v2284 = vpop.f32.mrf.mxu0
    %v2285 = vadd.f32 %v1996, %v2284
    %v2286 = vpop.f32.mrf.mxu0
    %v2287 = vpop.f32.mrf.mxu0
    %v2288 = vadd.f32 %v1999, %v2287
    %v2289 = vpop.f32.mrf.mxu0
    %2290 = vmatprep.mubr.bf16.mxu0 %v549
    %2291 = vmatmul.mubr.bf16.gmra.mxu0 %v441
    %v2292 = vpop.f32.mrf.mxu0
    %v2293 = vadd.f32 %v2004, %v2292
    %v2294 = vpop.f32.mrf.mxu0
    %v2295 = vpop.f32.mrf.mxu0
    %v2296 = vadd.f32 %v2007, %v2295
    %v2297 = vpop.f32.mrf.mxu0
    %2298 = vmatprep.mubr.bf16.mxu0 %v550
    %2299 = vmatmul.mubr.bf16.gmra.mxu0 %v442
    %v2300 = vpop.f32.mrf.mxu0
    %v2301 = vadd.f32 %v2012, %v2300
    %v2302 = vpop.f32.mrf.mxu0
    %v2303 = vpop.f32.mrf.mxu0
    %v2304 = vadd.f32 %v2015, %v2303
    %v2305 = vpop.f32.mrf.mxu0
    %2306 = vmatprep.mubr.bf16.mxu0 %v551
    %2307 = vmatmul.mubr.bf16.gmra.mxu0 %v443
    %v2308 = vpop.f32.mrf.mxu0
    %v2309 = vadd.f32 %v2020, %v2308
    %v2310 = vpop.f32.mrf.mxu0
    %v2311 = vpop.f32.mrf.mxu0
    %v2312 = vadd.f32 %v2023, %v2311
    %v2313 = vpop.f32.mrf.mxu0
    %2314 = vmatprep.mubr.bf16.mxu0 %v552
    %2315 = vmatmul.mubr.bf16.gmra.mxu0 %v444
    %v2316 = vpop.f32.mrf.mxu0
    %v2317 = vadd.f32 %v2028, %v2316
    %v2318 = vpop.f32.mrf.mxu0
    %v2319 = vpop.f32.mrf.mxu0
    %v2320 = vadd.f32 %v2031, %v2319
    %v2321 = vpop.f32.mrf.mxu0
    %2322 = vmatprep.mubr.bf16.mxu0 %v553
    %2323 = vmatmul.mubr.bf16.gmra.mxu0 %v445
    %v2324 = vpop.f32.mrf.mxu0
    %v2325 = vadd.f32 %v2036, %v2324
    %v2326 = vpop.f32.mrf.mxu0
    %v2327 = vpop.f32.mrf.mxu0
    %v2328 = vadd.f32 %v2039, %v2327
    %v2329 = vpop.f32.mrf.mxu0
    %2330 = vmatprep.mubr.bf16.mxu0 %v554
    %2331 = vmatmul.mubr.bf16.gmra.mxu0 %v446
    %v2332 = vpop.f32.mrf.mxu0
    %v2333 = vadd.f32 %v2044, %v2332
    %v2334 = vpop.f32.mrf.mxu0
    %v2335 = vpop.f32.mrf.mxu0
    %v2336 = vadd.f32 %v2047, %v2335
    %v2337 = vpop.f32.mrf.mxu0
    %2338 = vmatprep.mubr.bf16.mxu0 %v555
    %2339 = vmatmul.mubr.bf16.gmra.mxu0 %v447
    %v2340 = vpop.f32.mrf.mxu0
    %v2341 = vadd.f32 %v2052, %v2340
    %v2342 = vpop.f32.mrf.mxu0
    %v2343 = vpop.f32.mrf.mxu0
    %v2344 = vadd.f32 %v2055, %v2343
    %v2345 = vpop.f32.mrf.mxu0
    %2346 = vmatprep.mubr.bf16.mxu0 %v556
    %2347 = vmatmul.mubr.bf16.gmra.mxu0 %v448
    %v2348 = vpop.f32.mrf.mxu0
    %v2349 = vadd.f32 %v2060, %v2348
    %v2350 = vpop.f32.mrf.mxu0
    %v2351 = vpop.f32.mrf.mxu0
    %v2352 = vadd.f32 %v2063, %v2351
    %v2353 = vpop.f32.mrf.mxu0
    %2354 = vmatprep.mubr.bf16.mxu0 %v557
    %2355 = vmatmul.mubr.bf16.gmra.mxu0 %v449
    %v2356 = vpop.f32.mrf.mxu0
    %v2357 = vadd.f32 %v2068, %v2356
    %v2358 = vpop.f32.mrf.mxu0
    %v2359 = vpop.f32.mrf.mxu0
    %v2360 = vadd.f32 %v2071, %v2359
    %v2361 = vpop.f32.mrf.mxu0
    %2362 = vmatprep.mubr.bf16.mxu0 %v558
    %2363 = vmatmul.mubr.bf16.gmra.mxu0 %v450
    %v2364 = vpop.f32.mrf.mxu0
    %v2365 = vadd.f32 %v2076, %v2364
    %v2366 = vpop.f32.mrf.mxu0
    %v2367 = vpop.f32.mrf.mxu0
    %v2368 = vadd.f32 %v2079, %v2367
    %v2369 = vpop.f32.mrf.mxu0
    %2370 = vmatprep.mubr.bf16.mxu0 %v559
    %2371 = vmatmul.mubr.bf16.gmra.mxu0 %v451
    %v2372 = vpop.f32.mrf.mxu0
    %v2373 = vadd.f32 %v2084, %v2372
    %v2374 = vpop.f32.mrf.mxu0
    %v2375 = vpop.f32.mrf.mxu0
    %v2376 = vadd.f32 %v2087, %v2375
    %v2377 = vpop.f32.mrf.mxu0
    %2378 = vmatprep.mubr.bf16.mxu0 %v560
    %2379 = vmatmul.mubr.bf16.gmra.mxu0 %v452
    %v2380 = vpop.f32.mrf.mxu0
    %v2381 = vadd.f32 %v2092, %v2380
    %v2382 = vpop.f32.mrf.mxu0
    %v2383 = vpop.f32.mrf.mxu0
    %v2384 = vadd.f32 %v2095, %v2383
    %v2385 = vpop.f32.mrf.mxu0
    %2386 = vmatprep.mubr.bf16.mxu0 %v561
    %2387 = vmatmul.mubr.bf16.gmra.mxu0 %v453
    %v2388 = vpop.f32.mrf.mxu0
    %v2389 = vadd.f32 %v2100, %v2388
    %v2390 = vpop.f32.mrf.mxu0
    %v2391 = vpop.f32.mrf.mxu0
    %v2392 = vadd.f32 %v2103, %v2391
    %v2393 = vpop.f32.mrf.mxu0
    %2394 = vmatprep.mubr.bf16.mxu0 %v562
    %2395 = vmatmul.mubr.bf16.gmra.mxu0 %v454
    %v2396 = vpop.f32.mrf.mxu0
    %v2397 = vadd.f32 %v2108, %v2396
    %v2398 = vpop.f32.mrf.mxu0
    %v2399 = vpop.f32.mrf.mxu0
    %v2400 = vadd.f32 %v2111, %v2399
    %v2401 = vpop.f32.mrf.mxu0
    %2402 = vdwg.mxu0
    %2403 = vmatprep.subr.bf16.mxu0 0
    %2404 = vmatpush1.bf16.msra.mxu0 %v1174
    %2405 = vmatprep.subr.bf16.mxu0 0
    %2406 = vmatpush1.bf16.msra.mxu0 %v1173
    %2407 = vmatprep.subr.bf16.mxu0 0
    %2408 = vmatpush1.bf16.msra.mxu0 %v1172
    %2409 = vmatprep.subr.bf16.mxu0 0
    %2410 = vmatpush1.bf16.msra.mxu0 %v1171
    %2411 = vmatprep.subr.bf16.mxu0 0
    %2412 = vmatpush1.bf16.msra.mxu0 %v1170
    %2413 = vmatprep.subr.bf16.mxu0 0
    %2414 = vmatpush1.bf16.msra.mxu0 %v1169
    %2415 = vmatprep.subr.bf16.mxu0 0
    %2416 = vmatpush1.bf16.msra.mxu0 %v1168
    %2417 = vmatprep.subr.bf16.mxu0 0
    %2418 = vmatpush1.bf16.msra.mxu0 %v1167
    %2419 = vmatprep.subr.bf16.mxu0 0
    %2420 = vmatpush2.bf16.msra.mxu0 0
    %2421 = vmatprep.subr.bf16.mxu0 0
    %2422 = vmatpush2.bf16.msra.mxu0 0
    %2423 = vmatprep.subr.bf16.mxu0 0
    %2424 = vmatpush2.bf16.msra.mxu0 0
    %2425 = vmatprep.subr.bf16.mxu0 0
    %2426 = vmatpush2.bf16.msra.mxu0 0
    %2427 = vmatprep.subr.bf16.mxu0 0
    %2428 = vmatpush2.bf16.msra.mxu0 0
    %2429 = vmatprep.subr.bf16.mxu0 0
    %2430 = vmatpush2.bf16.msra.mxu0 0
    %2431 = vmatprep.subr.bf16.mxu0 0
    %2432 = vmatpush2.bf16.msra.mxu0 0
    %2433 = vmatprep.subr.bf16.mxu0 0
    %2434 = vmatpush2.bf16.msra.mxu0 0
    %2435 = vmatprep.mubr.bf16.mxu0 0
    %2436 = vmatmul.mubr.bf16.gmra.mxu0 %v637
    %v2437 = vpop.f32.mrf.mxu0
    %v2438 = vadd.f32 %v2149, %v2437
    %v2439 = vpop.f32.mrf.mxu0
    %v2440 = vpop.f32.mrf.mxu0
    %v2441 = vadd.f32 %v2152, %v2440
    %v2442 = vpop.f32.mrf.mxu0
    %2443 = vmatprep.mubr.bf16.mxu0 0
    %2444 = vmatmul.mubr.bf16.gmra.mxu0 %v638
    %v2445 = vpop.f32.mrf.mxu0
    %v2446 = vadd.f32 %v2157, %v2445
    %v2447 = vpop.f32.mrf.mxu0
    %v2448 = vpop.f32.mrf.mxu0
    %v2449 = vadd.f32 %v2160, %v2448
    %v2450 = vpop.f32.mrf.mxu0
    %2451 = vmatprep.mubr.bf16.mxu0 0
    %2452 = vmatmul.mubr.bf16.gmra.mxu0 %v639
    %v2453 = vpop.f32.mrf.mxu0
    %v2454 = vadd.f32 %v2165, %v2453
    %v2455 = vpop.f32.mrf.mxu0
    %v2456 = vpop.f32.mrf.mxu0
    %v2457 = vadd.f32 %v2168, %v2456
    %v2458 = vpop.f32.mrf.mxu0
    %2459 = vmatprep.mubr.bf16.mxu0 0
    %2460 = vmatmul.mubr.bf16.gmra.mxu0 %v640
    %v2461 = vpop.f32.mrf.mxu0
    %v2462 = vadd.f32 %v2173, %v2461
    %v2463 = vpop.f32.mrf.mxu0
    %v2464 = vpop.f32.mrf.mxu0
    %v2465 = vadd.f32 %v2176, %v2464
    %v2466 = vpop.f32.mrf.mxu0
    %2467 = vmatprep.mubr.bf16.mxu0 0
    %2468 = vmatmul.mubr.bf16.gmra.mxu0 %v641
    %v2469 = vpop.f32.mrf.mxu0
    %v2470 = vadd.f32 %v2181, %v2469
    %v2471 = vpop.f32.mrf.mxu0
    %v2472 = vpop.f32.mrf.mxu0
    %v2473 = vadd.f32 %v2184, %v2472
    %v2474 = vpop.f32.mrf.mxu0
    %2475 = vmatprep.mubr.bf16.mxu0 0
    %2476 = vmatmul.mubr.bf16.gmra.mxu0 %v642
    %v2477 = vpop.f32.mrf.mxu0
    %v2478 = vadd.f32 %v2189, %v2477
    %v2479 = vpop.f32.mrf.mxu0
    %v2480 = vpop.f32.mrf.mxu0
    %v2481 = vadd.f32 %v2192, %v2480
    %v2482 = vpop.f32.mrf.mxu0
    %2483 = vmatprep.mubr.bf16.mxu0 0
    %2484 = vmatmul.mubr.bf16.gmra.mxu0 %v643
    %v2485 = vpop.f32.mrf.mxu0
    %v2486 = vadd.f32 %v2197, %v2485
    %v2487 = vpop.f32.mrf.mxu0
    %v2488 = vpop.f32.mrf.mxu0
    %v2489 = vadd.f32 %v2200, %v2488
    %v2490 = vpop.f32.mrf.mxu0
    %2491 = vmatprep.mubr.bf16.mxu0 0
    %2492 = vmatmul.mubr.bf16.gmra.mxu0 %v644
    %v2493 = vpop.f32.mrf.mxu0
    %v2494 = vadd.f32 %v2205, %v2493
    %v2495 = vpop.f32.mrf.mxu0
    %v2496 = vpop.f32.mrf.mxu0
    %v2497 = vadd.f32 %v2208, %v2496
    %v2498 = vpop.f32.mrf.mxu0
    %2499 = vmatprep.mubr.bf16.mxu0 0
    %2500 = vmatmul.mubr.bf16.gmra.mxu0 %v645
    %v2501 = vpop.f32.mrf.mxu0
    %v2502 = vadd.f32 %v2213, %v2501
    %v2503 = vpop.f32.mrf.mxu0
    %v2504 = vpop.f32.mrf.mxu0
    %v2505 = vadd.f32 %v2216, %v2504
    %v2506 = vpop.f32.mrf.mxu0
    %2507 = vmatprep.mubr.bf16.mxu0 0
    %2508 = vmatmul.mubr.bf16.gmra.mxu0 %v646
    %v2509 = vpop.f32.mrf.mxu0
    %v2510 = vadd.f32 %v2221, %v2509
    %v2511 = vpop.f32.mrf.mxu0
    %v2512 = vpop.f32.mrf.mxu0
    %v2513 = vadd.f32 %v2224, %v2512
    %v2514 = vpop.f32.mrf.mxu0
    %2515 = vmatprep.mubr.bf16.mxu0 0
    %2516 = vmatmul.mubr.bf16.gmra.mxu0 %v647
    %v2517 = vpop.f32.mrf.mxu0
    %v2518 = vadd.f32 %v2229, %v2517
    %v2519 = vpop.f32.mrf.mxu0
    %v2520 = vpop.f32.mrf.mxu0
    %v2521 = vadd.f32 %v2232, %v2520
    %v2522 = vpop.f32.mrf.mxu0
    %2523 = vmatprep.mubr.bf16.mxu0 0
    %2524 = vmatmul.mubr.bf16.gmra.mxu0 %v648
    %v2525 = vpop.f32.mrf.mxu0
    %v2526 = vadd.f32 %v2237, %v2525
    %v2527 = vpop.f32.mrf.mxu0
    %v2528 = vpop.f32.mrf.mxu0
    %v2529 = vadd.f32 %v2240, %v2528
    %v2530 = vpop.f32.mrf.mxu0
    %2531 = vmatprep.mubr.bf16.mxu0 0
    %2532 = vmatmul.mubr.bf16.gmra.mxu0 %v649
    %v2533 = vpop.f32.mrf.mxu0
    %v2534 = vadd.f32 %v2245, %v2533
    %v2535 = vpop.f32.mrf.mxu0
    %v2536 = vpop.f32.mrf.mxu0
    %v2537 = vadd.f32 %v2248, %v2536
    %v2538 = vpop.f32.mrf.mxu0
    %2539 = vmatprep.mubr.bf16.mxu0 0
    %2540 = vmatmul.mubr.bf16.gmra.mxu0 %v650
    %v2541 = vpop.f32.mrf.mxu0
    %v2542 = vadd.f32 %v2253, %v2541
    %v2543 = vpop.f32.mrf.mxu0
    %v2544 = vpop.f32.mrf.mxu0
    %v2545 = vadd.f32 %v2256, %v2544
    %v2546 = vpop.f32.mrf.mxu0
    %2547 = vmatprep.mubr.bf16.mxu0 0
    %2548 = vmatmul.mubr.bf16.gmra.mxu0 %v651
    %v2549 = vpop.f32.mrf.mxu0
    %v2550 = vadd.f32 %v2261, %v2549
    %v2551 = vpop.f32.mrf.mxu0
    %v2552 = vpop.f32.mrf.mxu0
    %v2553 = vadd.f32 %v2264, %v2552
    %v2554 = vpop.f32.mrf.mxu0
    %2555 = vmatprep.mubr.bf16.mxu0 0
    %2556 = vmatmul.mubr.bf16.gmra.mxu0 %v652
    %v2557 = vpop.f32.mrf.mxu0
    %v2558 = vadd.f32 %v2269, %v2557
    %v2559 = vpop.f32.mrf.mxu0
    %v2560 = vpop.f32.mrf.mxu0
    %v2561 = vadd.f32 %v2272, %v2560
    %v2562 = vpop.f32.mrf.mxu0
    %2563 = vmatprep.mubr.bf16.mxu0 0
    %2564 = vmatmul.mubr.bf16.gmra.mxu0 %v655
    %v2565 = vpop.f32.mrf.mxu0
    %v2566 = vadd.f32 %v2277, %v2565
    %v2567 = vpop.f32.mrf.mxu0
    %v2568 = vpop.f32.mrf.mxu0
    %v2569 = vadd.f32 %v2280, %v2568
    %v2570 = vpop.f32.mrf.mxu0
    %2571 = vmatprep.mubr.bf16.mxu0 0
    %2572 = vmatmul.mubr.bf16.gmra.mxu0 %v656
    %v2573 = vpop.f32.mrf.mxu0
    %v2574 = vadd.f32 %v2285, %v2573
    %v2575 = vpop.f32.mrf.mxu0
    %v2576 = vpop.f32.mrf.mxu0
    %v2577 = vadd.f32 %v2288, %v2576
    %v2578 = vpop.f32.mrf.mxu0
    %2579 = vmatprep.mubr.bf16.mxu0 0
    %2580 = vmatmul.mubr.bf16.gmra.mxu0 %v657
    %v2581 = vpop.f32.mrf.mxu0
    %v2582 = vadd.f32 %v2293, %v2581
    %v2583 = vpop.f32.mrf.mxu0
    %v2584 = vpop.f32.mrf.mxu0
    %v2585 = vadd.f32 %v2296, %v2584
    %v2586 = vpop.f32.mrf.mxu0
    %2587 = vmatprep.mubr.bf16.mxu0 0
    %2588 = vmatmul.mubr.bf16.gmra.mxu0 %v658
    %v2589 = vpop.f32.mrf.mxu0
    %v2590 = vadd.f32 %v2301, %v2589
    %v2591 = vpop.f32.mrf.mxu0
    %v2592 = vpop.f32.mrf.mxu0
    %v2593 = vadd.f32 %v2304, %v2592
    %v2594 = vpop.f32.mrf.mxu0
    %2595 = vmatprep.mubr.bf16.mxu0 0
    %2596 = vmatmul.mubr.bf16.gmra.mxu0 %v659
    %v2597 = vpop.f32.mrf.mxu0
    %v2598 = vadd.f32 %v2309, %v2597
    %v2599 = vpop.f32.mrf.mxu0
    %v2600 = vpop.f32.mrf.mxu0
    %v2601 = vadd.f32 %v2312, %v2600
    %v2602 = vpop.f32.mrf.mxu0
    %2603 = vmatprep.mubr.bf16.mxu0 0
    %2604 = vmatmul.mubr.bf16.gmra.mxu0 %v660
    %v2605 = vpop.f32.mrf.mxu0
    %v2606 = vadd.f32 %v2317, %v2605
    %v2607 = vpop.f32.mrf.mxu0
    %v2608 = vpop.f32.mrf.mxu0
    %v2609 = vadd.f32 %v2320, %v2608
    %v2610 = vpop.f32.mrf.mxu0
    %2611 = vmatprep.mubr.bf16.mxu0 0
    %2612 = vmatmul.mubr.bf16.gmra.mxu0 %v661
    %v2613 = vpop.f32.mrf.mxu0
    %v2614 = vadd.f32 %v2325, %v2613
    %v2615 = vpop.f32.mrf.mxu0
    %v2616 = vpop.f32.mrf.mxu0
    %v2617 = vadd.f32 %v2328, %v2616
    %v2618 = vpop.f32.mrf.mxu0
    %2619 = vmatprep.mubr.bf16.mxu0 0
    %2620 = vmatmul.mubr.bf16.gmra.mxu0 %v662
    %v2621 = vpop.f32.mrf.mxu0
    %v2622 = vadd.f32 %v2333, %v2621
    %v2623 = vpop.f32.mrf.mxu0
    %v2624 = vpop.f32.mrf.mxu0
    %v2625 = vadd.f32 %v2336, %v2624
    %v2626 = vpop.f32.mrf.mxu0
    %2627 = vmatprep.mubr.bf16.mxu0 0
    %2628 = vmatmul.mubr.bf16.gmra.mxu0 %v663
    %v2629 = vpop.f32.mrf.mxu0
    %v2630 = vadd.f32 %v2341, %v2629
    %v2631 = vpop.f32.mrf.mxu0
    %v2632 = vpop.f32.mrf.mxu0
    %v2633 = vadd.f32 %v2344, %v2632
    %v2634 = vpop.f32.mrf.mxu0
    %2635 = vmatprep.mubr.bf16.mxu0 0
    %2636 = vmatmul.mubr.bf16.gmra.mxu0 %v664
    %v2637 = vpop.f32.mrf.mxu0
    %v2638 = vadd.f32 %v2349, %v2637
    %v2639 = vpop.f32.mrf.mxu0
    %v2640 = vpop.f32.mrf.mxu0
    %v2641 = vadd.f32 %v2352, %v2640
    %v2642 = vpop.f32.mrf.mxu0
    %2643 = vmatprep.mubr.bf16.mxu0 0
    %2644 = vmatmul.mubr.bf16.gmra.mxu0 %v665
    %v2645 = vpop.f32.mrf.mxu0
    %v2646 = vadd.f32 %v2357, %v2645
    %v2647 = vpop.f32.mrf.mxu0
    %v2648 = vpop.f32.mrf.mxu0
    %v2649 = vadd.f32 %v2360, %v2648
    %v2650 = vpop.f32.mrf.mxu0
    %2651 = vmatprep.mubr.bf16.mxu0 0
    %2652 = vmatmul.mubr.bf16.gmra.mxu0 %v666
    %v2653 = vpop.f32.mrf.mxu0
    %v2654 = vadd.f32 %v2365, %v2653
    %v2655 = vpop.f32.mrf.mxu0
    %v2656 = vpop.f32.mrf.mxu0
    %v2657 = vadd.f32 %v2368, %v2656
    %v2658 = vpop.f32.mrf.mxu0
    %2659 = vmatprep.mubr.bf16.mxu0 0
    %2660 = vmatmul.mubr.bf16.gmra.mxu0 %v667
    %v2661 = vpop.f32.mrf.mxu0
    %v2662 = vadd.f32 %v2373, %v2661
    %v2663 = vpop.f32.mrf.mxu0
    %v2664 = vpop.f32.mrf.mxu0
    %v2665 = vadd.f32 %v2376, %v2664
    %v2666 = vpop.f32.mrf.mxu0
    %2667 = vmatprep.mubr.bf16.mxu0 0
    %2668 = vmatmul.mubr.bf16.gmra.mxu0 %v668
    %v2669 = vpop.f32.mrf.mxu0
    %v2670 = vadd.f32 %v2381, %v2669
    %v2671 = vpop.f32.mrf.mxu0
    %v2672 = vpop.f32.mrf.mxu0
    %v2673 = vadd.f32 %v2384, %v2672
    %v2674 = vpop.f32.mrf.mxu0
    %2675 = vmatprep.mubr.bf16.mxu0 0
    %2676 = vmatmul.mubr.bf16.gmra.mxu0 %v669
    %v2677 = vpop.f32.mrf.mxu0
    %v2678 = vadd.f32 %v2389, %v2677
    %v2679 = vpop.f32.mrf.mxu0
    %v2680 = vpop.f32.mrf.mxu0
    %v2681 = vadd.f32 %v2392, %v2680
    %v2682 = vpop.f32.mrf.mxu0
    %2683 = vmatprep.mubr.bf16.mxu0 0
    %2684 = vmatmul.mubr.bf16.gmra.mxu0 %v670
    %v2685 = vpop.f32.mrf.mxu0
    %v2686 = vadd.f32 %v2397, %v2685
    %v2687 = vpop.f32.mrf.mxu0
    %v2688 = vpop.f32.mrf.mxu0
    %v2689 = vadd.f32 %v2400, %v2688
    %v2690 = vpop.f32.mrf.mxu0
    %2691 = vdwg.mxu0
    %v2692 = vld [vmem:[%s2] sm:$0x1]
    %v2693 = vld [vmem:[%s3] sm:$0x1]
    %v2694 = vadd.f32 %v2438, %v2441
    %v2695 = vadd.f32 %v2694, %v2446
    %v2696 = vadd.f32 %v2695, %v2449
    %v2697 = vadd.f32 %v2696, %v2454
    %v2698 = vadd.f32 %v2697, %v2457
    %v2699 = vadd.f32 %v2698, %v2462
    %v2700 = vadd.f32 %v2699, %v2465
    %v2701 = vadd.f32 %v2700, %v2470
    %v2702 = vadd.f32 %v2701, %v2473
    %v2703 = vadd.f32 %v2702, %v2478
    %v2704 = vadd.f32 %v2703, %v2481
    %v2705 = vadd.f32 %v2704, %v2486
    %v2706 = vadd.f32 %v2705, %v2489
    %v2707 = vadd.f32 %v2706, %v2494
    %v2708 = vadd.f32 %v2707, %v2497
    %v2709 = vadd.f32 %v2708, %v2502
    %v2710 = vadd.f32 %v2709, %v2505
    %v2711 = vadd.f32 %v2710, %v2510
    %v2712 = vadd.f32 %v2711, %v2513
    %v2713 = vadd.f32 %v2712, %v2518
    %v2714 = vadd.f32 %v2713, %v2521
    %v2715 = vadd.f32 %v2714, %v2526
    %v2716 = vadd.f32 %v2715, %v2529
    %v2717 = vadd.f32 %v2716, %v2534
    %v2718 = vadd.f32 %v2717, %v2537
    %v2719 = vadd.f32 %v2718, %v2542
    %v2720 = vadd.f32 %v2719, %v2545
    %v2721 = vadd.f32 %v2720, %v2550
    %v2722 = vadd.f32 %v2721, %v2553
    %v2723 = vadd.f32 %v2722, %v2558
    %v2724 = vadd.f32 %v2723, %v2561
    %v2725 = vadd.f32 %v2724, %v2566
    %v2726 = vadd.f32 %v2725, %v2569
    %v2727 = vadd.f32 %v2726, %v2574
    %v2728 = vadd.f32 %v2727, %v2577
    %v2729 = vadd.f32 %v2728, %v2582
    %v2730 = vadd.f32 %v2729, %v2585
    %v2731 = vadd.f32 %v2730, %v2590
    %v2732 = vadd.f32 %v2731, %v2593
    %v2733 = vadd.f32 %v2732, %v2598
    %v2734 = vadd.f32 %v2733, %v2601
    %v2735 = vadd.f32 %v2734, %v2606
    %v2736 = vadd.f32 %v2735, %v2609
    %v2737 = vadd.f32 %v2736, %v2614
    %v2738 = vadd.f32 %v2737, %v2617
    %v2739 = vadd.f32 %v2738, %v2622
    %v2740 = vadd.f32 %v2739, %v2625
    %v2741 = vadd.f32 %v2740, %v2630
    %v2742 = vadd.f32 %v2741, %v2633
    %v2743 = vadd.f32 %v2742, %v2638
    %v2744 = vadd.f32 %v2743, %v2641
    %v2745 = vadd.f32 %v2744, %v2646
    %v2746 = vadd.f32 %v2745, %v2649
    %v2747 = vadd.f32 %v2746, %v2654
    %v2748 = vadd.f32 %v2747, %v2657
    %v2749 = vadd.f32 %v2748, %v2662
    %v2750 = vadd.f32 %v2749, %v2665
    %v2751 = vadd.f32 %v2750, %v2670
    %v2752 = vadd.f32 %v2751, %v2673
    %v2753 = vadd.f32 %v2752, %v2678
    %v2754 = vadd.f32 %v2753, %v2681
    %v2755 = vadd.f32 %v2754, %v2686
    %v2756 = vadd.f32 %v2755, %v2689
    %v2757 = vrot.slane %v2756, 4
    %v2758 = vadd.f32 %v2756, %v2757
    %v2759 = vrot.slane %v2758, 2
    %v2760 = vadd.f32 %v2758, %v2759
    %v2761 = vrot.slane %v2760, 1
    %v2762 = vadd.f32 %v2760, %v2761
    %v2763 = vrcp.pop 512.0
    %v2764 = vmul.f32 %v2762, %v2763
    %v2765 = vsub.f32 %v2438, %v2764
    %v2766 = vsub.f32 %v2441, %v2764
    %v2767 = vsub.f32 %v2446, %v2764
    %v2768 = vsub.f32 %v2449, %v2764
    %v2769 = vsub.f32 %v2454, %v2764
    %v2770 = vsub.f32 %v2457, %v2764
    %v2771 = vsub.f32 %v2462, %v2764
    %v2772 = vsub.f32 %v2465, %v2764
    %v2773 = vsub.f32 %v2470, %v2764
    %v2774 = vsub.f32 %v2473, %v2764
    %v2775 = vsub.f32 %v2478, %v2764
    %v2776 = vsub.f32 %v2481, %v2764
    %v2777 = vsub.f32 %v2486, %v2764
    %v2778 = vsub.f32 %v2489, %v2764
    %v2779 = vsub.f32 %v2494, %v2764
    %v2780 = vsub.f32 %v2497, %v2764
    %v2781 = vsub.f32 %v2502, %v2764
    %v2782 = vsub.f32 %v2505, %v2764
    %v2783 = vsub.f32 %v2510, %v2764
    %v2784 = vsub.f32 %v2513, %v2764
    %v2785 = vsub.f32 %v2518, %v2764
    %v2786 = vsub.f32 %v2521, %v2764
    %v2787 = vsub.f32 %v2526, %v2764
    %v2788 = vsub.f32 %v2529, %v2764
    %v2789 = vsub.f32 %v2534, %v2764
    %v2790 = vsub.f32 %v2537, %v2764
    %v2791 = vsub.f32 %v2542, %v2764
    %v2792 = vsub.f32 %v2545, %v2764
    %v2793 = vsub.f32 %v2550, %v2764
    %v2794 = vsub.f32 %v2553, %v2764
    %v2795 = vsub.f32 %v2558, %v2764
    %v2796 = vsub.f32 %v2561, %v2764
    %v2797 = vsub.f32 %v2566, %v2764
    %v2798 = vsub.f32 %v2569, %v2764
    %v2799 = vsub.f32 %v2574, %v2764
    %v2800 = vsub.f32 %v2577, %v2764
    %v2801 = vsub.f32 %v2582, %v2764
    %v2802 = vsub.f32 %v2585, %v2764
    %v2803 = vsub.f32 %v2590, %v2764
    %v2804 = vsub.f32 %v2593, %v2764
    %v2805 = vsub.f32 %v2598, %v2764
    %v2806 = vsub.f32 %v2601, %v2764
    %v2807 = vsub.f32 %v2606, %v2764
    %v2808 = vsub.f32 %v2609, %v2764
    %v2809 = vsub.f32 %v2614, %v2764
    %v2810 = vsub.f32 %v2617, %v2764
    %v2811 = vsub.f32 %v2622, %v2764
    %v2812 = vsub.f32 %v2625, %v2764
    %v2813 = vsub.f32 %v2630, %v2764
    %v2814 = vsub.f32 %v2633, %v2764
    %v2815 = vsub.f32 %v2638, %v2764
    %v2816 = vsub.f32 %v2641, %v2764
    %v2817 = vsub.f32 %v2646, %v2764
    %v2818 = vsub.f32 %v2649, %v2764
    %v2819 = vsub.f32 %v2654, %v2764
    %v2820 = vsub.f32 %v2657, %v2764
    %v2821 = vsub.f32 %v2662, %v2764
    %v2822 = vsub.f32 %v2665, %v2764
    %v2823 = vsub.f32 %v2670, %v2764
    %v2824 = vsub.f32 %v2673, %v2764
    %v2825 = vsub.f32 %v2678, %v2764
    %v2826 = vsub.f32 %v2681, %v2764
    %v2827 = vsub.f32 %v2686, %v2764
    %v2828 = vsub.f32 %v2689, %v2764
    %v2829 = vmul.f32 %v2765, %v2765
    %v2830 = vmul.f32 %v2766, %v2766
    %v2831 = vmul.f32 %v2767, %v2767
    %v2832 = vmul.f32 %v2768, %v2768
    %v2833 = vmul.f32 %v2769, %v2769
    %v2834 = vmul.f32 %v2770, %v2770
    %v2835 = vmul.f32 %v2771, %v2771
    %v2836 = vmul.f32 %v2772, %v2772
    %v2837 = vmul.f32 %v2773, %v2773
    %v2838 = vmul.f32 %v2774, %v2774
    %v2839 = vmul.f32 %v2775, %v2775
    %v2840 = vmul.f32 %v2776, %v2776
    %v2841 = vmul.f32 %v2777, %v2777
    %v2842 = vmul.f32 %v2778, %v2778
    %v2843 = vmul.f32 %v2779, %v2779
    %v2844 = vmul.f32 %v2780, %v2780
    %v2845 = vmul.f32 %v2781, %v2781
    %v2846 = vmul.f32 %v2782, %v2782
    %v2847 = vmul.f32 %v2783, %v2783
    %v2848 = vmul.f32 %v2784, %v2784
    %v2849 = vmul.f32 %v2785, %v2785
    %v2850 = vmul.f32 %v2786, %v2786
    %v2851 = vmul.f32 %v2787, %v2787
    %v2852 = vmul.f32 %v2788, %v2788
    %v2853 = vmul.f32 %v2789, %v2789
    %v2854 = vmul.f32 %v2790, %v2790
    %v2855 = vmul.f32 %v2791, %v2791
    %v2856 = vmul.f32 %v2792, %v2792
    %v2857 = vmul.f32 %v2793, %v2793
    %v2858 = vmul.f32 %v2794, %v2794
    %v2859 = vmul.f32 %v2795, %v2795
    %v2860 = vmul.f32 %v2796, %v2796
    %v2861 = vmul.f32 %v2797, %v2797
    %v2862 = vmul.f32 %v2798, %v2798
    %v2863 = vmul.f32 %v2799, %v2799
    %v2864 = vmul.f32 %v2800, %v2800
    %v2865 = vmul.f32 %v2801, %v2801
    %v2866 = vmul.f32 %v2802, %v2802
    %v2867 = vmul.f32 %v2803, %v2803
    %v2868 = vmul.f32 %v2804, %v2804
    %v2869 = vmul.f32 %v2805, %v2805
    %v2870 = vmul.f32 %v2806, %v2806
    %v2871 = vmul.f32 %v2807, %v2807
    %v2872 = vmul.f32 %v2808, %v2808
    %v2873 = vmul.f32 %v2809, %v2809
    %v2874 = vmul.f32 %v2810, %v2810
    %v2875 = vmul.f32 %v2811, %v2811
    %v2876 = vmul.f32 %v2812, %v2812
    %v2877 = vmul.f32 %v2813, %v2813
    %v2878 = vmul.f32 %v2814, %v2814
    %v2879 = vmul.f32 %v2815, %v2815
    %v2880 = vmul.f32 %v2816, %v2816
    %v2881 = vmul.f32 %v2817, %v2817
    %v2882 = vmul.f32 %v2818, %v2818
    %v2883 = vmul.f32 %v2819, %v2819
    %v2884 = vmul.f32 %v2820, %v2820
    %v2885 = vmul.f32 %v2821, %v2821
    %v2886 = vmul.f32 %v2822, %v2822
    %v2887 = vmul.f32 %v2823, %v2823
    %v2888 = vmul.f32 %v2824, %v2824
    %v2889 = vmul.f32 %v2825, %v2825
    %v2890 = vmul.f32 %v2826, %v2826
    %v2891 = vmul.f32 %v2827, %v2827
    %v2892 = vmul.f32 %v2828, %v2828
    %v2893 = vadd.f32 %v2829, %v2830
    %v2894 = vadd.f32 %v2893, %v2831
    %v2895 = vadd.f32 %v2894, %v2832
    %v2896 = vadd.f32 %v2895, %v2833
    %v2897 = vadd.f32 %v2896, %v2834
    %v2898 = vadd.f32 %v2897, %v2835
    %v2899 = vadd.f32 %v2898, %v2836
    %v2900 = vadd.f32 %v2899, %v2837
    %v2901 = vadd.f32 %v2900, %v2838
    %v2902 = vadd.f32 %v2901, %v2839
    %v2903 = vadd.f32 %v2902, %v2840
    %v2904 = vadd.f32 %v2903, %v2841
    %v2905 = vadd.f32 %v2904, %v2842
    %v2906 = vadd.f32 %v2905, %v2843
    %v2907 = vadd.f32 %v2906, %v2844
    %v2908 = vadd.f32 %v2907, %v2845
    %v2909 = vadd.f32 %v2908, %v2846
    %v2910 = vadd.f32 %v2909, %v2847
    %v2911 = vadd.f32 %v2910, %v2848
    %v2912 = vadd.f32 %v2911, %v2849
    %v2913 = vadd.f32 %v2912, %v2850
    %v2914 = vadd.f32 %v2913, %v2851
    %v2915 = vadd.f32 %v2914, %v2852
    %v2916 = vadd.f32 %v2915, %v2853
    %v2917 = vadd.f32 %v2916, %v2854
    %v2918 = vadd.f32 %v2917, %v2855
    %v2919 = vadd.f32 %v2918, %v2856
    %v2920 = vadd.f32 %v2919, %v2857
    %v2921 = vadd.f32 %v2920, %v2858
    %v2922 = vadd.f32 %v2921, %v2859
    %v2923 = vadd.f32 %v2922, %v2860
    %v2924 = vadd.f32 %v2923, %v2861
    %v2925 = vadd.f32 %v2924, %v2862
    %v2926 = vadd.f32 %v2925, %v2863
    %v2927 = vadd.f32 %v2926, %v2864
    %v2928 = vadd.f32 %v2927, %v2865
    %v2929 = vadd.f32 %v2928, %v2866
    %v2930 = vadd.f32 %v2929, %v2867
    %v2931 = vadd.f32 %v2930, %v2868
    %v2932 = vadd.f32 %v2931, %v2869
    %v2933 = vadd.f32 %v2932, %v2870
    %v2934 = vadd.f32 %v2933, %v2871
    %v2935 = vadd.f32 %v2934, %v2872
    %v2936 = vadd.f32 %v2935, %v2873
    %v2937 = vadd.f32 %v2936, %v2874
    %v2938 = vadd.f32 %v2937, %v2875
    %v2939 = vadd.f32 %v2938, %v2876
    %v2940 = vadd.f32 %v2939, %v2877
    %v2941 = vadd.f32 %v2940, %v2878
    %v2942 = vadd.f32 %v2941, %v2879
    %v2943 = vadd.f32 %v2942, %v2880
    %v2944 = vadd.f32 %v2943, %v2881
    %v2945 = vadd.f32 %v2944, %v2882
    %v2946 = vadd.f32 %v2945, %v2883
    %v2947 = vadd.f32 %v2946, %v2884
    %v2948 = vadd.f32 %v2947, %v2885
    %v2949 = vadd.f32 %v2948, %v2886
    %v2950 = vadd.f32 %v2949, %v2887
    %v2951 = vadd.f32 %v2950, %v2888
    %v2952 = vadd.f32 %v2951, %v2889
    %v2953 = vadd.f32 %v2952, %v2890
    %v2954 = vadd.f32 %v2953, %v2891
    %v2955 = vadd.f32 %v2954, %v2892
    %v2956 = vrot.slane %v2955, 4
    %v2957 = vadd.f32 %v2955, %v2956
    %v2958 = vrot.slane %v2957, 2
    %v2959 = vadd.f32 %v2957, %v2958
    %v2960 = vrot.slane %v2959, 1
    %v2961 = vadd.f32 %v2959, %v2960
    %v2962 = vmul.f32 %v2961, %v2763
    %v2963 = vadd.f32 %v2962, 1e-05
    %v2964 = vrsqrt.pop %v2963
    %v2965 = vmul.f32 %v2692, %v2964
    %v2967 = vlaneseq
    %v2968 = vshrl.u32 %v2967, 7
    %v2969 = vsub.s32 0, %v2968
    %v2970 = vrot.slane %v2965, %v2969
    %v2972 = vmul.f32 %v2765, %v2970
    %v2973 = vmul.f32 %v2766, %v2970
    %v2974 = vmul.f32 %v2767, %v2970
    %v2975 = vmul.f32 %v2768, %v2970
    %v2976 = vmul.f32 %v2769, %v2970
    %v2977 = vmul.f32 %v2770, %v2970
    %v2978 = vmul.f32 %v2771, %v2970
    %v2979 = vmul.f32 %v2772, %v2970
    %v2980 = vmul.f32 %v2773, %v2970
    %v2981 = vmul.f32 %v2774, %v2970
    %v2982 = vmul.f32 %v2775, %v2970
    %v2983 = vmul.f32 %v2776, %v2970
    %v2984 = vmul.f32 %v2777, %v2970
    %v2985 = vmul.f32 %v2778, %v2970
    %v2986 = vmul.f32 %v2779, %v2970
    %v2987 = vmul.f32 %v2780, %v2970
    %v2988 = vmul.f32 %v2781, %v2970
    %v2989 = vmul.f32 %v2782, %v2970
    %v2990 = vmul.f32 %v2783, %v2970
    %v2991 = vmul.f32 %v2784, %v2970
    %v2992 = vmul.f32 %v2785, %v2970
    %v2993 = vmul.f32 %v2786, %v2970
    %v2994 = vmul.f32 %v2787, %v2970
    %v2995 = vmul.f32 %v2788, %v2970
    %v2996 = vmul.f32 %v2789, %v2970
    %v2997 = vmul.f32 %v2790, %v2970
    %v2998 = vmul.f32 %v2791, %v2970
    %v2999 = vmul.f32 %v2792, %v2970
    %v3000 = vmul.f32 %v2793, %v2970
    %v3001 = vmul.f32 %v2794, %v2970
    %v3002 = vmul.f32 %v2795, %v2970
    %v3003 = vmul.f32 %v2796, %v2970
    %v3004 = vmul.f32 %v2797, %v2970
    %v3005 = vmul.f32 %v2798, %v2970
    %v3006 = vmul.f32 %v2799, %v2970
    %v3007 = vmul.f32 %v2800, %v2970
    %v3008 = vmul.f32 %v2801, %v2970
    %v3009 = vmul.f32 %v2802, %v2970
    %v3010 = vmul.f32 %v2803, %v2970
    %v3011 = vmul.f32 %v2804, %v2970
    %v3012 = vmul.f32 %v2805, %v2970
    %v3013 = vmul.f32 %v2806, %v2970
    %v3014 = vmul.f32 %v2807, %v2970
    %v3015 = vmul.f32 %v2808, %v2970
    %v3016 = vmul.f32 %v2809, %v2970
    %v3017 = vmul.f32 %v2810, %v2970
    %v3018 = vmul.f32 %v2811, %v2970
    %v3019 = vmul.f32 %v2812, %v2970
    %v3020 = vmul.f32 %v2813, %v2970
    %v3021 = vmul.f32 %v2814, %v2970
    %v3022 = vmul.f32 %v2815, %v2970
    %v3023 = vmul.f32 %v2816, %v2970
    %v3024 = vmul.f32 %v2817, %v2970
    %v3025 = vmul.f32 %v2818, %v2970
    %v3026 = vmul.f32 %v2819, %v2970
    %v3027 = vmul.f32 %v2820, %v2970
    %v3028 = vmul.f32 %v2821, %v2970
    %v3029 = vmul.f32 %v2822, %v2970
    %v3030 = vmul.f32 %v2823, %v2970
    %v3031 = vmul.f32 %v2824, %v2970
    %v3032 = vmul.f32 %v2825, %v2970
    %v3033 = vmul.f32 %v2826, %v2970
    %v3034 = vmul.f32 %v2827, %v2970
    %v3035 = vmul.f32 %v2828, %v2970
    %v3037 = vlaneseq
    %v3038 = vshrl.u32 %v3037, 7
    %v3039 = vsub.s32 0, %v3038
    %v3040 = vrot.slane %v2693, %v3039
    %v3042 = vadd.f32 %v2972, %v3040
    %v3043 = vadd.f32 %v2973, %v3040
    %v3044 = vadd.f32 %v2974, %v3040
    %v3045 = vadd.f32 %v2975, %v3040
    %v3046 = vadd.f32 %v2976, %v3040
    %v3047 = vadd.f32 %v2977, %v3040
    %v3048 = vadd.f32 %v2978, %v3040
    %v3049 = vadd.f32 %v2979, %v3040
    %v3050 = vadd.f32 %v2980, %v3040
    %v3051 = vadd.f32 %v2981, %v3040
    %v3052 = vadd.f32 %v2982, %v3040
    %v3053 = vadd.f32 %v2983, %v3040
    %v3054 = vadd.f32 %v2984, %v3040
    %v3055 = vadd.f32 %v2985, %v3040
    %v3056 = vadd.f32 %v2986, %v3040
    %v3057 = vadd.f32 %v2987, %v3040
    %v3058 = vadd.f32 %v2988, %v3040
    %v3059 = vadd.f32 %v2989, %v3040
    %v3060 = vadd.f32 %v2990, %v3040
    %v3061 = vadd.f32 %v2991, %v3040
    %v3062 = vadd.f32 %v2992, %v3040
    %v3063 = vadd.f32 %v2993, %v3040
    %v3064 = vadd.f32 %v2994, %v3040
    %v3065 = vadd.f32 %v2995, %v3040
    %v3066 = vadd.f32 %v2996, %v3040
    %v3067 = vadd.f32 %v2997, %v3040
    %v3068 = vadd.f32 %v2998, %v3040
    %v3069 = vadd.f32 %v2999, %v3040
    %v3070 = vadd.f32 %v3000, %v3040
    %v3071 = vadd.f32 %v3001, %v3040
    %v3072 = vadd.f32 %v3002, %v3040
    %v3073 = vadd.f32 %v3003, %v3040
    %v3074 = vadd.f32 %v3004, %v3040
    %v3075 = vadd.f32 %v3005, %v3040
    %v3076 = vadd.f32 %v3006, %v3040
    %v3077 = vadd.f32 %v3007, %v3040
    %v3078 = vadd.f32 %v3008, %v3040
    %v3079 = vadd.f32 %v3009, %v3040
    %v3080 = vadd.f32 %v3010, %v3040
    %v3081 = vadd.f32 %v3011, %v3040
    %v3082 = vadd.f32 %v3012, %v3040
    %v3083 = vadd.f32 %v3013, %v3040
    %v3084 = vadd.f32 %v3014, %v3040
    %v3085 = vadd.f32 %v3015, %v3040
    %v3086 = vadd.f32 %v3016, %v3040
    %v3087 = vadd.f32 %v3017, %v3040
    %v3088 = vadd.f32 %v3018, %v3040
    %v3089 = vadd.f32 %v3019, %v3040
    %v3090 = vadd.f32 %v3020, %v3040
    %v3091 = vadd.f32 %v3021, %v3040
    %v3092 = vadd.f32 %v3022, %v3040
    %v3093 = vadd.f32 %v3023, %v3040
    %v3094 = vadd.f32 %v3024, %v3040
    %v3095 = vadd.f32 %v3025, %v3040
    %v3096 = vadd.f32 %v3026, %v3040
    %v3097 = vadd.f32 %v3027, %v3040
    %v3098 = vadd.f32 %v3028, %v3040
    %v3099 = vadd.f32 %v3029, %v3040
    %v3100 = vadd.f32 %v3030, %v3040
    %v3101 = vadd.f32 %v3031, %v3040
    %v3102 = vadd.f32 %v3032, %v3040
    %v3103 = vadd.f32 %v3033, %v3040
    %v3104 = vadd.f32 %v3034, %v3040
    %v3105 = vadd.f32 %v3035, %v3040
    %v3106 = vmax.f32 %v3042, 0.0
    %v3107 = vmax.f32 %v3043, 0.0
    %v3108 = vmax.f32 %v3044, 0.0
    %v3109 = vmax.f32 %v3045, 0.0
    %v3110 = vmax.f32 %v3046, 0.0
    %v3111 = vmax.f32 %v3047, 0.0
    %v3112 = vmax.f32 %v3048, 0.0
    %v3113 = vmax.f32 %v3049, 0.0
    %v3114 = vmax.f32 %v3050, 0.0
    %v3115 = vmax.f32 %v3051, 0.0
    %v3116 = vmax.f32 %v3052, 0.0
    %v3117 = vmax.f32 %v3053, 0.0
    %v3118 = vmax.f32 %v3054, 0.0
    %v3119 = vmax.f32 %v3055, 0.0
    %v3120 = vmax.f32 %v3056, 0.0
    %v3121 = vmax.f32 %v3057, 0.0
    %v3122 = vmax.f32 %v3058, 0.0
    %v3123 = vmax.f32 %v3059, 0.0
    %v3124 = vmax.f32 %v3060, 0.0
    %v3125 = vmax.f32 %v3061, 0.0
    %v3126 = vmax.f32 %v3062, 0.0
    %v3127 = vmax.f32 %v3063, 0.0
    %v3128 = vmax.f32 %v3064, 0.0
    %v3129 = vmax.f32 %v3065, 0.0
    %v3130 = vmax.f32 %v3066, 0.0
    %v3131 = vmax.f32 %v3067, 0.0
    %v3132 = vmax.f32 %v3068, 0.0
    %v3133 = vmax.f32 %v3069, 0.0
    %v3134 = vmax.f32 %v3070, 0.0
    %v3135 = vmax.f32 %v3071, 0.0
    %v3136 = vmax.f32 %v3072, 0.0
    %v3137 = vmax.f32 %v3073, 0.0
    %v3138 = vmax.f32 %v3074, 0.0
    %v3139 = vmax.f32 %v3075, 0.0
    %v3140 = vmax.f32 %v3076, 0.0
    %v3141 = vmax.f32 %v3077, 0.0
    %v3142 = vmax.f32 %v3078, 0.0
    %v3143 = vmax.f32 %v3079, 0.0
    %v3144 = vmax.f32 %v3080, 0.0
    %v3145 = vmax.f32 %v3081, 0.0
    %v3146 = vmax.f32 %v3082, 0.0
    %v3147 = vmax.f32 %v3083, 0.0
    %v3148 = vmax.f32 %v3084, 0.0
    %v3149 = vmax.f32 %v3085, 0.0
    %v3150 = vmax.f32 %v3086, 0.0
    %v3151 = vmax.f32 %v3087, 0.0
    %v3152 = vmax.f32 %v3088, 0.0
    %v3153 = vmax.f32 %v3089, 0.0
    %v3154 = vmax.f32 %v3090, 0.0
    %v3155 = vmax.f32 %v3091, 0.0
    %v3156 = vmax.f32 %v3092, 0.0
    %v3157 = vmax.f32 %v3093, 0.0
    %v3158 = vmax.f32 %v3094, 0.0
    %v3159 = vmax.f32 %v3095, 0.0
    %v3160 = vmax.f32 %v3096, 0.0
    %v3161 = vmax.f32 %v3097, 0.0
    %v3162 = vmax.f32 %v3098, 0.0
    %v3163 = vmax.f32 %v3099, 0.0
    %v3164 = vmax.f32 %v3100, 0.0
    %v3165 = vmax.f32 %v3101, 0.0
    %v3166 = vmax.f32 %v3102, 0.0
    %v3167 = vmax.f32 %v3103, 0.0
    %v3168 = vmax.f32 %v3104, 0.0
    %v3169 = vmax.f32 %v3105, 0.0
    %s3170 = scalar_lea.vmem [#allocation3], 24
    %3171 = vst [vmem:[%s3170 + $0x1] sm:$0xff] %v3106
    %3172 = vst [vmem:[%s3170 + $0x9] sm:$0xff] %v3107
    %3173 = vst [vmem:[%s3170 + $0x19] sm:$0xff] %v3108
    %3174 = vst [vmem:[%s3170 + $0x21] sm:$0xff] %v3109
    %3175 = vst [vmem:[%s3170 + $0x31] sm:$0xff] %v3110
    %3176 = vst [vmem:[%s3170 + $0x39] sm:$0xff] %v3111
    %3177 = vst [vmem:[%s3170 + $0x49] sm:$0xff] %v3112
    %3178 = vst [vmem:[%s3170 + $0x51] sm:$0xff] %v3113
    %3179 = vst [vmem:[%s3170 + $0x61] sm:$0xff] %v3114
    %3180 = vst [vmem:[%s3170 + $0x69] sm:$0xff] %v3115
    %3181 = vst [vmem:[%s3170 + $0x79] sm:$0xff] %v3116
    %3182 = vst [vmem:[%s3170 + $0x81] sm:$0xff] %v3117
    %3183 = vst [vmem:[%s3170 + $0x91] sm:$0xff] %v3118
    %3184 = vst [vmem:[%s3170 + $0x99] sm:$0xff] %v3119
    %3185 = vst [vmem:[%s3170 + $0xa9] sm:$0xff] %v3120
    %3186 = vst [vmem:[%s3170 + $0xb1] sm:$0xff] %v3121
    %3187 = vst [vmem:[%s3170 + $0xc1] sm:$0xff] %v3122
    %3188 = vst [vmem:[%s3170 + $0xc9] sm:$0xff] %v3123
    %3189 = vst [vmem:[%s3170 + $0xd9] sm:$0xff] %v3124
    %3190 = vst [vmem:[%s3170 + $0xe1] sm:$0xff] %v3125
    %3191 = vst [vmem:[%s3170 + $0xf1] sm:$0xff] %v3126
    %3192 = vst [vmem:[%s3170 + $0xf9] sm:$0xff] %v3127
    %3193 = vst [vmem:[%s3170 + $0x109] sm:$0xff] %v3128
    %3194 = vst [vmem:[%s3170 + $0x111] sm:$0xff] %v3129
    %3195 = vst [vmem:[%s3170 + $0x121] sm:$0xff] %v3130
    %3196 = vst [vmem:[%s3170 + $0x129] sm:$0xff] %v3131
    %3197 = vst [vmem:[%s3170 + $0x139] sm:$0xff] %v3132
    %3198 = vst [vmem:[%s3170 + $0x141] sm:$0xff] %v3133
    %3199 = vst [vmem:[%s3170 + $0x151] sm:$0xff] %v3134
    %3200 = vst [vmem:[%s3170 + $0x159] sm:$0xff] %v3135
    %3201 = vst [vmem:[%s3170 + $0x169] sm:$0xff] %v3136
    %3202 = vst [vmem:[%s3170 + $0x171] sm:$0xff] %v3137
    %3203 = vst [vmem:[%s3170 + $0x1b1] sm:$0xff] %v3138
    %3204 = vst [vmem:[%s3170 + $0x1b9] sm:$0xff] %v3139
    %3205 = vst [vmem:[%s3170 + $0x1c9] sm:$0xff] %v3140
    %3206 = vst [vmem:[%s3170 + $0x1d1] sm:$0xff] %v3141
    %3207 = vst [vmem:[%s3170 + $0x1e1] sm:$0xff] %v3142
    %3208 = vst [vmem:[%s3170 + $0x1e9] sm:$0xff] %v3143
    %3209 = vst [vmem:[%s3170 + $0x1f9] sm:$0xff] %v3144
    %3210 = vst [vmem:[%s3170 + $0x201] sm:$0xff] %v3145
    %3211 = vst [vmem:[%s3170 + $0x211] sm:$0xff] %v3146
    %3212 = vst [vmem:[%s3170 + $0x219] sm:$0xff] %v3147
    %3213 = vst [vmem:[%s3170 + $0x229] sm:$0xff] %v3148
    %3214 = vst [vmem:[%s3170 + $0x231] sm:$0xff] %v3149
    %3215 = vst [vmem:[%s3170 + $0x241] sm:$0xff] %v3150
    %3216 = vst [vmem:[%s3170 + $0x249] sm:$0xff] %v3151
    %3217 = vst [vmem:[%s3170 + $0x259] sm:$0xff] %v3152
    %3218 = vst [vmem:[%s3170 + $0x261] sm:$0xff] %v3153
    %3219 = vst [vmem:[%s3170 + $0x271] sm:$0xff] %v3154
    %3220 = vst [vmem:[%s3170 + $0x279] sm:$0xff] %v3155
    %3221 = vst [vmem:[%s3170 + $0x289] sm:$0xff] %v3156
    %3222 = vst [vmem:[%s3170 + $0x291] sm:$0xff] %v3157
    %3223 = vst [vmem:[%s3170 + $0x2a1] sm:$0xff] %v3158
    %3224 = vst [vmem:[%s3170 + $0x2a9] sm:$0xff] %v3159
    %3225 = vst [vmem:[%s3170 + $0x2b9] sm:$0xff] %v3160
    %3226 = vst [vmem:[%s3170 + $0x2c1] sm:$0xff] %v3161
    %3227 = vst [vmem:[%s3170 + $0x2d1] sm:$0xff] %v3162
    %3228 = vst [vmem:[%s3170 + $0x2d9] sm:$0xff] %v3163
    %3229 = vst [vmem:[%s3170 + $0x2e9] sm:$0xff] %v3164
    %3230 = vst [vmem:[%s3170 + $0x2f1] sm:$0xff] %v3165
    %3231 = vst [vmem:[%s3170 + $0x301] sm:$0xff] %v3166
    %3232 = vst [vmem:[%s3170 + $0x309] sm:$0xff] %v3167
    %3233 = vst [vmem:[%s3170 + $0x319] sm:$0xff] %v3168
    %3234 = vst [vmem:[%s3170 + $0x321] sm:$0xff] %v3169
    %3235 = vst [vmem:[#allocation3] sm:$0xff] 0.0
    %3236 = vst [vmem:[#allocation3 + $0x8] sm:$0xff] 0.0
    %3237 = vst [vmem:[#allocation3 + $0x10] sm:$0x3] 0.0
    %3238 = vst [vmem:[#allocation3 + $0x1b0] sm:$0xff] 0.0
    %3239 = vst [vmem:[#allocation3 + $0x1b8] sm:$0xff] 0.0
    %3240 = vst [vmem:[#allocation3 + $0x1c0] sm:$0x3] 0.0
    %s3241 = scalar_lea.vmem [#allocation3], 408
    %3242 = vst [vmem:[%s3241] sm:$0xff] 0.0
    %3243 = vst [vmem:[%s3241 + $0x8] sm:$0xff] 0.0
    %3244 = vst [vmem:[%s3241 + $0x10] sm:$0x3] 0.0
    %3245 = vst [vmem:[%s3241 + $0x1b0] sm:$0xff] 0.0
    %3246 = vst [vmem:[%s3241 + $0x1b8] sm:$0xff] 0.0
    %3247 = vst [vmem:[%s3241 + $0x1c0] sm:$0x3] 0.0
    %3248 = vst [vmem:[#allocation3] sm:$0x1] 0.0
    %3249 = vst [vmem:[#allocation3 + $0x18] sm:$0x1] 0.0
    %3250 = vst [vmem:[#allocation3 + $0x30] sm:$0x1] 0.0
    %3251 = vst [vmem:[#allocation3 + $0x48] sm:$0x1] 0.0
    %3252 = vst [vmem:[#allocation3 + $0x60] sm:$0x1] 0.0
    %3253 = vst [vmem:[#allocation3 + $0x78] sm:$0x1] 0.0
    %3254 = vst [vmem:[#allocation3 + $0x90] sm:$0x1] 0.0
    %3255 = vst [vmem:[#allocation3 + $0xa8] sm:$0x1] 0.0
    %3256 = vst [vmem:[#allocation3 + $0xc0] sm:$0x1] 0.0
    %3257 = vst [vmem:[#allocation3 + $0xd8] sm:$0x1] 0.0
    %3258 = vst [vmem:[#allocation3 + $0xf0] sm:$0x1] 0.0
    %3259 = vst [vmem:[#allocation3 + $0x108] sm:$0x1] 0.0
    %3260 = vst [vmem:[#allocation3 + $0x120] sm:$0x1] 0.0
    %3261 = vst [vmem:[#allocation3 + $0x138] sm:$0x1] 0.0
    %3262 = vst [vmem:[#allocation3 + $0x150] sm:$0x1] 0.0
    %3263 = vst [vmem:[#allocation3 + $0x168] sm:$0x1] 0.0
    %3264 = vst [vmem:[#allocation3 + $0x180] sm:$0x1] 0.0
    %3265 = vst [vmem:[#allocation3 + $0x198] sm:$0x1] 0.0
    %3266 = vst [vmem:[#allocation3 + $0x1b0] sm:$0x1] 0.0
    %3267 = vst [vmem:[#allocation3 + $0x1c8] sm:$0x1] 0.0
    %3268 = vst [vmem:[#allocation3 + $0x1e0] sm:$0x1] 0.0
    %3269 = vst [vmem:[#allocation3 + $0x1f8] sm:$0x1] 0.0
    %3270 = vst [vmem:[#allocation3 + $0x210] sm:$0x1] 0.0
    %3271 = vst [vmem:[#allocation3 + $0x228] sm:$0x1] 0.0
    %3272 = vst [vmem:[#allocation3 + $0x240] sm:$0x1] 0.0
    %3273 = vst [vmem:[#allocation3 + $0x258] sm:$0x1] 0.0
    %3274 = vst [vmem:[#allocation3 + $0x270] sm:$0x1] 0.0
    %3275 = vst [vmem:[#allocation3 + $0x288] sm:$0x1] 0.0
    %3276 = vst [vmem:[#allocation3 + $0x2a0] sm:$0x1] 0.0
    %3277 = vst [vmem:[#allocation3 + $0x2b8] sm:$0x1] 0.0
    %3278 = vst [vmem:[#allocation3 + $0x2d0] sm:$0x1] 0.0
    %3279 = vst [vmem:[#allocation3 + $0x2e8] sm:$0x1] 0.0
    %3280 = vst [vmem:[#allocation3 + $0x300] sm:$0x1] 0.0
    %3281 = vst [vmem:[#allocation3 + $0x318] sm:$0x1] 0.0
    %3282 = vst [vmem:[#allocation3 + $0x330] sm:$0x1] 0.0
    %3283 = vst [vmem:[#allocation3 + $0x348] sm:$0x1] 0.0
    %3284 = vst [vmem:[#allocation3 + $0x11] sm:$0x1] 0.0
    %3285 = vst [vmem:[#allocation3 + $0x29] sm:$0x1] 0.0
    %3286 = vst [vmem:[#allocation3 + $0x41] sm:$0x1] 0.0
    %3287 = vst [vmem:[#allocation3 + $0x59] sm:$0x1] 0.0
    %3288 = vst [vmem:[#allocation3 + $0x71] sm:$0x1] 0.0
    %3289 = vst [vmem:[#allocation3 + $0x89] sm:$0x1] 0.0
    %3290 = vst [vmem:[#allocation3 + $0xa1] sm:$0x1] 0.0
    %3291 = vst [vmem:[#allocation3 + $0xb9] sm:$0x1] 0.0
    %3292 = vst [vmem:[#allocation3 + $0xd1] sm:$0x1] 0.0
    %3293 = vst [vmem:[#allocation3 + $0xe9] sm:$0x1] 0.0
    %3294 = vst [vmem:[#allocation3 + $0x101] sm:$0x1] 0.0
    %3295 = vst [vmem:[#allocation3 + $0x119] sm:$0x1] 0.0
    %3296 = vst [vmem:[#allocation3 + $0x131] sm:$0x1] 0.0
    %3297 = vst [vmem:[#allocation3 + $0x149] sm:$0x1] 0.0
    %3298 = vst [vmem:[#allocation3 + $0x161] sm:$0x1] 0.0
    %3299 = vst [vmem:[#allocation3 + $0x179] sm:$0x1] 0.0
    %3300 = vst [vmem:[#allocation3 + $0x191] sm:$0x1] 0.0
    %3301 = vst [vmem:[#allocation3 + $0x1a9] sm:$0x1] 0.0
    %3302 = vst [vmem:[#allocation3 + $0x1c1] sm:$0x1] 0.0
    %3303 = vst [vmem:[#allocation3 + $0x1d9] sm:$0x1] 0.0
    %3304 = vst [vmem:[#allocation3 + $0x1f1] sm:$0x1] 0.0
    %3305 = vst [vmem:[#allocation3 + $0x209] sm:$0x1] 0.0
    %3306 = vst [vmem:[#allocation3 + $0x221] sm:$0x1] 0.0
    %3307 = vst [vmem:[#allocation3 + $0x239] sm:$0x1] 0.0
    %3308 = vst [vmem:[#allocation3 + $0x251] sm:$0x1] 0.0
    %3309 = vst [vmem:[#allocation3 + $0x269] sm:$0x1] 0.0
    %3310 = vst [vmem:[#allocation3 + $0x281] sm:$0x1] 0.0
    %3311 = vst [vmem:[#allocation3 + $0x299] sm:$0x1] 0.0
    %3312 = vst [vmem:[#allocation3 + $0x2b1] sm:$0x1] 0.0
    %3313 = vst [vmem:[#allocation3 + $0x2c9] sm:$0x1] 0.0
    %3314 = vst [vmem:[#allocation3 + $0x2e1] sm:$0x1] 0.0
    %3315 = vst [vmem:[#allocation3 + $0x2f9] sm:$0x1] 0.0
    %3316 = vst [vmem:[#allocation3 + $0x311] sm:$0x1] 0.0
    %3317 = vst [vmem:[#allocation3 + $0x329] sm:$0x1] 0.0
    %3318 = vst [vmem:[#allocation3 + $0x341] sm:$0x1] 0.0
    %3319 = vst [vmem:[#allocation3 + $0x359] sm:$0x1] 0.0
    %v3320 = vld [vmem:[#allocation3] sm:$0xff]
    %v3321 = vld [vmem:[#allocation3 + $0x8] sm:$0xff]
    %v3322 = vld [vmem:[#allocation3 + $0x18] sm:$0xff]
    %v3323 = vld [vmem:[#allocation3 + $0x20] sm:$0xff]
    %v3324 = vld [vmem:[#allocation3 + $0x30] sm:$0xff]
    %v3325 = vld [vmem:[#allocation3 + $0x38] sm:$0xff]
    %v3326 = vld [vmem:[#allocation3 + $0x48] sm:$0xff]
    %v3327 = vld [vmem:[#allocation3 + $0x50] sm:$0xff]
    %v3328 = vld [vmem:[#allocation3 + $0x60] sm:$0xff]
    %v3329 = vld [vmem:[#allocation3 + $0x68] sm:$0xff]
    %v3330 = vld [vmem:[#allocation3 + $0x78] sm:$0xff]
    %v3331 = vld [vmem:[#allocation3 + $0x80] sm:$0xff]
    %v3332 = vld [vmem:[#allocation3 + $0x90] sm:$0xff]
    %v3333 = vld [vmem:[#allocation3 + $0x98] sm:$0xff]
    %v3334 = vld [vmem:[#allocation3 + $0xa8] sm:$0xff]
    %v3335 = vld [vmem:[#allocation3 + $0xb0] sm:$0xff]
    %v3336 = vld [vmem:[#allocation3 + $0xc0] sm:$0xff]
    %v3337 = vld [vmem:[#allocation3 + $0xc8] sm:$0xff]
    %v3338 = vld [vmem:[#allocation3 + $0xd8] sm:$0xff]
    %v3339 = vld [vmem:[#allocation3 + $0xe0] sm:$0xff]
    %v3340 = vld [vmem:[#allocation3 + $0xf0] sm:$0xff]
    %v3341 = vld [vmem:[#allocation3 + $0xf8] sm:$0xff]
    %v3342 = vld [vmem:[#allocation3 + $0x108] sm:$0xff]
    %v3343 = vld [vmem:[#allocation3 + $0x110] sm:$0xff]
    %v3344 = vld [vmem:[#allocation3 + $0x120] sm:$0xff]
    %v3345 = vld [vmem:[#allocation3 + $0x128] sm:$0xff]
    %v3346 = vld [vmem:[#allocation3 + $0x138] sm:$0xff]
    %v3347 = vld [vmem:[#allocation3 + $0x140] sm:$0xff]
    %v3348 = vld [vmem:[#allocation3 + $0x150] sm:$0xff]
    %v3349 = vld [vmem:[#allocation3 + $0x158] sm:$0xff]
    %v3350 = vld [vmem:[#allocation3 + $0x168] sm:$0xff]
    %v3351 = vld [vmem:[#allocation3 + $0x170] sm:$0xff]
    %v3352 = vld [vmem:[#allocation3 + $0x180] sm:$0xff]
    %v3353 = vld [vmem:[#allocation3 + $0x188] sm:$0xff]
    %v3354 = vld [vmem:[#allocation3 + $0x198] sm:$0xff]
    %v3355 = vld [vmem:[#allocation3 + $0x1a0] sm:$0xff]
    %v3356 = vld [vmem:[#allocation3 + $0x1b0] sm:$0xff]
    %v3357 = vld [vmem:[#allocation3 + $0x1b8] sm:$0xff]
    %v3358 = vld [vmem:[#allocation3 + $0x1c8] sm:$0xff]
    %v3359 = vld [vmem:[#allocation3 + $0x1d0] sm:$0xff]
    %v3360 = vld [vmem:[#allocation3 + $0x1e0] sm:$0xff]
    %v3361 = vld [vmem:[#allocation3 + $0x1e8] sm:$0xff]
    %v3362 = vld [vmem:[#allocation3 + $0x1f8] sm:$0xff]
    %v3363 = vld [vmem:[#allocation3 + $0x200] sm:$0xff]
    %v3364 = vld [vmem:[#allocation3 + $0x210] sm:$0xff]
    %v3365 = vld [vmem:[#allocation3 + $0x218] sm:$0xff]
    %v3366 = vld [vmem:[#allocation3 + $0x228] sm:$0xff]
    %v3367 = vld [vmem:[#allocation3 + $0x230] sm:$0xff]
    %v3368 = vld [vmem:[#allocation3 + $0x240] sm:$0xff]
    %v3369 = vld [vmem:[#allocation3 + $0x248] sm:$0xff]
    %v3370 = vld [vmem:[#allocation3 + $0x258] sm:$0xff]
    %v3371 = vld [vmem:[#allocation3 + $0x260] sm:$0xff]
    %v3372 = vld [vmem:[#allocation3 + $0x270] sm:$0xff]
    %v3373 = vld [vmem:[#allocation3 + $0x278] sm:$0xff]
    %v3374 = vld [vmem:[#allocation3 + $0x288] sm:$0xff]
    %v3375 = vld [vmem:[#allocation3 + $0x290] sm:$0xff]
    %v3376 = vld [vmem:[#allocation3 + $0x2a0] sm:$0xff]
    %v3377 = vld [vmem:[#allocation3 + $0x2a8] sm:$0xff]
    %v3378 = vld [vmem:[#allocation3 + $0x2b8] sm:$0xff]
    %v3379 = vld [vmem:[#allocation3 + $0x2c0] sm:$0xff]
    %v3380 = vld [vmem:[#allocation3 + $0x2d0] sm:$0xff]
    %v3381 = vld [vmem:[#allocation3 + $0x2d8] sm:$0xff]
    %v3382 = vld [vmem:[#allocation3 + $0x2e8] sm:$0xff]
    %v3383 = vld [vmem:[#allocation3 + $0x2f0] sm:$0xff]
    %v3384 = vld [vmem:[#allocation3 + $0x300] sm:$0xff]
    %v3385 = vld [vmem:[#allocation3 + $0x308] sm:$0xff]
    %v3386 = vld [vmem:[#allocation3 + $0x318] sm:$0xff]
    %v3387 = vld [vmem:[#allocation3 + $0x320] sm:$0xff]
    %v3388 = vld [vmem:[#allocation3 + $0x330] sm:$0xff]
    %v3389 = vld [vmem:[#allocation3 + $0x338] sm:$0xff]
    %v3390 = vld [vmem:[#allocation3 + $0x348] sm:$0xff]
    %v3391 = vld [vmem:[#allocation3 + $0x350] sm:$0xff]
    %v3392 = vpack.c.bf16 %v3321, %v3320
    %v3393 = vpack.c.bf16 %v3323, %v3322
    %v3394 = vpack.c.bf16 %v3325, %v3324
    %v3395 = vpack.c.bf16 %v3327, %v3326
    %v3396 = vpack.c.bf16 %v3329, %v3328
    %v3397 = vpack.c.bf16 %v3331, %v3330
    %v3398 = vpack.c.bf16 %v3333, %v3332
    %v3399 = vpack.c.bf16 %v3335, %v3334
    %v3400 = vpack.c.bf16 %v3337, %v3336
    %v3401 = vpack.c.bf16 %v3339, %v3338
    %v3402 = vpack.c.bf16 %v3341, %v3340
    %v3403 = vpack.c.bf16 %v3343, %v3342
    %v3404 = vpack.c.bf16 %v3345, %v3344
    %v3405 = vpack.c.bf16 %v3347, %v3346
    %v3406 = vpack.c.bf16 %v3349, %v3348
    %v3407 = vpack.c.bf16 %v3351, %v3350
    %v3408 = vpack.c.bf16 %v3353, %v3352
    %v3409 = vpack.c.bf16 %v3355, %v3354
    %v3410 = vpack.c.bf16 %v3357, %v3356
    %v3411 = vpack.c.bf16 %v3359, %v3358
    %v3412 = vpack.c.bf16 %v3361, %v3360
    %v3413 = vpack.c.bf16 %v3363, %v3362
    %v3414 = vpack.c.bf16 %v3365, %v3364
    %v3415 = vpack.c.bf16 %v3367, %v3366
    %v3416 = vpack.c.bf16 %v3369, %v3368
    %v3417 = vpack.c.bf16 %v3371, %v3370
    %v3418 = vpack.c.bf16 %v3373, %v3372
    %v3419 = vpack.c.bf16 %v3375, %v3374
    %v3420 = vpack.c.bf16 %v3377, %v3376
    %v3421 = vpack.c.bf16 %v3379, %v3378
    %v3422 = vpack.c.bf16 %v3381, %v3380
    %v3423 = vpack.c.bf16 %v3383, %v3382
    %v3424 = vpack.c.bf16 %v3385, %v3384
    %v3425 = vpack.c.bf16 %v3387, %v3386
    %v3426 = vpack.c.bf16 %v3389, %v3388
    %v3427 = vpack.c.bf16 %v3391, %v3390
    %v3428 = vld [vmem:[#allocation3 + $0x1] sm:$0xff]
    %v3429 = vld [vmem:[#allocation3 + $0x9] sm:$0xff]
    %v3430 = vld [vmem:[#allocation3 + $0x19] sm:$0xff]
    %v3431 = vld [vmem:[#allocation3 + $0x21] sm:$0xff]
    %v3432 = vld [vmem:[#allocation3 + $0x31] sm:$0xff]
    %v3433 = vld [vmem:[#allocation3 + $0x39] sm:$0xff]
    %v3434 = vld [vmem:[#allocation3 + $0x49] sm:$0xff]
    %v3435 = vld [vmem:[#allocation3 + $0x51] sm:$0xff]
    %v3436 = vld [vmem:[#allocation3 + $0x61] sm:$0xff]
    %v3437 = vld [vmem:[#allocation3 + $0x69] sm:$0xff]
    %v3438 = vld [vmem:[#allocation3 + $0x79] sm:$0xff]
    %v3439 = vld [vmem:[#allocation3 + $0x81] sm:$0xff]
    %v3440 = vld [vmem:[#allocation3 + $0x91] sm:$0xff]
    %v3441 = vld [vmem:[#allocation3 + $0x99] sm:$0xff]
    %v3442 = vld [vmem:[#allocation3 + $0xa9] sm:$0xff]
    %v3443 = vld [vmem:[#allocation3 + $0xb1] sm:$0xff]
    %v3444 = vld [vmem:[#allocation3 + $0xc1] sm:$0xff]
    %v3445 = vld [vmem:[#allocation3 + $0xc9] sm:$0xff]
    %v3446 = vld [vmem:[#allocation3 + $0xd9] sm:$0xff]
    %v3447 = vld [vmem:[#allocation3 + $0xe1] sm:$0xff]
    %v3448 = vld [vmem:[#allocation3 + $0xf1] sm:$0xff]
    %v3449 = vld [vmem:[#allocation3 + $0xf9] sm:$0xff]
    %v3450 = vld [vmem:[#allocation3 + $0x109] sm:$0xff]
    %v3451 = vld [vmem:[#allocation3 + $0x111] sm:$0xff]
    %v3452 = vld [vmem:[#allocation3 + $0x121] sm:$0xff]
    %v3453 = vld [vmem:[#allocation3 + $0x129] sm:$0xff]
    %v3454 = vld [vmem:[#allocation3 + $0x139] sm:$0xff]
    %v3455 = vld [vmem:[#allocation3 + $0x141] sm:$0xff]
    %v3456 = vld [vmem:[#allocation3 + $0x151] sm:$0xff]
    %v3457 = vld [vmem:[#allocation3 + $0x159] sm:$0xff]
    %v3458 = vld [vmem:[#allocation3 + $0x169] sm:$0xff]
    %v3459 = vld [vmem:[#allocation3 + $0x171] sm:$0xff]
    %v3460 = vld [vmem:[#allocation3 + $0x181] sm:$0xff]
    %v3461 = vld [vmem:[#allocation3 + $0x189] sm:$0xff]
    %v3462 = vld [vmem:[#allocation3 + $0x199] sm:$0xff]
    %v3463 = vld [vmem:[#allocation3 + $0x1a1] sm:$0xff]
    %v3464 = vld [vmem:[#allocation3 + $0x1b1] sm:$0xff]
    %v3465 = vld [vmem:[#allocation3 + $0x1b9] sm:$0xff]
    %v3466 = vld [vmem:[#allocation3 + $0x1c9] sm:$0xff]
    %v3467 = vld [vmem:[#allocation3 + $0x1d1] sm:$0xff]
    %v3468 = vld [vmem:[#allocation3 + $0x1e1] sm:$0xff]
    %v3469 = vld [vmem:[#allocation3 + $0x1e9] sm:$0xff]
    %v3470 = vld [vmem:[#allocation3 + $0x1f9] sm:$0xff]
    %v3471 = vld [vmem:[#allocation3 + $0x201] sm:$0xff]
    %v3472 = vld [vmem:[#allocation3 + $0x211] sm:$0xff]
    %v3473 = vld [vmem:[#allocation3 + $0x219] sm:$0xff]
    %v3474 = vld [vmem:[#allocation3 + $0x229] sm:$0xff]
    %v3475 = vld [vmem:[#allocation3 + $0x231] sm:$0xff]
    %v3476 = vld [vmem:[#allocation3 + $0x241] sm:$0xff]
    %v3477 = vld [vmem:[#allocation3 + $0x249] sm:$0xff]
    %v3478 = vld [vmem:[#allocation3 + $0x259] sm:$0xff]
    %v3479 = vld [vmem:[#allocation3 + $0x261] sm:$0xff]
    %v3480 = vld [vmem:[#allocation3 + $0x271] sm:$0xff]
    %v3481 = vld [vmem:[#allocation3 + $0x279] sm:$0xff]
    %v3482 = vld [vmem:[#allocation3 + $0x289] sm:$0xff]
    %v3483 = vld [vmem:[#allocation3 + $0x291] sm:$0xff]
    %v3484 = vld [vmem:[#allocation3 + $0x2a1] sm:$0xff]
    %v3485 = vld [vmem:[#allocation3 + $0x2a9] sm:$0xff]
    %v3486 = vld [vmem:[#allocation3 + $0x2b9] sm:$0xff]
    %v3487 = vld [vmem:[#allocation3 + $0x2c1] sm:$0xff]
    %v3488 = vld [vmem:[#allocation3 + $0x2d1] sm:$0xff]
    %v3489 = vld [vmem:[#allocation3 + $0x2d9] sm:$0xff]
    %v3490 = vld [vmem:[#allocation3 + $0x2e9] sm:$0xff]
    %v3491 = vld [vmem:[#allocation3 + $0x2f1] sm:$0xff]
    %v3492 = vld [vmem:[#allocation3 + $0x301] sm:$0xff]
    %v3493 = vld [vmem:[#allocation3 + $0x309] sm:$0xff]
    %v3494 = vld [vmem:[#allocation3 + $0x319] sm:$0xff]
    %v3495 = vld [vmem:[#allocation3 + $0x321] sm:$0xff]
    %v3496 = vld [vmem:[#allocation3 + $0x331] sm:$0xff]
    %v3497 = vld [vmem:[#allocation3 + $0x339] sm:$0xff]
    %v3498 = vld [vmem:[#allocation3 + $0x349] sm:$0xff]
    %v3499 = vld [vmem:[#allocation3 + $0x351] sm:$0xff]
    %v3500 = vpack.c.bf16 %v3429, %v3428
    %v3501 = vpack.c.bf16 %v3431, %v3430
    %v3502 = vpack.c.bf16 %v3433, %v3432
    %v3503 = vpack.c.bf16 %v3435, %v3434
    %v3504 = vpack.c.bf16 %v3437, %v3436
    %v3505 = vpack.c.bf16 %v3439, %v3438
    %v3506 = vpack.c.bf16 %v3441, %v3440
    %v3507 = vpack.c.bf16 %v3443, %v3442
    %v3508 = vpack.c.bf16 %v3445, %v3444
    %v3509 = vpack.c.bf16 %v3447, %v3446
    %v3510 = vpack.c.bf16 %v3449, %v3448
    %v3511 = vpack.c.bf16 %v3451, %v3450
    %v3512 = vpack.c.bf16 %v3453, %v3452
    %v3513 = vpack.c.bf16 %v3455, %v3454
    %v3514 = vpack.c.bf16 %v3457, %v3456
    %v3515 = vpack.c.bf16 %v3459, %v3458
    %v3516 = vpack.c.bf16 %v3461, %v3460
    %v3517 = vpack.c.bf16 %v3463, %v3462
    %v3518 = vpack.c.bf16 %v3465, %v3464
    %v3519 = vpack.c.bf16 %v3467, %v3466
    %v3520 = vpack.c.bf16 %v3469, %v3468
    %v3521 = vpack.c.bf16 %v3471, %v3470
    %v3522 = vpack.c.bf16 %v3473, %v3472
    %v3523 = vpack.c.bf16 %v3475, %v3474
    %v3524 = vpack.c.bf16 %v3477, %v3476
    %v3525 = vpack.c.bf16 %v3479, %v3478
    %v3526 = vpack.c.bf16 %v3481, %v3480
    %v3527 = vpack.c.bf16 %v3483, %v3482
    %v3528 = vpack.c.bf16 %v3485, %v3484
    %v3529 = vpack.c.bf16 %v3487, %v3486
    %v3530 = vpack.c.bf16 %v3489, %v3488
    %v3531 = vpack.c.bf16 %v3491, %v3490
    %v3532 = vpack.c.bf16 %v3493, %v3492
    %v3533 = vpack.c.bf16 %v3495, %v3494
    %v3534 = vpack.c.bf16 %v3497, %v3496
    %v3535 = vpack.c.bf16 %v3499, %v3498
    %v3536 = vld [vmem:[#allocation3 + $0x2] sm:$0xff]
    %v3537 = vld [vmem:[#allocation3 + $0xa] sm:$0xff]
    %v3538 = vld [vmem:[#allocation3 + $0x1a] sm:$0xff]
    %v3539 = vld [vmem:[#allocation3 + $0x22] sm:$0xff]
    %v3540 = vld [vmem:[#allocation3 + $0x32] sm:$0xff]
    %v3541 = vld [vmem:[#allocation3 + $0x3a] sm:$0xff]
    %v3542 = vld [vmem:[#allocation3 + $0x4a] sm:$0xff]
    %v3543 = vld [vmem:[#allocation3 + $0x52] sm:$0xff]
    %v3544 = vld [vmem:[#allocation3 + $0x62] sm:$0xff]
    %v3545 = vld [vmem:[#allocation3 + $0x6a] sm:$0xff]
    %v3546 = vld [vmem:[#allocation3 + $0x7a] sm:$0xff]
    %v3547 = vld [vmem:[#allocation3 + $0x82] sm:$0xff]
    %v3548 = vld [vmem:[#allocation3 + $0x92] sm:$0xff]
    %v3549 = vld [vmem:[#allocation3 + $0x9a] sm:$0xff]
    %v3550 = vld [vmem:[#allocation3 + $0xaa] sm:$0xff]
    %v3551 = vld [vmem:[#allocation3 + $0xb2] sm:$0xff]
    %v3552 = vld [vmem:[#allocation3 + $0xc2] sm:$0xff]
    %v3553 = vld [vmem:[#allocation3 + $0xca] sm:$0xff]
    %v3554 = vld [vmem:[#allocation3 + $0xda] sm:$0xff]
    %v3555 = vld [vmem:[#allocation3 + $0xe2] sm:$0xff]
    %v3556 = vld [vmem:[#allocation3 + $0xf2] sm:$0xff]
    %v3557 = vld [vmem:[#allocation3 + $0xfa] sm:$0xff]
    %v3558 = vld [vmem:[#allocation3 + $0x10a] sm:$0xff]
    %v3559 = vld [vmem:[#allocation3 + $0x112] sm:$0xff]
    %v3560 = vld [vmem:[#allocation3 + $0x122] sm:$0xff]
    %v3561 = vld [vmem:[#allocation3 + $0x12a] sm:$0xff]
    %v3562 = vld [vmem:[#allocation3 + $0x13a] sm:$0xff]
    %v3563 = vld [vmem:[#allocation3 + $0x142] sm:$0xff]
    %v3564 = vld [vmem:[#allocation3 + $0x152] sm:$0xff]
    %v3565 = vld [vmem:[#allocation3 + $0x15a] sm:$0xff]
    %v3566 = vld [vmem:[#allocation3 + $0x16a] sm:$0xff]
    %v3567 = vld [vmem:[#allocation3 + $0x172] sm:$0xff]
    %v3568 = vld [vmem:[#allocation3 + $0x182] sm:$0xff]
    %v3569 = vld [vmem:[#allocation3 + $0x18a] sm:$0xff]
    %v3570 = vld [vmem:[#allocation3 + $0x19a] sm:$0xff]
    %v3571 = vld [vmem:[#allocation3 + $0x1a2] sm:$0xff]
    %v3572 = vld [vmem:[#allocation3 + $0x1b2] sm:$0xff]
    %v3573 = vld [vmem:[#allocation3 + $0x1ba] sm:$0xff]
    %v3574 = vld [vmem:[#allocation3 + $0x1ca] sm:$0xff]
    %v3575 = vld [vmem:[#allocation3 + $0x1d2] sm:$0xff]
    %v3576 = vld [vmem:[#allocation3 + $0x1e2] sm:$0xff]
    %v3577 = vld [vmem:[#allocation3 + $0x1ea] sm:$0xff]
    %v3578 = vld [vmem:[#allocation3 + $0x1fa] sm:$0xff]
    %v3579 = vld [vmem:[#allocation3 + $0x202] sm:$0xff]
    %v3580 = vld [vmem:[#allocation3 + $0x212] sm:$0xff]
    %v3581 = vld [vmem:[#allocation3 + $0x21a] sm:$0xff]
    %v3582 = vld [vmem:[#allocation3 + $0x22a] sm:$0xff]
    %v3583 = vld [vmem:[#allocation3 + $0x232] sm:$0xff]
    %v3584 = vld [vmem:[#allocation3 + $0x242] sm:$0xff]
    %v3585 = vld [vmem:[#allocation3 + $0x24a] sm:$0xff]
    %v3586 = vld [vmem:[#allocation3 + $0x25a] sm:$0xff]
    %v3587 = vld [vmem:[#allocation3 + $0x262] sm:$0xff]
    %v3588 = vld [vmem:[#allocation3 + $0x272] sm:$0xff]
    %v3589 = vld [vmem:[#allocation3 + $0x27a] sm:$0xff]
    %v3590 = vld [vmem:[#allocation3 + $0x28a] sm:$0xff]
    %v3591 = vld [vmem:[#allocation3 + $0x292] sm:$0xff]
    %v3592 = vld [vmem:[#allocation3 + $0x2a2] sm:$0xff]
    %v3593 = vld [vmem:[#allocation3 + $0x2aa] sm:$0xff]
    %v3594 = vld [vmem:[#allocation3 + $0x2ba] sm:$0xff]
    %v3595 = vld [vmem:[#allocation3 + $0x2c2] sm:$0xff]
    %v3596 = vld [vmem:[#allocation3 + $0x2d2] sm:$0xff]
    %v3597 = vld [vmem:[#allocation3 + $0x2da] sm:$0xff]
    %v3598 = vld [vmem:[#allocation3 + $0x2ea] sm:$0xff]
    %v3599 = vld [vmem:[#allocation3 + $0x2f2] sm:$0xff]
    %v3600 = vld [vmem:[#allocation3 + $0x302] sm:$0xff]
    %v3601 = vld [vmem:[#allocation3 + $0x30a] sm:$0xff]
    %v3602 = vld [vmem:[#allocation3 + $0x31a] sm:$0xff]
    %v3603 = vld [vmem:[#allocation3 + $0x322] sm:$0xff]
    %v3604 = vld [vmem:[#allocation3 + $0x332] sm:$0xff]
    %v3605 = vld [vmem:[#allocation3 + $0x33a] sm:$0xff]
    %v3606 = vld [vmem:[#allocation3 + $0x34a] sm:$0xff]
    %v3607 = vld [vmem:[#allocation3 + $0x352] sm:$0xff]
    %v3608 = vpack.c.bf16 %v3537, %v3536
    %v3609 = vpack.c.bf16 %v3539, %v3538
    %v3610 = vpack.c.bf16 %v3541, %v3540
    %v3611 = vpack.c.bf16 %v3543, %v3542
    %v3612 = vpack.c.bf16 %v3545, %v3544
    %v3613 = vpack.c.bf16 %v3547, %v3546
    %v3614 = vpack.c.bf16 %v3549, %v3548
    %v3615 = vpack.c.bf16 %v3551, %v3550
    %v3616 = vpack.c.bf16 %v3553, %v3552
    %v3617 = vpack.c.bf16 %v3555, %v3554
    %v3618 = vpack.c.bf16 %v3557, %v3556
    %v3619 = vpack.c.bf16 %v3559, %v3558
    %v3620 = vpack.c.bf16 %v3561, %v3560
    %v3621 = vpack.c.bf16 %v3563, %v3562
    %v3622 = vpack.c.bf16 %v3565, %v3564
    %v3623 = vpack.c.bf16 %v3567, %v3566
    %v3624 = vpack.c.bf16 %v3569, %v3568
    %v3625 = vpack.c.bf16 %v3571, %v3570
    %v3626 = vpack.c.bf16 %v3573, %v3572
    %v3627 = vpack.c.bf16 %v3575, %v3574
    %v3628 = vpack.c.bf16 %v3577, %v3576
    %v3629 = vpack.c.bf16 %v3579, %v3578
    %v3630 = vpack.c.bf16 %v3581, %v3580
    %v3631 = vpack.c.bf16 %v3583, %v3582
    %v3632 = vpack.c.bf16 %v3585, %v3584
    %v3633 = vpack.c.bf16 %v3587, %v3586
    %v3634 = vpack.c.bf16 %v3589, %v3588
    %v3635 = vpack.c.bf16 %v3591, %v3590
    %v3636 = vpack.c.bf16 %v3593, %v3592
    %v3637 = vpack.c.bf16 %v3595, %v3594
    %v3638 = vpack.c.bf16 %v3597, %v3596
    %v3639 = vpack.c.bf16 %v3599, %v3598
    %v3640 = vpack.c.bf16 %v3601, %v3600
    %v3641 = vpack.c.bf16 %v3603, %v3602
    %v3642 = vpack.c.bf16 %v3605, %v3604
    %v3643 = vpack.c.bf16 %v3607, %v3606
    %v3644 = vld [vmem:[#allocation9] sm:$0xf]
    %v3645 = vld [vmem:[#allocation9 + $0x4] sm:$0xf]
    %v3646 = vld [vmem:[#allocation9 + $0x8] sm:$0xf]
    %v3647 = vld [vmem:[#allocation9 + $0xc] sm:$0xf]
    %v3648 = vld [vmem:[#allocation9 + $0x10] sm:$0xf]
    %v3649 = vld [vmem:[#allocation9 + $0x14] sm:$0xf]
    %v3650 = vld [vmem:[#allocation9 + $0x18] sm:$0xf]
    %v3651 = vld [vmem:[#allocation9 + $0x1c] sm:$0xf]
    %v3652 = vld [vmem:[#allocation9 + $0x20] sm:$0xf]
    %v3653 = vld [vmem:[#allocation9 + $0x24] sm:$0xf]
    %v3654 = vld [vmem:[#allocation9 + $0x28] sm:$0xf]
    %v3655 = vld [vmem:[#allocation9 + $0x2c] sm:$0xf]
    %v3656 = vld [vmem:[#allocation9 + $0x30] sm:$0xf]
    %v3657 = vld [vmem:[#allocation9 + $0x34] sm:$0xf]
    %v3658 = vld [vmem:[#allocation9 + $0x38] sm:$0xf]
    %v3659 = vld [vmem:[#allocation9 + $0x3c] sm:$0xf]
    %v3660 = vld [vmem:[#allocation9 + $0x40] sm:$0xf]
    %v3661 = vld [vmem:[#allocation9 + $0x44] sm:$0xf]
    %v3662 = vld [vmem:[#allocation9 + $0x48] sm:$0xf]
    %v3663 = vld [vmem:[#allocation9 + $0x4c] sm:$0xf]
    %v3664 = vld [vmem:[#allocation9 + $0x50] sm:$0xf]
    %v3665 = vld [vmem:[#allocation9 + $0x54] sm:$0xf]
    %v3666 = vld [vmem:[#allocation9 + $0x58] sm:$0xf]
    %v3667 = vld [vmem:[#allocation9 + $0x5c] sm:$0xf]
    %v3668 = vld [vmem:[#allocation9 + $0x60] sm:$0xf]
    %v3669 = vld [vmem:[#allocation9 + $0x64] sm:$0xf]
    %v3670 = vld [vmem:[#allocation9 + $0x68] sm:$0xf]
    %v3671 = vld [vmem:[#allocation9 + $0x6c] sm:$0xf]
    %v3672 = vld [vmem:[#allocation9 + $0x70] sm:$0xf]
    %v3673 = vld [vmem:[#allocation9 + $0x74] sm:$0xf]
    %v3674 = vld [vmem:[#allocation9 + $0x78] sm:$0xf]
    %v3675 = vld [vmem:[#allocation9 + $0x7c] sm:$0xf]
    %v3676 = vld [vmem:[#allocation9 + $0x80] sm:$0xf]
    %v3677 = vld [vmem:[#allocation9 + $0x84] sm:$0xf]
    %v3678 = vld [vmem:[#allocation9 + $0x88] sm:$0xf]
    %v3679 = vld [vmem:[#allocation9 + $0x8c] sm:$0xf]
    %v3680 = vld [vmem:[#allocation9 + $0x90] sm:$0xf]
    %v3681 = vld [vmem:[#allocation9 + $0x94] sm:$0xf]
    %v3682 = vld [vmem:[#allocation9 + $0x98] sm:$0xf]
    %v3683 = vld [vmem:[#allocation9 + $0x9c] sm:$0xf]
    %v3684 = vld [vmem:[#allocation9 + $0xa0] sm:$0xf]
    %v3685 = vld [vmem:[#allocation9 + $0xa4] sm:$0xf]
    %v3686 = vld [vmem:[#allocation9 + $0xa8] sm:$0xf]
    %v3687 = vld [vmem:[#allocation9 + $0xac] sm:$0xf]
    %v3688 = vld [vmem:[#allocation9 + $0xb0] sm:$0xf]
    %v3689 = vld [vmem:[#allocation9 + $0xb4] sm:$0xf]
    %v3690 = vld [vmem:[#allocation9 + $0xb8] sm:$0xf]
    %v3691 = vld [vmem:[#allocation9 + $0xbc] sm:$0xf]
    %v3692 = vld [vmem:[#allocation9 + $0xc0] sm:$0xf]
    %v3693 = vld [vmem:[#allocation9 + $0xc4] sm:$0xf]
    %v3694 = vld [vmem:[#allocation9 + $0xc8] sm:$0xf]
    %v3695 = vld [vmem:[#allocation9 + $0xcc] sm:$0xf]
    %v3696 = vld [vmem:[#allocation9 + $0xd0] sm:$0xf]
    %v3697 = vld [vmem:[#allocation9 + $0xd4] sm:$0xf]
    %v3698 = vld [vmem:[#allocation9 + $0xd8] sm:$0xf]
    %v3699 = vld [vmem:[#allocation9 + $0xdc] sm:$0xf]
    %v3700 = vld [vmem:[#allocation9 + $0xe0] sm:$0xf]
    %v3701 = vld [vmem:[#allocation9 + $0xe4] sm:$0xf]
    %v3702 = vld [vmem:[#allocation9 + $0xe8] sm:$0xf]
    %v3703 = vld [vmem:[#allocation9 + $0xec] sm:$0xf]
    %v3704 = vld [vmem:[#allocation9 + $0xf0] sm:$0xf]
    %v3705 = vld [vmem:[#allocation9 + $0xf4] sm:$0xf]
    %v3706 = vld [vmem:[#allocation9 + $0xf8] sm:$0xf]
    %v3707 = vld [vmem:[#allocation9 + $0xfc] sm:$0xf]
    %v3708 = vld [vmem:[#allocation9 + $0x100] sm:$0xf]
    %v3709 = vld [vmem:[#allocation9 + $0x104] sm:$0xf]
    %v3710 = vld [vmem:[#allocation9 + $0x108] sm:$0xf]
    %v3711 = vld [vmem:[#allocation9 + $0x10c] sm:$0xf]
    %v3712 = vld [vmem:[#allocation9 + $0x110] sm:$0xf]
    %v3713 = vld [vmem:[#allocation9 + $0x114] sm:$0xf]
    %v3714 = vld [vmem:[#allocation9 + $0x118] sm:$0xf]
    %v3715 = vld [vmem:[#allocation9 + $0x11c] sm:$0xf]
    %v3716 = vld [vmem:[#allocation9 + $0x120] sm:$0xf]
    %v3717 = vld [vmem:[#allocation9 + $0x124] sm:$0xf]
    %v3718 = vld [vmem:[#allocation9 + $0x128] sm:$0xf]
    %v3719 = vld [vmem:[#allocation9 + $0x12c] sm:$0xf]
    %v3720 = vld [vmem:[#allocation9 + $0x130] sm:$0xf]
    %v3721 = vld [vmem:[#allocation9 + $0x134] sm:$0xf]
    %v3722 = vld [vmem:[#allocation9 + $0x138] sm:$0xf]
    %v3723 = vld [vmem:[#allocation9 + $0x13c] sm:$0xf]
    %v3724 = vld [vmem:[#allocation9 + $0x140] sm:$0xf]
    %v3725 = vld [vmem:[#allocation9 + $0x144] sm:$0xf]
    %v3726 = vld [vmem:[#allocation9 + $0x148] sm:$0xf]
    %v3727 = vld [vmem:[#allocation9 + $0x14c] sm:$0xf]
    %v3728 = vld [vmem:[#allocation9 + $0x150] sm:$0xf]
    %v3729 = vld [vmem:[#allocation9 + $0x154] sm:$0xf]
    %v3730 = vld [vmem:[#allocation9 + $0x158] sm:$0xf]
    %v3731 = vld [vmem:[#allocation9 + $0x15c] sm:$0xf]
    %v3732 = vld [vmem:[#allocation9 + $0x160] sm:$0xf]
    %v3733 = vld [vmem:[#allocation9 + $0x164] sm:$0xf]
    %v3734 = vld [vmem:[#allocation9 + $0x168] sm:$0xf]
    %v3735 = vld [vmem:[#allocation9 + $0x16c] sm:$0xf]
    %v3736 = vld [vmem:[#allocation9 + $0x170] sm:$0xf]
    %v3737 = vld [vmem:[#allocation9 + $0x174] sm:$0xf]
    %v3738 = vld [vmem:[#allocation9 + $0x178] sm:$0xf]
    %v3739 = vld [vmem:[#allocation9 + $0x17c] sm:$0xf]
    %v3740 = vld [vmem:[#allocation9 + $0x180] sm:$0xf]
    %v3741 = vld [vmem:[#allocation9 + $0x184] sm:$0xf]
    %v3742 = vld [vmem:[#allocation9 + $0x188] sm:$0xf]
    %v3743 = vld [vmem:[#allocation9 + $0x18c] sm:$0xf]
    %v3744 = vld [vmem:[#allocation9 + $0x190] sm:$0xf]
    %v3745 = vld [vmem:[#allocation9 + $0x194] sm:$0xf]
    %v3746 = vld [vmem:[#allocation9 + $0x198] sm:$0xf]
    %v3747 = vld [vmem:[#allocation9 + $0x19c] sm:$0xf]
    %v3748 = vld [vmem:[#allocation9 + $0x1a0] sm:$0xf]
    %v3749 = vld [vmem:[#allocation9 + $0x1a4] sm:$0xf]
    %v3750 = vld [vmem:[#allocation9 + $0x1a8] sm:$0xf]
    %v3751 = vld [vmem:[#allocation9 + $0x1ac] sm:$0xf]
    %v3752 = vld [vmem:[#allocation9 + $0x1b0] sm:$0xf]
    %v3753 = vld [vmem:[#allocation9 + $0x1b4] sm:$0xf]
    %v3754 = vld [vmem:[#allocation9 + $0x1b8] sm:$0xf]
    %v3755 = vld [vmem:[#allocation9 + $0x1bc] sm:$0xf]
    %v3756 = vld [vmem:[#allocation9 + $0x1c0] sm:$0xf]
    %v3757 = vld [vmem:[#allocation9 + $0x1c4] sm:$0xf]
    %v3758 = vld [vmem:[#allocation9 + $0x1c8] sm:$0xf]
    %v3759 = vld [vmem:[#allocation9 + $0x1cc] sm:$0xf]
    %v3760 = vld [vmem:[#allocation9 + $0x1d0] sm:$0xf]
    %v3761 = vld [vmem:[#allocation9 + $0x1d4] sm:$0xf]
    %v3762 = vld [vmem:[#allocation9 + $0x1d8] sm:$0xf]
    %v3763 = vld [vmem:[#allocation9 + $0x1dc] sm:$0xf]
    %v3764 = vld [vmem:[#allocation9 + $0x1e0] sm:$0xf]
    %v3765 = vld [vmem:[#allocation9 + $0x1e4] sm:$0xf]
    %v3766 = vld [vmem:[#allocation9 + $0x1e8] sm:$0xf]
    %v3767 = vld [vmem:[#allocation9 + $0x1ec] sm:$0xf]
    %v3768 = vld [vmem:[#allocation9 + $0x1f0] sm:$0xf]
    %v3769 = vld [vmem:[#allocation9 + $0x1f4] sm:$0xf]
    %v3770 = vld [vmem:[#allocation9 + $0x1f8] sm:$0xf]
    %v3771 = vld [vmem:[#allocation9 + $0x1fc] sm:$0xf]
    %v3772 = vld [vmem:[#allocation9 + $0x200] sm:$0xf]
    %v3773 = vld [vmem:[#allocation9 + $0x204] sm:$0xf]
    %v3774 = vld [vmem:[#allocation9 + $0x208] sm:$0xf]
    %v3775 = vld [vmem:[#allocation9 + $0x20c] sm:$0xf]
    %v3776 = vld [vmem:[#allocation9 + $0x210] sm:$0xf]
    %v3777 = vld [vmem:[#allocation9 + $0x214] sm:$0xf]
    %v3778 = vld [vmem:[#allocation9 + $0x218] sm:$0xf]
    %v3779 = vld [vmem:[#allocation9 + $0x21c] sm:$0xf]
    %v3780 = vld [vmem:[#allocation9 + $0x220] sm:$0xf]
    %v3781 = vld [vmem:[#allocation9 + $0x224] sm:$0xf]
    %v3782 = vld [vmem:[#allocation9 + $0x228] sm:$0xf]
    %v3783 = vld [vmem:[#allocation9 + $0x22c] sm:$0xf]
    %v3784 = vld [vmem:[#allocation9 + $0x230] sm:$0xf]
    %v3785 = vld [vmem:[#allocation9 + $0x234] sm:$0xf]
    %v3786 = vld [vmem:[#allocation9 + $0x238] sm:$0xf]
    %v3787 = vld [vmem:[#allocation9 + $0x23c] sm:$0xf]
    %v3932 = vunpack.c.l.b16 %v3644
    %v3933 = vunpack.c.l.b16 %v3645
    %v3934 = vunpack.c.l.b16 %v3646
    %v3935 = vunpack.c.l.b16 %v3647
    %v3936 = vunpack.c.l.b16 %v3648
    %v3937 = vunpack.c.l.b16 %v3649
    %v3938 = vunpack.c.l.b16 %v3650
    %v3939 = vunpack.c.l.b16 %v3651
    %v3940 = vunpack.c.l.b16 %v3652
    %v3941 = vunpack.c.l.b16 %v3653
    %v3942 = vunpack.c.l.b16 %v3654
    %v3943 = vunpack.c.l.b16 %v3655
    %v3944 = vunpack.c.l.b16 %v3656
    %v3945 = vunpack.c.l.b16 %v3657
    %v3946 = vunpack.c.l.b16 %v3658
    %v3947 = vunpack.c.l.b16 %v3659
    %v3948 = vunpack.c.l.b16 %v3660
    %v3949 = vunpack.c.l.b16 %v3661
    %v3950 = vunpack.c.l.b16 %v3662
    %v3951 = vunpack.c.l.b16 %v3663
    %v3952 = vunpack.c.l.b16 %v3664
    %v3953 = vunpack.c.l.b16 %v3665
    %v3954 = vunpack.c.l.b16 %v3666
    %v3955 = vunpack.c.l.b16 %v3667
    %v3956 = vunpack.c.l.b16 %v3668
    %v3957 = vunpack.c.l.b16 %v3669
    %v3958 = vunpack.c.l.b16 %v3670
    %v3959 = vunpack.c.l.b16 %v3671
    %v3960 = vunpack.c.l.b16 %v3672
    %v3961 = vunpack.c.l.b16 %v3673
    %v3962 = vunpack.c.l.b16 %v3674
    %v3963 = vunpack.c.l.b16 %v3675
    %v3964 = vunpack.c.l.b16 %v3676
    %v3965 = vunpack.c.l.b16 %v3677
    %v3966 = vunpack.c.l.b16 %v3678
    %v3967 = vunpack.c.l.b16 %v3679
    %v3968 = vunpack.c.l.b16 %v3680
    %v3969 = vunpack.c.l.b16 %v3681
    %v3970 = vunpack.c.l.b16 %v3682
    %v3971 = vunpack.c.l.b16 %v3683
    %v3972 = vunpack.c.l.b16 %v3684
    %v3973 = vunpack.c.l.b16 %v3685
    %v3974 = vunpack.c.l.b16 %v3686
    %v3975 = vunpack.c.l.b16 %v3687
    %v3976 = vunpack.c.l.b16 %v3688
    %v3977 = vunpack.c.l.b16 %v3689
    %v3978 = vunpack.c.l.b16 %v3690
    %v3979 = vunpack.c.l.b16 %v3691
    %v3980 = vunpack.c.l.b16 %v3692
    %v3981 = vunpack.c.l.b16 %v3693
    %v3982 = vunpack.c.l.b16 %v3694
    %v3983 = vunpack.c.l.b16 %v3695
    %v3984 = vunpack.c.l.b16 %v3696
    %v3985 = vunpack.c.l.b16 %v3697
    %v3986 = vunpack.c.l.b16 %v3698
    %v3987 = vunpack.c.l.b16 %v3699
    %v3988 = vunpack.c.l.b16 %v3700
    %v3989 = vunpack.c.l.b16 %v3701
    %v3990 = vunpack.c.l.b16 %v3702
    %v3991 = vunpack.c.l.b16 %v3703
    %v3992 = vunpack.c.l.b16 %v3704
    %v3993 = vunpack.c.l.b16 %v3705
    %v3994 = vunpack.c.l.b16 %v3706
    %v3995 = vunpack.c.l.b16 %v3707
    %v3996 = vunpack.c.l.b16 %v3708
    %v3997 = vunpack.c.l.b16 %v3709
    %v3998 = vunpack.c.l.b16 %v3710
    %v3999 = vunpack.c.l.b16 %v3711
    %v4000 = vunpack.c.l.b16 %v3712
    %v4001 = vunpack.c.l.b16 %v3713
    %v4002 = vunpack.c.l.b16 %v3714
    %v4003 = vunpack.c.l.b16 %v3715
    %v4004 = vunpack.c.l.b16 %v3716
    %v4005 = vunpack.c.l.b16 %v3717
    %v4006 = vunpack.c.l.b16 %v3718
    %v4007 = vunpack.c.l.b16 %v3719
    %v4008 = vunpack.c.l.b16 %v3720
    %v4009 = vunpack.c.l.b16 %v3721
    %v4010 = vunpack.c.l.b16 %v3722
    %v4011 = vunpack.c.l.b16 %v3723
    %v4012 = vunpack.c.l.b16 %v3724
    %v4013 = vunpack.c.l.b16 %v3725
    %v4014 = vunpack.c.l.b16 %v3726
    %v4015 = vunpack.c.l.b16 %v3727
    %v4016 = vunpack.c.l.b16 %v3728
    %v4017 = vunpack.c.l.b16 %v3729
    %v4018 = vunpack.c.l.b16 %v3730
    %v4019 = vunpack.c.l.b16 %v3731
    %v4020 = vunpack.c.l.b16 %v3732
    %v4021 = vunpack.c.l.b16 %v3733
    %v4022 = vunpack.c.l.b16 %v3734
    %v4023 = vunpack.c.l.b16 %v3735
    %v4024 = vunpack.c.l.b16 %v3736
    %v4025 = vunpack.c.l.b16 %v3737
    %v4026 = vunpack.c.l.b16 %v3738
    %v4027 = vunpack.c.l.b16 %v3739
    %v4028 = vunpack.c.l.b16 %v3740
    %v4029 = vunpack.c.l.b16 %v3741
    %v4030 = vunpack.c.l.b16 %v3742
    %v4031 = vunpack.c.l.b16 %v3743
    %v4032 = vunpack.c.l.b16 %v3744
    %v4033 = vunpack.c.l.b16 %v3745
    %v4034 = vunpack.c.l.b16 %v3746
    %v4035 = vunpack.c.l.b16 %v3747
    %v4036 = vunpack.c.l.b16 %v3748
    %v4037 = vunpack.c.l.b16 %v3749
    %v4038 = vunpack.c.l.b16 %v3750
    %v4039 = vunpack.c.l.b16 %v3751
    %v4040 = vunpack.c.l.b16 %v3752
    %v4041 = vunpack.c.l.b16 %v3753
    %v4042 = vunpack.c.l.b16 %v3754
    %v4043 = vunpack.c.l.b16 %v3755
    %v4044 = vunpack.c.l.b16 %v3756
    %v4045 = vunpack.c.l.b16 %v3757
    %v4046 = vunpack.c.l.b16 %v3758
    %v4047 = vunpack.c.l.b16 %v3759
    %v4048 = vunpack.c.l.b16 %v3760
    %v4049 = vunpack.c.l.b16 %v3761
    %v4050 = vunpack.c.l.b16 %v3762
    %v4051 = vunpack.c.l.b16 %v3763
    %v4052 = vunpack.c.l.b16 %v3764
    %v4053 = vunpack.c.l.b16 %v3765
    %v4054 = vunpack.c.l.b16 %v3766
    %v4055 = vunpack.c.l.b16 %v3767
    %v4056 = vunpack.c.l.b16 %v3768
    %v4057 = vunpack.c.l.b16 %v3769
    %v4058 = vunpack.c.l.b16 %v3770
    %v4059 = vunpack.c.l.b16 %v3771
    %v4060 = vunpack.c.l.b16 %v3772
    %v4061 = vunpack.c.l.b16 %v3773
    %v4062 = vunpack.c.l.b16 %v3774
    %v4063 = vunpack.c.l.b16 %v3775
    %v4064 = vunpack.c.l.b16 %v3776
    %v4065 = vunpack.c.l.b16 %v3777
    %v4066 = vunpack.c.l.b16 %v3778
    %v4067 = vunpack.c.l.b16 %v3779
    %v4068 = vunpack.c.l.b16 %v3780
    %v4069 = vunpack.c.l.b16 %v3781
    %v4070 = vunpack.c.l.b16 %v3782
    %v4071 = vunpack.c.l.b16 %v3783
    %v4072 = vunpack.c.l.b16 %v3784
    %v4073 = vunpack.c.l.b16 %v3785
    %v4074 = vunpack.c.l.b16 %v3786
    %v4075 = vunpack.c.l.b16 %v3787
    %v4076 = vpack.c.b16 %v3933, %v3932
    %v4077 = vpack.c.b16 %v3935, %v3934
    %v4078 = vpack.c.b16 %v3937, %v3936
    %v4079 = vpack.c.b16 %v3939, %v3938
    %v4080 = vpack.c.b16 %v3941, %v3940
    %v4081 = vpack.c.b16 %v3943, %v3942
    %v4082 = vpack.c.b16 %v3945, %v3944
    %v4083 = vpack.c.b16 %v3947, %v3946
    %v4084 = vpack.c.b16 %v3949, %v3948
    %v4085 = vpack.c.b16 %v3951, %v3950
    %v4086 = vpack.c.b16 %v3953, %v3952
    %v4087 = vpack.c.b16 %v3955, %v3954
    %v4088 = vpack.c.b16 %v3957, %v3956
    %v4089 = vpack.c.b16 %v3959, %v3958
    %v4090 = vpack.c.b16 %v3961, %v3960
    %v4091 = vpack.c.b16 %v3963, %v3962
    %v4092 = vpack.c.b16 %v3965, %v3964
    %v4093 = vpack.c.b16 %v3967, %v3966
    %v4094 = vpack.c.b16 %v3969, %v3968
    %v4095 = vpack.c.b16 %v3971, %v3970
    %v4096 = vpack.c.b16 %v3973, %v3972
    %v4097 = vpack.c.b16 %v3975, %v3974
    %v4098 = vpack.c.b16 %v3977, %v3976
    %v4099 = vpack.c.b16 %v3979, %v3978
    %v4100 = vpack.c.b16 %v3981, %v3980
    %v4101 = vpack.c.b16 %v3983, %v3982
    %v4102 = vpack.c.b16 %v3985, %v3984
    %v4103 = vpack.c.b16 %v3987, %v3986
    %v4104 = vpack.c.b16 %v3989, %v3988
    %v4105 = vpack.c.b16 %v3991, %v3990
    %v4106 = vpack.c.b16 %v3993, %v3992
    %v4107 = vpack.c.b16 %v3995, %v3994
    %v4108 = vpack.c.b16 %v3997, %v3996
    %v4109 = vpack.c.b16 %v3999, %v3998
    %v4110 = vpack.c.b16 %v4001, %v4000
    %v4111 = vpack.c.b16 %v4003, %v4002
    %v4112 = vpack.c.b16 %v4005, %v4004
    %v4113 = vpack.c.b16 %v4007, %v4006
    %v4114 = vpack.c.b16 %v4009, %v4008
    %v4115 = vpack.c.b16 %v4011, %v4010
    %v4116 = vpack.c.b16 %v4013, %v4012
    %v4117 = vpack.c.b16 %v4015, %v4014
    %v4118 = vpack.c.b16 %v4017, %v4016
    %v4119 = vpack.c.b16 %v4019, %v4018
    %v4120 = vpack.c.b16 %v4021, %v4020
    %v4121 = vpack.c.b16 %v4023, %v4022
    %v4122 = vpack.c.b16 %v4025, %v4024
    %v4123 = vpack.c.b16 %v4027, %v4026
    %v4124 = vpack.c.b16 %v4029, %v4028
    %v4125 = vpack.c.b16 %v4031, %v4030
    %v4126 = vpack.c.b16 %v4033, %v4032
    %v4127 = vpack.c.b16 %v4035, %v4034
    %v4128 = vpack.c.b16 %v4037, %v4036
    %v4129 = vpack.c.b16 %v4039, %v4038
    %v4130 = vpack.c.b16 %v4041, %v4040
    %v4131 = vpack.c.b16 %v4043, %v4042
    %v4132 = vpack.c.b16 %v4045, %v4044
    %v4133 = vpack.c.b16 %v4047, %v4046
    %v4134 = vpack.c.b16 %v4049, %v4048
    %v4135 = vpack.c.b16 %v4051, %v4050
    %v4136 = vpack.c.b16 %v4053, %v4052
    %v4137 = vpack.c.b16 %v4055, %v4054
    %v4138 = vpack.c.b16 %v4057, %v4056
    %v4139 = vpack.c.b16 %v4059, %v4058
    %v4140 = vpack.c.b16 %v4061, %v4060
    %v4141 = vpack.c.b16 %v4063, %v4062
    %v4142 = vpack.c.b16 %v4065, %v4064
    %v4143 = vpack.c.b16 %v4067, %v4066
    %v4144 = vpack.c.b16 %v4069, %v4068
    %v4145 = vpack.c.b16 %v4071, %v4070
    %v4146 = vpack.c.b16 %v4073, %v4072
    %v4147 = vpack.c.b16 %v4075, %v4074
    %4220 = vmatprep.subr.bf16.mxu0 0
    %4221 = vmatpush1.bf16.msra.mxu0 %v4083
    %4222 = vmatprep.subr.bf16.mxu0 0
    %4223 = vmatpush1.bf16.msra.mxu0 %v4082
    %4224 = vmatprep.subr.bf16.mxu0 0
    %4225 = vmatpush1.bf16.msra.mxu0 %v4081
    %4226 = vmatprep.subr.bf16.mxu0 0
    %4227 = vmatpush1.bf16.msra.mxu0 %v4080
    %4228 = vmatprep.subr.bf16.mxu0 0
    %4229 = vmatpush1.bf16.msra.mxu0 %v4079
    %4230 = vmatprep.subr.bf16.mxu0 0
    %4231 = vmatpush1.bf16.msra.mxu0 %v4078
    %4232 = vmatprep.subr.bf16.mxu0 0
    %4233 = vmatpush1.bf16.msra.mxu0 %v4077
    %4234 = vmatprep.subr.bf16.mxu0 0
    %4235 = vmatpush1.bf16.msra.mxu0 %v4076
    %4236 = vmatprep.subr.bf16.mxu0 0
    %4237 = vmatpush2.bf16.msra.mxu0 %v4091
    %4238 = vmatprep.subr.bf16.mxu0 0
    %4239 = vmatpush2.bf16.msra.mxu0 %v4090
    %4240 = vmatprep.subr.bf16.mxu0 0
    %4241 = vmatpush2.bf16.msra.mxu0 %v4089
    %4242 = vmatprep.subr.bf16.mxu0 0
    %4243 = vmatpush2.bf16.msra.mxu0 %v4088
    %4244 = vmatprep.subr.bf16.mxu0 0
    %4245 = vmatpush2.bf16.msra.mxu0 %v4087
    %4246 = vmatprep.subr.bf16.mxu0 0
    %4247 = vmatpush2.bf16.msra.mxu0 %v4086
    %4248 = vmatprep.subr.bf16.mxu0 0
    %4249 = vmatpush2.bf16.msra.mxu0 %v4085
    %4250 = vmatprep.subr.bf16.mxu0 0
    %4251 = vmatpush2.bf16.msra.mxu0 %v4084
    %4252 = vmatprep.mubr.bf16.mxu0 %v3500
    %4253 = vmatmul.mubr.bf16.gmra.mxu0 %v3392
    %v4254 = vpop.f32.mrf.mxu0
    %v4255 = vadd.f32 0.0, %v4254
    %v4256 = vpop.f32.mrf.mxu0
    %v4257 = vpop.f32.mrf.mxu0
    %v4258 = vadd.f32 0.0, %v4257
    %v4259 = vpop.f32.mrf.mxu0
    %4260 = vmatprep.mubr.bf16.mxu0 %v3501
    %4261 = vmatmul.mubr.bf16.gmra.mxu0 %v3393
    %v4262 = vpop.f32.mrf.mxu0
    %v4263 = vadd.f32 0.0, %v4262
    %v4264 = vpop.f32.mrf.mxu0
    %v4265 = vpop.f32.mrf.mxu0
    %v4266 = vadd.f32 0.0, %v4265
    %v4267 = vpop.f32.mrf.mxu0
    %4268 = vmatprep.mubr.bf16.mxu0 %v3502
    %4269 = vmatmul.mubr.bf16.gmra.mxu0 %v3394
    %v4270 = vpop.f32.mrf.mxu0
    %v4271 = vadd.f32 0.0, %v4270
    %v4272 = vpop.f32.mrf.mxu0
    %v4273 = vpop.f32.mrf.mxu0
    %v4274 = vadd.f32 0.0, %v4273
    %v4275 = vpop.f32.mrf.mxu0
    %4276 = vmatprep.mubr.bf16.mxu0 %v3503
    %4277 = vmatmul.mubr.bf16.gmra.mxu0 %v3395
    %v4278 = vpop.f32.mrf.mxu0
    %v4279 = vadd.f32 0.0, %v4278
    %v4280 = vpop.f32.mrf.mxu0
    %v4281 = vpop.f32.mrf.mxu0
    %v4282 = vadd.f32 0.0, %v4281
    %v4283 = vpop.f32.mrf.mxu0
    %4284 = vmatprep.mubr.bf16.mxu0 %v3504
    %4285 = vmatmul.mubr.bf16.gmra.mxu0 %v3396
    %v4286 = vpop.f32.mrf.mxu0
    %v4287 = vadd.f32 0.0, %v4286
    %v4288 = vpop.f32.mrf.mxu0
    %v4289 = vpop.f32.mrf.mxu0
    %v4290 = vadd.f32 0.0, %v4289
    %v4291 = vpop.f32.mrf.mxu0
    %4292 = vmatprep.mubr.bf16.mxu0 %v3505
    %4293 = vmatmul.mubr.bf16.gmra.mxu0 %v3397
    %v4294 = vpop.f32.mrf.mxu0
    %v4295 = vadd.f32 0.0, %v4294
    %v4296 = vpop.f32.mrf.mxu0
    %v4297 = vpop.f32.mrf.mxu0
    %v4298 = vadd.f32 0.0, %v4297
    %v4299 = vpop.f32.mrf.mxu0
    %4300 = vmatprep.mubr.bf16.mxu0 %v3506
    %4301 = vmatmul.mubr.bf16.gmra.mxu0 %v3398
    %v4302 = vpop.f32.mrf.mxu0
    %v4303 = vadd.f32 0.0, %v4302
    %v4304 = vpop.f32.mrf.mxu0
    %v4305 = vpop.f32.mrf.mxu0
    %v4306 = vadd.f32 0.0, %v4305
    %v4307 = vpop.f32.mrf.mxu0
    %4308 = vmatprep.mubr.bf16.mxu0 %v3507
    %4309 = vmatmul.mubr.bf16.gmra.mxu0 %v3399
    %v4310 = vpop.f32.mrf.mxu0
    %v4311 = vadd.f32 0.0, %v4310
    %v4312 = vpop.f32.mrf.mxu0
    %v4313 = vpop.f32.mrf.mxu0
    %v4314 = vadd.f32 0.0, %v4313
    %v4315 = vpop.f32.mrf.mxu0
    %4316 = vmatprep.mubr.bf16.mxu0 %v3508
    %4317 = vmatmul.mubr.bf16.gmra.mxu0 %v3400
    %v4318 = vpop.f32.mrf.mxu0
    %v4319 = vadd.f32 0.0, %v4318
    %v4320 = vpop.f32.mrf.mxu0
    %v4321 = vpop.f32.mrf.mxu0
    %v4322 = vadd.f32 0.0, %v4321
    %v4323 = vpop.f32.mrf.mxu0
    %4324 = vmatprep.mubr.bf16.mxu0 %v3509
    %4325 = vmatmul.mubr.bf16.gmra.mxu0 %v3401
    %v4326 = vpop.f32.mrf.mxu0
    %v4327 = vadd.f32 0.0, %v4326
    %v4328 = vpop.f32.mrf.mxu0
    %v4329 = vpop.f32.mrf.mxu0
    %v4330 = vadd.f32 0.0, %v4329
    %v4331 = vpop.f32.mrf.mxu0
    %4332 = vmatprep.mubr.bf16.mxu0 %v3510
    %4333 = vmatmul.mubr.bf16.gmra.mxu0 %v3402
    %v4334 = vpop.f32.mrf.mxu0
    %v4335 = vadd.f32 0.0, %v4334
    %v4336 = vpop.f32.mrf.mxu0
    %v4337 = vpop.f32.mrf.mxu0
    %v4338 = vadd.f32 0.0, %v4337
    %v4339 = vpop.f32.mrf.mxu0
    %4340 = vmatprep.mubr.bf16.mxu0 %v3511
    %4341 = vmatmul.mubr.bf16.gmra.mxu0 %v3403
    %v4342 = vpop.f32.mrf.mxu0
    %v4343 = vadd.f32 0.0, %v4342
    %v4344 = vpop.f32.mrf.mxu0
    %v4345 = vpop.f32.mrf.mxu0
    %v4346 = vadd.f32 0.0, %v4345
    %v4347 = vpop.f32.mrf.mxu0
    %4348 = vmatprep.mubr.bf16.mxu0 %v3512
    %4349 = vmatmul.mubr.bf16.gmra.mxu0 %v3404
    %v4350 = vpop.f32.mrf.mxu0
    %v4351 = vadd.f32 0.0, %v4350
    %v4352 = vpop.f32.mrf.mxu0
    %v4353 = vpop.f32.mrf.mxu0
    %v4354 = vadd.f32 0.0, %v4353
    %v4355 = vpop.f32.mrf.mxu0
    %4356 = vmatprep.mubr.bf16.mxu0 %v3513
    %4357 = vmatmul.mubr.bf16.gmra.mxu0 %v3405
    %v4358 = vpop.f32.mrf.mxu0
    %v4359 = vadd.f32 0.0, %v4358
    %v4360 = vpop.f32.mrf.mxu0
    %v4361 = vpop.f32.mrf.mxu0
    %v4362 = vadd.f32 0.0, %v4361
    %v4363 = vpop.f32.mrf.mxu0
    %4364 = vmatprep.mubr.bf16.mxu0 %v3514
    %4365 = vmatmul.mubr.bf16.gmra.mxu0 %v3406
    %v4366 = vpop.f32.mrf.mxu0
    %v4367 = vadd.f32 0.0, %v4366
    %v4368 = vpop.f32.mrf.mxu0
    %v4369 = vpop.f32.mrf.mxu0
    %v4370 = vadd.f32 0.0, %v4369
    %v4371 = vpop.f32.mrf.mxu0
    %4372 = vmatprep.mubr.bf16.mxu0 %v3515
    %4373 = vmatmul.mubr.bf16.gmra.mxu0 %v3407
    %v4374 = vpop.f32.mrf.mxu0
    %v4375 = vadd.f32 0.0, %v4374
    %v4376 = vpop.f32.mrf.mxu0
    %v4377 = vpop.f32.mrf.mxu0
    %v4378 = vadd.f32 0.0, %v4377
    %v4379 = vpop.f32.mrf.mxu0
    %4380 = vmatprep.mubr.bf16.mxu0 %v3518
    %4381 = vmatmul.mubr.bf16.gmra.mxu0 %v3410
    %v4382 = vpop.f32.mrf.mxu0
    %v4383 = vadd.f32 0.0, %v4382
    %v4384 = vpop.f32.mrf.mxu0
    %v4385 = vpop.f32.mrf.mxu0
    %v4386 = vadd.f32 0.0, %v4385
    %v4387 = vpop.f32.mrf.mxu0
    %4388 = vmatprep.mubr.bf16.mxu0 %v3519
    %4389 = vmatmul.mubr.bf16.gmra.mxu0 %v3411
    %v4390 = vpop.f32.mrf.mxu0
    %v4391 = vadd.f32 0.0, %v4390
    %v4392 = vpop.f32.mrf.mxu0
    %v4393 = vpop.f32.mrf.mxu0
    %v4394 = vadd.f32 0.0, %v4393
    %v4395 = vpop.f32.mrf.mxu0
    %4396 = vmatprep.mubr.bf16.mxu0 %v3520
    %4397 = vmatmul.mubr.bf16.gmra.mxu0 %v3412
    %v4398 = vpop.f32.mrf.mxu0
    %v4399 = vadd.f32 0.0, %v4398
    %v4400 = vpop.f32.mrf.mxu0
    %v4401 = vpop.f32.mrf.mxu0
    %v4402 = vadd.f32 0.0, %v4401
    %v4403 = vpop.f32.mrf.mxu0
    %4404 = vmatprep.mubr.bf16.mxu0 %v3521
    %4405 = vmatmul.mubr.bf16.gmra.mxu0 %v3413
    %v4406 = vpop.f32.mrf.mxu0
    %v4407 = vadd.f32 0.0, %v4406
    %v4408 = vpop.f32.mrf.mxu0
    %v4409 = vpop.f32.mrf.mxu0
    %v4410 = vadd.f32 0.0, %v4409
    %v4411 = vpop.f32.mrf.mxu0
    %4412 = vmatprep.mubr.bf16.mxu0 %v3522
    %4413 = vmatmul.mubr.bf16.gmra.mxu0 %v3414
    %v4414 = vpop.f32.mrf.mxu0
    %v4415 = vadd.f32 0.0, %v4414
    %v4416 = vpop.f32.mrf.mxu0
    %v4417 = vpop.f32.mrf.mxu0
    %v4418 = vadd.f32 0.0, %v4417
    %v4419 = vpop.f32.mrf.mxu0
    %4420 = vmatprep.mubr.bf16.mxu0 %v3523
    %4421 = vmatmul.mubr.bf16.gmra.mxu0 %v3415
    %v4422 = vpop.f32.mrf.mxu0
    %v4423 = vadd.f32 0.0, %v4422
    %v4424 = vpop.f32.mrf.mxu0
    %v4425 = vpop.f32.mrf.mxu0
    %v4426 = vadd.f32 0.0, %v4425
    %v4427 = vpop.f32.mrf.mxu0
    %4428 = vmatprep.mubr.bf16.mxu0 %v3524
    %4429 = vmatmul.mubr.bf16.gmra.mxu0 %v3416
    %v4430 = vpop.f32.mrf.mxu0
    %v4431 = vadd.f32 0.0, %v4430
    %v4432 = vpop.f32.mrf.mxu0
    %v4433 = vpop.f32.mrf.mxu0
    %v4434 = vadd.f32 0.0, %v4433
    %v4435 = vpop.f32.mrf.mxu0
    %4436 = vmatprep.mubr.bf16.mxu0 %v3525
    %4437 = vmatmul.mubr.bf16.gmra.mxu0 %v3417
    %v4438 = vpop.f32.mrf.mxu0
    %v4439 = vadd.f32 0.0, %v4438
    %v4440 = vpop.f32.mrf.mxu0
    %v4441 = vpop.f32.mrf.mxu0
    %v4442 = vadd.f32 0.0, %v4441
    %v4443 = vpop.f32.mrf.mxu0
    %4444 = vmatprep.mubr.bf16.mxu0 %v3526
    %4445 = vmatmul.mubr.bf16.gmra.mxu0 %v3418
    %v4446 = vpop.f32.mrf.mxu0
    %v4447 = vadd.f32 0.0, %v4446
    %v4448 = vpop.f32.mrf.mxu0
    %v4449 = vpop.f32.mrf.mxu0
    %v4450 = vadd.f32 0.0, %v4449
    %v4451 = vpop.f32.mrf.mxu0
    %4452 = vmatprep.mubr.bf16.mxu0 %v3527
    %4453 = vmatmul.mubr.bf16.gmra.mxu0 %v3419
    %v4454 = vpop.f32.mrf.mxu0
    %v4455 = vadd.f32 0.0, %v4454
    %v4456 = vpop.f32.mrf.mxu0
    %v4457 = vpop.f32.mrf.mxu0
    %v4458 = vadd.f32 0.0, %v4457
    %v4459 = vpop.f32.mrf.mxu0
    %4460 = vmatprep.mubr.bf16.mxu0 %v3528
    %4461 = vmatmul.mubr.bf16.gmra.mxu0 %v3420
    %v4462 = vpop.f32.mrf.mxu0
    %v4463 = vadd.f32 0.0, %v4462
    %v4464 = vpop.f32.mrf.mxu0
    %v4465 = vpop.f32.mrf.mxu0
    %v4466 = vadd.f32 0.0, %v4465
    %v4467 = vpop.f32.mrf.mxu0
    %4468 = vmatprep.mubr.bf16.mxu0 %v3529
    %4469 = vmatmul.mubr.bf16.gmra.mxu0 %v3421
    %v4470 = vpop.f32.mrf.mxu0
    %v4471 = vadd.f32 0.0, %v4470
    %v4472 = vpop.f32.mrf.mxu0
    %v4473 = vpop.f32.mrf.mxu0
    %v4474 = vadd.f32 0.0, %v4473
    %v4475 = vpop.f32.mrf.mxu0
    %4476 = vmatprep.mubr.bf16.mxu0 %v3530
    %4477 = vmatmul.mubr.bf16.gmra.mxu0 %v3422
    %v4478 = vpop.f32.mrf.mxu0
    %v4479 = vadd.f32 0.0, %v4478
    %v4480 = vpop.f32.mrf.mxu0
    %v4481 = vpop.f32.mrf.mxu0
    %v4482 = vadd.f32 0.0, %v4481
    %v4483 = vpop.f32.mrf.mxu0
    %4484 = vmatprep.mubr.bf16.mxu0 %v3531
    %4485 = vmatmul.mubr.bf16.gmra.mxu0 %v3423
    %v4486 = vpop.f32.mrf.mxu0
    %v4487 = vadd.f32 0.0, %v4486
    %v4488 = vpop.f32.mrf.mxu0
    %v4489 = vpop.f32.mrf.mxu0
    %v4490 = vadd.f32 0.0, %v4489
    %v4491 = vpop.f32.mrf.mxu0
    %4492 = vmatprep.mubr.bf16.mxu0 %v3532
    %4493 = vmatmul.mubr.bf16.gmra.mxu0 %v3424
    %v4494 = vpop.f32.mrf.mxu0
    %v4495 = vadd.f32 0.0, %v4494
    %v4496 = vpop.f32.mrf.mxu0
    %v4497 = vpop.f32.mrf.mxu0
    %v4498 = vadd.f32 0.0, %v4497
    %v4499 = vpop.f32.mrf.mxu0
    %4500 = vmatprep.mubr.bf16.mxu0 %v3533
    %4501 = vmatmul.mubr.bf16.gmra.mxu0 %v3425
    %v4502 = vpop.f32.mrf.mxu0
    %v4503 = vadd.f32 0.0, %v4502
    %v4504 = vpop.f32.mrf.mxu0
    %v4505 = vpop.f32.mrf.mxu0
    %v4506 = vadd.f32 0.0, %v4505
    %v4507 = vpop.f32.mrf.mxu0
    %4508 = vdwg.mxu0
    %4509 = vmatprep.subr.bf16.mxu0 0
    %4510 = vmatpush1.bf16.msra.mxu0 %v4099
    %4511 = vmatprep.subr.bf16.mxu0 0
    %4512 = vmatpush1.bf16.msra.mxu0 %v4098
    %4513 = vmatprep.subr.bf16.mxu0 0
    %4514 = vmatpush1.bf16.msra.mxu0 %v4097
    %4515 = vmatprep.subr.bf16.mxu0 0
    %4516 = vmatpush1.bf16.msra.mxu0 %v4096
    %4517 = vmatprep.subr.bf16.mxu0 0
    %4518 = vmatpush1.bf16.msra.mxu0 %v4095
    %4519 = vmatprep.subr.bf16.mxu0 0
    %4520 = vmatpush1.bf16.msra.mxu0 %v4094
    %4521 = vmatprep.subr.bf16.mxu0 0
    %4522 = vmatpush1.bf16.msra.mxu0 %v4093
    %4523 = vmatprep.subr.bf16.mxu0 0
    %4524 = vmatpush1.bf16.msra.mxu0 %v4092
    %4525 = vmatprep.subr.bf16.mxu0 0
    %4526 = vmatpush2.bf16.msra.mxu0 %v4107
    %4527 = vmatprep.subr.bf16.mxu0 0
    %4528 = vmatpush2.bf16.msra.mxu0 %v4106
    %4529 = vmatprep.subr.bf16.mxu0 0
    %4530 = vmatpush2.bf16.msra.mxu0 %v4105
    %4531 = vmatprep.subr.bf16.mxu0 0
    %4532 = vmatpush2.bf16.msra.mxu0 %v4104
    %4533 = vmatprep.subr.bf16.mxu0 0
    %4534 = vmatpush2.bf16.msra.mxu0 %v4103
    %4535 = vmatprep.subr.bf16.mxu0 0
    %4536 = vmatpush2.bf16.msra.mxu0 %v4102
    %4537 = vmatprep.subr.bf16.mxu0 0
    %4538 = vmatpush2.bf16.msra.mxu0 %v4101
    %4539 = vmatprep.subr.bf16.mxu0 0
    %4540 = vmatpush2.bf16.msra.mxu0 %v4100
    %4541 = vmatprep.mubr.bf16.mxu0 %v3393
    %4542 = vmatmul.mubr.bf16.gmra.mxu0 %v3608
    %v4543 = vpop.f32.mrf.mxu0
    %v4544 = vadd.f32 %v4255, %v4543
    %v4545 = vpop.f32.mrf.mxu0
    %v4546 = vpop.f32.mrf.mxu0
    %v4547 = vadd.f32 %v4258, %v4546
    %v4548 = vpop.f32.mrf.mxu0
    %4549 = vmatprep.mubr.bf16.mxu0 %v3394
    %4550 = vmatmul.mubr.bf16.gmra.mxu0 %v3609
    %v4551 = vpop.f32.mrf.mxu0
    %v4552 = vadd.f32 %v4263, %v4551
    %v4553 = vpop.f32.mrf.mxu0
    %v4554 = vpop.f32.mrf.mxu0
    %v4555 = vadd.f32 %v4266, %v4554
    %v4556 = vpop.f32.mrf.mxu0
    %4557 = vmatprep.mubr.bf16.mxu0 %v3395
    %4558 = vmatmul.mubr.bf16.gmra.mxu0 %v3610
    %v4559 = vpop.f32.mrf.mxu0
    %v4560 = vadd.f32 %v4271, %v4559
    %v4561 = vpop.f32.mrf.mxu0
    %v4562 = vpop.f32.mrf.mxu0
    %v4563 = vadd.f32 %v4274, %v4562
    %v4564 = vpop.f32.mrf.mxu0
    %4565 = vmatprep.mubr.bf16.mxu0 %v3396
    %4566 = vmatmul.mubr.bf16.gmra.mxu0 %v3611
    %v4567 = vpop.f32.mrf.mxu0
    %v4568 = vadd.f32 %v4279, %v4567
    %v4569 = vpop.f32.mrf.mxu0
    %v4570 = vpop.f32.mrf.mxu0
    %v4571 = vadd.f32 %v4282, %v4570
    %v4572 = vpop.f32.mrf.mxu0
    %4573 = vmatprep.mubr.bf16.mxu0 %v3397
    %4574 = vmatmul.mubr.bf16.gmra.mxu0 %v3612
    %v4575 = vpop.f32.mrf.mxu0
    %v4576 = vadd.f32 %v4287, %v4575
    %v4577 = vpop.f32.mrf.mxu0
    %v4578 = vpop.f32.mrf.mxu0
    %v4579 = vadd.f32 %v4290, %v4578
    %v4580 = vpop.f32.mrf.mxu0
    %4581 = vmatprep.mubr.bf16.mxu0 %v3398
    %4582 = vmatmul.mubr.bf16.gmra.mxu0 %v3613
    %v4583 = vpop.f32.mrf.mxu0
    %v4584 = vadd.f32 %v4295, %v4583
    %v4585 = vpop.f32.mrf.mxu0
    %v4586 = vpop.f32.mrf.mxu0
    %v4587 = vadd.f32 %v4298, %v4586
    %v4588 = vpop.f32.mrf.mxu0
    %4589 = vmatprep.mubr.bf16.mxu0 %v3399
    %4590 = vmatmul.mubr.bf16.gmra.mxu0 %v3614
    %v4591 = vpop.f32.mrf.mxu0
    %v4592 = vadd.f32 %v4303, %v4591
    %v4593 = vpop.f32.mrf.mxu0
    %v4594 = vpop.f32.mrf.mxu0
    %v4595 = vadd.f32 %v4306, %v4594
    %v4596 = vpop.f32.mrf.mxu0
    %4597 = vmatprep.mubr.bf16.mxu0 %v3400
    %4598 = vmatmul.mubr.bf16.gmra.mxu0 %v3615
    %v4599 = vpop.f32.mrf.mxu0
    %v4600 = vadd.f32 %v4311, %v4599
    %v4601 = vpop.f32.mrf.mxu0
    %v4602 = vpop.f32.mrf.mxu0
    %v4603 = vadd.f32 %v4314, %v4602
    %v4604 = vpop.f32.mrf.mxu0
    %4605 = vmatprep.mubr.bf16.mxu0 %v3401
    %4606 = vmatmul.mubr.bf16.gmra.mxu0 %v3616
    %v4607 = vpop.f32.mrf.mxu0
    %v4608 = vadd.f32 %v4319, %v4607
    %v4609 = vpop.f32.mrf.mxu0
    %v4610 = vpop.f32.mrf.mxu0
    %v4611 = vadd.f32 %v4322, %v4610
    %v4612 = vpop.f32.mrf.mxu0
    %4613 = vmatprep.mubr.bf16.mxu0 %v3402
    %4614 = vmatmul.mubr.bf16.gmra.mxu0 %v3617
    %v4615 = vpop.f32.mrf.mxu0
    %v4616 = vadd.f32 %v4327, %v4615
    %v4617 = vpop.f32.mrf.mxu0
    %v4618 = vpop.f32.mrf.mxu0
    %v4619 = vadd.f32 %v4330, %v4618
    %v4620 = vpop.f32.mrf.mxu0
    %4621 = vmatprep.mubr.bf16.mxu0 %v3403
    %4622 = vmatmul.mubr.bf16.gmra.mxu0 %v3618
    %v4623 = vpop.f32.mrf.mxu0
    %v4624 = vadd.f32 %v4335, %v4623
    %v4625 = vpop.f32.mrf.mxu0
    %v4626 = vpop.f32.mrf.mxu0
    %v4627 = vadd.f32 %v4338, %v4626
    %v4628 = vpop.f32.mrf.mxu0
    %4629 = vmatprep.mubr.bf16.mxu0 %v3404
    %4630 = vmatmul.mubr.bf16.gmra.mxu0 %v3619
    %v4631 = vpop.f32.mrf.mxu0
    %v4632 = vadd.f32 %v4343, %v4631
    %v4633 = vpop.f32.mrf.mxu0
    %v4634 = vpop.f32.mrf.mxu0
    %v4635 = vadd.f32 %v4346, %v4634
    %v4636 = vpop.f32.mrf.mxu0
    %4637 = vmatprep.mubr.bf16.mxu0 %v3405
    %4638 = vmatmul.mubr.bf16.gmra.mxu0 %v3620
    %v4639 = vpop.f32.mrf.mxu0
    %v4640 = vadd.f32 %v4351, %v4639
    %v4641 = vpop.f32.mrf.mxu0
    %v4642 = vpop.f32.mrf.mxu0
    %v4643 = vadd.f32 %v4354, %v4642
    %v4644 = vpop.f32.mrf.mxu0
    %4645 = vmatprep.mubr.bf16.mxu0 %v3406
    %4646 = vmatmul.mubr.bf16.gmra.mxu0 %v3621
    %v4647 = vpop.f32.mrf.mxu0
    %v4648 = vadd.f32 %v4359, %v4647
    %v4649 = vpop.f32.mrf.mxu0
    %v4650 = vpop.f32.mrf.mxu0
    %v4651 = vadd.f32 %v4362, %v4650
    %v4652 = vpop.f32.mrf.mxu0
    %4653 = vmatprep.mubr.bf16.mxu0 %v3407
    %4654 = vmatmul.mubr.bf16.gmra.mxu0 %v3622
    %v4655 = vpop.f32.mrf.mxu0
    %v4656 = vadd.f32 %v4367, %v4655
    %v4657 = vpop.f32.mrf.mxu0
    %v4658 = vpop.f32.mrf.mxu0
    %v4659 = vadd.f32 %v4370, %v4658
    %v4660 = vpop.f32.mrf.mxu0
    %4661 = vmatprep.mubr.bf16.mxu0 %v3408
    %4662 = vmatmul.mubr.bf16.gmra.mxu0 %v3623
    %v4663 = vpop.f32.mrf.mxu0
    %v4664 = vadd.f32 %v4375, %v4663
    %v4665 = vpop.f32.mrf.mxu0
    %v4666 = vpop.f32.mrf.mxu0
    %v4667 = vadd.f32 %v4378, %v4666
    %v4668 = vpop.f32.mrf.mxu0
    %4669 = vmatprep.mubr.bf16.mxu0 %v3411
    %4670 = vmatmul.mubr.bf16.gmra.mxu0 %v3626
    %v4671 = vpop.f32.mrf.mxu0
    %v4672 = vadd.f32 %v4383, %v4671
    %v4673 = vpop.f32.mrf.mxu0
    %v4674 = vpop.f32.mrf.mxu0
    %v4675 = vadd.f32 %v4386, %v4674
    %v4676 = vpop.f32.mrf.mxu0
    %4677 = vmatprep.mubr.bf16.mxu0 %v3412
    %4678 = vmatmul.mubr.bf16.gmra.mxu0 %v3627
    %v4679 = vpop.f32.mrf.mxu0
    %v4680 = vadd.f32 %v4391, %v4679
    %v4681 = vpop.f32.mrf.mxu0
    %v4682 = vpop.f32.mrf.mxu0
    %v4683 = vadd.f32 %v4394, %v4682
    %v4684 = vpop.f32.mrf.mxu0
    %4685 = vmatprep.mubr.bf16.mxu0 %v3413
    %4686 = vmatmul.mubr.bf16.gmra.mxu0 %v3628
    %v4687 = vpop.f32.mrf.mxu0
    %v4688 = vadd.f32 %v4399, %v4687
    %v4689 = vpop.f32.mrf.mxu0
    %v4690 = vpop.f32.mrf.mxu0
    %v4691 = vadd.f32 %v4402, %v4690
    %v4692 = vpop.f32.mrf.mxu0
    %4693 = vmatprep.mubr.bf16.mxu0 %v3414
    %4694 = vmatmul.mubr.bf16.gmra.mxu0 %v3629
    %v4695 = vpop.f32.mrf.mxu0
    %v4696 = vadd.f32 %v4407, %v4695
    %v4697 = vpop.f32.mrf.mxu0
    %v4698 = vpop.f32.mrf.mxu0
    %v4699 = vadd.f32 %v4410, %v4698
    %v4700 = vpop.f32.mrf.mxu0
    %4701 = vmatprep.mubr.bf16.mxu0 %v3415
    %4702 = vmatmul.mubr.bf16.gmra.mxu0 %v3630
    %v4703 = vpop.f32.mrf.mxu0
    %v4704 = vadd.f32 %v4415, %v4703
    %v4705 = vpop.f32.mrf.mxu0
    %v4706 = vpop.f32.mrf.mxu0
    %v4707 = vadd.f32 %v4418, %v4706
    %v4708 = vpop.f32.mrf.mxu0
    %4709 = vmatprep.mubr.bf16.mxu0 %v3416
    %4710 = vmatmul.mubr.bf16.gmra.mxu0 %v3631
    %v4711 = vpop.f32.mrf.mxu0
    %v4712 = vadd.f32 %v4423, %v4711
    %v4713 = vpop.f32.mrf.mxu0
    %v4714 = vpop.f32.mrf.mxu0
    %v4715 = vadd.f32 %v4426, %v4714
    %v4716 = vpop.f32.mrf.mxu0
    %4717 = vmatprep.mubr.bf16.mxu0 %v3417
    %4718 = vmatmul.mubr.bf16.gmra.mxu0 %v3632
    %v4719 = vpop.f32.mrf.mxu0
    %v4720 = vadd.f32 %v4431, %v4719
    %v4721 = vpop.f32.mrf.mxu0
    %v4722 = vpop.f32.mrf.mxu0
    %v4723 = vadd.f32 %v4434, %v4722
    %v4724 = vpop.f32.mrf.mxu0
    %4725 = vmatprep.mubr.bf16.mxu0 %v3418
    %4726 = vmatmul.mubr.bf16.gmra.mxu0 %v3633
    %v4727 = vpop.f32.mrf.mxu0
    %v4728 = vadd.f32 %v4439, %v4727
    %v4729 = vpop.f32.mrf.mxu0
    %v4730 = vpop.f32.mrf.mxu0
    %v4731 = vadd.f32 %v4442, %v4730
    %v4732 = vpop.f32.mrf.mxu0
    %4733 = vmatprep.mubr.bf16.mxu0 %v3419
    %4734 = vmatmul.mubr.bf16.gmra.mxu0 %v3634
    %v4735 = vpop.f32.mrf.mxu0
    %v4736 = vadd.f32 %v4447, %v4735
    %v4737 = vpop.f32.mrf.mxu0
    %v4738 = vpop.f32.mrf.mxu0
    %v4739 = vadd.f32 %v4450, %v4738
    %v4740 = vpop.f32.mrf.mxu0
    %4741 = vmatprep.mubr.bf16.mxu0 %v3420
    %4742 = vmatmul.mubr.bf16.gmra.mxu0 %v3635
    %v4743 = vpop.f32.mrf.mxu0
    %v4744 = vadd.f32 %v4455, %v4743
    %v4745 = vpop.f32.mrf.mxu0
    %v4746 = vpop.f32.mrf.mxu0
    %v4747 = vadd.f32 %v4458, %v4746
    %v4748 = vpop.f32.mrf.mxu0
    %4749 = vmatprep.mubr.bf16.mxu0 %v3421
    %4750 = vmatmul.mubr.bf16.gmra.mxu0 %v3636
    %v4751 = vpop.f32.mrf.mxu0
    %v4752 = vadd.f32 %v4463, %v4751
    %v4753 = vpop.f32.mrf.mxu0
    %v4754 = vpop.f32.mrf.mxu0
    %v4755 = vadd.f32 %v4466, %v4754
    %v4756 = vpop.f32.mrf.mxu0
    %4757 = vmatprep.mubr.bf16.mxu0 %v3422
    %4758 = vmatmul.mubr.bf16.gmra.mxu0 %v3637
    %v4759 = vpop.f32.mrf.mxu0
    %v4760 = vadd.f32 %v4471, %v4759
    %v4761 = vpop.f32.mrf.mxu0
    %v4762 = vpop.f32.mrf.mxu0
    %v4763 = vadd.f32 %v4474, %v4762
    %v4764 = vpop.f32.mrf.mxu0
    %4765 = vmatprep.mubr.bf16.mxu0 %v3423
    %4766 = vmatmul.mubr.bf16.gmra.mxu0 %v3638
    %v4767 = vpop.f32.mrf.mxu0
    %v4768 = vadd.f32 %v4479, %v4767
    %v4769 = vpop.f32.mrf.mxu0
    %v4770 = vpop.f32.mrf.mxu0
    %v4771 = vadd.f32 %v4482, %v4770
    %v4772 = vpop.f32.mrf.mxu0
    %4773 = vmatprep.mubr.bf16.mxu0 %v3424
    %4774 = vmatmul.mubr.bf16.gmra.mxu0 %v3639
    %v4775 = vpop.f32.mrf.mxu0
    %v4776 = vadd.f32 %v4487, %v4775
    %v4777 = vpop.f32.mrf.mxu0
    %v4778 = vpop.f32.mrf.mxu0
    %v4779 = vadd.f32 %v4490, %v4778
    %v4780 = vpop.f32.mrf.mxu0
    %4781 = vmatprep.mubr.bf16.mxu0 %v3425
    %4782 = vmatmul.mubr.bf16.gmra.mxu0 %v3640
    %v4783 = vpop.f32.mrf.mxu0
    %v4784 = vadd.f32 %v4495, %v4783
    %v4785 = vpop.f32.mrf.mxu0
    %v4786 = vpop.f32.mrf.mxu0
    %v4787 = vadd.f32 %v4498, %v4786
    %v4788 = vpop.f32.mrf.mxu0
    %4789 = vmatprep.mubr.bf16.mxu0 %v3426
    %4790 = vmatmul.mubr.bf16.gmra.mxu0 %v3641
    %v4791 = vpop.f32.mrf.mxu0
    %v4792 = vadd.f32 %v4503, %v4791
    %v4793 = vpop.f32.mrf.mxu0
    %v4794 = vpop.f32.mrf.mxu0
    %v4795 = vadd.f32 %v4506, %v4794
    %v4796 = vpop.f32.mrf.mxu0
    %4797 = vdwg.mxu0
    %4798 = vmatprep.subr.bf16.mxu0 0
    %4799 = vmatpush1.bf16.msra.mxu0 %v4115
    %4800 = vmatprep.subr.bf16.mxu0 0
    %4801 = vmatpush1.bf16.msra.mxu0 %v4114
    %4802 = vmatprep.subr.bf16.mxu0 0
    %4803 = vmatpush1.bf16.msra.mxu0 %v4113
    %4804 = vmatprep.subr.bf16.mxu0 0
    %4805 = vmatpush1.bf16.msra.mxu0 %v4112
    %4806 = vmatprep.subr.bf16.mxu0 0
    %4807 = vmatpush1.bf16.msra.mxu0 %v4111
    %4808 = vmatprep.subr.bf16.mxu0 0
    %4809 = vmatpush1.bf16.msra.mxu0 %v4110
    %4810 = vmatprep.subr.bf16.mxu0 0
    %4811 = vmatpush1.bf16.msra.mxu0 %v4109
    %4812 = vmatprep.subr.bf16.mxu0 0
    %4813 = vmatpush1.bf16.msra.mxu0 %v4108
    %4814 = vmatprep.subr.bf16.mxu0 0
    %4815 = vmatpush2.bf16.msra.mxu0 %v4123
    %4816 = vmatprep.subr.bf16.mxu0 0
    %4817 = vmatpush2.bf16.msra.mxu0 %v4122
    %4818 = vmatprep.subr.bf16.mxu0 0
    %4819 = vmatpush2.bf16.msra.mxu0 %v4121
    %4820 = vmatprep.subr.bf16.mxu0 0
    %4821 = vmatpush2.bf16.msra.mxu0 %v4120
    %4822 = vmatprep.subr.bf16.mxu0 0
    %4823 = vmatpush2.bf16.msra.mxu0 %v4119
    %4824 = vmatprep.subr.bf16.mxu0 0
    %4825 = vmatpush2.bf16.msra.mxu0 %v4118
    %4826 = vmatprep.subr.bf16.mxu0 0
    %4827 = vmatpush2.bf16.msra.mxu0 %v4117
    %4828 = vmatprep.subr.bf16.mxu0 0
    %4829 = vmatpush2.bf16.msra.mxu0 %v4116
    %4830 = vmatprep.mubr.bf16.mxu0 %v3609
    %4831 = vmatmul.mubr.bf16.gmra.mxu0 %v3501
    %v4832 = vpop.f32.mrf.mxu0
    %v4833 = vadd.f32 %v4544, %v4832
    %v4834 = vpop.f32.mrf.mxu0
    %v4835 = vpop.f32.mrf.mxu0
    %v4836 = vadd.f32 %v4547, %v4835
    %v4837 = vpop.f32.mrf.mxu0
    %4838 = vmatprep.mubr.bf16.mxu0 %v3610
    %4839 = vmatmul.mubr.bf16.gmra.mxu0 %v3502
    %v4840 = vpop.f32.mrf.mxu0
    %v4841 = vadd.f32 %v4552, %v4840
    %v4842 = vpop.f32.mrf.mxu0
    %v4843 = vpop.f32.mrf.mxu0
    %v4844 = vadd.f32 %v4555, %v4843
    %v4845 = vpop.f32.mrf.mxu0
    %4846 = vmatprep.mubr.bf16.mxu0 %v3611
    %4847 = vmatmul.mubr.bf16.gmra.mxu0 %v3503
    %v4848 = vpop.f32.mrf.mxu0
    %v4849 = vadd.f32 %v4560, %v4848
    %v4850 = vpop.f32.mrf.mxu0
    %v4851 = vpop.f32.mrf.mxu0
    %v4852 = vadd.f32 %v4563, %v4851
    %v4853 = vpop.f32.mrf.mxu0
    %4854 = vmatprep.mubr.bf16.mxu0 %v3612
    %4855 = vmatmul.mubr.bf16.gmra.mxu0 %v3504
    %v4856 = vpop.f32.mrf.mxu0
    %v4857 = vadd.f32 %v4568, %v4856
    %v4858 = vpop.f32.mrf.mxu0
    %v4859 = vpop.f32.mrf.mxu0
    %v4860 = vadd.f32 %v4571, %v4859
    %v4861 = vpop.f32.mrf.mxu0
    %4862 = vmatprep.mubr.bf16.mxu0 %v3613
    %4863 = vmatmul.mubr.bf16.gmra.mxu0 %v3505
    %v4864 = vpop.f32.mrf.mxu0
    %v4865 = vadd.f32 %v4576, %v4864
    %v4866 = vpop.f32.mrf.mxu0
    %v4867 = vpop.f32.mrf.mxu0
    %v4868 = vadd.f32 %v4579, %v4867
    %v4869 = vpop.f32.mrf.mxu0
    %4870 = vmatprep.mubr.bf16.mxu0 %v3614
    %4871 = vmatmul.mubr.bf16.gmra.mxu0 %v3506
    %v4872 = vpop.f32.mrf.mxu0
    %v4873 = vadd.f32 %v4584, %v4872
    %v4874 = vpop.f32.mrf.mxu0
    %v4875 = vpop.f32.mrf.mxu0
    %v4876 = vadd.f32 %v4587, %v4875
    %v4877 = vpop.f32.mrf.mxu0
    %4878 = vmatprep.mubr.bf16.mxu0 %v3615
    %4879 = vmatmul.mubr.bf16.gmra.mxu0 %v3507
    %v4880 = vpop.f32.mrf.mxu0
    %v4881 = vadd.f32 %v4592, %v4880
    %v4882 = vpop.f32.mrf.mxu0
    %v4883 = vpop.f32.mrf.mxu0
    %v4884 = vadd.f32 %v4595, %v4883
    %v4885 = vpop.f32.mrf.mxu0
    %4886 = vmatprep.mubr.bf16.mxu0 %v3616
    %4887 = vmatmul.mubr.bf16.gmra.mxu0 %v3508
    %v4888 = vpop.f32.mrf.mxu0
    %v4889 = vadd.f32 %v4600, %v4888
    %v4890 = vpop.f32.mrf.mxu0
    %v4891 = vpop.f32.mrf.mxu0
    %v4892 = vadd.f32 %v4603, %v4891
    %v4893 = vpop.f32.mrf.mxu0
    %4894 = vmatprep.mubr.bf16.mxu0 %v3617
    %4895 = vmatmul.mubr.bf16.gmra.mxu0 %v3509
    %v4896 = vpop.f32.mrf.mxu0
    %v4897 = vadd.f32 %v4608, %v4896
    %v4898 = vpop.f32.mrf.mxu0
    %v4899 = vpop.f32.mrf.mxu0
    %v4900 = vadd.f32 %v4611, %v4899
    %v4901 = vpop.f32.mrf.mxu0
    %4902 = vmatprep.mubr.bf16.mxu0 %v3618
    %4903 = vmatmul.mubr.bf16.gmra.mxu0 %v3510
    %v4904 = vpop.f32.mrf.mxu0
    %v4905 = vadd.f32 %v4616, %v4904
    %v4906 = vpop.f32.mrf.mxu0
    %v4907 = vpop.f32.mrf.mxu0
    %v4908 = vadd.f32 %v4619, %v4907
    %v4909 = vpop.f32.mrf.mxu0
    %4910 = vmatprep.mubr.bf16.mxu0 %v3619
    %4911 = vmatmul.mubr.bf16.gmra.mxu0 %v3511
    %v4912 = vpop.f32.mrf.mxu0
    %v4913 = vadd.f32 %v4624, %v4912
    %v4914 = vpop.f32.mrf.mxu0
    %v4915 = vpop.f32.mrf.mxu0
    %v4916 = vadd.f32 %v4627, %v4915
    %v4917 = vpop.f32.mrf.mxu0
    %4918 = vmatprep.mubr.bf16.mxu0 %v3620
    %4919 = vmatmul.mubr.bf16.gmra.mxu0 %v3512
    %v4920 = vpop.f32.mrf.mxu0
    %v4921 = vadd.f32 %v4632, %v4920
    %v4922 = vpop.f32.mrf.mxu0
    %v4923 = vpop.f32.mrf.mxu0
    %v4924 = vadd.f32 %v4635, %v4923
    %v4925 = vpop.f32.mrf.mxu0
    %4926 = vmatprep.mubr.bf16.mxu0 %v3621
    %4927 = vmatmul.mubr.bf16.gmra.mxu0 %v3513
    %v4928 = vpop.f32.mrf.mxu0
    %v4929 = vadd.f32 %v4640, %v4928
    %v4930 = vpop.f32.mrf.mxu0
    %v4931 = vpop.f32.mrf.mxu0
    %v4932 = vadd.f32 %v4643, %v4931
    %v4933 = vpop.f32.mrf.mxu0
    %4934 = vmatprep.mubr.bf16.mxu0 %v3622
    %4935 = vmatmul.mubr.bf16.gmra.mxu0 %v3514
    %v4936 = vpop.f32.mrf.mxu0
    %v4937 = vadd.f32 %v4648, %v4936
    %v4938 = vpop.f32.mrf.mxu0
    %v4939 = vpop.f32.mrf.mxu0
    %v4940 = vadd.f32 %v4651, %v4939
    %v4941 = vpop.f32.mrf.mxu0
    %4942 = vmatprep.mubr.bf16.mxu0 %v3623
    %4943 = vmatmul.mubr.bf16.gmra.mxu0 %v3515
    %v4944 = vpop.f32.mrf.mxu0
    %v4945 = vadd.f32 %v4656, %v4944
    %v4946 = vpop.f32.mrf.mxu0
    %v4947 = vpop.f32.mrf.mxu0
    %v4948 = vadd.f32 %v4659, %v4947
    %v4949 = vpop.f32.mrf.mxu0
    %4950 = vmatprep.mubr.bf16.mxu0 %v3624
    %4951 = vmatmul.mubr.bf16.gmra.mxu0 %v3516
    %v4952 = vpop.f32.mrf.mxu0
    %v4953 = vadd.f32 %v4664, %v4952
    %v4954 = vpop.f32.mrf.mxu0
    %v4955 = vpop.f32.mrf.mxu0
    %v4956 = vadd.f32 %v4667, %v4955
    %v4957 = vpop.f32.mrf.mxu0
    %4958 = vmatprep.mubr.bf16.mxu0 %v3627
    %4959 = vmatmul.mubr.bf16.gmra.mxu0 %v3519
    %v4960 = vpop.f32.mrf.mxu0
    %v4961 = vadd.f32 %v4672, %v4960
    %v4962 = vpop.f32.mrf.mxu0
    %v4963 = vpop.f32.mrf.mxu0
    %v4964 = vadd.f32 %v4675, %v4963
    %v4965 = vpop.f32.mrf.mxu0
    %4966 = vmatprep.mubr.bf16.mxu0 %v3628
    %4967 = vmatmul.mubr.bf16.gmra.mxu0 %v3520
    %v4968 = vpop.f32.mrf.mxu0
    %v4969 = vadd.f32 %v4680, %v4968
    %v4970 = vpop.f32.mrf.mxu0
    %v4971 = vpop.f32.mrf.mxu0
    %v4972 = vadd.f32 %v4683, %v4971
    %v4973 = vpop.f32.mrf.mxu0
    %4974 = vmatprep.mubr.bf16.mxu0 %v3629
    %4975 = vmatmul.mubr.bf16.gmra.mxu0 %v3521
    %v4976 = vpop.f32.mrf.mxu0
    %v4977 = vadd.f32 %v4688, %v4976
    %v4978 = vpop.f32.mrf.mxu0
    %v4979 = vpop.f32.mrf.mxu0
    %v4980 = vadd.f32 %v4691, %v4979
    %v4981 = vpop.f32.mrf.mxu0
    %4982 = vmatprep.mubr.bf16.mxu0 %v3630
    %4983 = vmatmul.mubr.bf16.gmra.mxu0 %v3522
    %v4984 = vpop.f32.mrf.mxu0
    %v4985 = vadd.f32 %v4696, %v4984
    %v4986 = vpop.f32.mrf.mxu0
    %v4987 = vpop.f32.mrf.mxu0
    %v4988 = vadd.f32 %v4699, %v4987
    %v4989 = vpop.f32.mrf.mxu0
    %4990 = vmatprep.mubr.bf16.mxu0 %v3631
    %4991 = vmatmul.mubr.bf16.gmra.mxu0 %v3523
    %v4992 = vpop.f32.mrf.mxu0
    %v4993 = vadd.f32 %v4704, %v4992
    %v4994 = vpop.f32.mrf.mxu0
    %v4995 = vpop.f32.mrf.mxu0
    %v4996 = vadd.f32 %v4707, %v4995
    %v4997 = vpop.f32.mrf.mxu0
    %4998 = vmatprep.mubr.bf16.mxu0 %v3632
    %4999 = vmatmul.mubr.bf16.gmra.mxu0 %v3524
    %v5000 = vpop.f32.mrf.mxu0
    %v5001 = vadd.f32 %v4712, %v5000
    %v5002 = vpop.f32.mrf.mxu0
    %v5003 = vpop.f32.mrf.mxu0
    %v5004 = vadd.f32 %v4715, %v5003
    %v5005 = vpop.f32.mrf.mxu0
    %5006 = vmatprep.mubr.bf16.mxu0 %v3633
    %5007 = vmatmul.mubr.bf16.gmra.mxu0 %v3525
    %v5008 = vpop.f32.mrf.mxu0
    %v5009 = vadd.f32 %v4720, %v5008
    %v5010 = vpop.f32.mrf.mxu0
    %v5011 = vpop.f32.mrf.mxu0
    %v5012 = vadd.f32 %v4723, %v5011
    %v5013 = vpop.f32.mrf.mxu0
    %5014 = vmatprep.mubr.bf16.mxu0 %v3634
    %5015 = vmatmul.mubr.bf16.gmra.mxu0 %v3526
    %v5016 = vpop.f32.mrf.mxu0
    %v5017 = vadd.f32 %v4728, %v5016
    %v5018 = vpop.f32.mrf.mxu0
    %v5019 = vpop.f32.mrf.mxu0
    %v5020 = vadd.f32 %v4731, %v5019
    %v5021 = vpop.f32.mrf.mxu0
    %5022 = vmatprep.mubr.bf16.mxu0 %v3635
    %5023 = vmatmul.mubr.bf16.gmra.mxu0 %v3527
    %v5024 = vpop.f32.mrf.mxu0
    %v5025 = vadd.f32 %v4736, %v5024
    %v5026 = vpop.f32.mrf.mxu0
    %v5027 = vpop.f32.mrf.mxu0
    %v5028 = vadd.f32 %v4739, %v5027
    %v5029 = vpop.f32.mrf.mxu0
    %5030 = vmatprep.mubr.bf16.mxu0 %v3636
    %5031 = vmatmul.mubr.bf16.gmra.mxu0 %v3528
    %v5032 = vpop.f32.mrf.mxu0
    %v5033 = vadd.f32 %v4744, %v5032
    %v5034 = vpop.f32.mrf.mxu0
    %v5035 = vpop.f32.mrf.mxu0
    %v5036 = vadd.f32 %v4747, %v5035
    %v5037 = vpop.f32.mrf.mxu0
    %5038 = vmatprep.mubr.bf16.mxu0 %v3637
    %5039 = vmatmul.mubr.bf16.gmra.mxu0 %v3529
    %v5040 = vpop.f32.mrf.mxu0
    %v5041 = vadd.f32 %v4752, %v5040
    %v5042 = vpop.f32.mrf.mxu0
    %v5043 = vpop.f32.mrf.mxu0
    %v5044 = vadd.f32 %v4755, %v5043
    %v5045 = vpop.f32.mrf.mxu0
    %5046 = vmatprep.mubr.bf16.mxu0 %v3638
    %5047 = vmatmul.mubr.bf16.gmra.mxu0 %v3530
    %v5048 = vpop.f32.mrf.mxu0
    %v5049 = vadd.f32 %v4760, %v5048
    %v5050 = vpop.f32.mrf.mxu0
    %v5051 = vpop.f32.mrf.mxu0
    %v5052 = vadd.f32 %v4763, %v5051
    %v5053 = vpop.f32.mrf.mxu0
    %5054 = vmatprep.mubr.bf16.mxu0 %v3639
    %5055 = vmatmul.mubr.bf16.gmra.mxu0 %v3531
    %v5056 = vpop.f32.mrf.mxu0
    %v5057 = vadd.f32 %v4768, %v5056
    %v5058 = vpop.f32.mrf.mxu0
    %v5059 = vpop.f32.mrf.mxu0
    %v5060 = vadd.f32 %v4771, %v5059
    %v5061 = vpop.f32.mrf.mxu0
    %5062 = vmatprep.mubr.bf16.mxu0 %v3640
    %5063 = vmatmul.mubr.bf16.gmra.mxu0 %v3532
    %v5064 = vpop.f32.mrf.mxu0
    %v5065 = vadd.f32 %v4776, %v5064
    %v5066 = vpop.f32.mrf.mxu0
    %v5067 = vpop.f32.mrf.mxu0
    %v5068 = vadd.f32 %v4779, %v5067
    %v5069 = vpop.f32.mrf.mxu0
    %5070 = vmatprep.mubr.bf16.mxu0 %v3641
    %5071 = vmatmul.mubr.bf16.gmra.mxu0 %v3533
    %v5072 = vpop.f32.mrf.mxu0
    %v5073 = vadd.f32 %v4784, %v5072
    %v5074 = vpop.f32.mrf.mxu0
    %v5075 = vpop.f32.mrf.mxu0
    %v5076 = vadd.f32 %v4787, %v5075
    %v5077 = vpop.f32.mrf.mxu0
    %5078 = vmatprep.mubr.bf16.mxu0 %v3642
    %5079 = vmatmul.mubr.bf16.gmra.mxu0 %v3534
    %v5080 = vpop.f32.mrf.mxu0
    %v5081 = vadd.f32 %v4792, %v5080
    %v5082 = vpop.f32.mrf.mxu0
    %v5083 = vpop.f32.mrf.mxu0
    %v5084 = vadd.f32 %v4795, %v5083
    %v5085 = vpop.f32.mrf.mxu0
    %5086 = vdwg.mxu0
    %5087 = vmatprep.subr.bf16.mxu0 0
    %5088 = vmatpush1.bf16.msra.mxu0 %v4131
    %5089 = vmatprep.subr.bf16.mxu0 0
    %5090 = vmatpush1.bf16.msra.mxu0 %v4130
    %5091 = vmatprep.subr.bf16.mxu0 0
    %5092 = vmatpush1.bf16.msra.mxu0 %v4129
    %5093 = vmatprep.subr.bf16.mxu0 0
    %5094 = vmatpush1.bf16.msra.mxu0 %v4128
    %5095 = vmatprep.subr.bf16.mxu0 0
    %5096 = vmatpush1.bf16.msra.mxu0 %v4127
    %5097 = vmatprep.subr.bf16.mxu0 0
    %5098 = vmatpush1.bf16.msra.mxu0 %v4126
    %5099 = vmatprep.subr.bf16.mxu0 0
    %5100 = vmatpush1.bf16.msra.mxu0 %v4125
    %5101 = vmatprep.subr.bf16.mxu0 0
    %5102 = vmatpush1.bf16.msra.mxu0 %v4124
    %5103 = vmatprep.subr.bf16.mxu0 0
    %5104 = vmatpush2.bf16.msra.mxu0 %v4139
    %5105 = vmatprep.subr.bf16.mxu0 0
    %5106 = vmatpush2.bf16.msra.mxu0 %v4138
    %5107 = vmatprep.subr.bf16.mxu0 0
    %5108 = vmatpush2.bf16.msra.mxu0 %v4137
    %5109 = vmatprep.subr.bf16.mxu0 0
    %5110 = vmatpush2.bf16.msra.mxu0 %v4136
    %5111 = vmatprep.subr.bf16.mxu0 0
    %5112 = vmatpush2.bf16.msra.mxu0 %v4135
    %5113 = vmatprep.subr.bf16.mxu0 0
    %5114 = vmatpush2.bf16.msra.mxu0 %v4134
    %5115 = vmatprep.subr.bf16.mxu0 0
    %5116 = vmatpush2.bf16.msra.mxu0 %v4133
    %5117 = vmatprep.subr.bf16.mxu0 0
    %5118 = vmatpush2.bf16.msra.mxu0 %v4132
    %5119 = vmatprep.mubr.bf16.mxu0 %v3502
    %5120 = vmatmul.mubr.bf16.gmra.mxu0 %v3394
    %v5121 = vpop.f32.mrf.mxu0
    %v5122 = vadd.f32 %v4833, %v5121
    %v5123 = vpop.f32.mrf.mxu0
    %v5124 = vpop.f32.mrf.mxu0
    %v5125 = vadd.f32 %v4836, %v5124
    %v5126 = vpop.f32.mrf.mxu0
    %5127 = vmatprep.mubr.bf16.mxu0 %v3503
    %5128 = vmatmul.mubr.bf16.gmra.mxu0 %v3395
    %v5129 = vpop.f32.mrf.mxu0
    %v5130 = vadd.f32 %v4841, %v5129
    %v5131 = vpop.f32.mrf.mxu0
    %v5132 = vpop.f32.mrf.mxu0
    %v5133 = vadd.f32 %v4844, %v5132
    %v5134 = vpop.f32.mrf.mxu0
    %5135 = vmatprep.mubr.bf16.mxu0 %v3504
    %5136 = vmatmul.mubr.bf16.gmra.mxu0 %v3396
    %v5137 = vpop.f32.mrf.mxu0
    %v5138 = vadd.f32 %v4849, %v5137
    %v5139 = vpop.f32.mrf.mxu0
    %v5140 = vpop.f32.mrf.mxu0
    %v5141 = vadd.f32 %v4852, %v5140
    %v5142 = vpop.f32.mrf.mxu0
    %5143 = vmatprep.mubr.bf16.mxu0 %v3505
    %5144 = vmatmul.mubr.bf16.gmra.mxu0 %v3397
    %v5145 = vpop.f32.mrf.mxu0
    %v5146 = vadd.f32 %v4857, %v5145
    %v5147 = vpop.f32.mrf.mxu0
    %v5148 = vpop.f32.mrf.mxu0
    %v5149 = vadd.f32 %v4860, %v5148
    %v5150 = vpop.f32.mrf.mxu0
    %5151 = vmatprep.mubr.bf16.mxu0 %v3506
    %5152 = vmatmul.mubr.bf16.gmra.mxu0 %v3398
    %v5153 = vpop.f32.mrf.mxu0
    %v5154 = vadd.f32 %v4865, %v5153
    %v5155 = vpop.f32.mrf.mxu0
    %v5156 = vpop.f32.mrf.mxu0
    %v5157 = vadd.f32 %v4868, %v5156
    %v5158 = vpop.f32.mrf.mxu0
    %5159 = vmatprep.mubr.bf16.mxu0 %v3507
    %5160 = vmatmul.mubr.bf16.gmra.mxu0 %v3399
    %v5161 = vpop.f32.mrf.mxu0
    %v5162 = vadd.f32 %v4873, %v5161
    %v5163 = vpop.f32.mrf.mxu0
    %v5164 = vpop.f32.mrf.mxu0
    %v5165 = vadd.f32 %v4876, %v5164
    %v5166 = vpop.f32.mrf.mxu0
    %5167 = vmatprep.mubr.bf16.mxu0 %v3508
    %5168 = vmatmul.mubr.bf16.gmra.mxu0 %v3400
    %v5169 = vpop.f32.mrf.mxu0
    %v5170 = vadd.f32 %v4881, %v5169
    %v5171 = vpop.f32.mrf.mxu0
    %v5172 = vpop.f32.mrf.mxu0
    %v5173 = vadd.f32 %v4884, %v5172
    %v5174 = vpop.f32.mrf.mxu0
    %5175 = vmatprep.mubr.bf16.mxu0 %v3509
    %5176 = vmatmul.mubr.bf16.gmra.mxu0 %v3401
    %v5177 = vpop.f32.mrf.mxu0
    %v5178 = vadd.f32 %v4889, %v5177
    %v5179 = vpop.f32.mrf.mxu0
    %v5180 = vpop.f32.mrf.mxu0
    %v5181 = vadd.f32 %v4892, %v5180
    %v5182 = vpop.f32.mrf.mxu0
    %5183 = vmatprep.mubr.bf16.mxu0 %v3510
    %5184 = vmatmul.mubr.bf16.gmra.mxu0 %v3402
    %v5185 = vpop.f32.mrf.mxu0
    %v5186 = vadd.f32 %v4897, %v5185
    %v5187 = vpop.f32.mrf.mxu0
    %v5188 = vpop.f32.mrf.mxu0
    %v5189 = vadd.f32 %v4900, %v5188
    %v5190 = vpop.f32.mrf.mxu0
    %5191 = vmatprep.mubr.bf16.mxu0 %v3511
    %5192 = vmatmul.mubr.bf16.gmra.mxu0 %v3403
    %v5193 = vpop.f32.mrf.mxu0
    %v5194 = vadd.f32 %v4905, %v5193
    %v5195 = vpop.f32.mrf.mxu0
    %v5196 = vpop.f32.mrf.mxu0
    %v5197 = vadd.f32 %v4908, %v5196
    %v5198 = vpop.f32.mrf.mxu0
    %5199 = vmatprep.mubr.bf16.mxu0 %v3512
    %5200 = vmatmul.mubr.bf16.gmra.mxu0 %v3404
    %v5201 = vpop.f32.mrf.mxu0
    %v5202 = vadd.f32 %v4913, %v5201
    %v5203 = vpop.f32.mrf.mxu0
    %v5204 = vpop.f32.mrf.mxu0
    %v5205 = vadd.f32 %v4916, %v5204
    %v5206 = vpop.f32.mrf.mxu0
    %5207 = vmatprep.mubr.bf16.mxu0 %v3513
    %5208 = vmatmul.mubr.bf16.gmra.mxu0 %v3405
    %v5209 = vpop.f32.mrf.mxu0
    %v5210 = vadd.f32 %v4921, %v5209
    %v5211 = vpop.f32.mrf.mxu0
    %v5212 = vpop.f32.mrf.mxu0
    %v5213 = vadd.f32 %v4924, %v5212
    %v5214 = vpop.f32.mrf.mxu0
    %5215 = vmatprep.mubr.bf16.mxu0 %v3514
    %5216 = vmatmul.mubr.bf16.gmra.mxu0 %v3406
    %v5217 = vpop.f32.mrf.mxu0
    %v5218 = vadd.f32 %v4929, %v5217
    %v5219 = vpop.f32.mrf.mxu0
    %v5220 = vpop.f32.mrf.mxu0
    %v5221 = vadd.f32 %v4932, %v5220
    %v5222 = vpop.f32.mrf.mxu0
    %5223 = vmatprep.mubr.bf16.mxu0 %v3515
    %5224 = vmatmul.mubr.bf16.gmra.mxu0 %v3407
    %v5225 = vpop.f32.mrf.mxu0
    %v5226 = vadd.f32 %v4937, %v5225
    %v5227 = vpop.f32.mrf.mxu0
    %v5228 = vpop.f32.mrf.mxu0
    %v5229 = vadd.f32 %v4940, %v5228
    %v5230 = vpop.f32.mrf.mxu0
    %5231 = vmatprep.mubr.bf16.mxu0 %v3516
    %5232 = vmatmul.mubr.bf16.gmra.mxu0 %v3408
    %v5233 = vpop.f32.mrf.mxu0
    %v5234 = vadd.f32 %v4945, %v5233
    %v5235 = vpop.f32.mrf.mxu0
    %v5236 = vpop.f32.mrf.mxu0
    %v5237 = vadd.f32 %v4948, %v5236
    %v5238 = vpop.f32.mrf.mxu0
    %5239 = vmatprep.mubr.bf16.mxu0 %v3517
    %5240 = vmatmul.mubr.bf16.gmra.mxu0 %v3409
    %v5241 = vpop.f32.mrf.mxu0
    %v5242 = vadd.f32 %v4953, %v5241
    %v5243 = vpop.f32.mrf.mxu0
    %v5244 = vpop.f32.mrf.mxu0
    %v5245 = vadd.f32 %v4956, %v5244
    %v5246 = vpop.f32.mrf.mxu0
    %5247 = vmatprep.mubr.bf16.mxu0 %v3520
    %5248 = vmatmul.mubr.bf16.gmra.mxu0 %v3412
    %v5249 = vpop.f32.mrf.mxu0
    %v5250 = vadd.f32 %v4961, %v5249
    %v5251 = vpop.f32.mrf.mxu0
    %v5252 = vpop.f32.mrf.mxu0
    %v5253 = vadd.f32 %v4964, %v5252
    %v5254 = vpop.f32.mrf.mxu0
    %5255 = vmatprep.mubr.bf16.mxu0 %v3521
    %5256 = vmatmul.mubr.bf16.gmra.mxu0 %v3413
    %v5257 = vpop.f32.mrf.mxu0
    %v5258 = vadd.f32 %v4969, %v5257
    %v5259 = vpop.f32.mrf.mxu0
    %v5260 = vpop.f32.mrf.mxu0
    %v5261 = vadd.f32 %v4972, %v5260
    %v5262 = vpop.f32.mrf.mxu0
    %5263 = vmatprep.mubr.bf16.mxu0 %v3522
    %5264 = vmatmul.mubr.bf16.gmra.mxu0 %v3414
    %v5265 = vpop.f32.mrf.mxu0
    %v5266 = vadd.f32 %v4977, %v5265
    %v5267 = vpop.f32.mrf.mxu0
    %v5268 = vpop.f32.mrf.mxu0
    %v5269 = vadd.f32 %v4980, %v5268
    %v5270 = vpop.f32.mrf.mxu0
    %5271 = vmatprep.mubr.bf16.mxu0 %v3523
    %5272 = vmatmul.mubr.bf16.gmra.mxu0 %v3415
    %v5273 = vpop.f32.mrf.mxu0
    %v5274 = vadd.f32 %v4985, %v5273
    %v5275 = vpop.f32.mrf.mxu0
    %v5276 = vpop.f32.mrf.mxu0
    %v5277 = vadd.f32 %v4988, %v5276
    %v5278 = vpop.f32.mrf.mxu0
    %5279 = vmatprep.mubr.bf16.mxu0 %v3524
    %5280 = vmatmul.mubr.bf16.gmra.mxu0 %v3416
    %v5281 = vpop.f32.mrf.mxu0
    %v5282 = vadd.f32 %v4993, %v5281
    %v5283 = vpop.f32.mrf.mxu0
    %v5284 = vpop.f32.mrf.mxu0
    %v5285 = vadd.f32 %v4996, %v5284
    %v5286 = vpop.f32.mrf.mxu0
    %5287 = vmatprep.mubr.bf16.mxu0 %v3525
    %5288 = vmatmul.mubr.bf16.gmra.mxu0 %v3417
    %v5289 = vpop.f32.mrf.mxu0
    %v5290 = vadd.f32 %v5001, %v5289
    %v5291 = vpop.f32.mrf.mxu0
    %v5292 = vpop.f32.mrf.mxu0
    %v5293 = vadd.f32 %v5004, %v5292
    %v5294 = vpop.f32.mrf.mxu0
    %5295 = vmatprep.mubr.bf16.mxu0 %v3526
    %5296 = vmatmul.mubr.bf16.gmra.mxu0 %v3418
    %v5297 = vpop.f32.mrf.mxu0
    %v5298 = vadd.f32 %v5009, %v5297
    %v5299 = vpop.f32.mrf.mxu0
    %v5300 = vpop.f32.mrf.mxu0
    %v5301 = vadd.f32 %v5012, %v5300
    %v5302 = vpop.f32.mrf.mxu0
    %5303 = vmatprep.mubr.bf16.mxu0 %v3527
    %5304 = vmatmul.mubr.bf16.gmra.mxu0 %v3419
    %v5305 = vpop.f32.mrf.mxu0
    %v5306 = vadd.f32 %v5017, %v5305
    %v5307 = vpop.f32.mrf.mxu0
    %v5308 = vpop.f32.mrf.mxu0
    %v5309 = vadd.f32 %v5020, %v5308
    %v5310 = vpop.f32.mrf.mxu0
    %5311 = vmatprep.mubr.bf16.mxu0 %v3528
    %5312 = vmatmul.mubr.bf16.gmra.mxu0 %v3420
    %v5313 = vpop.f32.mrf.mxu0
    %v5314 = vadd.f32 %v5025, %v5313
    %v5315 = vpop.f32.mrf.mxu0
    %v5316 = vpop.f32.mrf.mxu0
    %v5317 = vadd.f32 %v5028, %v5316
    %v5318 = vpop.f32.mrf.mxu0
    %5319 = vmatprep.mubr.bf16.mxu0 %v3529
    %5320 = vmatmul.mubr.bf16.gmra.mxu0 %v3421
    %v5321 = vpop.f32.mrf.mxu0
    %v5322 = vadd.f32 %v5033, %v5321
    %v5323 = vpop.f32.mrf.mxu0
    %v5324 = vpop.f32.mrf.mxu0
    %v5325 = vadd.f32 %v5036, %v5324
    %v5326 = vpop.f32.mrf.mxu0
    %5327 = vmatprep.mubr.bf16.mxu0 %v3530
    %5328 = vmatmul.mubr.bf16.gmra.mxu0 %v3422
    %v5329 = vpop.f32.mrf.mxu0
    %v5330 = vadd.f32 %v5041, %v5329
    %v5331 = vpop.f32.mrf.mxu0
    %v5332 = vpop.f32.mrf.mxu0
    %v5333 = vadd.f32 %v5044, %v5332
    %v5334 = vpop.f32.mrf.mxu0
    %5335 = vmatprep.mubr.bf16.mxu0 %v3531
    %5336 = vmatmul.mubr.bf16.gmra.mxu0 %v3423
    %v5337 = vpop.f32.mrf.mxu0
    %v5338 = vadd.f32 %v5049, %v5337
    %v5339 = vpop.f32.mrf.mxu0
    %v5340 = vpop.f32.mrf.mxu0
    %v5341 = vadd.f32 %v5052, %v5340
    %v5342 = vpop.f32.mrf.mxu0
    %5343 = vmatprep.mubr.bf16.mxu0 %v3532
    %5344 = vmatmul.mubr.bf16.gmra.mxu0 %v3424
    %v5345 = vpop.f32.mrf.mxu0
    %v5346 = vadd.f32 %v5057, %v5345
    %v5347 = vpop.f32.mrf.mxu0
    %v5348 = vpop.f32.mrf.mxu0
    %v5349 = vadd.f32 %v5060, %v5348
    %v5350 = vpop.f32.mrf.mxu0
    %5351 = vmatprep.mubr.bf16.mxu0 %v3533
    %5352 = vmatmul.mubr.bf16.gmra.mxu0 %v3425
    %v5353 = vpop.f32.mrf.mxu0
    %v5354 = vadd.f32 %v5065, %v5353
    %v5355 = vpop.f32.mrf.mxu0
    %v5356 = vpop.f32.mrf.mxu0
    %v5357 = vadd.f32 %v5068, %v5356
    %v5358 = vpop.f32.mrf.mxu0
    %5359 = vmatprep.mubr.bf16.mxu0 %v3534
    %5360 = vmatmul.mubr.bf16.gmra.mxu0 %v3426
    %v5361 = vpop.f32.mrf.mxu0
    %v5362 = vadd.f32 %v5073, %v5361
    %v5363 = vpop.f32.mrf.mxu0
    %v5364 = vpop.f32.mrf.mxu0
    %v5365 = vadd.f32 %v5076, %v5364
    %v5366 = vpop.f32.mrf.mxu0
    %5367 = vmatprep.mubr.bf16.mxu0 %v3535
    %5368 = vmatmul.mubr.bf16.gmra.mxu0 %v3427
    %v5369 = vpop.f32.mrf.mxu0
    %v5370 = vadd.f32 %v5081, %v5369
    %v5371 = vpop.f32.mrf.mxu0
    %v5372 = vpop.f32.mrf.mxu0
    %v5373 = vadd.f32 %v5084, %v5372
    %v5374 = vpop.f32.mrf.mxu0
    %5375 = vdwg.mxu0
    %5376 = vmatprep.subr.bf16.mxu0 0
    %5377 = vmatpush1.bf16.msra.mxu0 %v4147
    %5378 = vmatprep.subr.bf16.mxu0 0
    %5379 = vmatpush1.bf16.msra.mxu0 %v4146
    %5380 = vmatprep.subr.bf16.mxu0 0
    %5381 = vmatpush1.bf16.msra.mxu0 %v4145
    %5382 = vmatprep.subr.bf16.mxu0 0
    %5383 = vmatpush1.bf16.msra.mxu0 %v4144
    %5384 = vmatprep.subr.bf16.mxu0 0
    %5385 = vmatpush1.bf16.msra.mxu0 %v4143
    %5386 = vmatprep.subr.bf16.mxu0 0
    %5387 = vmatpush1.bf16.msra.mxu0 %v4142
    %5388 = vmatprep.subr.bf16.mxu0 0
    %5389 = vmatpush1.bf16.msra.mxu0 %v4141
    %5390 = vmatprep.subr.bf16.mxu0 0
    %5391 = vmatpush1.bf16.msra.mxu0 %v4140
    %5392 = vmatprep.subr.bf16.mxu0 0
    %5393 = vmatpush2.bf16.msra.mxu0 0
    %5394 = vmatprep.subr.bf16.mxu0 0
    %5395 = vmatpush2.bf16.msra.mxu0 0
    %5396 = vmatprep.subr.bf16.mxu0 0
    %5397 = vmatpush2.bf16.msra.mxu0 0
    %5398 = vmatprep.subr.bf16.mxu0 0
    %5399 = vmatpush2.bf16.msra.mxu0 0
    %5400 = vmatprep.subr.bf16.mxu0 0
    %5401 = vmatpush2.bf16.msra.mxu0 0
    %5402 = vmatprep.subr.bf16.mxu0 0
    %5403 = vmatpush2.bf16.msra.mxu0 0
    %5404 = vmatprep.subr.bf16.mxu0 0
    %5405 = vmatpush2.bf16.msra.mxu0 0
    %5406 = vmatprep.subr.bf16.mxu0 0
    %5407 = vmatpush2.bf16.msra.mxu0 0
    %5408 = vmatprep.mubr.bf16.mxu0 0
    %5409 = vmatmul.mubr.bf16.gmra.mxu0 %v3610
    %v5410 = vpop.f32.mrf.mxu0
    %v5411 = vadd.f32 %v5122, %v5410
    %v5412 = vpop.f32.mrf.mxu0
    %v5413 = vpop.f32.mrf.mxu0
    %v5414 = vadd.f32 %v5125, %v5413
    %v5415 = vpop.f32.mrf.mxu0
    %5416 = vmatprep.mubr.bf16.mxu0 0
    %5417 = vmatmul.mubr.bf16.gmra.mxu0 %v3611
    %v5418 = vpop.f32.mrf.mxu0
    %v5419 = vadd.f32 %v5130, %v5418
    %v5420 = vpop.f32.mrf.mxu0
    %v5421 = vpop.f32.mrf.mxu0
    %v5422 = vadd.f32 %v5133, %v5421
    %v5423 = vpop.f32.mrf.mxu0
    %5424 = vmatprep.mubr.bf16.mxu0 0
    %5425 = vmatmul.mubr.bf16.gmra.mxu0 %v3612
    %v5426 = vpop.f32.mrf.mxu0
    %v5427 = vadd.f32 %v5138, %v5426
    %v5428 = vpop.f32.mrf.mxu0
    %v5429 = vpop.f32.mrf.mxu0
    %v5430 = vadd.f32 %v5141, %v5429
    %v5431 = vpop.f32.mrf.mxu0
    %5432 = vmatprep.mubr.bf16.mxu0 0
    %5433 = vmatmul.mubr.bf16.gmra.mxu0 %v3613
    %v5434 = vpop.f32.mrf.mxu0
    %v5435 = vadd.f32 %v5146, %v5434
    %v5436 = vpop.f32.mrf.mxu0
    %v5437 = vpop.f32.mrf.mxu0
    %v5438 = vadd.f32 %v5149, %v5437
    %v5439 = vpop.f32.mrf.mxu0
    %5440 = vmatprep.mubr.bf16.mxu0 0
    %5441 = vmatmul.mubr.bf16.gmra.mxu0 %v3614
    %v5442 = vpop.f32.mrf.mxu0
    %v5443 = vadd.f32 %v5154, %v5442
    %v5444 = vpop.f32.mrf.mxu0
    %v5445 = vpop.f32.mrf.mxu0
    %v5446 = vadd.f32 %v5157, %v5445
    %v5447 = vpop.f32.mrf.mxu0
    %5448 = vmatprep.mubr.bf16.mxu0 0
    %5449 = vmatmul.mubr.bf16.gmra.mxu0 %v3615
    %v5450 = vpop.f32.mrf.mxu0
    %v5451 = vadd.f32 %v5162, %v5450
    %v5452 = vpop.f32.mrf.mxu0
    %v5453 = vpop.f32.mrf.mxu0
    %v5454 = vadd.f32 %v5165, %v5453
    %v5455 = vpop.f32.mrf.mxu0
    %5456 = vmatprep.mubr.bf16.mxu0 0
    %5457 = vmatmul.mubr.bf16.gmra.mxu0 %v3616
    %v5458 = vpop.f32.mrf.mxu0
    %v5459 = vadd.f32 %v5170, %v5458
    %v5460 = vpop.f32.mrf.mxu0
    %v5461 = vpop.f32.mrf.mxu0
    %v5462 = vadd.f32 %v5173, %v5461
    %v5463 = vpop.f32.mrf.mxu0
    %5464 = vmatprep.mubr.bf16.mxu0 0
    %5465 = vmatmul.mubr.bf16.gmra.mxu0 %v3617
    %v5466 = vpop.f32.mrf.mxu0
    %v5467 = vadd.f32 %v5178, %v5466
    %v5468 = vpop.f32.mrf.mxu0
    %v5469 = vpop.f32.mrf.mxu0
    %v5470 = vadd.f32 %v5181, %v5469
    %v5471 = vpop.f32.mrf.mxu0
    %5472 = vmatprep.mubr.bf16.mxu0 0
    %5473 = vmatmul.mubr.bf16.gmra.mxu0 %v3618
    %v5474 = vpop.f32.mrf.mxu0
    %v5475 = vadd.f32 %v5186, %v5474
    %v5476 = vpop.f32.mrf.mxu0
    %v5477 = vpop.f32.mrf.mxu0
    %v5478 = vadd.f32 %v5189, %v5477
    %v5479 = vpop.f32.mrf.mxu0
    %5480 = vmatprep.mubr.bf16.mxu0 0
    %5481 = vmatmul.mubr.bf16.gmra.mxu0 %v3619
    %v5482 = vpop.f32.mrf.mxu0
    %v5483 = vadd.f32 %v5194, %v5482
    %v5484 = vpop.f32.mrf.mxu0
    %v5485 = vpop.f32.mrf.mxu0
    %v5486 = vadd.f32 %v5197, %v5485
    %v5487 = vpop.f32.mrf.mxu0
    %5488 = vmatprep.mubr.bf16.mxu0 0
    %5489 = vmatmul.mubr.bf16.gmra.mxu0 %v3620
    %v5490 = vpop.f32.mrf.mxu0
    %v5491 = vadd.f32 %v5202, %v5490
    %v5492 = vpop.f32.mrf.mxu0
    %v5493 = vpop.f32.mrf.mxu0
    %v5494 = vadd.f32 %v5205, %v5493
    %v5495 = vpop.f32.mrf.mxu0
    %5496 = vmatprep.mubr.bf16.mxu0 0
    %5497 = vmatmul.mubr.bf16.gmra.mxu0 %v3621
    %v5498 = vpop.f32.mrf.mxu0
    %v5499 = vadd.f32 %v5210, %v5498
    %v5500 = vpop.f32.mrf.mxu0
    %v5501 = vpop.f32.mrf.mxu0
    %v5502 = vadd.f32 %v5213, %v5501
    %v5503 = vpop.f32.mrf.mxu0
    %5504 = vmatprep.mubr.bf16.mxu0 0
    %5505 = vmatmul.mubr.bf16.gmra.mxu0 %v3622
    %v5506 = vpop.f32.mrf.mxu0
    %v5507 = vadd.f32 %v5218, %v5506
    %v5508 = vpop.f32.mrf.mxu0
    %v5509 = vpop.f32.mrf.mxu0
    %v5510 = vadd.f32 %v5221, %v5509
    %v5511 = vpop.f32.mrf.mxu0
    %5512 = vmatprep.mubr.bf16.mxu0 0
    %5513 = vmatmul.mubr.bf16.gmra.mxu0 %v3623
    %v5514 = vpop.f32.mrf.mxu0
    %v5515 = vadd.f32 %v5226, %v5514
    %v5516 = vpop.f32.mrf.mxu0
    %v5517 = vpop.f32.mrf.mxu0
    %v5518 = vadd.f32 %v5229, %v5517
    %v5519 = vpop.f32.mrf.mxu0
    %5520 = vmatprep.mubr.bf16.mxu0 0
    %5521 = vmatmul.mubr.bf16.gmra.mxu0 %v3624
    %v5522 = vpop.f32.mrf.mxu0
    %v5523 = vadd.f32 %v5234, %v5522
    %v5524 = vpop.f32.mrf.mxu0
    %v5525 = vpop.f32.mrf.mxu0
    %v5526 = vadd.f32 %v5237, %v5525
    %v5527 = vpop.f32.mrf.mxu0
    %5528 = vmatprep.mubr.bf16.mxu0 0
    %5529 = vmatmul.mubr.bf16.gmra.mxu0 %v3625
    %v5530 = vpop.f32.mrf.mxu0
    %v5531 = vadd.f32 %v5242, %v5530
    %v5532 = vpop.f32.mrf.mxu0
    %v5533 = vpop.f32.mrf.mxu0
    %v5534 = vadd.f32 %v5245, %v5533
    %v5535 = vpop.f32.mrf.mxu0
    %5536 = vmatprep.mubr.bf16.mxu0 0
    %5537 = vmatmul.mubr.bf16.gmra.mxu0 %v3628
    %v5538 = vpop.f32.mrf.mxu0
    %v5539 = vadd.f32 %v5250, %v5538
    %v5540 = vpop.f32.mrf.mxu0
    %v5541 = vpop.f32.mrf.mxu0
    %v5542 = vadd.f32 %v5253, %v5541
    %v5543 = vpop.f32.mrf.mxu0
    %5544 = vmatprep.mubr.bf16.mxu0 0
    %5545 = vmatmul.mubr.bf16.gmra.mxu0 %v3629
    %v5546 = vpop.f32.mrf.mxu0
    %v5547 = vadd.f32 %v5258, %v5546
    %v5548 = vpop.f32.mrf.mxu0
    %v5549 = vpop.f32.mrf.mxu0
    %v5550 = vadd.f32 %v5261, %v5549
    %v5551 = vpop.f32.mrf.mxu0
    %5552 = vmatprep.mubr.bf16.mxu0 0
    %5553 = vmatmul.mubr.bf16.gmra.mxu0 %v3630
    %v5554 = vpop.f32.mrf.mxu0
    %v5555 = vadd.f32 %v5266, %v5554
    %v5556 = vpop.f32.mrf.mxu0
    %v5557 = vpop.f32.mrf.mxu0
    %v5558 = vadd.f32 %v5269, %v5557
    %v5559 = vpop.f32.mrf.mxu0
    %5560 = vmatprep.mubr.bf16.mxu0 0
    %5561 = vmatmul.mubr.bf16.gmra.mxu0 %v3631
    %v5562 = vpop.f32.mrf.mxu0
    %v5563 = vadd.f32 %v5274, %v5562
    %v5564 = vpop.f32.mrf.mxu0
    %v5565 = vpop.f32.mrf.mxu0
    %v5566 = vadd.f32 %v5277, %v5565
    %v5567 = vpop.f32.mrf.mxu0
    %5568 = vmatprep.mubr.bf16.mxu0 0
    %5569 = vmatmul.mubr.bf16.gmra.mxu0 %v3632
    %v5570 = vpop.f32.mrf.mxu0
    %v5571 = vadd.f32 %v5282, %v5570
    %v5572 = vpop.f32.mrf.mxu0
    %v5573 = vpop.f32.mrf.mxu0
    %v5574 = vadd.f32 %v5285, %v5573
    %v5575 = vpop.f32.mrf.mxu0
    %5576 = vmatprep.mubr.bf16.mxu0 0
    %5577 = vmatmul.mubr.bf16.gmra.mxu0 %v3633
    %v5578 = vpop.f32.mrf.mxu0
    %v5579 = vadd.f32 %v5290, %v5578
    %v5580 = vpop.f32.mrf.mxu0
    %v5581 = vpop.f32.mrf.mxu0
    %v5582 = vadd.f32 %v5293, %v5581
    %v5583 = vpop.f32.mrf.mxu0
    %5584 = vmatprep.mubr.bf16.mxu0 0
    %5585 = vmatmul.mubr.bf16.gmra.mxu0 %v3634
    %v5586 = vpop.f32.mrf.mxu0
    %v5587 = vadd.f32 %v5298, %v5586
    %v5588 = vpop.f32.mrf.mxu0
    %v5589 = vpop.f32.mrf.mxu0
    %v5590 = vadd.f32 %v5301, %v5589
    %v5591 = vpop.f32.mrf.mxu0
    %5592 = vmatprep.mubr.bf16.mxu0 0
    %5593 = vmatmul.mubr.bf16.gmra.mxu0 %v3635
    %v5594 = vpop.f32.mrf.mxu0
    %v5595 = vadd.f32 %v5306, %v5594
    %v5596 = vpop.f32.mrf.mxu0
    %v5597 = vpop.f32.mrf.mxu0
    %v5598 = vadd.f32 %v5309, %v5597
    %v5599 = vpop.f32.mrf.mxu0
    %5600 = vmatprep.mubr.bf16.mxu0 0
    %5601 = vmatmul.mubr.bf16.gmra.mxu0 %v3636
    %v5602 = vpop.f32.mrf.mxu0
    %v5603 = vadd.f32 %v5314, %v5602
    %v5604 = vpop.f32.mrf.mxu0
    %v5605 = vpop.f32.mrf.mxu0
    %v5606 = vadd.f32 %v5317, %v5605
    %v5607 = vpop.f32.mrf.mxu0
    %5608 = vmatprep.mubr.bf16.mxu0 0
    %5609 = vmatmul.mubr.bf16.gmra.mxu0 %v3637
    %v5610 = vpop.f32.mrf.mxu0
    %v5611 = vadd.f32 %v5322, %v5610
    %v5612 = vpop.f32.mrf.mxu0
    %v5613 = vpop.f32.mrf.mxu0
    %v5614 = vadd.f32 %v5325, %v5613
    %v5615 = vpop.f32.mrf.mxu0
    %5616 = vmatprep.mubr.bf16.mxu0 0
    %5617 = vmatmul.mubr.bf16.gmra.mxu0 %v3638
    %v5618 = vpop.f32.mrf.mxu0
    %v5619 = vadd.f32 %v5330, %v5618
    %v5620 = vpop.f32.mrf.mxu0
    %v5621 = vpop.f32.mrf.mxu0
    %v5622 = vadd.f32 %v5333, %v5621
    %v5623 = vpop.f32.mrf.mxu0
    %5624 = vmatprep.mubr.bf16.mxu0 0
    %5625 = vmatmul.mubr.bf16.gmra.mxu0 %v3639
    %v5626 = vpop.f32.mrf.mxu0
    %v5627 = vadd.f32 %v5338, %v5626
    %v5628 = vpop.f32.mrf.mxu0
    %v5629 = vpop.f32.mrf.mxu0
    %v5630 = vadd.f32 %v5341, %v5629
    %v5631 = vpop.f32.mrf.mxu0
    %5632 = vmatprep.mubr.bf16.mxu0 0
    %5633 = vmatmul.mubr.bf16.gmra.mxu0 %v3640
    %v5634 = vpop.f32.mrf.mxu0
    %v5635 = vadd.f32 %v5346, %v5634
    %v5636 = vpop.f32.mrf.mxu0
    %v5637 = vpop.f32.mrf.mxu0
    %v5638 = vadd.f32 %v5349, %v5637
    %v5639 = vpop.f32.mrf.mxu0
    %5640 = vmatprep.mubr.bf16.mxu0 0
    %5641 = vmatmul.mubr.bf16.gmra.mxu0 %v3641
    %v5642 = vpop.f32.mrf.mxu0
    %v5643 = vadd.f32 %v5354, %v5642
    %v5644 = vpop.f32.mrf.mxu0
    %v5645 = vpop.f32.mrf.mxu0
    %v5646 = vadd.f32 %v5357, %v5645
    %v5647 = vpop.f32.mrf.mxu0
    %5648 = vmatprep.mubr.bf16.mxu0 0
    %5649 = vmatmul.mubr.bf16.gmra.mxu0 %v3642
    %v5650 = vpop.f32.mrf.mxu0
    %v5651 = vadd.f32 %v5362, %v5650
    %v5652 = vpop.f32.mrf.mxu0
    %v5653 = vpop.f32.mrf.mxu0
    %v5654 = vadd.f32 %v5365, %v5653
    %v5655 = vpop.f32.mrf.mxu0
    %5656 = vmatprep.mubr.bf16.mxu0 0
    %5657 = vmatmul.mubr.bf16.gmra.mxu0 %v3643
    %v5658 = vpop.f32.mrf.mxu0
    %v5659 = vadd.f32 %v5370, %v5658
    %v5660 = vpop.f32.mrf.mxu0
    %v5661 = vpop.f32.mrf.mxu0
    %v5662 = vadd.f32 %v5373, %v5661
    %v5663 = vpop.f32.mrf.mxu0
    %5664 = vdwg.mxu0
    %v5665 = vld [vmem:[%s5] sm:$0x1]
    %v5666 = vld [vmem:[%s6] sm:$0x1]
    %v5667 = vadd.f32 %v5411, %v5414
    %v5668 = vadd.f32 %v5667, %v5419
    %v5669 = vadd.f32 %v5668, %v5422
    %v5670 = vadd.f32 %v5669, %v5427
    %v5671 = vadd.f32 %v5670, %v5430
    %v5672 = vadd.f32 %v5671, %v5435
    %v5673 = vadd.f32 %v5672, %v5438
    %v5674 = vadd.f32 %v5673, %v5443
    %v5675 = vadd.f32 %v5674, %v5446
    %v5676 = vadd.f32 %v5675, %v5451
    %v5677 = vadd.f32 %v5676, %v5454
    %v5678 = vadd.f32 %v5677, %v5459
    %v5679 = vadd.f32 %v5678, %v5462
    %v5680 = vadd.f32 %v5679, %v5467
    %v5681 = vadd.f32 %v5680, %v5470
    %v5682 = vadd.f32 %v5681, %v5475
    %v5683 = vadd.f32 %v5682, %v5478
    %v5684 = vadd.f32 %v5683, %v5483
    %v5685 = vadd.f32 %v5684, %v5486
    %v5686 = vadd.f32 %v5685, %v5491
    %v5687 = vadd.f32 %v5686, %v5494
    %v5688 = vadd.f32 %v5687, %v5499
    %v5689 = vadd.f32 %v5688, %v5502
    %v5690 = vadd.f32 %v5689, %v5507
    %v5691 = vadd.f32 %v5690, %v5510
    %v5692 = vadd.f32 %v5691, %v5515
    %v5693 = vadd.f32 %v5692, %v5518
    %v5694 = vadd.f32 %v5693, %v5523
    %v5695 = vadd.f32 %v5694, %v5526
    %v5696 = vadd.f32 %v5695, %v5531
    %v5697 = vadd.f32 %v5696, %v5534
    %v5698 = vadd.f32 %v5697, %v5539
    %v5699 = vadd.f32 %v5698, %v5542
    %v5700 = vadd.f32 %v5699, %v5547
    %v5701 = vadd.f32 %v5700, %v5550
    %v5702 = vadd.f32 %v5701, %v5555
    %v5703 = vadd.f32 %v5702, %v5558
    %v5704 = vadd.f32 %v5703, %v5563
    %v5705 = vadd.f32 %v5704, %v5566
    %v5706 = vadd.f32 %v5705, %v5571
    %v5707 = vadd.f32 %v5706, %v5574
    %v5708 = vadd.f32 %v5707, %v5579
    %v5709 = vadd.f32 %v5708, %v5582
    %v5710 = vadd.f32 %v5709, %v5587
    %v5711 = vadd.f32 %v5710, %v5590
    %v5712 = vadd.f32 %v5711, %v5595
    %v5713 = vadd.f32 %v5712, %v5598
    %v5714 = vadd.f32 %v5713, %v5603
    %v5715 = vadd.f32 %v5714, %v5606
    %v5716 = vadd.f32 %v5715, %v5611
    %v5717 = vadd.f32 %v5716, %v5614
    %v5718 = vadd.f32 %v5717, %v5619
    %v5719 = vadd.f32 %v5718, %v5622
    %v5720 = vadd.f32 %v5719, %v5627
    %v5721 = vadd.f32 %v5720, %v5630
    %v5722 = vadd.f32 %v5721, %v5635
    %v5723 = vadd.f32 %v5722, %v5638
    %v5724 = vadd.f32 %v5723, %v5643
    %v5725 = vadd.f32 %v5724, %v5646
    %v5726 = vadd.f32 %v5725, %v5651
    %v5727 = vadd.f32 %v5726, %v5654
    %v5728 = vadd.f32 %v5727, %v5659
    %v5729 = vadd.f32 %v5728, %v5662
    %v5730 = vrot.slane %v5729, 4
    %v5731 = vadd.f32 %v5729, %v5730
    %v5732 = vrot.slane %v5731, 2
    %v5733 = vadd.f32 %v5731, %v5732
    %v5734 = vrot.slane %v5733, 1
    %v5735 = vadd.f32 %v5733, %v5734
    %v5736 = vmul.f32 %v5735, %v2763
    %v5737 = vsub.f32 %v5411, %v5736
    %v5738 = vsub.f32 %v5414, %v5736
    %v5739 = vsub.f32 %v5419, %v5736
    %v5740 = vsub.f32 %v5422, %v5736
    %v5741 = vsub.f32 %v5427, %v5736
    %v5742 = vsub.f32 %v5430, %v5736
    %v5743 = vsub.f32 %v5435, %v5736
    %v5744 = vsub.f32 %v5438, %v5736
    %v5745 = vsub.f32 %v5443, %v5736
    %v5746 = vsub.f32 %v5446, %v5736
    %v5747 = vsub.f32 %v5451, %v5736
    %v5748 = vsub.f32 %v5454, %v5736
    %v5749 = vsub.f32 %v5459, %v5736
    %v5750 = vsub.f32 %v5462, %v5736
    %v5751 = vsub.f32 %v5467, %v5736
    %v5752 = vsub.f32 %v5470, %v5736
    %v5753 = vsub.f32 %v5475, %v5736
    %v5754 = vsub.f32 %v5478, %v5736
    %v5755 = vsub.f32 %v5483, %v5736
    %v5756 = vsub.f32 %v5486, %v5736
    %v5757 = vsub.f32 %v5491, %v5736
    %v5758 = vsub.f32 %v5494, %v5736
    %v5759 = vsub.f32 %v5499, %v5736
    %v5760 = vsub.f32 %v5502, %v5736
    %v5761 = vsub.f32 %v5507, %v5736
    %v5762 = vsub.f32 %v5510, %v5736
    %v5763 = vsub.f32 %v5515, %v5736
    %v5764 = vsub.f32 %v5518, %v5736
    %v5765 = vsub.f32 %v5523, %v5736
    %v5766 = vsub.f32 %v5526, %v5736
    %v5767 = vsub.f32 %v5531, %v5736
    %v5768 = vsub.f32 %v5534, %v5736
    %v5769 = vsub.f32 %v5539, %v5736
    %v5770 = vsub.f32 %v5542, %v5736
    %v5771 = vsub.f32 %v5547, %v5736
    %v5772 = vsub.f32 %v5550, %v5736
    %v5773 = vsub.f32 %v5555, %v5736
    %v5774 = vsub.f32 %v5558, %v5736
    %v5775 = vsub.f32 %v5563, %v5736
    %v5776 = vsub.f32 %v5566, %v5736
    %v5777 = vsub.f32 %v5571, %v5736
    %v5778 = vsub.f32 %v5574, %v5736
    %v5779 = vsub.f32 %v5579, %v5736
    %v5780 = vsub.f32 %v5582, %v5736
    %v5781 = vsub.f32 %v5587, %v5736
    %v5782 = vsub.f32 %v5590, %v5736
    %v5783 = vsub.f32 %v5595, %v5736
    %v5784 = vsub.f32 %v5598, %v5736
    %v5785 = vsub.f32 %v5603, %v5736
    %v5786 = vsub.f32 %v5606, %v5736
    %v5787 = vsub.f32 %v5611, %v5736
    %v5788 = vsub.f32 %v5614, %v5736
    %v5789 = vsub.f32 %v5619, %v5736
    %v5790 = vsub.f32 %v5622, %v5736
    %v5791 = vsub.f32 %v5627, %v5736
    %v5792 = vsub.f32 %v5630, %v5736
    %v5793 = vsub.f32 %v5635, %v5736
    %v5794 = vsub.f32 %v5638, %v5736
    %v5795 = vsub.f32 %v5643, %v5736
    %v5796 = vsub.f32 %v5646, %v5736
    %v5797 = vsub.f32 %v5651, %v5736
    %v5798 = vsub.f32 %v5654, %v5736
    %v5799 = vsub.f32 %v5659, %v5736
    %v5800 = vsub.f32 %v5662, %v5736
    %v5801 = vmul.f32 %v5737, %v5737
    %v5802 = vmul.f32 %v5738, %v5738
    %v5803 = vmul.f32 %v5739, %v5739
    %v5804 = vmul.f32 %v5740, %v5740
    %v5805 = vmul.f32 %v5741, %v5741
    %v5806 = vmul.f32 %v5742, %v5742
    %v5807 = vmul.f32 %v5743, %v5743
    %v5808 = vmul.f32 %v5744, %v5744
    %v5809 = vmul.f32 %v5745, %v5745
    %v5810 = vmul.f32 %v5746, %v5746
    %v5811 = vmul.f32 %v5747, %v5747
    %v5812 = vmul.f32 %v5748, %v5748
    %v5813 = vmul.f32 %v5749, %v5749
    %v5814 = vmul.f32 %v5750, %v5750
    %v5815 = vmul.f32 %v5751, %v5751
    %v5816 = vmul.f32 %v5752, %v5752
    %v5817 = vmul.f32 %v5753, %v5753
    %v5818 = vmul.f32 %v5754, %v5754
    %v5819 = vmul.f32 %v5755, %v5755
    %v5820 = vmul.f32 %v5756, %v5756
    %v5821 = vmul.f32 %v5757, %v5757
    %v5822 = vmul.f32 %v5758, %v5758
    %v5823 = vmul.f32 %v5759, %v5759
    %v5824 = vmul.f32 %v5760, %v5760
    %v5825 = vmul.f32 %v5761, %v5761
    %v5826 = vmul.f32 %v5762, %v5762
    %v5827 = vmul.f32 %v5763, %v5763
    %v5828 = vmul.f32 %v5764, %v5764
    %v5829 = vmul.f32 %v5765, %v5765
    %v5830 = vmul.f32 %v5766, %v5766
    %v5831 = vmul.f32 %v5767, %v5767
    %v5832 = vmul.f32 %v5768, %v5768
    %v5833 = vmul.f32 %v5769, %v5769
    %v5834 = vmul.f32 %v5770, %v5770
    %v5835 = vmul.f32 %v5771, %v5771
    %v5836 = vmul.f32 %v5772, %v5772
    %v5837 = vmul.f32 %v5773, %v5773
    %v5838 = vmul.f32 %v5774, %v5774
    %v5839 = vmul.f32 %v5775, %v5775
    %v5840 = vmul.f32 %v5776, %v5776
    %v5841 = vmul.f32 %v5777, %v5777
    %v5842 = vmul.f32 %v5778, %v5778
    %v5843 = vmul.f32 %v5779, %v5779
    %v5844 = vmul.f32 %v5780, %v5780
    %v5845 = vmul.f32 %v5781, %v5781
    %v5846 = vmul.f32 %v5782, %v5782
    %v5847 = vmul.f32 %v5783, %v5783
    %v5848 = vmul.f32 %v5784, %v5784
    %v5849 = vmul.f32 %v5785, %v5785
    %v5850 = vmul.f32 %v5786, %v5786
    %v5851 = vmul.f32 %v5787, %v5787
    %v5852 = vmul.f32 %v5788, %v5788
    %v5853 = vmul.f32 %v5789, %v5789
    %v5854 = vmul.f32 %v5790, %v5790
    %v5855 = vmul.f32 %v5791, %v5791
    %v5856 = vmul.f32 %v5792, %v5792
    %v5857 = vmul.f32 %v5793, %v5793
    %v5858 = vmul.f32 %v5794, %v5794
    %v5859 = vmul.f32 %v5795, %v5795
    %v5860 = vmul.f32 %v5796, %v5796
    %v5861 = vmul.f32 %v5797, %v5797
    %v5862 = vmul.f32 %v5798, %v5798
    %v5863 = vmul.f32 %v5799, %v5799
    %v5864 = vmul.f32 %v5800, %v5800
    %v5865 = vadd.f32 %v5801, %v5802
    %v5866 = vadd.f32 %v5865, %v5803
    %v5867 = vadd.f32 %v5866, %v5804
    %v5868 = vadd.f32 %v5867, %v5805
    %v5869 = vadd.f32 %v5868, %v5806
    %v5870 = vadd.f32 %v5869, %v5807
    %v5871 = vadd.f32 %v5870, %v5808
    %v5872 = vadd.f32 %v5871, %v5809
    %v5873 = vadd.f32 %v5872, %v5810
    %v5874 = vadd.f32 %v5873, %v5811
    %v5875 = vadd.f32 %v5874, %v5812
    %v5876 = vadd.f32 %v5875, %v5813
    %v5877 = vadd.f32 %v5876, %v5814
    %v5878 = vadd.f32 %v5877, %v5815
    %v5879 = vadd.f32 %v5878, %v5816
    %v5880 = vadd.f32 %v5879, %v5817
    %v5881 = vadd.f32 %v5880, %v5818
    %v5882 = vadd.f32 %v5881, %v5819
    %v5883 = vadd.f32 %v5882, %v5820
    %v5884 = vadd.f32 %v5883, %v5821
    %v5885 = vadd.f32 %v5884, %v5822
    %v5886 = vadd.f32 %v5885, %v5823
    %v5887 = vadd.f32 %v5886, %v5824
    %v5888 = vadd.f32 %v5887, %v5825
    %v5889 = vadd.f32 %v5888, %v5826
    %v5890 = vadd.f32 %v5889, %v5827
    %v5891 = vadd.f32 %v5890, %v5828
    %v5892 = vadd.f32 %v5891, %v5829
    %v5893 = vadd.f32 %v5892, %v5830
    %v5894 = vadd.f32 %v5893, %v5831
    %v5895 = vadd.f32 %v5894, %v5832
    %v5896 = vadd.f32 %v5895, %v5833
    %v5897 = vadd.f32 %v5896, %v5834
    %v5898 = vadd.f32 %v5897, %v5835
    %v5899 = vadd.f32 %v5898, %v5836
    %v5900 = vadd.f32 %v5899, %v5837
    %v5901 = vadd.f32 %v5900, %v5838
    %v5902 = vadd.f32 %v5901, %v5839
    %v5903 = vadd.f32 %v5902, %v5840
    %v5904 = vadd.f32 %v5903, %v5841
    %v5905 = vadd.f32 %v5904, %v5842
    %v5906 = vadd.f32 %v5905, %v5843
    %v5907 = vadd.f32 %v5906, %v5844
    %v5908 = vadd.f32 %v5907, %v5845
    %v5909 = vadd.f32 %v5908, %v5846
    %v5910 = vadd.f32 %v5909, %v5847
    %v5911 = vadd.f32 %v5910, %v5848
    %v5912 = vadd.f32 %v5911, %v5849
    %v5913 = vadd.f32 %v5912, %v5850
    %v5914 = vadd.f32 %v5913, %v5851
    %v5915 = vadd.f32 %v5914, %v5852
    %v5916 = vadd.f32 %v5915, %v5853
    %v5917 = vadd.f32 %v5916, %v5854
    %v5918 = vadd.f32 %v5917, %v5855
    %v5919 = vadd.f32 %v5918, %v5856
    %v5920 = vadd.f32 %v5919, %v5857
    %v5921 = vadd.f32 %v5920, %v5858
    %v5922 = vadd.f32 %v5921, %v5859
    %v5923 = vadd.f32 %v5922, %v5860
    %v5924 = vadd.f32 %v5923, %v5861
    %v5925 = vadd.f32 %v5924, %v5862
    %v5926 = vadd.f32 %v5925, %v5863
    %v5927 = vadd.f32 %v5926, %v5864
    %v5928 = vrot.slane %v5927, 4
    %v5929 = vadd.f32 %v5927, %v5928
    %v5930 = vrot.slane %v5929, 2
    %v5931 = vadd.f32 %v5929, %v5930
    %v5932 = vrot.slane %v5931, 1
    %v5933 = vadd.f32 %v5931, %v5932
    %v5934 = vmul.f32 %v5933, %v2763
    %v5935 = vadd.f32 %v5934, 1e-05
    %v5936 = vrsqrt.pop %v5935
    %v5937 = vmul.f32 %v5665, %v5936
    %v5939 = vlaneseq
    %v5940 = vshrl.u32 %v5939, 7
    %v5941 = vsub.s32 0, %v5940
    %v5942 = vrot.slane %v5937, %v5941
    %v5944 = vmul.f32 %v5737, %v5942
    %v5945 = vmul.f32 %v5738, %v5942
    %v5946 = vmul.f32 %v5739, %v5942
    %v5947 = vmul.f32 %v5740, %v5942
    %v5948 = vmul.f32 %v5741, %v5942
    %v5949 = vmul.f32 %v5742, %v5942
    %v5950 = vmul.f32 %v5743, %v5942
    %v5951 = vmul.f32 %v5744, %v5942
    %v5952 = vmul.f32 %v5745, %v5942
    %v5953 = vmul.f32 %v5746, %v5942
    %v5954 = vmul.f32 %v5747, %v5942
    %v5955 = vmul.f32 %v5748, %v5942
    %v5956 = vmul.f32 %v5749, %v5942
    %v5957 = vmul.f32 %v5750, %v5942
    %v5958 = vmul.f32 %v5751, %v5942
    %v5959 = vmul.f32 %v5752, %v5942
    %v5960 = vmul.f32 %v5753, %v5942
    %v5961 = vmul.f32 %v5754, %v5942
    %v5962 = vmul.f32 %v5755, %v5942
    %v5963 = vmul.f32 %v5756, %v5942
    %v5964 = vmul.f32 %v5757, %v5942
    %v5965 = vmul.f32 %v5758, %v5942
    %v5966 = vmul.f32 %v5759, %v5942
    %v5967 = vmul.f32 %v5760, %v5942
    %v5968 = vmul.f32 %v5761, %v5942
    %v5969 = vmul.f32 %v5762, %v5942
    %v5970 = vmul.f32 %v5763, %v5942
    %v5971 = vmul.f32 %v5764, %v5942
    %v5972 = vmul.f32 %v5765, %v5942
    %v5973 = vmul.f32 %v5766, %v5942
    %v5974 = vmul.f32 %v5767, %v5942
    %v5975 = vmul.f32 %v5768, %v5942
    %v5976 = vmul.f32 %v5769, %v5942
    %v5977 = vmul.f32 %v5770, %v5942
    %v5978 = vmul.f32 %v5771, %v5942
    %v5979 = vmul.f32 %v5772, %v5942
    %v5980 = vmul.f32 %v5773, %v5942
    %v5981 = vmul.f32 %v5774, %v5942
    %v5982 = vmul.f32 %v5775, %v5942
    %v5983 = vmul.f32 %v5776, %v5942
    %v5984 = vmul.f32 %v5777, %v5942
    %v5985 = vmul.f32 %v5778, %v5942
    %v5986 = vmul.f32 %v5779, %v5942
    %v5987 = vmul.f32 %v5780, %v5942
    %v5988 = vmul.f32 %v5781, %v5942
    %v5989 = vmul.f32 %v5782, %v5942
    %v5990 = vmul.f32 %v5783, %v5942
    %v5991 = vmul.f32 %v5784, %v5942
    %v5992 = vmul.f32 %v5785, %v5942
    %v5993 = vmul.f32 %v5786, %v5942
    %v5994 = vmul.f32 %v5787, %v5942
    %v5995 = vmul.f32 %v5788, %v5942
    %v5996 = vmul.f32 %v5789, %v5942
    %v5997 = vmul.f32 %v5790, %v5942
    %v5998 = vmul.f32 %v5791, %v5942
    %v5999 = vmul.f32 %v5792, %v5942
    %v6000 = vmul.f32 %v5793, %v5942
    %v6001 = vmul.f32 %v5794, %v5942
    %v6002 = vmul.f32 %v5795, %v5942
    %v6003 = vmul.f32 %v5796, %v5942
    %v6004 = vmul.f32 %v5797, %v5942
    %v6005 = vmul.f32 %v5798, %v5942
    %v6006 = vmul.f32 %v5799, %v5942
    %v6007 = vmul.f32 %v5800, %v5942
    %v6009 = vlaneseq
    %v6010 = vshrl.u32 %v6009, 7
    %v6011 = vsub.s32 0, %v6010
    %v6012 = vrot.slane %v5666, %v6011
    %v6014 = vadd.f32 %v5944, %v6012
    %v6015 = vadd.f32 %v5945, %v6012
    %v6016 = vadd.f32 %v5946, %v6012
    %v6017 = vadd.f32 %v5947, %v6012
    %v6018 = vadd.f32 %v5948, %v6012
    %v6019 = vadd.f32 %v5949, %v6012
    %v6020 = vadd.f32 %v5950, %v6012
    %v6021 = vadd.f32 %v5951, %v6012
    %v6022 = vadd.f32 %v5952, %v6012
    %v6023 = vadd.f32 %v5953, %v6012
    %v6024 = vadd.f32 %v5954, %v6012
    %v6025 = vadd.f32 %v5955, %v6012
    %v6026 = vadd.f32 %v5956, %v6012
    %v6027 = vadd.f32 %v5957, %v6012
    %v6028 = vadd.f32 %v5958, %v6012
    %v6029 = vadd.f32 %v5959, %v6012
    %v6030 = vadd.f32 %v5960, %v6012
    %v6031 = vadd.f32 %v5961, %v6012
    %v6032 = vadd.f32 %v5962, %v6012
    %v6033 = vadd.f32 %v5963, %v6012
    %v6034 = vadd.f32 %v5964, %v6012
    %v6035 = vadd.f32 %v5965, %v6012
    %v6036 = vadd.f32 %v5966, %v6012
    %v6037 = vadd.f32 %v5967, %v6012
    %v6038 = vadd.f32 %v5968, %v6012
    %v6039 = vadd.f32 %v5969, %v6012
    %v6040 = vadd.f32 %v5970, %v6012
    %v6041 = vadd.f32 %v5971, %v6012
    %v6042 = vadd.f32 %v5972, %v6012
    %v6043 = vadd.f32 %v5973, %v6012
    %v6044 = vadd.f32 %v5974, %v6012
    %v6045 = vadd.f32 %v5975, %v6012
    %v6046 = vadd.f32 %v5976, %v6012
    %v6047 = vadd.f32 %v5977, %v6012
    %v6048 = vadd.f32 %v5978, %v6012
    %v6049 = vadd.f32 %v5979, %v6012
    %v6050 = vadd.f32 %v5980, %v6012
    %v6051 = vadd.f32 %v5981, %v6012
    %v6052 = vadd.f32 %v5982, %v6012
    %v6053 = vadd.f32 %v5983, %v6012
    %v6054 = vadd.f32 %v5984, %v6012
    %v6055 = vadd.f32 %v5985, %v6012
    %v6056 = vadd.f32 %v5986, %v6012
    %v6057 = vadd.f32 %v5987, %v6012
    %v6058 = vadd.f32 %v5988, %v6012
    %v6059 = vadd.f32 %v5989, %v6012
    %v6060 = vadd.f32 %v5990, %v6012
    %v6061 = vadd.f32 %v5991, %v6012
    %v6062 = vadd.f32 %v5992, %v6012
    %v6063 = vadd.f32 %v5993, %v6012
    %v6064 = vadd.f32 %v5994, %v6012
    %v6065 = vadd.f32 %v5995, %v6012
    %v6066 = vadd.f32 %v5996, %v6012
    %v6067 = vadd.f32 %v5997, %v6012
    %v6068 = vadd.f32 %v5998, %v6012
    %v6069 = vadd.f32 %v5999, %v6012
    %v6070 = vadd.f32 %v6000, %v6012
    %v6071 = vadd.f32 %v6001, %v6012
    %v6072 = vadd.f32 %v6002, %v6012
    %v6073 = vadd.f32 %v6003, %v6012
    %v6074 = vadd.f32 %v6004, %v6012
    %v6075 = vadd.f32 %v6005, %v6012
    %v6076 = vadd.f32 %v6006, %v6012
    %v6077 = vadd.f32 %v6007, %v6012
    %v6078 = vmax.f32 %v6014, 0.0
    %v6079 = vmax.f32 %v6015, 0.0
    %v6080 = vmax.f32 %v6016, 0.0
    %v6081 = vmax.f32 %v6017, 0.0
    %v6082 = vmax.f32 %v6018, 0.0
    %v6083 = vmax.f32 %v6019, 0.0
    %v6084 = vmax.f32 %v6020, 0.0
    %v6085 = vmax.f32 %v6021, 0.0
    %v6086 = vmax.f32 %v6022, 0.0
    %v6087 = vmax.f32 %v6023, 0.0
    %v6088 = vmax.f32 %v6024, 0.0
    %v6089 = vmax.f32 %v6025, 0.0
    %v6090 = vmax.f32 %v6026, 0.0
    %v6091 = vmax.f32 %v6027, 0.0
    %v6092 = vmax.f32 %v6028, 0.0
    %v6093 = vmax.f32 %v6029, 0.0
    %v6094 = vmax.f32 %v6030, 0.0
    %v6095 = vmax.f32 %v6031, 0.0
    %v6096 = vmax.f32 %v6032, 0.0
    %v6097 = vmax.f32 %v6033, 0.0
    %v6098 = vmax.f32 %v6034, 0.0
    %v6099 = vmax.f32 %v6035, 0.0
    %v6100 = vmax.f32 %v6036, 0.0
    %v6101 = vmax.f32 %v6037, 0.0
    %v6102 = vmax.f32 %v6038, 0.0
    %v6103 = vmax.f32 %v6039, 0.0
    %v6104 = vmax.f32 %v6040, 0.0
    %v6105 = vmax.f32 %v6041, 0.0
    %v6106 = vmax.f32 %v6042, 0.0
    %v6107 = vmax.f32 %v6043, 0.0
    %v6108 = vmax.f32 %v6044, 0.0
    %v6109 = vmax.f32 %v6045, 0.0
    %v6110 = vmax.f32 %v6046, 0.0
    %v6111 = vmax.f32 %v6047, 0.0
    %v6112 = vmax.f32 %v6048, 0.0
    %v6113 = vmax.f32 %v6049, 0.0
    %v6114 = vmax.f32 %v6050, 0.0
    %v6115 = vmax.f32 %v6051, 0.0
    %v6116 = vmax.f32 %v6052, 0.0
    %v6117 = vmax.f32 %v6053, 0.0
    %v6118 = vmax.f32 %v6054, 0.0
    %v6119 = vmax.f32 %v6055, 0.0
    %v6120 = vmax.f32 %v6056, 0.0
    %v6121 = vmax.f32 %v6057, 0.0
    %v6122 = vmax.f32 %v6058, 0.0
    %v6123 = vmax.f32 %v6059, 0.0
    %v6124 = vmax.f32 %v6060, 0.0
    %v6125 = vmax.f32 %v6061, 0.0
    %v6126 = vmax.f32 %v6062, 0.0
    %v6127 = vmax.f32 %v6063, 0.0
    %v6128 = vmax.f32 %v6064, 0.0
    %v6129 = vmax.f32 %v6065, 0.0
    %v6130 = vmax.f32 %v6066, 0.0
    %v6131 = vmax.f32 %v6067, 0.0
    %v6132 = vmax.f32 %v6068, 0.0
    %v6133 = vmax.f32 %v6069, 0.0
    %v6134 = vmax.f32 %v6070, 0.0
    %v6135 = vmax.f32 %v6071, 0.0
    %v6136 = vmax.f32 %v6072, 0.0
    %v6137 = vmax.f32 %v6073, 0.0
    %v6138 = vmax.f32 %v6074, 0.0
    %v6139 = vmax.f32 %v6075, 0.0
    %v6140 = vmax.f32 %v6076, 0.0
    %v6141 = vmax.f32 %v6077, 0.0
    %6142 = vst [vmem:[#allocation10] sm:$0xff] %v6078
    %6143 = vst [vmem:[#allocation10 + $0x8] sm:$0xff] %v6079
    %6144 = vst [vmem:[#allocation10 + $0x10] sm:$0xff] %v6080
    %6145 = vst [vmem:[#allocation10 + $0x18] sm:$0xff] %v6081
    %6146 = vst [vmem:[#allocation10 + $0x20] sm:$0xff] %v6082
    %6147 = vst [vmem:[#allocation10 + $0x28] sm:$0xff] %v6083
    %6148 = vst [vmem:[#allocation10 + $0x30] sm:$0xff] %v6084
    %6149 = vst [vmem:[#allocation10 + $0x38] sm:$0xff] %v6085
    %6150 = vst [vmem:[#allocation10 + $0x40] sm:$0xff] %v6086
    %6151 = vst [vmem:[#allocation10 + $0x48] sm:$0xff] %v6087
    %6152 = vst [vmem:[#allocation10 + $0x50] sm:$0xff] %v6088
    %6153 = vst [vmem:[#allocation10 + $0x58] sm:$0xff] %v6089
    %6154 = vst [vmem:[#allocation10 + $0x60] sm:$0xff] %v6090
    %6155 = vst [vmem:[#allocation10 + $0x68] sm:$0xff] %v6091
    %6156 = vst [vmem:[#allocation10 + $0x70] sm:$0xff] %v6092
    %6157 = vst [vmem:[#allocation10 + $0x78] sm:$0xff] %v6093
    %6158 = vst [vmem:[#allocation10 + $0x80] sm:$0xff] %v6094
    %6159 = vst [vmem:[#allocation10 + $0x88] sm:$0xff] %v6095
    %6160 = vst [vmem:[#allocation10 + $0x90] sm:$0xff] %v6096
    %6161 = vst [vmem:[#allocation10 + $0x98] sm:$0xff] %v6097
    %6162 = vst [vmem:[#allocation10 + $0xa0] sm:$0xff] %v6098
    %6163 = vst [vmem:[#allocation10 + $0xa8] sm:$0xff] %v6099
    %6164 = vst [vmem:[#allocation10 + $0xb0] sm:$0xff] %v6100
    %6165 = vst [vmem:[#allocation10 + $0xb8] sm:$0xff] %v6101
    %6166 = vst [vmem:[#allocation10 + $0xc0] sm:$0xff] %v6102
    %6167 = vst [vmem:[#allocation10 + $0xc8] sm:$0xff] %v6103
    %6168 = vst [vmem:[#allocation10 + $0xd0] sm:$0xff] %v6104
    %6169 = vst [vmem:[#allocation10 + $0xd8] sm:$0xff] %v6105
    %6170 = vst [vmem:[#allocation10 + $0xe0] sm:$0xff] %v6106
    %6171 = vst [vmem:[#allocation10 + $0xe8] sm:$0xff] %v6107
    %6172 = vst [vmem:[#allocation10 + $0xf0] sm:$0xff] %v6108
    %6173 = vst [vmem:[#allocation10 + $0xf8] sm:$0xff] %v6109
    %6174 = vst [vmem:[#allocation10 + $0x100] sm:$0xff] %v6110
    %6175 = vst [vmem:[#allocation10 + $0x108] sm:$0xff] %v6111
    %6176 = vst [vmem:[#allocation10 + $0x110] sm:$0xff] %v6112
    %6177 = vst [vmem:[#allocation10 + $0x118] sm:$0xff] %v6113
    %6178 = vst [vmem:[#allocation10 + $0x120] sm:$0xff] %v6114
    %6179 = vst [vmem:[#allocation10 + $0x128] sm:$0xff] %v6115
    %6180 = vst [vmem:[#allocation10 + $0x130] sm:$0xff] %v6116
    %6181 = vst [vmem:[#allocation10 + $0x138] sm:$0xff] %v6117
    %6182 = vst [vmem:[#allocation10 + $0x140] sm:$0xff] %v6118
    %6183 = vst [vmem:[#allocation10 + $0x148] sm:$0xff] %v6119
    %6184 = vst [vmem:[#allocation10 + $0x150] sm:$0xff] %v6120
    %6185 = vst [vmem:[#allocation10 + $0x158] sm:$0xff] %v6121
    %6186 = vst [vmem:[#allocation10 + $0x160] sm:$0xff] %v6122
    %6187 = vst [vmem:[#allocation10 + $0x168] sm:$0xff] %v6123
    %6188 = vst [vmem:[#allocation10 + $0x170] sm:$0xff] %v6124
    %6189 = vst [vmem:[#allocation10 + $0x178] sm:$0xff] %v6125
    %6190 = vst [vmem:[#allocation10 + $0x180] sm:$0xff] %v6126
    %6191 = vst [vmem:[#allocation10 + $0x188] sm:$0xff] %v6127
    %6192 = vst [vmem:[#allocation10 + $0x190] sm:$0xff] %v6128
    %6193 = vst [vmem:[#allocation10 + $0x198] sm:$0xff] %v6129
    %6194 = vst [vmem:[#allocation10 + $0x1a0] sm:$0xff] %v6130
    %6195 = vst [vmem:[#allocation10 + $0x1a8] sm:$0xff] %v6131
    %6196 = vst [vmem:[#allocation10 + $0x1b0] sm:$0xff] %v6132
    %6197 = vst [vmem:[#allocation10 + $0x1b8] sm:$0xff] %v6133
    %6198 = vst [vmem:[#allocation10 + $0x1c0] sm:$0xff] %v6134
    %6199 = vst [vmem:[#allocation10 + $0x1c8] sm:$0xff] %v6135
    %6200 = vst [vmem:[#allocation10 + $0x1d0] sm:$0xff] %v6136
    %6201 = vst [vmem:[#allocation10 + $0x1d8] sm:$0xff] %v6137
    %6202 = vst [vmem:[#allocation10 + $0x1e0] sm:$0xff] %v6138
    %6203 = vst [vmem:[#allocation10 + $0x1e8] sm:$0xff] %v6139
    %6204 = vst [vmem:[#allocation10 + $0x1f0] sm:$0xff] %v6140
    %6205 = vst [vmem:[#allocation10 + $0x1f8] sm:$0xff] %v6141
    // Predicated region
    $region42: #{tpu_custom_call.1} parent=1 // pred_check
      _
    $region43: #{tpu_custom_call.1} parent=1 // pred_check_branch
      %6207 = sbr.rel (0) target = $region45
    $region44: #{tpu_custom_call.1} parent=1 // pred_region
      %s6209 = ssub.s32 8192, 8192
      %6210 = vsyncadd [#allocation6], %s6209
      %s6211 = sshll.u32 [#allocation10], 4
      %s6212 = int_to_ptr.vmem [resolvable:$true] %s6211
      %6217 = dma.vmem_to_hbm [thread:$0]  %s6212, 8192, %s7, [#allocation6], 128, 128, 8
    $region45: #{tpu_custom_call.1} parent=1 // pred_fallthru
      _
    // Predicated region
    $region46: #{tpu_custom_call.1} parent=1 // pred_check
      _
    $region47: #{tpu_custom_call.1} parent=1 // pred_check_branch
      %6219 = sbr.rel (0) target = $region49
    $region48: #{tpu_custom_call.1} parent=1 // pred_region
      %6220 = dma.done [#allocation6], 8192
    $region49: #{tpu_custom_call.1} parent=1 // pred_fallthru
      _
    %6221 = vsyncpa [#allocation5], 1
    %6222 = vsyncpa [#allocation8], 1
    %6223 = vsyncpa [#allocation6], 1

</llo_original>
